<compile_context>
chip_gen: v7x
topology: tpu7x:2x2x1
jax: 0.10.0
libtpu: 0.0.40
codegen_flags: <defaults>
</compile_context>

<pallas_src>
import jax
import jax.numpy as jnp
from jax.experimental import pallas as pl
from jax.experimental.pallas import tpu as pltpu


# ----------------------------------------------------------------------------
# The single fused kernel (one batch chunk per grid step).
# ----------------------------------------------------------------------------
def spectrum_cnn_kernel(x_ref, masks_ref,
                        w1_ref, b1_ref,
                        w2_ref, b2_ref,
                        w3_ref, b3_ref,
                        w4_ref, b4_ref,
                        sel_ref, wf1_ref, bf1_ref, wf2_ref, bf2_ref,
                        o_ref):
    n = x_ref.shape[1]                 # batch_chunk * L  (lane width, static)
    bc = o_ref.shape[2]                # batch chunk
    seq = n // bc                      # input spectral length L
    lf = seq // 16                     # length after the 4 pools

    masks = masks_ref[...]             # (8, n) f32: [prev_s, next_s] for s=1,2,4,8

    def shifted(x, s, k):
        # neighbours at +/- s with Conv1d padding=1 zeros at segment boundaries
        prev = pltpu.roll(x, s, axis=1) * masks[2 * k:2 * k + 1, :]
        nxt = pltpu.roll(x, n - s, axis=1) * masks[2 * k + 1:2 * k + 2, :]
        return prev, nxt

    def pool(y, s):
        # MaxPool1d(2) without compaction: valid columns stay at stride 2*s
        return jnp.maximum(y, pltpu.roll(y, n - s, axis=1))

    # ---- layer 1 (Ci=1): VPU broadcast FMAs, no MXU -------------------------
    x = x_ref[...]                                            # (1, n) f32
    xp, xn = shifted(x, 1, 0)
    w1 = w1_ref[...]                                          # (16, 3) f32
    y = w1[:, 0:1] * xp + w1[:, 1:2] * x + w1[:, 2:3] * xn    # (16, n)
    y = jnp.maximum(y + b1_ref[...], 0.0)
    x = pool(y, 1)                                            # stride 2

    # ---- layers 2..4: tap-stacked bf16 matmuls at dilated strides -----------
    for k, (w_ref, b_ref) in enumerate(
            [(w2_ref, b2_ref), (w3_ref, b3_ref), (w4_ref, b4_ref)], start=1):
        s = 1 << k                                            # input stride 2,4,8
        xp, xn = shifted(x, s, k)
        xc = jnp.concatenate([xp, x, xn], axis=0).astype(jnp.bfloat16)   # (3Ci, n)
        y = jnp.dot(w_ref[...], xc, preferred_element_type=jnp.float32)  # (Co, n)
        y = jnp.maximum(y + b_ref[...], 0.0)
        x = pool(y, s)                                        # stride 2*s

    # ---- head: gather valid (stride-16) columns, flatten, fc1+ReLU, fc2 -----
    # sel: (n, lf*bc) 0/1, column j*bc + b  <-  row b*seq + 16*j
    xg = jnp.dot(x.astype(jnp.bfloat16), sel_ref[...],
                 preferred_element_type=jnp.float32)          # (128, lf*bc)
    xst = jnp.concatenate([xg[:, j * bc:(j + 1) * bc] for j in range(lf)],
                          axis=0)                             # (lf*128, bc)
    h = jnp.dot(wf1_ref[...], xst.astype(jnp.bfloat16),
                preferred_element_type=jnp.float32)           # (256, bc)
    h = jnp.maximum(h + bf1_ref[...], 0.0)
    out = jnp.dot(wf2_ref[...], h.astype(jnp.bfloat16),
                  preferred_element_type=jnp.float32) + bf2_ref[...]     # (3, bc)
    o_ref[0] = out.astype(o_ref.dtype)


# ----------------------------------------------------------------------------
# Host-side one-time weight / constant preparation.
# ----------------------------------------------------------------------------
def _pick_batch_chunk(batch):
    for bc in (8, 4, 2, 1):
        if batch % bc == 0:
            return bc
    return 1


def prepare_params(p, seq_len, batch):
    """Pack weights for the kernel and precompute masks / gather matrix."""
    L = seq_len
    lf = L // 16
    bc = _pick_batch_chunk(batch)
    n = bc * L

    # boundary masks for the roll-based +/- stride shifts (stride 2^k, k=0..3)
    pos = jnp.arange(n, dtype=jnp.int32) % L
    rows = []
    for k in range(4):
        s = 1 << k
        rows.append((pos >= s).astype(jnp.float32))        # keep prev neighbour
        rows.append((pos < L - s).astype(jnp.float32))     # keep next neighbour
    masks = jnp.stack(rows, axis=0)                        # (8, n)

    # gather matrix: output column j*bc + b  <-  input column b*L + 16*j
    q = jnp.arange(lf * bc, dtype=jnp.int32)
    src = (q % bc) * L + (q // bc) * 16
    sel = (jnp.arange(n, dtype=jnp.int32)[:, None] == src[None, :]
           ).astype(jnp.bfloat16)                          # (n, lf*bc)

    prep = [masks,
            p["conv1_w"].reshape(16, 3).astype(jnp.float32),        # VPU path
            p["conv1_b"].reshape(-1, 1).astype(jnp.float32)]
    for i in (2, 3, 4):
        w = p[f"conv{i}_w"]                                # (Co, Ci, 3)
        co, ci, _ = w.shape
        wcat = jnp.transpose(w, (0, 2, 1)).reshape(co, 3 * ci)       # taps stacked
        prep += [wcat.astype(jnp.bfloat16),
                 p[f"conv{i}_b"].reshape(-1, 1).astype(jnp.float32)]
    prep.append(sel)

    w1 = p["fc1_w"]                                        # (256, 128*lf), c*lf + j
    hdim, feat = w1.shape
    cdim = feat // lf
    w1stk = jnp.transpose(w1.reshape(hdim, cdim, lf), (0, 2, 1)).reshape(hdim,
                                                                         lf * cdim)
    prep += [w1stk.astype(jnp.bfloat16),
             p["fc1_b"].reshape(-1, 1).astype(jnp.float32),
             p["fc2_w"].astype(jnp.bfloat16),
             p["fc2_b"].reshape(-1, 1).astype(jnp.float32)]
    return tuple(prep)


def _const_spec(a):
    zeros = (0,) * a.ndim
    return pl.BlockSpec(a.shape, lambda i: zeros)


@jax.jit
def spectrum_cnn_forward(x, prepared):
    """x: (B, 1, L) float32 (torch NCL).  prepared: output of prepare_params."""
    (masks, w1, b1, w2, b2, w3, b3, w4, b4,
     sel, wf1, bf1, wf2, bf2) = prepared
    B, ci, L = x.shape
    assert ci == 1 and L % 16 == 0
    n_chunk = masks.shape[1]
    bc = n_chunk // L
    assert B % bc == 0
    n_chunks = B // bc
    n_out = wf2.shape[0]

    x2d = x.reshape(1, B * L)                              # columns = b*L + l
    weight_args = (masks, w1, b1, w2, b2, w3, b3, w4, b4,
                   sel, wf1, bf1, wf2, bf2)
    in_specs = ([pl.BlockSpec((1, n_chunk), lambda i: (0, i))]
                + [_const_spec(a) for a in weight_args])
    out_spec = pl.BlockSpec((1, n_out, bc), lambda i: (i, 0, 0))

    out = pl.pallas_call(
        spectrum_cnn_kernel,
        out_shape=jax.ShapeDtypeStruct((n_chunks, n_out, bc), x.dtype),
        grid=(n_chunks,),
        in_specs=in_specs,
        out_specs=out_spec,
        compiler_params=pltpu.CompilerParams(
            dimension_semantics=("parallel",),
            vmem_limit_bytes=32 * 1024 * 1024),
    )(x2d, *weight_args)
    return out.transpose(0, 2, 1).reshape(B, n_out)        # (B, 3) torch order


# ----------------------------------------------------------------------------
# Pure-JAX reference (correctness check)
# ----------------------------------------------------------------------------
def ref_conv_relu_pool(x, w, b):
    B, Ci, L = x.shape
    x_pad = jnp.pad(x, ((0, 0), (0, 0), (1, 1)))
    y = sum(jnp.einsum("oc,bcl->bol", w[:, :, k], x_pad[:, :, k:k + L])
            for k in range(3))
    y = jnp.maximum(y + b[None, :, None], 0.0)
    return jnp.max(y.reshape(B, w.shape[0], L // 2, 2), axis=-1)


def ref_forward(x, p):
    x = ref_conv_relu_pool(x, p["conv1_w"], p["conv1_b"])
    x = ref_conv_relu_pool(x, p["conv2_w"], p["conv2_b"])
    x = ref_conv_relu_pool(x, p["conv3_w"], p["conv3_b"])
    x = ref_conv_relu_pool(x, p["conv4_w"], p["conv4_b"])
    x_flat = x.reshape(x.shape[0], -1)
    h = jnp.maximum(x_flat @ p["fc1_w"].T + p["fc1_b"], 0.0)
    return h @ p["fc2_w"].T + p["fc2_b"]


# ----------------------------------------------------------------------------
# Deterministic parameter init (PyTorch-style uniform(-1/sqrt(fan_in), ...))
# ----------------------------------------------------------------------------
def init_params(key, seq_len):
    def u(k, shape, fan_in):
        bound = 1.0 / jnp.sqrt(float(fan_in))
        return jax.random.uniform(k, shape, jnp.float32, -bound, bound)

    keys = jax.random.split(key, 12)
    conv_dims = [(1, 16), (16, 32), (32, 64), (64, 128)]
    params = {}
    for i, (ci, co) in enumerate(conv_dims, start=1):
        fan_in = ci * 3
        params[f"conv{i}_w"] = u(keys[2 * (i - 1)], (co, ci, 3), fan_in)
        params[f"conv{i}_b"] = u(keys[2 * (i - 1) + 1], (co,), fan_in)
    feat = 128 * (seq_len // 16)       # actual flatten size (see TODO above)
    params["fc1_w"] = u(keys[8], (256, feat), feat)
    params["fc1_b"] = u(keys[9], (256,), feat)
    params["fc2_w"] = u(keys[10], (3, 256), 256)
    params["fc2_b"] = u(keys[11], (3,), 256)
    return params


if __name__ == "__main__":
    B, L = 16, 128                     # small; B=16 keeps lane extents >= 128
    key = jax.random.PRNGKey(0)
    k_x, k_p = jax.random.split(key)
    x = jax.random.normal(k_x, (B, 1, L), jnp.float32)     # NCL input
    params = init_params(k_p, L)
    prepared = prepare_params(params, L, B)

    out = spectrum_cnn_forward(x, prepared)
    out = jax.block_until_ready(out)

    ref = ref_forward(x, params)
    assert out.shape == (B, 3), out.shape
    # Conv2-4 / fc1 / fc2 run with bf16 operands (f32 accumulation); all data
    # movement (rolls, masks, 0/1 gather) is exact, so only genuine compute
    # rounding remains.
    err = float(jnp.max(jnp.abs(out - ref)))
    assert jnp.allclose(out, ref, rtol=2e-2, atol=1e-2), err
    print("KERNEL_OK")
</pallas_src>

<mosaic_0001>
module attributes {stable_mosaic.version = 11 : i64} {
  func.func @spectrum_cnn_kernel(%arg0: i32, %arg1: memref<1x1024xf32, #tpu.memory_space<vmem>>, %arg2: memref<8x1024xf32, #tpu.memory_space<vmem>>, %arg3: memref<16x3xf32, #tpu.memory_space<vmem>>, %arg4: memref<16x1xf32, #tpu.memory_space<vmem>>, %arg5: memref<32x48xbf16, #tpu.memory_space<vmem>>, %arg6: memref<32x1xf32, #tpu.memory_space<vmem>>, %arg7: memref<64x96xbf16, #tpu.memory_space<vmem>>, %arg8: memref<64x1xf32, #tpu.memory_space<vmem>>, %arg9: memref<128x192xbf16, #tpu.memory_space<vmem>>, %arg10: memref<128x1xf32, #tpu.memory_space<vmem>>, %arg11: memref<1024x64xbf16, #tpu.memory_space<vmem>>, %arg12: memref<256x1024xbf16, #tpu.memory_space<vmem>>, %arg13: memref<256x1xf32, #tpu.memory_space<vmem>>, %arg14: memref<3x256xbf16, #tpu.memory_space<vmem>>, %arg15: memref<3x1xf32, #tpu.memory_space<vmem>>, %arg16: memref<1x3x8xf32, #tpu.memory_space<vmem>>) attributes {dimension_semantics = [#tpu.dimension_semantics<parallel>], iteration_bounds = array<i64: 2>, scalar_prefetch = 0 : i64, scratch_operands = 0 : i64, tpu.core_type = #tpu.core_type<tc>, window_params = [{transform_indices = @transform_0, window_bounds = array<i64: 1, 1024>}, {pipeline_mode = #tpu.pipeline_mode<synchronous>, transform_indices = @transform_1, window_bounds = array<i64: 8, 1024>}, {pipeline_mode = #tpu.pipeline_mode<synchronous>, transform_indices = @transform_2, window_bounds = array<i64: 16, 3>}, {pipeline_mode = #tpu.pipeline_mode<synchronous>, transform_indices = @transform_3, window_bounds = array<i64: 16, 1>}, {pipeline_mode = #tpu.pipeline_mode<synchronous>, transform_indices = @transform_4, window_bounds = array<i64: 32, 48>}, {pipeline_mode = #tpu.pipeline_mode<synchronous>, transform_indices = @transform_5, window_bounds = array<i64: 32, 1>}, {pipeline_mode = #tpu.pipeline_mode<synchronous>, transform_indices = @transform_6, window_bounds = array<i64: 64, 96>}, {pipeline_mode = #tpu.pipeline_mode<synchronous>, transform_indices = @transform_7, window_bounds = array<i64: 64, 1>}, {pipeline_mode = #tpu.pipeline_mode<synchronous>, transform_indices = @transform_8, window_bounds = array<i64: 128, 192>}, {pipeline_mode = #tpu.pipeline_mode<synchronous>, transform_indices = @transform_9, window_bounds = array<i64: 128, 1>}, {pipeline_mode = #tpu.pipeline_mode<synchronous>, transform_indices = @transform_10, window_bounds = array<i64: 1024, 64>}, {pipeline_mode = #tpu.pipeline_mode<synchronous>, transform_indices = @transform_11, window_bounds = array<i64: 256, 1024>}, {pipeline_mode = #tpu.pipeline_mode<synchronous>, transform_indices = @transform_12, window_bounds = array<i64: 256, 1>}, {pipeline_mode = #tpu.pipeline_mode<synchronous>, transform_indices = @transform_13, window_bounds = array<i64: 3, 256>}, {pipeline_mode = #tpu.pipeline_mode<synchronous>, transform_indices = @transform_14, window_bounds = array<i64: 3, 1>}, {transform_indices = @transform_15, window_bounds = array<i64: 1, 3, 8>}]} {
    %c0 = arith.constant 0 : index
    %c0_0 = arith.constant 0 : index
    %0 = vector.load %arg2[%c0, %c0_0] : memref<8x1024xf32, #tpu.memory_space<vmem>>, vector<8x1024xf32>
    %c0_1 = arith.constant 0 : index
    %c0_2 = arith.constant 0 : index
    %1 = vector.load %arg1[%c0_1, %c0_2] : memref<1x1024xf32, #tpu.memory_space<vmem>>, vector<1x1024xf32>
    %c1_i32 = arith.constant 1 : i32
    %2 = tpu.dynamic_rotate %1 by %c1_i32 dim 1 : vector<1x1024xf32>, i32 -> vector<1x1024xf32>
    %3 = vector.extract_strided_slice %0 {offsets = [0, 0], sizes = [1, 1024], strides = [1, 1]} : vector<8x1024xf32> to vector<1x1024xf32>
    %4 = arith.mulf %2, %3 : vector<1x1024xf32>
    %c1023_i32 = arith.constant 1023 : i32
    %5 = tpu.dynamic_rotate %1 by %c1023_i32 dim 1 : vector<1x1024xf32>, i32 -> vector<1x1024xf32>
    %6 = vector.extract_strided_slice %0 {offsets = [1, 0], sizes = [1, 1024], strides = [1, 1]} : vector<8x1024xf32> to vector<1x1024xf32>
    %7 = arith.mulf %5, %6 : vector<1x1024xf32>
    %c0_3 = arith.constant 0 : index
    %c0_4 = arith.constant 0 : index
    %8 = vector.load %arg3[%c0_3, %c0_4] : memref<16x3xf32, #tpu.memory_space<vmem>>, vector<16x3xf32>
    %9 = vector.extract_strided_slice %8 {offsets = [0, 0], sizes = [16, 1], strides = [1, 1]} : vector<16x3xf32> to vector<16x1xf32>
    %10 = vector.broadcast %9 : vector<16x1xf32> to vector<16x1024xf32>
    %11 = vector.broadcast %4 : vector<1x1024xf32> to vector<16x1024xf32>
    %12 = arith.mulf %10, %11 : vector<16x1024xf32>
    %13 = vector.extract_strided_slice %8 {offsets = [0, 1], sizes = [16, 1], strides = [1, 1]} : vector<16x3xf32> to vector<16x1xf32>
    %14 = vector.broadcast %13 : vector<16x1xf32> to vector<16x1024xf32>
    %15 = vector.broadcast %1 : vector<1x1024xf32> to vector<16x1024xf32>
    %16 = arith.mulf %14, %15 : vector<16x1024xf32>
    %17 = arith.addf %12, %16 : vector<16x1024xf32>
    %18 = vector.extract_strided_slice %8 {offsets = [0, 2], sizes = [16, 1], strides = [1, 1]} : vector<16x3xf32> to vector<16x1xf32>
    %19 = vector.broadcast %18 : vector<16x1xf32> to vector<16x1024xf32>
    %20 = vector.broadcast %7 : vector<1x1024xf32> to vector<16x1024xf32>
    %21 = arith.mulf %19, %20 : vector<16x1024xf32>
    %22 = arith.addf %17, %21 : vector<16x1024xf32>
    %c0_5 = arith.constant 0 : index
    %c0_6 = arith.constant 0 : index
    %23 = vector.load %arg4[%c0_5, %c0_6] : memref<16x1xf32, #tpu.memory_space<vmem>>, vector<16x1xf32>
    %24 = vector.broadcast %23 : vector<16x1xf32> to vector<16x1024xf32>
    %25 = arith.addf %22, %24 : vector<16x1024xf32>
    %cst = arith.constant 0.000000e+00 : f32
    %26 = vector.broadcast %cst : f32 to vector<16x1024xf32>
    %27 = arith.maximumf %25, %26 : vector<16x1024xf32>
    %c1023_i32_7 = arith.constant 1023 : i32
    %28 = tpu.dynamic_rotate %27 by %c1023_i32_7 dim 1 : vector<16x1024xf32>, i32 -> vector<16x1024xf32>
    %29 = arith.maximumf %27, %28 : vector<16x1024xf32>
    %c2_i32 = arith.constant 2 : i32
    %30 = tpu.dynamic_rotate %29 by %c2_i32 dim 1 : vector<16x1024xf32>, i32 -> vector<16x1024xf32>
    %31 = vector.extract_strided_slice %0 {offsets = [2, 0], sizes = [1, 1024], strides = [1, 1]} : vector<8x1024xf32> to vector<1x1024xf32>
    %32 = vector.broadcast %31 : vector<1x1024xf32> to vector<16x1024xf32>
    %33 = arith.mulf %30, %32 : vector<16x1024xf32>
    %c1022_i32 = arith.constant 1022 : i32
    %34 = tpu.dynamic_rotate %29 by %c1022_i32 dim 1 : vector<16x1024xf32>, i32 -> vector<16x1024xf32>
    %35 = vector.extract_strided_slice %0 {offsets = [3, 0], sizes = [1, 1024], strides = [1, 1]} : vector<8x1024xf32> to vector<1x1024xf32>
    %36 = vector.broadcast %35 : vector<1x1024xf32> to vector<16x1024xf32>
    %37 = arith.mulf %34, %36 : vector<16x1024xf32>
    %38 = tpu.concatenate %33, %29, %37 in 0 : vector<16x1024xf32>, vector<16x1024xf32>, vector<16x1024xf32> -> vector<48x1024xf32>
    %39 = arith.truncf %38 : vector<48x1024xf32> to vector<48x1024xbf16>
    %c0_8 = arith.constant 0 : index
    %c0_9 = arith.constant 0 : index
    %40 = vector.load %arg5[%c0_8, %c0_9] : memref<32x48xbf16, #tpu.memory_space<vmem>>, vector<32x48xbf16>
    %cst_10 = arith.constant dense<0.000000e+00> : vector<32x1024xf32>
    %41 = tpu.matmul %40, %39, %cst_10 {dimension_numbers = #tpu.dot_dimension_numbers<[1], [0], [0], [1], [0, 0, 1, 1], [], []>} : vector<32x48xbf16>, vector<48x1024xbf16>, vector<32x1024xf32> -> vector<32x1024xf32>
    %c0_11 = arith.constant 0 : index
    %c0_12 = arith.constant 0 : index
    %42 = vector.load %arg6[%c0_11, %c0_12] : memref<32x1xf32, #tpu.memory_space<vmem>>, vector<32x1xf32>
    %43 = vector.broadcast %42 : vector<32x1xf32> to vector<32x1024xf32>
    %44 = arith.addf %41, %43 : vector<32x1024xf32>
    %cst_13 = arith.constant 0.000000e+00 : f32
    %45 = vector.broadcast %cst_13 : f32 to vector<32x1024xf32>
    %46 = arith.maximumf %44, %45 : vector<32x1024xf32>
    %c1022_i32_14 = arith.constant 1022 : i32
    %47 = tpu.dynamic_rotate %46 by %c1022_i32_14 dim 1 : vector<32x1024xf32>, i32 -> vector<32x1024xf32>
    %48 = arith.maximumf %46, %47 : vector<32x1024xf32>
    %c4_i32 = arith.constant 4 : i32
    %49 = tpu.dynamic_rotate %48 by %c4_i32 dim 1 : vector<32x1024xf32>, i32 -> vector<32x1024xf32>
    %50 = vector.extract_strided_slice %0 {offsets = [4, 0], sizes = [1, 1024], strides = [1, 1]} : vector<8x1024xf32> to vector<1x1024xf32>
    %51 = vector.broadcast %50 : vector<1x1024xf32> to vector<32x1024xf32>
    %52 = arith.mulf %49, %51 : vector<32x1024xf32>
    %c1020_i32 = arith.constant 1020 : i32
    %53 = tpu.dynamic_rotate %48 by %c1020_i32 dim 1 : vector<32x1024xf32>, i32 -> vector<32x1024xf32>
    %54 = vector.extract_strided_slice %0 {offsets = [5, 0], sizes = [1, 1024], strides = [1, 1]} : vector<8x1024xf32> to vector<1x1024xf32>
    %55 = vector.broadcast %54 : vector<1x1024xf32> to vector<32x1024xf32>
    %56 = arith.mulf %53, %55 : vector<32x1024xf32>
    %57 = tpu.concatenate %52, %48, %56 in 0 : vector<32x1024xf32>, vector<32x1024xf32>, vector<32x1024xf32> -> vector<96x1024xf32>
    %58 = arith.truncf %57 : vector<96x1024xf32> to vector<96x1024xbf16>
    %c0_15 = arith.constant 0 : index
    %c0_16 = arith.constant 0 : index
    %59 = vector.load %arg7[%c0_15, %c0_16] : memref<64x96xbf16, #tpu.memory_space<vmem>>, vector<64x96xbf16>
    %cst_17 = arith.constant dense<0.000000e+00> : vector<64x1024xf32>
    %60 = tpu.matmul %59, %58, %cst_17 {dimension_numbers = #tpu.dot_dimension_numbers<[1], [0], [0], [1], [0, 0, 1, 1], [], []>} : vector<64x96xbf16>, vector<96x1024xbf16>, vector<64x1024xf32> -> vector<64x1024xf32>
    %c0_18 = arith.constant 0 : index
    %c0_19 = arith.constant 0 : index
    %61 = vector.load %arg8[%c0_18, %c0_19] : memref<64x1xf32, #tpu.memory_space<vmem>>, vector<64x1xf32>
    %62 = vector.broadcast %61 : vector<64x1xf32> to vector<64x1024xf32>
    %63 = arith.addf %60, %62 : vector<64x1024xf32>
    %cst_20 = arith.constant 0.000000e+00 : f32
    %64 = vector.broadcast %cst_20 : f32 to vector<64x1024xf32>
    %65 = arith.maximumf %63, %64 : vector<64x1024xf32>
    %c1020_i32_21 = arith.constant 1020 : i32
    %66 = tpu.dynamic_rotate %65 by %c1020_i32_21 dim 1 : vector<64x1024xf32>, i32 -> vector<64x1024xf32>
    %67 = arith.maximumf %65, %66 : vector<64x1024xf32>
    %c8_i32 = arith.constant 8 : i32
    %68 = tpu.dynamic_rotate %67 by %c8_i32 dim 1 : vector<64x1024xf32>, i32 -> vector<64x1024xf32>
    %69 = vector.extract_strided_slice %0 {offsets = [6, 0], sizes = [1, 1024], strides = [1, 1]} : vector<8x1024xf32> to vector<1x1024xf32>
    %70 = vector.broadcast %69 : vector<1x1024xf32> to vector<64x1024xf32>
    %71 = arith.mulf %68, %70 : vector<64x1024xf32>
    %c1016_i32 = arith.constant 1016 : i32
    %72 = tpu.dynamic_rotate %67 by %c1016_i32 dim 1 : vector<64x1024xf32>, i32 -> vector<64x1024xf32>
    %73 = vector.extract_strided_slice %0 {offsets = [7, 0], sizes = [1, 1024], strides = [1, 1]} : vector<8x1024xf32> to vector<1x1024xf32>
    %74 = vector.broadcast %73 : vector<1x1024xf32> to vector<64x1024xf32>
    %75 = arith.mulf %72, %74 : vector<64x1024xf32>
    %76 = tpu.concatenate %71, %67, %75 in 0 : vector<64x1024xf32>, vector<64x1024xf32>, vector<64x1024xf32> -> vector<192x1024xf32>
    %77 = arith.truncf %76 : vector<192x1024xf32> to vector<192x1024xbf16>
    %c0_22 = arith.constant 0 : index
    %c0_23 = arith.constant 0 : index
    %78 = vector.load %arg9[%c0_22, %c0_23] : memref<128x192xbf16, #tpu.memory_space<vmem>>, vector<128x192xbf16>
    %cst_24 = arith.constant dense<0.000000e+00> : vector<128x1024xf32>
    %79 = tpu.matmul %78, %77, %cst_24 {dimension_numbers = #tpu.dot_dimension_numbers<[1], [0], [0], [1], [0, 0, 1, 1], [], []>} : vector<128x192xbf16>, vector<192x1024xbf16>, vector<128x1024xf32> -> vector<128x1024xf32>
    %c0_25 = arith.constant 0 : index
    %c0_26 = arith.constant 0 : index
    %80 = vector.load %arg10[%c0_25, %c0_26] : memref<128x1xf32, #tpu.memory_space<vmem>>, vector<128x1xf32>
    %81 = vector.broadcast %80 : vector<128x1xf32> to vector<128x1024xf32>
    %82 = arith.addf %79, %81 : vector<128x1024xf32>
    %cst_27 = arith.constant 0.000000e+00 : f32
    %83 = vector.broadcast %cst_27 : f32 to vector<128x1024xf32>
    %84 = arith.maximumf %82, %83 : vector<128x1024xf32>
    %c1016_i32_28 = arith.constant 1016 : i32
    %85 = tpu.dynamic_rotate %84 by %c1016_i32_28 dim 1 : vector<128x1024xf32>, i32 -> vector<128x1024xf32>
    %86 = arith.maximumf %84, %85 : vector<128x1024xf32>
    %87 = arith.truncf %86 : vector<128x1024xf32> to vector<128x1024xbf16>
    %c0_29 = arith.constant 0 : index
    %c0_30 = arith.constant 0 : index
    %88 = vector.load %arg11[%c0_29, %c0_30] : memref<1024x64xbf16, #tpu.memory_space<vmem>>, vector<1024x64xbf16>
    %cst_31 = arith.constant dense<0.000000e+00> : vector<128x64xf32>
    %89 = tpu.matmul %87, %88, %cst_31 {dimension_numbers = #tpu.dot_dimension_numbers<[1], [0], [0], [1], [0, 0, 1, 1], [], []>} : vector<128x1024xbf16>, vector<1024x64xbf16>, vector<128x64xf32> -> vector<128x64xf32>
    %90 = vector.extract_strided_slice %89 {offsets = [0, 0], sizes = [128, 8], strides = [1, 1]} : vector<128x64xf32> to vector<128x8xf32>
    %91 = vector.extract_strided_slice %89 {offsets = [0, 8], sizes = [128, 8], strides = [1, 1]} : vector<128x64xf32> to vector<128x8xf32>
    %92 = vector.extract_strided_slice %89 {offsets = [0, 16], sizes = [128, 8], strides = [1, 1]} : vector<128x64xf32> to vector<128x8xf32>
    %93 = vector.extract_strided_slice %89 {offsets = [0, 24], sizes = [128, 8], strides = [1, 1]} : vector<128x64xf32> to vector<128x8xf32>
    %94 = vector.extract_strided_slice %89 {offsets = [0, 32], sizes = [128, 8], strides = [1, 1]} : vector<128x64xf32> to vector<128x8xf32>
    %95 = vector.extract_strided_slice %89 {offsets = [0, 40], sizes = [128, 8], strides = [1, 1]} : vector<128x64xf32> to vector<128x8xf32>
    %96 = vector.extract_strided_slice %89 {offsets = [0, 48], sizes = [128, 8], strides = [1, 1]} : vector<128x64xf32> to vector<128x8xf32>
    %97 = vector.extract_strided_slice %89 {offsets = [0, 56], sizes = [128, 8], strides = [1, 1]} : vector<128x64xf32> to vector<128x8xf32>
    %98 = tpu.concatenate %90, %91, %92, %93, %94, %95, %96, %97 in 0 : vector<128x8xf32>, vector<128x8xf32>, vector<128x8xf32>, vector<128x8xf32>, vector<128x8xf32>, vector<128x8xf32>, vector<128x8xf32>, vector<128x8xf32> -> vector<1024x8xf32>
    %c0_32 = arith.constant 0 : index
    %c0_33 = arith.constant 0 : index
    %99 = vector.load %arg12[%c0_32, %c0_33] : memref<256x1024xbf16, #tpu.memory_space<vmem>>, vector<256x1024xbf16>
    %100 = arith.truncf %98 : vector<1024x8xf32> to vector<1024x8xbf16>
    %cst_34 = arith.constant dense<0.000000e+00> : vector<256x8xf32>
    %101 = tpu.matmul %99, %100, %cst_34 {dimension_numbers = #tpu.dot_dimension_numbers<[1], [0], [0], [1], [0, 0, 1, 1], [], []>} : vector<256x1024xbf16>, vector<1024x8xbf16>, vector<256x8xf32> -> vector<256x8xf32>
    %c0_35 = arith.constant 0 : index
    %c0_36 = arith.constant 0 : index
    %102 = vector.load %arg13[%c0_35, %c0_36] : memref<256x1xf32, #tpu.memory_space<vmem>>, vector<256x1xf32>
    %103 = vector.broadcast %102 : vector<256x1xf32> to vector<256x8xf32>
    %104 = arith.addf %101, %103 : vector<256x8xf32>
    %cst_37 = arith.constant 0.000000e+00 : f32
    %105 = vector.broadcast %cst_37 : f32 to vector<256x8xf32>
    %106 = arith.maximumf %104, %105 : vector<256x8xf32>
    %c0_38 = arith.constant 0 : index
    %c0_39 = arith.constant 0 : index
    %107 = vector.load %arg14[%c0_38, %c0_39] : memref<3x256xbf16, #tpu.memory_space<vmem>>, vector<3x256xbf16>
    %108 = arith.truncf %106 : vector<256x8xf32> to vector<256x8xbf16>
    %cst_40 = arith.constant dense<0.000000e+00> : vector<3x8xf32>
    %109 = tpu.matmul %107, %108, %cst_40 {dimension_numbers = #tpu.dot_dimension_numbers<[1], [0], [0], [1], [0, 0, 1, 1], [], []>} : vector<3x256xbf16>, vector<256x8xbf16>, vector<3x8xf32> -> vector<3x8xf32>
    %c0_41 = arith.constant 0 : index
    %c0_42 = arith.constant 0 : index
    %110 = vector.load %arg15[%c0_41, %c0_42] : memref<3x1xf32, #tpu.memory_space<vmem>>, vector<3x1xf32>
    %111 = vector.broadcast %110 : vector<3x1xf32> to vector<3x8xf32>
    %112 = arith.addf %109, %111 : vector<3x8xf32>
    %c0_43 = arith.constant 0 : index
    %c0_44 = arith.constant 0 : index
    %c0_45 = arith.constant 0 : index
    %113 = vector.load %arg16[%c0_43, %c0_44, %c0_45] : memref<1x3x8xf32, #tpu.memory_space<vmem>>, vector<1x3x8xf32>
    %114 = vector.shape_cast %113 : vector<1x3x8xf32> to vector<3x8xf32>
    %115 = vector.shape_cast %112 : vector<3x8xf32> to vector<1x3x8xf32>
    tpu.vector_store %arg16[%c0_43, %c0_44, %c0_45], %115 {strides = array<i32>} : memref<1x3x8xf32, #tpu.memory_space<vmem>>, vector<1x3x8xf32>,
    return
  }
  func.func @transform_0(%arg0: i32) -> (i32, i32) {
    %c0_i32 = arith.constant 0 : i32
    %c0_i32_0 = arith.constant 0 : i32
    return %c0_i32, %arg0 : i32, i32
  }
  func.func @transform_1(%arg0: i32) -> (i32, i32) {
    %c0_i32 = arith.constant 0 : i32
    %c0_i32_0 = arith.constant 0 : i32
    %c0_i32_1 = arith.constant 0 : i32
    return %c0_i32, %c0_i32_0 : i32, i32
  }
  func.func @transform_2(%arg0: i32) -> (i32, i32) {
    %c0_i32 = arith.constant 0 : i32
    %c0_i32_0 = arith.constant 0 : i32
    %c0_i32_1 = arith.constant 0 : i32
    return %c0_i32, %c0_i32_0 : i32, i32
  }
  func.func @transform_3(%arg0: i32) -> (i32, i32) {
    %c0_i32 = arith.constant 0 : i32
    %c0_i32_0 = arith.constant 0 : i32
    %c0_i32_1 = arith.constant 0 : i32
    return %c0_i32, %c0_i32_0 : i32, i32
  }
  func.func @transform_4(%arg0: i32) -> (i32, i32) {
    %c0_i32 = arith.constant 0 : i32
    %c0_i32_0 = arith.constant 0 : i32
    %c0_i32_1 = arith.constant 0 : i32
    return %c0_i32, %c0_i32_0 : i32, i32
  }
  func.func @transform_5(%arg0: i32) -> (i32, i32) {
    %c0_i32 = arith.constant 0 : i32
    %c0_i32_0 = arith.constant 0 : i32
    %c0_i32_1 = arith.constant 0 : i32
    return %c0_i32, %c0_i32_0 : i32, i32
  }
  func.func @transform_6(%arg0: i32) -> (i32, i32) {
    %c0_i32 = arith.constant 0 : i32
    %c0_i32_0 = arith.constant 0 : i32
    %c0_i32_1 = arith.constant 0 : i32
    return %c0_i32, %c0_i32_0 : i32, i32
  }
  func.func @transform_7(%arg0: i32) -> (i32, i32) {
    %c0_i32 = arith.constant 0 : i32
    %c0_i32_0 = arith.constant 0 : i32
    %c0_i32_1 = arith.constant 0 : i32
    return %c0_i32, %c0_i32_0 : i32, i32
  }
  func.func @transform_8(%arg0: i32) -> (i32, i32) {
    %c0_i32 = arith.constant 0 : i32
    %c0_i32_0 = arith.constant 0 : i32
    %c0_i32_1 = arith.constant 0 : i32
    return %c0_i32, %c0_i32_0 : i32, i32
  }
  func.func @transform_9(%arg0: i32) -> (i32, i32) {
    %c0_i32 = arith.constant 0 : i32
    %c0_i32_0 = arith.constant 0 : i32
    %c0_i32_1 = arith.constant 0 : i32
    return %c0_i32, %c0_i32_0 : i32, i32
  }
  func.func @transform_10(%arg0: i32) -> (i32, i32) {
    %c0_i32 = arith.constant 0 : i32
    %c0_i32_0 = arith.constant 0 : i32
    %c0_i32_1 = arith.constant 0 : i32
    return %c0_i32, %c0_i32_0 : i32, i32
  }
  func.func @transform_11(%arg0: i32) -> (i32, i32) {
    %c0_i32 = arith.constant 0 : i32
    %c0_i32_0 = arith.constant 0 : i32
    %c0_i32_1 = arith.constant 0 : i32
    return %c0_i32, %c0_i32_0 : i32, i32
  }
  func.func @transform_12(%arg0: i32) -> (i32, i32) {
    %c0_i32 = arith.constant 0 : i32
    %c0_i32_0 = arith.constant 0 : i32
    %c0_i32_1 = arith.constant 0 : i32
    return %c0_i32, %c0_i32_0 : i32, i32
  }
  func.func @transform_13(%arg0: i32) -> (i32, i32) {
    %c0_i32 = arith.constant 0 : i32
    %c0_i32_0 = arith.constant 0 : i32
    %c0_i32_1 = arith.constant 0 : i32
    return %c0_i32, %c0_i32_0 : i32, i32
  }
  func.func @transform_14(%arg0: i32) -> (i32, i32) {
    %c0_i32 = arith.constant 0 : i32
    %c0_i32_0 = arith.constant 0 : i32
    %c0_i32_1 = arith.constant 0 : i32
    return %c0_i32, %c0_i32_0 : i32, i32
  }
  func.func @transform_15(%arg0: i32) -> (i32, i32, i32) {
    %c0_i32 = arith.constant 0 : i32
    %c0_i32_0 = arith.constant 0 : i32
    %c0_i32_1 = arith.constant 0 : i32
    return %arg0, %c0_i32, %c0_i32_0 : i32, i32, i32
  }
}

</mosaic_0001>

<llo_original>
// kernel: spectrum_cnn_forward.1
$region0: #{spectrum_cnn_forward.1}
  #allocation0 [shape = 'u32[]', space=smem, size = 0x4, offset = 0x4, fixed_abs, tag = 'smem constant byte address 0x4 - core index']
  #allocation1 [shape = 'u32[144,128]{1,0:T(1,128)}', space=vmem, size = 0x12000, scoped, tag = 'internal scratch']
  %s0 = inlined_call_operand.vmem [shape: f32[1,2048], index: 0, kind: input, shape index: {}]
  %s1 = inlined_call_operand.vmem [shape: f32[8,1024], index: 1, kind: input, shape index: {}]
  %s2 = inlined_call_operand.vmem [shape: f32[16,3], index: 2, kind: input, shape index: {}]
  %s3 = inlined_call_operand.vmem [shape: f32[16,1], index: 3, kind: input, shape index: {}]
  %s4 = inlined_call_operand.vmem [shape: bf16[32,48], index: 4, kind: input, shape index: {}]
  %s5 = inlined_call_operand.vmem [shape: f32[32,1], index: 5, kind: input, shape index: {}]
  %s6 = inlined_call_operand.vmem [shape: bf16[64,96], index: 6, kind: input, shape index: {}]
  %s7 = inlined_call_operand.vmem [shape: f32[64,1], index: 7, kind: input, shape index: {}]
  %s8 = inlined_call_operand.vmem [shape: bf16[128,192], index: 8, kind: input, shape index: {}]
  %s9 = inlined_call_operand.vmem [shape: f32[128,1], index: 9, kind: input, shape index: {}]
  %s10 = inlined_call_operand.vmem [shape: bf16[1024,64], index: 10, kind: input, shape index: {}]
  %s11 = inlined_call_operand.vmem [shape: bf16[256,1024], index: 11, kind: input, shape index: {}]
  %s12 = inlined_call_operand.vmem [shape: f32[256,1], index: 12, kind: input, shape index: {}]
  %s13 = inlined_call_operand.vmem [shape: bf16[3,256], index: 13, kind: input, shape index: {}]
  %s14 = inlined_call_operand.vmem [shape: f32[3,1], index: 14, kind: input, shape index: {}]
  %s15 = inlined_call_operand.vmem [shape: f32[2,3,8], index: 15, kind: output, shape index: {}]
  %s16 = sld [smem:[#allocation0]]
  $region93: #{spectrum_cnn_forward.1} parent=0
    _
  %s18 = ssub.s32 1, %s16
  %s19 = scalar_select 0, %s18, %s16
  loop: start=0, step=1, limit=4
  $region2: #{spectrum_cnn_forward.1} parent=0 // loop_pre_header
    _
  $region3: #{spectrum_cnn_forward.1} parent=0 // loop_header
    %s21 = sphi 0, %s25
    %p22 = scmp.ge.s32.totalorder %s21, 4
    %s31 = sphi 0, %s33
    %s34 = sphi 0, %s31
    %s35 = sphi 0, %s34
    %s51 = sphi 0, %s35
    %s55 = sphi 0, %s55
    %s57 = sphi 0, %s55
    %s58 = sphi 0, %s57
    %s72 = sphi 0, %s58
    %s76 = sphi 0, %s76
    %s78 = sphi 0, %s76
    %s79 = sphi 0, %s78
    %s93 = sphi 0, %s79
    %s97 = sphi 0, %s97
    %s99 = sphi 0, %s97
    %s100 = sphi 0, %s99
    %s114 = sphi 0, %s100
    %s118 = sphi 0, %s118
    %s120 = sphi 0, %s118
    %s121 = sphi 0, %s120
    %s135 = sphi 0, %s121
    %s139 = sphi 0, %s139
    %s141 = sphi 0, %s139
    %s142 = sphi 0, %s141
    %s156 = sphi 0, %s142
    %s160 = sphi 0, %s160
    %s162 = sphi 0, %s160
    %s163 = sphi 0, %s162
    %s177 = sphi 0, %s163
    %s181 = sphi 0, %s181
    %s183 = sphi 0, %s181
    %s184 = sphi 0, %s183
    %s198 = sphi 0, %s184
    %s202 = sphi 0, %s202
    %s204 = sphi 0, %s202
    %s205 = sphi 0, %s204
    %s219 = sphi 0, %s205
    %s223 = sphi 0, %s223
    %s225 = sphi 0, %s223
    %s226 = sphi 0, %s225
    %s240 = sphi 0, %s226
    %s244 = sphi 0, %s244
    %s246 = sphi 0, %s244
    %s247 = sphi 0, %s246
    %s261 = sphi 0, %s247
    %s265 = sphi 0, %s265
    %s267 = sphi 0, %s265
    %s268 = sphi 0, %s267
    %s282 = sphi 0, %s268
    %s286 = sphi 0, %s286
    %s288 = sphi 0, %s286
    %s289 = sphi 0, %s288
    %s303 = sphi 0, %s289
    %s307 = sphi 0, %s307
    %s309 = sphi 0, %s307
    %s310 = sphi 0, %s309
    %s324 = sphi 0, %s310
    %s328 = sphi 0, %s328
    %s330 = sphi 0, %s328
    %s331 = sphi 0, %s330
    %s345 = sphi 0, %s331
    %s351 = sphi 0, %s353
    %s354 = sphi 0, %s351
    %s355 = sphi 0, %s354
    %s371 = sphi 0, %s355
  $region4: #{spectrum_cnn_forward.1} parent=0 // loop_header_branch
    %24 = sbr.rel (%p22) target = $region8
  $region5: #{spectrum_cnn_forward.1} parent=0 // loop_body
    %s26 = ssub.s32 %s21, 1
    %s27 = ssub.s32 %s21, 2
    %s28 = sadd.s32 %s21, 1
    %s29 = ssub.s32 %s21, %s28
    %p30 = scmp.eq.s32.totalorder %s29, 0
    %s32 = sadd.s32 %s31, 1
    %s33 = scalar_select %p30, %s31, %s32
    %p36 = pneg %p30
    %p37 = scmp.eq.s32.totalorder %s21, 1
    %p38 = por %p36, %p37
    %p39 = scmp.ne.s32.totalorder %s31, %s34
    %p40 = scmp.eq.s32.totalorder %s21, 0
    %p41 = por %p39, %p40
    %p42 = scmp.ne.s32.totalorder %s31, %s34
    %p43 = scmp.eq.s32.totalorder %s26, 1
    %p44 = por %p42, %p43
    %p45 = scmp.ne.s32.totalorder %s34, %s35
    %p46 = scmp.eq.s32.totalorder %s26, 0
    %p47 = por %p45, %p46
    %p48 = scmp.ne.s32.totalorder %s34, %s35
    %p49 = scmp.eq.s32.totalorder %s27, 1
    %p50 = por %p48, %p49
    %p52 = scmp.ne.s32.totalorder %s35, %s51
    %p53 = scmp.eq.s32.totalorder %s27, 0
    %p54 = por %p52, %p53
    %s56 = sadd.s32 %s55, 1
    %p59 = scmp.eq.s32.totalorder %s21, 1
    %p60 = scmp.ne.s32.totalorder %s55, %s57
    %p61 = scmp.eq.s32.totalorder %s21, 0
    %p62 = por %p60, %p61
    %p63 = scmp.ne.s32.totalorder %s55, %s57
    %p64 = scmp.eq.s32.totalorder %s26, 1
    %p65 = por %p63, %p64
    %p66 = scmp.ne.s32.totalorder %s57, %s58
    %p67 = scmp.eq.s32.totalorder %s26, 0
    %p68 = por %p66, %p67
    %p69 = scmp.ne.s32.totalorder %s57, %s58
    %p70 = scmp.eq.s32.totalorder %s27, 1
    %p71 = por %p69, %p70
    %p73 = scmp.ne.s32.totalorder %s58, %s72
    %p74 = scmp.eq.s32.totalorder %s27, 0
    %p75 = por %p73, %p74
    %s77 = sadd.s32 %s76, 1
    %p80 = scmp.eq.s32.totalorder %s21, 1
    %p81 = scmp.ne.s32.totalorder %s76, %s78
    %p82 = scmp.eq.s32.totalorder %s21, 0
    %p83 = por %p81, %p82
    %p84 = scmp.ne.s32.totalorder %s76, %s78
    %p85 = scmp.eq.s32.totalorder %s26, 1
    %p86 = por %p84, %p85
    %p87 = scmp.ne.s32.totalorder %s78, %s79
    %p88 = scmp.eq.s32.totalorder %s26, 0
    %p89 = por %p87, %p88
    %p90 = scmp.ne.s32.totalorder %s78, %s79
    %p91 = scmp.eq.s32.totalorder %s27, 1
    %p92 = por %p90, %p91
    %p94 = scmp.ne.s32.totalorder %s79, %s93
    %p95 = scmp.eq.s32.totalorder %s27, 0
    %p96 = por %p94, %p95
    %s98 = sadd.s32 %s97, 1
    %p101 = scmp.eq.s32.totalorder %s21, 1
    %p102 = scmp.ne.s32.totalorder %s97, %s99
    %p103 = scmp.eq.s32.totalorder %s21, 0
    %p104 = por %p102, %p103
    %p105 = scmp.ne.s32.totalorder %s97, %s99
    %p106 = scmp.eq.s32.totalorder %s26, 1
    %p107 = por %p105, %p106
    %p108 = scmp.ne.s32.totalorder %s99, %s100
    %p109 = scmp.eq.s32.totalorder %s26, 0
    %p110 = por %p108, %p109
    %p111 = scmp.ne.s32.totalorder %s99, %s100
    %p112 = scmp.eq.s32.totalorder %s27, 1
    %p113 = por %p111, %p112
    %p115 = scmp.ne.s32.totalorder %s100, %s114
    %p116 = scmp.eq.s32.totalorder %s27, 0
    %p117 = por %p115, %p116
    %s119 = sadd.s32 %s118, 1
    %p122 = scmp.eq.s32.totalorder %s21, 1
    %p123 = scmp.ne.s32.totalorder %s118, %s120
    %p124 = scmp.eq.s32.totalorder %s21, 0
    %p125 = por %p123, %p124
    %p126 = scmp.ne.s32.totalorder %s118, %s120
    %p127 = scmp.eq.s32.totalorder %s26, 1
    %p128 = por %p126, %p127
    %p129 = scmp.ne.s32.totalorder %s120, %s121
    %p130 = scmp.eq.s32.totalorder %s26, 0
    %p131 = por %p129, %p130
    %p132 = scmp.ne.s32.totalorder %s120, %s121
    %p133 = scmp.eq.s32.totalorder %s27, 1
    %p134 = por %p132, %p133
    %p136 = scmp.ne.s32.totalorder %s121, %s135
    %p137 = scmp.eq.s32.totalorder %s27, 0
    %p138 = por %p136, %p137
    %s140 = sadd.s32 %s139, 1
    %p143 = scmp.eq.s32.totalorder %s21, 1
    %p144 = scmp.ne.s32.totalorder %s139, %s141
    %p145 = scmp.eq.s32.totalorder %s21, 0
    %p146 = por %p144, %p145
    %p147 = scmp.ne.s32.totalorder %s139, %s141
    %p148 = scmp.eq.s32.totalorder %s26, 1
    %p149 = por %p147, %p148
    %p150 = scmp.ne.s32.totalorder %s141, %s142
    %p151 = scmp.eq.s32.totalorder %s26, 0
    %p152 = por %p150, %p151
    %p153 = scmp.ne.s32.totalorder %s141, %s142
    %p154 = scmp.eq.s32.totalorder %s27, 1
    %p155 = por %p153, %p154
    %p157 = scmp.ne.s32.totalorder %s142, %s156
    %p158 = scmp.eq.s32.totalorder %s27, 0
    %p159 = por %p157, %p158
    %s161 = sadd.s32 %s160, 1
    %p164 = scmp.eq.s32.totalorder %s21, 1
    %p165 = scmp.ne.s32.totalorder %s160, %s162
    %p166 = scmp.eq.s32.totalorder %s21, 0
    %p167 = por %p165, %p166
    %p168 = scmp.ne.s32.totalorder %s160, %s162
    %p169 = scmp.eq.s32.totalorder %s26, 1
    %p170 = por %p168, %p169
    %p171 = scmp.ne.s32.totalorder %s162, %s163
    %p172 = scmp.eq.s32.totalorder %s26, 0
    %p173 = por %p171, %p172
    %p174 = scmp.ne.s32.totalorder %s162, %s163
    %p175 = scmp.eq.s32.totalorder %s27, 1
    %p176 = por %p174, %p175
    %p178 = scmp.ne.s32.totalorder %s163, %s177
    %p179 = scmp.eq.s32.totalorder %s27, 0
    %p180 = por %p178, %p179
    %s182 = sadd.s32 %s181, 1
    %p185 = scmp.eq.s32.totalorder %s21, 1
    %p186 = scmp.ne.s32.totalorder %s181, %s183
    %p187 = scmp.eq.s32.totalorder %s21, 0
    %p188 = por %p186, %p187
    %p189 = scmp.ne.s32.totalorder %s181, %s183
    %p190 = scmp.eq.s32.totalorder %s26, 1
    %p191 = por %p189, %p190
    %p192 = scmp.ne.s32.totalorder %s183, %s184
    %p193 = scmp.eq.s32.totalorder %s26, 0
    %p194 = por %p192, %p193
    %p195 = scmp.ne.s32.totalorder %s183, %s184
    %p196 = scmp.eq.s32.totalorder %s27, 1
    %p197 = por %p195, %p196
    %p199 = scmp.ne.s32.totalorder %s184, %s198
    %p200 = scmp.eq.s32.totalorder %s27, 0
    %p201 = por %p199, %p200
    %s203 = sadd.s32 %s202, 1
    %p206 = scmp.eq.s32.totalorder %s21, 1
    %p207 = scmp.ne.s32.totalorder %s202, %s204
    %p208 = scmp.eq.s32.totalorder %s21, 0
    %p209 = por %p207, %p208
    %p210 = scmp.ne.s32.totalorder %s202, %s204
    %p211 = scmp.eq.s32.totalorder %s26, 1
    %p212 = por %p210, %p211
    %p213 = scmp.ne.s32.totalorder %s204, %s205
    %p214 = scmp.eq.s32.totalorder %s26, 0
    %p215 = por %p213, %p214
    %p216 = scmp.ne.s32.totalorder %s204, %s205
    %p217 = scmp.eq.s32.totalorder %s27, 1
    %p218 = por %p216, %p217
    %p220 = scmp.ne.s32.totalorder %s205, %s219
    %p221 = scmp.eq.s32.totalorder %s27, 0
    %p222 = por %p220, %p221
    %s224 = sadd.s32 %s223, 1
    %p227 = scmp.eq.s32.totalorder %s21, 1
    %p228 = scmp.ne.s32.totalorder %s223, %s225
    %p229 = scmp.eq.s32.totalorder %s21, 0
    %p230 = por %p228, %p229
    %p231 = scmp.ne.s32.totalorder %s223, %s225
    %p232 = scmp.eq.s32.totalorder %s26, 1
    %p233 = por %p231, %p232
    %p234 = scmp.ne.s32.totalorder %s225, %s226
    %p235 = scmp.eq.s32.totalorder %s26, 0
    %p236 = por %p234, %p235
    %p237 = scmp.ne.s32.totalorder %s225, %s226
    %p238 = scmp.eq.s32.totalorder %s27, 1
    %p239 = por %p237, %p238
    %p241 = scmp.ne.s32.totalorder %s226, %s240
    %p242 = scmp.eq.s32.totalorder %s27, 0
    %p243 = por %p241, %p242
    %s245 = sadd.s32 %s244, 1
    %p248 = scmp.eq.s32.totalorder %s21, 1
    %p249 = scmp.ne.s32.totalorder %s244, %s246
    %p250 = scmp.eq.s32.totalorder %s21, 0
    %p251 = por %p249, %p250
    %p252 = scmp.ne.s32.totalorder %s244, %s246
    %p253 = scmp.eq.s32.totalorder %s26, 1
    %p254 = por %p252, %p253
    %p255 = scmp.ne.s32.totalorder %s246, %s247
    %p256 = scmp.eq.s32.totalorder %s26, 0
    %p257 = por %p255, %p256
    %p258 = scmp.ne.s32.totalorder %s246, %s247
    %p259 = scmp.eq.s32.totalorder %s27, 1
    %p260 = por %p258, %p259
    %p262 = scmp.ne.s32.totalorder %s247, %s261
    %p263 = scmp.eq.s32.totalorder %s27, 0
    %p264 = por %p262, %p263
    %s266 = sadd.s32 %s265, 1
    %p269 = scmp.eq.s32.totalorder %s21, 1
    %p270 = scmp.ne.s32.totalorder %s265, %s267
    %p271 = scmp.eq.s32.totalorder %s21, 0
    %p272 = por %p270, %p271
    %p273 = scmp.ne.s32.totalorder %s265, %s267
    %p274 = scmp.eq.s32.totalorder %s26, 1
    %p275 = por %p273, %p274
    %p276 = scmp.ne.s32.totalorder %s267, %s268
    %p277 = scmp.eq.s32.totalorder %s26, 0
    %p278 = por %p276, %p277
    %p279 = scmp.ne.s32.totalorder %s267, %s268
    %p280 = scmp.eq.s32.totalorder %s27, 1
    %p281 = por %p279, %p280
    %p283 = scmp.ne.s32.totalorder %s268, %s282
    %p284 = scmp.eq.s32.totalorder %s27, 0
    %p285 = por %p283, %p284
    %s287 = sadd.s32 %s286, 1
    %p290 = scmp.eq.s32.totalorder %s21, 1
    %p291 = scmp.ne.s32.totalorder %s286, %s288
    %p292 = scmp.eq.s32.totalorder %s21, 0
    %p293 = por %p291, %p292
    %p294 = scmp.ne.s32.totalorder %s286, %s288
    %p295 = scmp.eq.s32.totalorder %s26, 1
    %p296 = por %p294, %p295
    %p297 = scmp.ne.s32.totalorder %s288, %s289
    %p298 = scmp.eq.s32.totalorder %s26, 0
    %p299 = por %p297, %p298
    %p300 = scmp.ne.s32.totalorder %s288, %s289
    %p301 = scmp.eq.s32.totalorder %s27, 1
    %p302 = por %p300, %p301
    %p304 = scmp.ne.s32.totalorder %s289, %s303
    %p305 = scmp.eq.s32.totalorder %s27, 0
    %p306 = por %p304, %p305
    %s308 = sadd.s32 %s307, 1
    %p311 = scmp.eq.s32.totalorder %s21, 1
    %p312 = scmp.ne.s32.totalorder %s307, %s309
    %p313 = scmp.eq.s32.totalorder %s21, 0
    %p314 = por %p312, %p313
    %p315 = scmp.ne.s32.totalorder %s307, %s309
    %p316 = scmp.eq.s32.totalorder %s26, 1
    %p317 = por %p315, %p316
    %p318 = scmp.ne.s32.totalorder %s309, %s310
    %p319 = scmp.eq.s32.totalorder %s26, 0
    %p320 = por %p318, %p319
    %p321 = scmp.ne.s32.totalorder %s309, %s310
    %p322 = scmp.eq.s32.totalorder %s27, 1
    %p323 = por %p321, %p322
    %p325 = scmp.ne.s32.totalorder %s310, %s324
    %p326 = scmp.eq.s32.totalorder %s27, 0
    %p327 = por %p325, %p326
    %s329 = sadd.s32 %s328, 1
    %p332 = scmp.eq.s32.totalorder %s21, 1
    %p333 = scmp.ne.s32.totalorder %s328, %s330
    %p334 = scmp.eq.s32.totalorder %s21, 0
    %p335 = por %p333, %p334
    %p336 = scmp.ne.s32.totalorder %s328, %s330
    %p337 = scmp.eq.s32.totalorder %s26, 1
    %p338 = por %p336, %p337
    %p339 = scmp.ne.s32.totalorder %s330, %s331
    %p340 = scmp.eq.s32.totalorder %s26, 0
    %p341 = por %p339, %p340
    %p342 = scmp.ne.s32.totalorder %s330, %s331
    %p343 = scmp.eq.s32.totalorder %s27, 1
    %p344 = por %p342, %p343
    %p346 = scmp.ne.s32.totalorder %s331, %s345
    %p347 = scmp.eq.s32.totalorder %s27, 0
    %p348 = por %p346, %p347
    %s349 = ssub.s32 %s21, %s28
    %p350 = scmp.eq.s32.totalorder %s349, 0
    %s352 = sadd.s32 %s351, 1
    %s353 = scalar_select %p350, %s351, %s352
    %p356 = pneg %p350
    %p357 = scmp.eq.s32.totalorder %s21, 1
    %p358 = por %p356, %p357
    %p359 = scmp.ne.s32.totalorder %s351, %s354
    %p360 = scmp.eq.s32.totalorder %s21, 0
    %p361 = por %p359, %p360
    %p362 = scmp.ne.s32.totalorder %s351, %s354
    %p363 = scmp.eq.s32.totalorder %s26, 1
    %p364 = por %p362, %p363
    %p365 = scmp.ne.s32.totalorder %s354, %s355
    %p366 = scmp.eq.s32.totalorder %s26, 0
    %p367 = por %p365, %p366
    %p368 = scmp.ne.s32.totalorder %s354, %s355
    %p369 = scmp.eq.s32.totalorder %s27, 1
    %p370 = por %p368, %p369
    %p372 = scmp.ne.s32.totalorder %s355, %s371
    %p373 = scmp.eq.s32.totalorder %s27, 0
    %p374 = por %p372, %p373
    %p375 = scmp.le.s32.totalorder 1, %s21
    %p376 = scmp.lt.s32.totalorder %s21, 3
    %p377 = pnand %p375, %p376
    %p378 = pneg %p377
    // Predicated region
    $region9: #{spectrum_cnn_forward.1} parent=5 // pred_check
      _
    $region10: #{spectrum_cnn_forward.1} parent=5 // pred_check_branch
      %380 = sbr.rel (%p377) target = $region12
    $region11: #{spectrum_cnn_forward.1} parent=5 // pred_region
      %s381 = ssub.s32 %s21, 1
      // Predicated region
      $region13: #{spectrum_cnn_forward.1} parent=11 // pred_check
        %p382 = pneg %p68
      $region14: #{spectrum_cnn_forward.1} parent=11 // pred_check_branch
        %384 = sbr.rel (%p382) target = $region16
      $region15: #{spectrum_cnn_forward.1} parent=11 // pred_region
        _
      $region16: #{spectrum_cnn_forward.1} parent=11 // pred_fallthru
        _
      // Predicated region
      $region17: #{spectrum_cnn_forward.1} parent=11 // pred_check
        %p385 = pneg %p89
      $region18: #{spectrum_cnn_forward.1} parent=11 // pred_check_branch
        %387 = sbr.rel (%p385) target = $region20
      $region19: #{spectrum_cnn_forward.1} parent=11 // pred_region
        _
      $region20: #{spectrum_cnn_forward.1} parent=11 // pred_fallthru
        _
      // Predicated region
      $region21: #{spectrum_cnn_forward.1} parent=11 // pred_check
        %p388 = pneg %p110
      $region22: #{spectrum_cnn_forward.1} parent=11 // pred_check_branch
        %390 = sbr.rel (%p388) target = $region24
      $region23: #{spectrum_cnn_forward.1} parent=11 // pred_region
        _
      $region24: #{spectrum_cnn_forward.1} parent=11 // pred_fallthru
        _
      // Predicated region
      $region25: #{spectrum_cnn_forward.1} parent=11 // pred_check
        %p391 = pneg %p131
      $region26: #{spectrum_cnn_forward.1} parent=11 // pred_check_branch
        %393 = sbr.rel (%p391) target = $region28
      $region27: #{spectrum_cnn_forward.1} parent=11 // pred_region
        _
      $region28: #{spectrum_cnn_forward.1} parent=11 // pred_fallthru
        _
      // Predicated region
      $region29: #{spectrum_cnn_forward.1} parent=11 // pred_check
        %p394 = pneg %p152
      $region30: #{spectrum_cnn_forward.1} parent=11 // pred_check_branch
        %396 = sbr.rel (%p394) target = $region32
      $region31: #{spectrum_cnn_forward.1} parent=11 // pred_region
        _
      $region32: #{spectrum_cnn_forward.1} parent=11 // pred_fallthru
        _
      // Predicated region
      $region33: #{spectrum_cnn_forward.1} parent=11 // pred_check
        %p397 = pneg %p173
      $region34: #{spectrum_cnn_forward.1} parent=11 // pred_check_branch
        %399 = sbr.rel (%p397) target = $region36
      $region35: #{spectrum_cnn_forward.1} parent=11 // pred_region
        _
      $region36: #{spectrum_cnn_forward.1} parent=11 // pred_fallthru
        _
      // Predicated region
      $region37: #{spectrum_cnn_forward.1} parent=11 // pred_check
        %p400 = pneg %p194
      $region38: #{spectrum_cnn_forward.1} parent=11 // pred_check_branch
        %402 = sbr.rel (%p400) target = $region40
      $region39: #{spectrum_cnn_forward.1} parent=11 // pred_region
        _
      $region40: #{spectrum_cnn_forward.1} parent=11 // pred_fallthru
        _
      // Predicated region
      $region41: #{spectrum_cnn_forward.1} parent=11 // pred_check
        %p403 = pneg %p215
      $region42: #{spectrum_cnn_forward.1} parent=11 // pred_check_branch
        %405 = sbr.rel (%p403) target = $region44
      $region43: #{spectrum_cnn_forward.1} parent=11 // pred_region
        _
      $region44: #{spectrum_cnn_forward.1} parent=11 // pred_fallthru
        _
      // Predicated region
      $region45: #{spectrum_cnn_forward.1} parent=11 // pred_check
        %p406 = pneg %p236
      $region46: #{spectrum_cnn_forward.1} parent=11 // pred_check_branch
        %408 = sbr.rel (%p406) target = $region48
      $region47: #{spectrum_cnn_forward.1} parent=11 // pred_region
        _
      $region48: #{spectrum_cnn_forward.1} parent=11 // pred_fallthru
        _
      // Predicated region
      $region49: #{spectrum_cnn_forward.1} parent=11 // pred_check
        %p409 = pneg %p257
      $region50: #{spectrum_cnn_forward.1} parent=11 // pred_check_branch
        %411 = sbr.rel (%p409) target = $region52
      $region51: #{spectrum_cnn_forward.1} parent=11 // pred_region
        _
      $region52: #{spectrum_cnn_forward.1} parent=11 // pred_fallthru
        _
      // Predicated region
      $region53: #{spectrum_cnn_forward.1} parent=11 // pred_check
        %p412 = pneg %p278
      $region54: #{spectrum_cnn_forward.1} parent=11 // pred_check_branch
        %414 = sbr.rel (%p412) target = $region56
      $region55: #{spectrum_cnn_forward.1} parent=11 // pred_region
        _
      $region56: #{spectrum_cnn_forward.1} parent=11 // pred_fallthru
        _
      // Predicated region
      $region57: #{spectrum_cnn_forward.1} parent=11 // pred_check
        %p415 = pneg %p299
      $region58: #{spectrum_cnn_forward.1} parent=11 // pred_check_branch
        %417 = sbr.rel (%p415) target = $region60
      $region59: #{spectrum_cnn_forward.1} parent=11 // pred_region
        _
      $region60: #{spectrum_cnn_forward.1} parent=11 // pred_fallthru
        _
      // Predicated region
      $region61: #{spectrum_cnn_forward.1} parent=11 // pred_check
        %p418 = pneg %p320
      $region62: #{spectrum_cnn_forward.1} parent=11 // pred_check_branch
        %420 = sbr.rel (%p418) target = $region64
      $region63: #{spectrum_cnn_forward.1} parent=11 // pred_region
        _
      $region64: #{spectrum_cnn_forward.1} parent=11 // pred_fallthru
        _
      // Predicated region
      $region65: #{spectrum_cnn_forward.1} parent=11 // pred_check
        %p421 = pneg %p341
      $region66: #{spectrum_cnn_forward.1} parent=11 // pred_check_branch
        %423 = sbr.rel (%p421) target = $region68
      $region67: #{spectrum_cnn_forward.1} parent=11 // pred_region
        _
      $region68: #{spectrum_cnn_forward.1} parent=11 // pred_fallthru
        _
    $region12: #{spectrum_cnn_forward.1} parent=5 // pred_fallthru
      _
    %p424 = scmp.lt.s32.totalorder %s21, 2
    // Predicated region
    $region69: #{spectrum_cnn_forward.1} parent=5 // pred_check
      %p425 = pneg %p424
    $region70: #{spectrum_cnn_forward.1} parent=5 // pred_check_branch
      %427 = sbr.rel (%p425) target = $region72
    $region71: #{spectrum_cnn_forward.1} parent=5 // pred_region
      // Predicated region
      $region73: #{spectrum_cnn_forward.1} parent=71 // pred_check
        %p428 = pneg %p41
      $region74: #{spectrum_cnn_forward.1} parent=71 // pred_check_branch
        %430 = sbr.rel (%p428) target = $region76
      $region75: #{spectrum_cnn_forward.1} parent=71 // pred_region
        %s431 = smul.u32 8, %s21
        %p432 = scmp.lt.s32.totalorder %s431, 15
        %s433 = scalar_select %p432, %s431, 15
        %s434 = scalar_lea.vmem %s0, %s433
        %s435 = smul.u32 8, %s21
      $region76: #{spectrum_cnn_forward.1} parent=71 // pred_fallthru
        _
    $region72: #{spectrum_cnn_forward.1} parent=5 // pred_fallthru
      _
    %p436 = scmp.le.s32.totalorder 1, %s21
    %p437 = scmp.lt.s32.totalorder %s21, 3
    %p438 = pnand %p436, %p437
    %p439 = pneg %p438
    // Predicated region
    $region77: #{spectrum_cnn_forward.1} parent=5 // pred_check
      _
    $region78: #{spectrum_cnn_forward.1} parent=5 // pred_check_branch
      %441 = sbr.rel (%p438) target = $region80
    $region79: #{spectrum_cnn_forward.1} parent=5 // pred_region
      %s442 = ssub.s32 %s21, 1
      %s443 = smul.u32 8, %s26
      %p444 = scmp.lt.s32.totalorder %s443, 15
      %s445 = scalar_select %p444, %s443, 15
      %s446 = scalar_lea.vmem %s0, %s445
      %p447 = pneg %p47
      %p448 = pneg %p44
      %p449 = pneg %p68
      %p450 = pneg %p65
      %p451 = pneg %p89
      %p452 = pneg %p86
      %p453 = pneg %p110
      %p454 = pneg %p107
      %p455 = pneg %p131
      %p456 = pneg %p128
      %p457 = pneg %p152
      %p458 = pneg %p149
      %p459 = pneg %p173
      %p460 = pneg %p170
      %p461 = pneg %p194
      %p462 = pneg %p191
      %p463 = pneg %p215
      %p464 = pneg %p212
      %p465 = pneg %p236
      %p466 = pneg %p233
      %p467 = pneg %p257
      %p468 = pneg %p254
      %p469 = pneg %p278
      %p470 = pneg %p275
      %p471 = pneg %p299
      %p472 = pneg %p296
      %p473 = pneg %p320
      %p474 = pneg %p317
      %p475 = pneg %p341
      %p476 = pneg %p338
      %p477 = pneg %p367
      %p478 = pneg %p364
      %p479 = scmp.lt.s32.totalorder %s26, 1
      %s480 = scalar_select %p479, %s26, 1
      %s481 = smul.addr %s480, 4
      %s482 = scalar_lea.vmem %s15, %s481
      %s483 = smul.u32 8, %s26
      %p484 = scmp.lt.s32.totalorder %s483, 15
      %s485 = scalar_select %p484, %s483, 15
      %s486 = scalar_lea.vmem %s0, %s485
      %s487 = smul.u32 8, %s26
      %p488 = scmp.lt.s32.totalorder %s26, 1
      %s489 = scalar_select %p488, %s26, 1
      %s490 = smul.addr %s489, 4
      %s491 = scalar_lea.vmem %s15, %s490
      %v493 = vld [vmem:[%s1] sm:$0xff]
      %v494 = vld [vmem:[%s1 + $0x8] sm:$0xff]
      %v495 = vld [vmem:[%s1 + $0x10] sm:$0xff]
      %v496 = vld [vmem:[%s1 + $0x18] sm:$0xff]
      %v497 = vld [vmem:[%s1 + $0x20] sm:$0xff]
      %v498 = vld [vmem:[%s1 + $0x28] sm:$0xff]
      %v499 = vld [vmem:[%s1 + $0x30] sm:$0xff]
      %v500 = vld [vmem:[%s1 + $0x38] sm:$0xff]
      %v501 = vld [vmem:[%s486] sm:$0xff]
      %v503 = vlaneseq
      %v504 = vshrl.u32 %v503, 7
      %v505 = vsub.s32 0, %v504
      %v506 = vrot.slane %v501, %v505
      %v507 = vlaneseq
      %v508 = vshrl.u32 %v507, 7
      %v509 = vsub.s32 1, %v508
      %v510 = vrot.slane %v501, %v509
      %v511 = vlaneseq
      %v512 = vshrl.u32 %v511, 7
      %v513 = vsub.s32 2, %v512
      %v514 = vrot.slane %v501, %v513
      %v515 = vlaneseq
      %v516 = vshrl.u32 %v515, 7
      %v517 = vsub.s32 3, %v516
      %v518 = vrot.slane %v501, %v517
      %v519 = vlaneseq
      %v520 = vshrl.u32 %v519, 7
      %v521 = vsub.s32 4, %v520
      %v522 = vrot.slane %v501, %v521
      %v523 = vlaneseq
      %v524 = vshrl.u32 %v523, 7
      %v525 = vsub.s32 5, %v524
      %v526 = vrot.slane %v501, %v525
      %v527 = vlaneseq
      %v528 = vshrl.u32 %v527, 7
      %v529 = vsub.s32 6, %v528
      %v530 = vrot.slane %v501, %v529
      %v531 = vlaneseq
      %v532 = vshrl.u32 %v531, 7
      %v533 = vsub.s32 7, %v532
      %v534 = vrot.slane %v501, %v533
      %543 = vrot.lane.b32.xlu0 %v506, 1
      %v544 = vpop.permute.xlu0 %543
      %545 = vrot.lane.b32.xlu0 %v510, 1
      %v546 = vpop.permute.xlu0 %545
      %547 = vrot.lane.b32.xlu0 %v514, 1
      %v548 = vpop.permute.xlu0 %547
      %549 = vrot.lane.b32.xlu0 %v518, 1
      %v550 = vpop.permute.xlu0 %549
      %551 = vrot.lane.b32.xlu0 %v522, 1
      %v552 = vpop.permute.xlu0 %551
      %553 = vrot.lane.b32.xlu0 %v526, 1
      %v554 = vpop.permute.xlu0 %553
      %555 = vrot.lane.b32.xlu0 %v530, 1
      %v556 = vpop.permute.xlu0 %555
      %557 = vrot.lane.b32.xlu0 %v534, 1
      %v558 = vpop.permute.xlu0 %557
      %v559 = vlaneseq
      %v560 = vand.u32 %v559, 127
      %vm561 = vcmp.lt.s32.totalorder %v560, 1
      %v562 = vsel %vm561, %v556, %v558
      %v563 = vsel %vm561, %v554, %v556
      %v564 = vsel %vm561, %v552, %v554
      %v565 = vsel %vm561, %v550, %v552
      %v566 = vsel %vm561, %v548, %v550
      %v567 = vsel %vm561, %v546, %v548
      %v568 = vsel %vm561, %v544, %v546
      %v569 = vsel %vm561, %v558, %v544
      %v570 = vmul.f32 %v569, %v493
      %v571 = vmul.f32 %v568, %v494
      %v572 = vmul.f32 %v567, %v495
      %v573 = vmul.f32 %v566, %v496
      %v574 = vmul.f32 %v565, %v497
      %v575 = vmul.f32 %v564, %v498
      %v576 = vmul.f32 %v563, %v499
      %v577 = vmul.f32 %v562, %v500
      %578 = vrot.lane.b32.xlu0 %v506, 127
      %v579 = vpop.permute.xlu0 %578
      %580 = vrot.lane.b32.xlu0 %v510, 127
      %v581 = vpop.permute.xlu0 %580
      %582 = vrot.lane.b32.xlu0 %v514, 127
      %v583 = vpop.permute.xlu0 %582
      %584 = vrot.lane.b32.xlu0 %v518, 127
      %v585 = vpop.permute.xlu0 %584
      %586 = vrot.lane.b32.xlu0 %v522, 127
      %v587 = vpop.permute.xlu0 %586
      %588 = vrot.lane.b32.xlu0 %v526, 127
      %v589 = vpop.permute.xlu0 %588
      %590 = vrot.lane.b32.xlu0 %v530, 127
      %v591 = vpop.permute.xlu0 %590
      %592 = vrot.lane.b32.xlu0 %v534, 127
      %v593 = vpop.permute.xlu0 %592
      %vm594 = vcmp.lt.s32.totalorder %v560, 127
      %v595 = vsel %vm594, %v591, %v593
      %v596 = vsel %vm594, %v589, %v591
      %v597 = vsel %vm594, %v587, %v589
      %v598 = vsel %vm594, %v585, %v587
      %v599 = vsel %vm594, %v583, %v585
      %v600 = vsel %vm594, %v581, %v583
      %v601 = vsel %vm594, %v579, %v581
      %v602 = vsel %vm594, %v593, %v579
      %v611 = vrot.slane %v493, 1
      %v612 = vrot.slane %v494, 1
      %v613 = vrot.slane %v495, 1
      %v614 = vrot.slane %v496, 1
      %v615 = vrot.slane %v497, 1
      %v616 = vrot.slane %v498, 1
      %v617 = vrot.slane %v499, 1
      %v618 = vrot.slane %v500, 1
      %v627 = vmul.f32 %v601, %v611
      %v628 = vmul.f32 %v600, %v612
      %v629 = vmul.f32 %v599, %v613
      %v630 = vmul.f32 %v598, %v614
      %v631 = vmul.f32 %v597, %v615
      %v632 = vmul.f32 %v596, %v616
      %v633 = vmul.f32 %v595, %v617
      %v634 = vmul.f32 %v602, %v618
      %v635 = vld [vmem:[%s2] sm:$0xff]
      %v636 = vld [vmem:[%s2 + $0x8] sm:$0xff]
      %638 = vset.pattern.permute.xlu0 0
      %639 = vperm.xlu0 %638, %v635
      %v640 = vpop.permute.xlu0 %639
      %643 = vset.pattern.permute.xlu0 0
      %644 = vperm.xlu0 %643, %v636
      %v645 = vpop.permute.xlu0 %644
      %v647 = vlaneseq
      %v648 = vshrl.u32 %v647, 7
      %v649 = vsub.s32 0, %v648
      %v650 = vrot.slane %v570, %v649
      %v651 = vlaneseq
      %v652 = vshrl.u32 %v651, 7
      %v653 = vsub.s32 0, %v652
      %v654 = vrot.slane %v571, %v653
      %v655 = vlaneseq
      %v656 = vshrl.u32 %v655, 7
      %v657 = vsub.s32 0, %v656
      %v658 = vrot.slane %v572, %v657
      %v659 = vlaneseq
      %v660 = vshrl.u32 %v659, 7
      %v661 = vsub.s32 0, %v660
      %v662 = vrot.slane %v573, %v661
      %v663 = vlaneseq
      %v664 = vshrl.u32 %v663, 7
      %v665 = vsub.s32 0, %v664
      %v666 = vrot.slane %v574, %v665
      %v667 = vlaneseq
      %v668 = vshrl.u32 %v667, 7
      %v669 = vsub.s32 0, %v668
      %v670 = vrot.slane %v575, %v669
      %v671 = vlaneseq
      %v672 = vshrl.u32 %v671, 7
      %v673 = vsub.s32 0, %v672
      %v674 = vrot.slane %v576, %v673
      %v675 = vlaneseq
      %v676 = vshrl.u32 %v675, 7
      %v677 = vsub.s32 0, %v676
      %v678 = vrot.slane %v577, %v677
      %v679 = vmul.f32 %v640, %v650
      %v680 = vmul.f32 %v640, %v654
      %v681 = vmul.f32 %v640, %v658
      %v682 = vmul.f32 %v640, %v662
      %v683 = vmul.f32 %v640, %v666
      %v684 = vmul.f32 %v640, %v670
      %v685 = vmul.f32 %v640, %v674
      %v686 = vmul.f32 %v640, %v678
      %v687 = vmul.f32 %v645, %v650
      %v688 = vmul.f32 %v645, %v654
      %v689 = vmul.f32 %v645, %v658
      %v690 = vmul.f32 %v645, %v662
      %v691 = vmul.f32 %v645, %v666
      %v692 = vmul.f32 %v645, %v670
      %v693 = vmul.f32 %v645, %v674
      %v694 = vmul.f32 %v645, %v678
      %695 = vset.pattern.permute.xlu0 1
      %696 = vperm.xlu0 %695, %v635
      %v697 = vpop.permute.xlu0 %696
      %699 = vset.pattern.permute.xlu0 1
      %700 = vperm.xlu0 %699, %v636
      %v701 = vpop.permute.xlu0 %700
      %v703 = vmul.f32 %v697, %v506
      %v704 = vmul.f32 %v697, %v510
      %v705 = vmul.f32 %v697, %v514
      %v706 = vmul.f32 %v697, %v518
      %v707 = vmul.f32 %v697, %v522
      %v708 = vmul.f32 %v697, %v526
      %v709 = vmul.f32 %v697, %v530
      %v710 = vmul.f32 %v697, %v534
      %v711 = vmul.f32 %v701, %v506
      %v712 = vmul.f32 %v701, %v510
      %v713 = vmul.f32 %v701, %v514
      %v714 = vmul.f32 %v701, %v518
      %v715 = vmul.f32 %v701, %v522
      %v716 = vmul.f32 %v701, %v526
      %v717 = vmul.f32 %v701, %v530
      %v718 = vmul.f32 %v701, %v534
      %v719 = vadd.f32 %v679, %v703
      %v720 = vadd.f32 %v680, %v704
      %v721 = vadd.f32 %v681, %v705
      %v722 = vadd.f32 %v682, %v706
      %v723 = vadd.f32 %v683, %v707
      %v724 = vadd.f32 %v684, %v708
      %v725 = vadd.f32 %v685, %v709
      %v726 = vadd.f32 %v686, %v710
      %v727 = vadd.f32 %v687, %v711
      %v728 = vadd.f32 %v688, %v712
      %v729 = vadd.f32 %v689, %v713
      %v730 = vadd.f32 %v690, %v714
      %v731 = vadd.f32 %v691, %v715
      %v732 = vadd.f32 %v692, %v716
      %v733 = vadd.f32 %v693, %v717
      %v734 = vadd.f32 %v694, %v718
      %735 = vset.pattern.permute.xlu0 2
      %736 = vperm.xlu0 %735, %v635
      %v737 = vpop.permute.xlu0 %736
      %739 = vset.pattern.permute.xlu0 2
      %740 = vperm.xlu0 %739, %v636
      %v741 = vpop.permute.xlu0 %740
      %v743 = vlaneseq
      %v744 = vshrl.u32 %v743, 7
      %v745 = vsub.s32 0, %v744
      %v746 = vrot.slane %v627, %v745
      %v747 = vlaneseq
      %v748 = vshrl.u32 %v747, 7
      %v749 = vsub.s32 0, %v748
      %v750 = vrot.slane %v628, %v749
      %v751 = vlaneseq
      %v752 = vshrl.u32 %v751, 7
      %v753 = vsub.s32 0, %v752
      %v754 = vrot.slane %v629, %v753
      %v755 = vlaneseq
      %v756 = vshrl.u32 %v755, 7
      %v757 = vsub.s32 0, %v756
      %v758 = vrot.slane %v630, %v757
      %v759 = vlaneseq
      %v760 = vshrl.u32 %v759, 7
      %v761 = vsub.s32 0, %v760
      %v762 = vrot.slane %v631, %v761
      %v763 = vlaneseq
      %v764 = vshrl.u32 %v763, 7
      %v765 = vsub.s32 0, %v764
      %v766 = vrot.slane %v632, %v765
      %v767 = vlaneseq
      %v768 = vshrl.u32 %v767, 7
      %v769 = vsub.s32 0, %v768
      %v770 = vrot.slane %v633, %v769
      %v771 = vlaneseq
      %v772 = vshrl.u32 %v771, 7
      %v773 = vsub.s32 0, %v772
      %v774 = vrot.slane %v634, %v773
      %v775 = vmul.f32 %v737, %v746
      %v776 = vmul.f32 %v737, %v750
      %v777 = vmul.f32 %v737, %v754
      %v778 = vmul.f32 %v737, %v758
      %v779 = vmul.f32 %v737, %v762
      %v780 = vmul.f32 %v737, %v766
      %v781 = vmul.f32 %v737, %v770
      %v782 = vmul.f32 %v737, %v774
      %v783 = vmul.f32 %v741, %v746
      %v784 = vmul.f32 %v741, %v750
      %v785 = vmul.f32 %v741, %v754
      %v786 = vmul.f32 %v741, %v758
      %v787 = vmul.f32 %v741, %v762
      %v788 = vmul.f32 %v741, %v766
      %v789 = vmul.f32 %v741, %v770
      %v790 = vmul.f32 %v741, %v774
      %v791 = vadd.f32 %v719, %v775
      %v792 = vadd.f32 %v720, %v776
      %v793 = vadd.f32 %v721, %v777
      %v794 = vadd.f32 %v722, %v778
      %v795 = vadd.f32 %v723, %v779
      %v796 = vadd.f32 %v724, %v780
      %v797 = vadd.f32 %v725, %v781
      %v798 = vadd.f32 %v726, %v782
      %v799 = vadd.f32 %v727, %v783
      %v800 = vadd.f32 %v728, %v784
      %v801 = vadd.f32 %v729, %v785
      %v802 = vadd.f32 %v730, %v786
      %v803 = vadd.f32 %v731, %v787
      %v804 = vadd.f32 %v732, %v788
      %v805 = vadd.f32 %v733, %v789
      %v806 = vadd.f32 %v734, %v790
      %v807 = vld [vmem:[%s3] sm:$0xff]
      %v808 = vld [vmem:[%s3 + $0x8] sm:$0xff]
      %810 = vset.pattern.permute.xlu0 0
      %811 = vperm.xlu0 %810, %v807
      %v812 = vpop.permute.xlu0 %811
      %815 = vset.pattern.permute.xlu0 0
      %816 = vperm.xlu0 %815, %v808
      %v817 = vpop.permute.xlu0 %816
      %v819 = vadd.f32 %v791, %v812
      %v820 = vadd.f32 %v792, %v812
      %v821 = vadd.f32 %v793, %v812
      %v822 = vadd.f32 %v794, %v812
      %v823 = vadd.f32 %v795, %v812
      %v824 = vadd.f32 %v796, %v812
      %v825 = vadd.f32 %v797, %v812
      %v826 = vadd.f32 %v798, %v812
      %v827 = vadd.f32 %v799, %v817
      %v828 = vadd.f32 %v800, %v817
      %v829 = vadd.f32 %v801, %v817
      %v830 = vadd.f32 %v802, %v817
      %v831 = vadd.f32 %v803, %v817
      %v832 = vadd.f32 %v804, %v817
      %v833 = vadd.f32 %v805, %v817
      %v834 = vadd.f32 %v806, %v817
      %v835 = vmax.f32 %v819, 0.0
      %v836 = vmax.f32 %v820, 0.0
      %v837 = vmax.f32 %v821, 0.0
      %v838 = vmax.f32 %v822, 0.0
      %v839 = vmax.f32 %v823, 0.0
      %v840 = vmax.f32 %v824, 0.0
      %v841 = vmax.f32 %v825, 0.0
      %v842 = vmax.f32 %v826, 0.0
      %v843 = vmax.f32 %v827, 0.0
      %v844 = vmax.f32 %v828, 0.0
      %v845 = vmax.f32 %v829, 0.0
      %v846 = vmax.f32 %v830, 0.0
      %v847 = vmax.f32 %v831, 0.0
      %v848 = vmax.f32 %v832, 0.0
      %v849 = vmax.f32 %v833, 0.0
      %v850 = vmax.f32 %v834, 0.0
      %851 = vrot.lane.b32.xlu0 %v835, 127
      %v852 = vpop.permute.xlu0 %851
      %853 = vrot.lane.b32.xlu0 %v843, 127
      %v854 = vpop.permute.xlu0 %853
      %855 = vrot.lane.b32.xlu0 %v836, 127
      %v856 = vpop.permute.xlu0 %855
      %857 = vrot.lane.b32.xlu0 %v844, 127
      %v858 = vpop.permute.xlu0 %857
      %859 = vrot.lane.b32.xlu0 %v837, 127
      %v860 = vpop.permute.xlu0 %859
      %861 = vrot.lane.b32.xlu0 %v845, 127
      %v862 = vpop.permute.xlu0 %861
      %863 = vrot.lane.b32.xlu0 %v838, 127
      %v864 = vpop.permute.xlu0 %863
      %865 = vrot.lane.b32.xlu0 %v846, 127
      %v866 = vpop.permute.xlu0 %865
      %867 = vrot.lane.b32.xlu0 %v839, 127
      %v868 = vpop.permute.xlu0 %867
      %869 = vrot.lane.b32.xlu0 %v847, 127
      %v870 = vpop.permute.xlu0 %869
      %871 = vrot.lane.b32.xlu0 %v840, 127
      %v872 = vpop.permute.xlu0 %871
      %873 = vrot.lane.b32.xlu0 %v848, 127
      %v874 = vpop.permute.xlu0 %873
      %875 = vrot.lane.b32.xlu0 %v841, 127
      %v876 = vpop.permute.xlu0 %875
      %877 = vrot.lane.b32.xlu0 %v849, 127
      %v878 = vpop.permute.xlu0 %877
      %879 = vrot.lane.b32.xlu0 %v842, 127
      %v880 = vpop.permute.xlu0 %879
      %881 = vrot.lane.b32.xlu0 %v850, 127
      %v882 = vpop.permute.xlu0 %881
      %v883 = vsel %vm594, %v876, %v880
      %v884 = vsel %vm594, %v878, %v882
      %v885 = vsel %vm594, %v872, %v876
      %v886 = vsel %vm594, %v874, %v878
      %v887 = vsel %vm594, %v868, %v872
      %v888 = vsel %vm594, %v870, %v874
      %v889 = vsel %vm594, %v864, %v868
      %v890 = vsel %vm594, %v866, %v870
      %v891 = vsel %vm594, %v860, %v864
      %v892 = vsel %vm594, %v862, %v866
      %v893 = vsel %vm594, %v856, %v860
      %v894 = vsel %vm594, %v858, %v862
      %v895 = vsel %vm594, %v852, %v856
      %v896 = vsel %vm594, %v854, %v858
      %v897 = vsel %vm594, %v880, %v852
      %v898 = vsel %vm594, %v882, %v854
      %v899 = vmax.f32 %v835, %v895
      %v900 = vmax.f32 %v836, %v893
      %v901 = vmax.f32 %v837, %v891
      %v902 = vmax.f32 %v838, %v889
      %v903 = vmax.f32 %v839, %v887
      %v904 = vmax.f32 %v840, %v885
      %v905 = vmax.f32 %v841, %v883
      %v906 = vmax.f32 %v842, %v897
      %v907 = vmax.f32 %v843, %v896
      %v908 = vmax.f32 %v844, %v894
      %v909 = vmax.f32 %v845, %v892
      %v910 = vmax.f32 %v846, %v890
      %v911 = vmax.f32 %v847, %v888
      %v912 = vmax.f32 %v848, %v886
      %v913 = vmax.f32 %v849, %v884
      %v914 = vmax.f32 %v850, %v898
      %915 = vrot.lane.b32.xlu0 %v899, 2
      %v916 = vpop.permute.xlu0 %915
      %917 = vrot.lane.b32.xlu0 %v907, 2
      %v918 = vpop.permute.xlu0 %917
      %919 = vrot.lane.b32.xlu0 %v900, 2
      %v920 = vpop.permute.xlu0 %919
      %921 = vrot.lane.b32.xlu0 %v908, 2
      %v922 = vpop.permute.xlu0 %921
      %923 = vrot.lane.b32.xlu0 %v901, 2
      %v924 = vpop.permute.xlu0 %923
      %925 = vrot.lane.b32.xlu0 %v909, 2
      %v926 = vpop.permute.xlu0 %925
      %927 = vrot.lane.b32.xlu0 %v902, 2
      %v928 = vpop.permute.xlu0 %927
      %929 = vrot.lane.b32.xlu0 %v910, 2
      %v930 = vpop.permute.xlu0 %929
      %931 = vrot.lane.b32.xlu0 %v903, 2
      %v932 = vpop.permute.xlu0 %931
      %933 = vrot.lane.b32.xlu0 %v911, 2
      %v934 = vpop.permute.xlu0 %933
      %935 = vrot.lane.b32.xlu0 %v904, 2
      %v936 = vpop.permute.xlu0 %935
      %937 = vrot.lane.b32.xlu0 %v912, 2
      %v938 = vpop.permute.xlu0 %937
      %939 = vrot.lane.b32.xlu0 %v905, 2
      %v940 = vpop.permute.xlu0 %939
      %941 = vrot.lane.b32.xlu0 %v913, 2
      %v942 = vpop.permute.xlu0 %941
      %943 = vrot.lane.b32.xlu0 %v906, 2
      %v944 = vpop.permute.xlu0 %943
      %945 = vrot.lane.b32.xlu0 %v914, 2
      %v946 = vpop.permute.xlu0 %945
      %vm947 = vcmp.lt.s32.totalorder %v560, 2
      %v948 = vsel %vm947, %v940, %v944
      %v949 = vsel %vm947, %v942, %v946
      %v950 = vsel %vm947, %v936, %v940
      %v951 = vsel %vm947, %v938, %v942
      %v952 = vsel %vm947, %v932, %v936
      %v953 = vsel %vm947, %v934, %v938
      %v954 = vsel %vm947, %v928, %v932
      %v955 = vsel %vm947, %v930, %v934
      %v956 = vsel %vm947, %v924, %v928
      %v957 = vsel %vm947, %v926, %v930
      %v958 = vsel %vm947, %v920, %v924
      %v959 = vsel %vm947, %v922, %v926
      %v960 = vsel %vm947, %v916, %v920
      %v961 = vsel %vm947, %v918, %v922
      %v962 = vsel %vm947, %v944, %v916
      %v963 = vsel %vm947, %v946, %v918
      %v964 = vlaneseq
      %v965 = vshrl.u32 %v964, 7
      %v966 = vsub.s32 2, %v965
      %v967 = vrot.slane %v493, %v966
      %v968 = vlaneseq
      %v969 = vshrl.u32 %v968, 7
      %v970 = vsub.s32 2, %v969
      %v971 = vrot.slane %v494, %v970
      %v972 = vlaneseq
      %v973 = vshrl.u32 %v972, 7
      %v974 = vsub.s32 2, %v973
      %v975 = vrot.slane %v495, %v974
      %v976 = vlaneseq
      %v977 = vshrl.u32 %v976, 7
      %v978 = vsub.s32 2, %v977
      %v979 = vrot.slane %v496, %v978
      %v980 = vlaneseq
      %v981 = vshrl.u32 %v980, 7
      %v982 = vsub.s32 2, %v981
      %v983 = vrot.slane %v497, %v982
      %v984 = vlaneseq
      %v985 = vshrl.u32 %v984, 7
      %v986 = vsub.s32 2, %v985
      %v987 = vrot.slane %v498, %v986
      %v988 = vlaneseq
      %v989 = vshrl.u32 %v988, 7
      %v990 = vsub.s32 2, %v989
      %v991 = vrot.slane %v499, %v990
      %v992 = vlaneseq
      %v993 = vshrl.u32 %v992, 7
      %v994 = vsub.s32 2, %v993
      %v995 = vrot.slane %v500, %v994
      %v996 = vmul.f32 %v962, %v967
      %v997 = vmul.f32 %v960, %v971
      %v998 = vmul.f32 %v958, %v975
      %v999 = vmul.f32 %v956, %v979
      %v1000 = vmul.f32 %v954, %v983
      %v1001 = vmul.f32 %v952, %v987
      %v1002 = vmul.f32 %v950, %v991
      %v1003 = vmul.f32 %v948, %v995
      %v1004 = vmul.f32 %v963, %v967
      %v1005 = vmul.f32 %v961, %v971
      %v1006 = vmul.f32 %v959, %v975
      %v1007 = vmul.f32 %v957, %v979
      %v1008 = vmul.f32 %v955, %v983
      %v1009 = vmul.f32 %v953, %v987
      %v1010 = vmul.f32 %v951, %v991
      %v1011 = vmul.f32 %v949, %v995
      %1012 = vrot.lane.b32.xlu0 %v899, 126
      %v1013 = vpop.permute.xlu0 %1012
      %1014 = vrot.lane.b32.xlu0 %v907, 126
      %v1015 = vpop.permute.xlu0 %1014
      %1016 = vrot.lane.b32.xlu0 %v900, 126
      %v1017 = vpop.permute.xlu0 %1016
      %1018 = vrot.lane.b32.xlu0 %v908, 126
      %v1019 = vpop.permute.xlu0 %1018
      %1020 = vrot.lane.b32.xlu0 %v901, 126
      %v1021 = vpop.permute.xlu0 %1020
      %1022 = vrot.lane.b32.xlu0 %v909, 126
      %v1023 = vpop.permute.xlu0 %1022
      %1024 = vrot.lane.b32.xlu0 %v902, 126
      %v1025 = vpop.permute.xlu0 %1024
      %1026 = vrot.lane.b32.xlu0 %v910, 126
      %v1027 = vpop.permute.xlu0 %1026
      %1028 = vrot.lane.b32.xlu0 %v903, 126
      %v1029 = vpop.permute.xlu0 %1028
      %1030 = vrot.lane.b32.xlu0 %v911, 126
      %v1031 = vpop.permute.xlu0 %1030
      %1032 = vrot.lane.b32.xlu0 %v904, 126
      %v1033 = vpop.permute.xlu0 %1032
      %1034 = vrot.lane.b32.xlu0 %v912, 126
      %v1035 = vpop.permute.xlu0 %1034
      %1036 = vrot.lane.b32.xlu0 %v905, 126
      %v1037 = vpop.permute.xlu0 %1036
      %1038 = vrot.lane.b32.xlu0 %v913, 126
      %v1039 = vpop.permute.xlu0 %1038
      %1040 = vrot.lane.b32.xlu0 %v906, 126
      %v1041 = vpop.permute.xlu0 %1040
      %1042 = vrot.lane.b32.xlu0 %v914, 126
      %v1043 = vpop.permute.xlu0 %1042
      %vm1044 = vcmp.lt.s32.totalorder %v560, 126
      %v1045 = vsel %vm1044, %v1037, %v1041
      %v1046 = vsel %vm1044, %v1039, %v1043
      %v1047 = vsel %vm1044, %v1033, %v1037
      %v1048 = vsel %vm1044, %v1035, %v1039
      %v1049 = vsel %vm1044, %v1029, %v1033
      %v1050 = vsel %vm1044, %v1031, %v1035
      %v1051 = vsel %vm1044, %v1025, %v1029
      %v1052 = vsel %vm1044, %v1027, %v1031
      %v1053 = vsel %vm1044, %v1021, %v1025
      %v1054 = vsel %vm1044, %v1023, %v1027
      %v1055 = vsel %vm1044, %v1017, %v1021
      %v1056 = vsel %vm1044, %v1019, %v1023
      %v1057 = vsel %vm1044, %v1013, %v1017
      %v1058 = vsel %vm1044, %v1015, %v1019
      %v1059 = vsel %vm1044, %v1041, %v1013
      %v1060 = vsel %vm1044, %v1043, %v1015
      %v1061 = vlaneseq
      %v1062 = vshrl.u32 %v1061, 7
      %v1063 = vsub.s32 3, %v1062
      %v1064 = vrot.slane %v493, %v1063
      %v1065 = vlaneseq
      %v1066 = vshrl.u32 %v1065, 7
      %v1067 = vsub.s32 3, %v1066
      %v1068 = vrot.slane %v494, %v1067
      %v1069 = vlaneseq
      %v1070 = vshrl.u32 %v1069, 7
      %v1071 = vsub.s32 3, %v1070
      %v1072 = vrot.slane %v495, %v1071
      %v1073 = vlaneseq
      %v1074 = vshrl.u32 %v1073, 7
      %v1075 = vsub.s32 3, %v1074
      %v1076 = vrot.slane %v496, %v1075
      %v1077 = vlaneseq
      %v1078 = vshrl.u32 %v1077, 7
      %v1079 = vsub.s32 3, %v1078
      %v1080 = vrot.slane %v497, %v1079
      %v1081 = vlaneseq
      %v1082 = vshrl.u32 %v1081, 7
      %v1083 = vsub.s32 3, %v1082
      %v1084 = vrot.slane %v498, %v1083
      %v1085 = vlaneseq
      %v1086 = vshrl.u32 %v1085, 7
      %v1087 = vsub.s32 3, %v1086
      %v1088 = vrot.slane %v499, %v1087
      %v1089 = vlaneseq
      %v1090 = vshrl.u32 %v1089, 7
      %v1091 = vsub.s32 3, %v1090
      %v1092 = vrot.slane %v500, %v1091
      %v1093 = vmul.f32 %v1057, %v1064
      %v1094 = vmul.f32 %v1055, %v1068
      %v1095 = vmul.f32 %v1053, %v1072
      %v1096 = vmul.f32 %v1051, %v1076
      %v1097 = vmul.f32 %v1049, %v1080
      %v1098 = vmul.f32 %v1047, %v1084
      %v1099 = vmul.f32 %v1045, %v1088
      %v1100 = vmul.f32 %v1059, %v1092
      %v1101 = vmul.f32 %v1058, %v1064
      %v1102 = vmul.f32 %v1056, %v1068
      %v1103 = vmul.f32 %v1054, %v1072
      %v1104 = vmul.f32 %v1052, %v1076
      %v1105 = vmul.f32 %v1050, %v1080
      %v1106 = vmul.f32 %v1048, %v1084
      %v1107 = vmul.f32 %v1046, %v1088
      %v1108 = vmul.f32 %v1060, %v1092
      %v1109 = vpack.c.bf16 %v1004, %v996
      %v1110 = vpack.c.bf16 %v1005, %v997
      %v1111 = vpack.c.bf16 %v1006, %v998
      %v1112 = vpack.c.bf16 %v1007, %v999
      %v1113 = vpack.c.bf16 %v1008, %v1000
      %v1114 = vpack.c.bf16 %v1009, %v1001
      %v1115 = vpack.c.bf16 %v1010, %v1002
      %v1116 = vpack.c.bf16 %v1011, %v1003
      %v1117 = vpack.c.bf16 %v907, %v899
      %v1118 = vpack.c.bf16 %v908, %v900
      %v1119 = vpack.c.bf16 %v909, %v901
      %v1120 = vpack.c.bf16 %v910, %v902
      %v1121 = vpack.c.bf16 %v911, %v903
      %v1122 = vpack.c.bf16 %v912, %v904
      %v1123 = vpack.c.bf16 %v913, %v905
      %v1124 = vpack.c.bf16 %v914, %v906
      %v1125 = vpack.c.bf16 %v1101, %v1093
      %v1126 = vpack.c.bf16 %v1102, %v1094
      %v1127 = vpack.c.bf16 %v1103, %v1095
      %v1128 = vpack.c.bf16 %v1104, %v1096
      %v1129 = vpack.c.bf16 %v1105, %v1097
      %v1130 = vpack.c.bf16 %v1106, %v1098
      %v1131 = vpack.c.bf16 %v1107, %v1099
      %v1132 = vpack.c.bf16 %v1108, %v1100
      %v1133 = vld [vmem:[%s4] sm:$0xf]
      %v1134 = vld [vmem:[%s4 + $0x4] sm:$0xf]
      %v1135 = vld [vmem:[%s4 + $0x8] sm:$0xf]
      %v1136 = vld [vmem:[%s4 + $0xc] sm:$0xf]
      %v1137 = vld [vmem:[%s5] sm:$0xff]
      %v1138 = vld [vmem:[%s5 + $0x8] sm:$0xff]
      %v1139 = vld [vmem:[%s5 + $0x10] sm:$0xff]
      %v1140 = vld [vmem:[%s5 + $0x18] sm:$0xff]
      %1142 = vset.pattern.permute.xlu0 0
      %1143 = vperm.xlu0 %1142, %v1137
      %v1144 = vpop.permute.xlu0 %1143
      %1147 = vset.pattern.permute.xlu0 0
      %1148 = vperm.xlu0 %1147, %v1138
      %v1149 = vpop.permute.xlu0 %1148
      %1152 = vset.pattern.permute.xlu0 0
      %1153 = vperm.xlu0 %1152, %v1139
      %v1154 = vpop.permute.xlu0 %1153
      %1157 = vset.pattern.permute.xlu0 0
      %1158 = vperm.xlu0 %1157, %v1140
      %v1159 = vpop.permute.xlu0 %1158
      %v1165 = vunpack.c.l.b16 %v1133
      %v1166 = vunpack.c.l.b16 %v1134
      %v1167 = vunpack.c.l.b16 %v1135
      %v1168 = vunpack.c.l.b16 %v1136
      %v1169 = vpack.c.b16 %v1166, %v1165
      %v1170 = vpack.c.b16 %v1168, %v1167
      %vm1171 = vcmask 392192
      %v1173 = vsel %vm1171, %v1169, 0
      %v1176 = vsel %vm1171, %v1170, 0
      %1178 = vmatprep.subr.bf16.mxu0 %v1110
      %1179 = vmatpush1.bf16.msra.mxu0 %v1109
      %1180 = vmatprep.subr.bf16.mxu0 %v1118
      %1181 = vmatpush1.bf16.msra.mxu0 %v1117
      %1182 = vmatprep.subr.bf16.mxu0 %v1126
      %1183 = vmatpush1.bf16.msra.mxu0 %v1125
      %1184 = vmatprep.subr.bf16.mxu0 0
      %1185 = vmatpush1.bf16.msra.mxu0 0
      %1186 = vmatprep.subr.bf16.mxu0 0
      %1187 = vmatpush1.bf16.msra.mxu0 0
      %1188 = vmatprep.subr.bf16.mxu0 0
      %1189 = vmatpush1.bf16.msra.mxu0 0
      %1190 = vmatprep.subr.bf16.mxu0 0
      %1191 = vmatpush1.bf16.msra.mxu0 0
      %1192 = vmatprep.subr.bf16.mxu0 0
      %1193 = vmatpush1.bf16.msra.mxu0 0
      %1194 = vmatprep.subr.bf16.mxu0 0
      %1195 = vmatpush1.bf16.msra.mxu0 0
      %1196 = vmatprep.subr.bf16.mxu0 0
      %1197 = vmatpush1.bf16.msra.mxu0 0
      %1198 = vmatprep.subr.bf16.mxu0 0
      %1199 = vmatpush1.bf16.msra.mxu0 0
      %1200 = vmatprep.subr.bf16.mxu0 0
      %1201 = vmatpush1.bf16.msra.mxu0 0
      %1202 = vmatprep.subr.bf16.mxu0 0
      %1203 = vmatpush1.bf16.msra.mxu0 0
      %1204 = vmatprep.subr.bf16.mxu0 0
      %1205 = vmatpush1.bf16.msra.mxu0 0
      %1206 = vmatprep.subr.bf16.mxu0 0
      %1207 = vmatpush1.bf16.msra.mxu0 0
      %1208 = vmatprep.subr.bf16.mxu0 0
      %1209 = vmatpush1.bf16.msra.mxu0 0
      %1210 = vmatprep.mubr.bf16.mxu0 0
      %1211 = vmatmul.mubr.bf16.gmra.mrb[0].mxu0 %v1173
      %v1212 = vpop.f32.mrb[0].mxu0
      %v1213 = vadd.f32 %v1144, %v1212
      %v1214 = vpop.f32.mrb[0].mxu0
      %v1215 = vadd.f32 %v1144, %v1214
      %v1216 = vpop.f32.mrb[0].mxu0
      %v1217 = vadd.f32 %v1149, %v1216
      %v1218 = vpop.f32.mrb[0].mxu0
      %v1219 = vadd.f32 %v1149, %v1218
      %1220 = vmatprep.mubr.bf16.mxu0 0
      %1221 = vmatmul.mubr.bf16.gmra.mrb[0].mxu0 %v1176
      %v1222 = vpop.f32.mrb[0].mxu0
      %v1223 = vadd.f32 %v1154, %v1222
      %v1224 = vpop.f32.mrb[0].mxu0
      %v1225 = vadd.f32 %v1154, %v1224
      %v1226 = vpop.f32.mrb[0].mxu0
      %v1227 = vadd.f32 %v1159, %v1226
      %v1228 = vpop.f32.mrb[0].mxu0
      %v1229 = vadd.f32 %v1159, %v1228
      %1230 = vdwg.mxu0
      %1231 = vmatprep.subr.bf16.mxu0 %v1112
      %1232 = vmatpush1.bf16.msra.mxu0 %v1111
      %1233 = vmatprep.subr.bf16.mxu0 %v1120
      %1234 = vmatpush1.bf16.msra.mxu0 %v1119
      %1235 = vmatprep.subr.bf16.mxu0 %v1128
      %1236 = vmatpush1.bf16.msra.mxu0 %v1127
      %1237 = vmatprep.subr.bf16.mxu0 0
      %1238 = vmatpush1.bf16.msra.mxu0 0
      %1239 = vmatprep.subr.bf16.mxu0 0
      %1240 = vmatpush1.bf16.msra.mxu0 0
      %1241 = vmatprep.subr.bf16.mxu0 0
      %1242 = vmatpush1.bf16.msra.mxu0 0
      %1243 = vmatprep.subr.bf16.mxu0 0
      %1244 = vmatpush1.bf16.msra.mxu0 0
      %1245 = vmatprep.subr.bf16.mxu0 0
      %1246 = vmatpush1.bf16.msra.mxu0 0
      %1247 = vmatprep.subr.bf16.mxu0 0
      %1248 = vmatpush1.bf16.msra.mxu0 0
      %1249 = vmatprep.subr.bf16.mxu0 0
      %1250 = vmatpush1.bf16.msra.mxu0 0
      %1251 = vmatprep.subr.bf16.mxu0 0
      %1252 = vmatpush1.bf16.msra.mxu0 0
      %1253 = vmatprep.subr.bf16.mxu0 0
      %1254 = vmatpush1.bf16.msra.mxu0 0
      %1255 = vmatprep.subr.bf16.mxu0 0
      %1256 = vmatpush1.bf16.msra.mxu0 0
      %1257 = vmatprep.subr.bf16.mxu0 0
      %1258 = vmatpush1.bf16.msra.mxu0 0
      %1259 = vmatprep.subr.bf16.mxu0 0
      %1260 = vmatpush1.bf16.msra.mxu0 0
      %1261 = vmatprep.subr.bf16.mxu0 0
      %1262 = vmatpush1.bf16.msra.mxu0 0
      %1263 = vmatprep.mubr.bf16.mxu0 0
      %1264 = vmatmul.mubr.bf16.gmra.mrb[0].mxu0 %v1173
      %v1265 = vpop.f32.mrb[0].mxu0
      %v1266 = vadd.f32 %v1144, %v1265
      %v1267 = vpop.f32.mrb[0].mxu0
      %v1268 = vadd.f32 %v1144, %v1267
      %v1269 = vpop.f32.mrb[0].mxu0
      %v1270 = vadd.f32 %v1149, %v1269
      %v1271 = vpop.f32.mrb[0].mxu0
      %v1272 = vadd.f32 %v1149, %v1271
      %1273 = vmatprep.mubr.bf16.mxu0 0
      %1274 = vmatmul.mubr.bf16.gmra.mrb[0].mxu0 %v1176
      %v1275 = vpop.f32.mrb[0].mxu0
      %v1276 = vadd.f32 %v1154, %v1275
      %v1277 = vpop.f32.mrb[0].mxu0
      %v1278 = vadd.f32 %v1154, %v1277
      %v1279 = vpop.f32.mrb[0].mxu0
      %v1280 = vadd.f32 %v1159, %v1279
      %v1281 = vpop.f32.mrb[0].mxu0
      %v1282 = vadd.f32 %v1159, %v1281
      %1283 = vdwg.mxu0
      %1284 = vmatprep.subr.bf16.mxu0 %v1114
      %1285 = vmatpush1.bf16.msra.mxu0 %v1113
      %1286 = vmatprep.subr.bf16.mxu0 %v1122
      %1287 = vmatpush1.bf16.msra.mxu0 %v1121
      %1288 = vmatprep.subr.bf16.mxu0 %v1130
      %1289 = vmatpush1.bf16.msra.mxu0 %v1129
      %1290 = vmatprep.subr.bf16.mxu0 0
      %1291 = vmatpush1.bf16.msra.mxu0 0
      %1292 = vmatprep.subr.bf16.mxu0 0
      %1293 = vmatpush1.bf16.msra.mxu0 0
      %1294 = vmatprep.subr.bf16.mxu0 0
      %1295 = vmatpush1.bf16.msra.mxu0 0
      %1296 = vmatprep.subr.bf16.mxu0 0
      %1297 = vmatpush1.bf16.msra.mxu0 0
      %1298 = vmatprep.subr.bf16.mxu0 0
      %1299 = vmatpush1.bf16.msra.mxu0 0
      %1300 = vmatprep.subr.bf16.mxu0 0
      %1301 = vmatpush1.bf16.msra.mxu0 0
      %1302 = vmatprep.subr.bf16.mxu0 0
      %1303 = vmatpush1.bf16.msra.mxu0 0
      %1304 = vmatprep.subr.bf16.mxu0 0
      %1305 = vmatpush1.bf16.msra.mxu0 0
      %1306 = vmatprep.subr.bf16.mxu0 0
      %1307 = vmatpush1.bf16.msra.mxu0 0
      %1308 = vmatprep.subr.bf16.mxu0 0
      %1309 = vmatpush1.bf16.msra.mxu0 0
      %1310 = vmatprep.subr.bf16.mxu0 0
      %1311 = vmatpush1.bf16.msra.mxu0 0
      %1312 = vmatprep.subr.bf16.mxu0 0
      %1313 = vmatpush1.bf16.msra.mxu0 0
      %1314 = vmatprep.subr.bf16.mxu0 0
      %1315 = vmatpush1.bf16.msra.mxu0 0
      %1316 = vmatprep.mubr.bf16.mxu0 0
      %1317 = vmatmul.mubr.bf16.gmra.mrb[0].mxu0 %v1173
      %v1318 = vpop.f32.mrb[0].mxu0
      %v1319 = vadd.f32 %v1144, %v1318
      %v1320 = vpop.f32.mrb[0].mxu0
      %v1321 = vadd.f32 %v1144, %v1320
      %v1322 = vpop.f32.mrb[0].mxu0
      %v1323 = vadd.f32 %v1149, %v1322
      %v1324 = vpop.f32.mrb[0].mxu0
      %v1325 = vadd.f32 %v1149, %v1324
      %1326 = vmatprep.mubr.bf16.mxu0 0
      %1327 = vmatmul.mubr.bf16.gmra.mrb[0].mxu0 %v1176
      %v1328 = vpop.f32.mrb[0].mxu0
      %v1329 = vadd.f32 %v1154, %v1328
      %v1330 = vpop.f32.mrb[0].mxu0
      %v1331 = vadd.f32 %v1154, %v1330
      %v1332 = vpop.f32.mrb[0].mxu0
      %v1333 = vadd.f32 %v1159, %v1332
      %v1334 = vpop.f32.mrb[0].mxu0
      %v1335 = vadd.f32 %v1159, %v1334
      %1336 = vdwg.mxu0
      %1337 = vmatprep.subr.bf16.mxu0 %v1116
      %1338 = vmatpush1.bf16.msra.mxu0 %v1115
      %1339 = vmatprep.subr.bf16.mxu0 %v1124
      %1340 = vmatpush1.bf16.msra.mxu0 %v1123
      %1341 = vmatprep.subr.bf16.mxu0 %v1132
      %1342 = vmatpush1.bf16.msra.mxu0 %v1131
      %1343 = vmatprep.subr.bf16.mxu0 0
      %1344 = vmatpush1.bf16.msra.mxu0 0
      %1345 = vmatprep.subr.bf16.mxu0 0
      %1346 = vmatpush1.bf16.msra.mxu0 0
      %1347 = vmatprep.subr.bf16.mxu0 0
      %1348 = vmatpush1.bf16.msra.mxu0 0
      %1349 = vmatprep.subr.bf16.mxu0 0
      %1350 = vmatpush1.bf16.msra.mxu0 0
      %1351 = vmatprep.subr.bf16.mxu0 0
      %1352 = vmatpush1.bf16.msra.mxu0 0
      %1353 = vmatprep.subr.bf16.mxu0 0
      %1354 = vmatpush1.bf16.msra.mxu0 0
      %1355 = vmatprep.subr.bf16.mxu0 0
      %1356 = vmatpush1.bf16.msra.mxu0 0
      %1357 = vmatprep.subr.bf16.mxu0 0
      %1358 = vmatpush1.bf16.msra.mxu0 0
      %1359 = vmatprep.subr.bf16.mxu0 0
      %1360 = vmatpush1.bf16.msra.mxu0 0
      %1361 = vmatprep.subr.bf16.mxu0 0
      %1362 = vmatpush1.bf16.msra.mxu0 0
      %1363 = vmatprep.subr.bf16.mxu0 0
      %1364 = vmatpush1.bf16.msra.mxu0 0
      %1365 = vmatprep.subr.bf16.mxu0 0
      %1366 = vmatpush1.bf16.msra.mxu0 0
      %1367 = vmatprep.subr.bf16.mxu0 0
      %1368 = vmatpush1.bf16.msra.mxu0 0
      %1369 = vmatprep.mubr.bf16.mxu0 0
      %1370 = vmatmul.mubr.bf16.gmra.mrb[0].mxu0 %v1173
      %v1371 = vpop.f32.mrb[0].mxu0
      %v1372 = vadd.f32 %v1144, %v1371
      %v1373 = vpop.f32.mrb[0].mxu0
      %v1374 = vadd.f32 %v1144, %v1373
      %v1375 = vpop.f32.mrb[0].mxu0
      %v1376 = vadd.f32 %v1149, %v1375
      %v1377 = vpop.f32.mrb[0].mxu0
      %v1378 = vadd.f32 %v1149, %v1377
      %1379 = vmatprep.mubr.bf16.mxu0 0
      %1380 = vmatmul.mubr.bf16.gmra.mrb[0].mxu0 %v1176
      %v1381 = vpop.f32.mrb[0].mxu0
      %v1382 = vadd.f32 %v1154, %v1381
      %v1383 = vpop.f32.mrb[0].mxu0
      %v1384 = vadd.f32 %v1154, %v1383
      %v1385 = vpop.f32.mrb[0].mxu0
      %v1386 = vadd.f32 %v1159, %v1385
      %v1387 = vpop.f32.mrb[0].mxu0
      %v1388 = vadd.f32 %v1159, %v1387
      %1389 = vdwg.mxu0
      %v1390 = vmax.f32 %v1213, 0.0
      %v1391 = vmax.f32 %v1215, 0.0
      %v1392 = vmax.f32 %v1266, 0.0
      %v1393 = vmax.f32 %v1268, 0.0
      %v1394 = vmax.f32 %v1319, 0.0
      %v1395 = vmax.f32 %v1321, 0.0
      %v1396 = vmax.f32 %v1372, 0.0
      %v1397 = vmax.f32 %v1374, 0.0
      %v1398 = vmax.f32 %v1217, 0.0
      %v1399 = vmax.f32 %v1219, 0.0
      %v1400 = vmax.f32 %v1270, 0.0
      %v1401 = vmax.f32 %v1272, 0.0
      %v1402 = vmax.f32 %v1323, 0.0
      %v1403 = vmax.f32 %v1325, 0.0
      %v1404 = vmax.f32 %v1376, 0.0
      %v1405 = vmax.f32 %v1378, 0.0
      %v1406 = vmax.f32 %v1223, 0.0
      %v1407 = vmax.f32 %v1225, 0.0
      %v1408 = vmax.f32 %v1276, 0.0
      %v1409 = vmax.f32 %v1278, 0.0
      %v1410 = vmax.f32 %v1329, 0.0
      %v1411 = vmax.f32 %v1331, 0.0
      %v1412 = vmax.f32 %v1382, 0.0
      %v1413 = vmax.f32 %v1384, 0.0
      %v1414 = vmax.f32 %v1227, 0.0
      %v1415 = vmax.f32 %v1229, 0.0
      %v1416 = vmax.f32 %v1280, 0.0
      %v1417 = vmax.f32 %v1282, 0.0
      %v1418 = vmax.f32 %v1333, 0.0
      %v1419 = vmax.f32 %v1335, 0.0
      %v1420 = vmax.f32 %v1386, 0.0
      %v1421 = vmax.f32 %v1388, 0.0
      %1422 = vrot.lane.b32.xlu0 %v1390, 126
      %v1423 = vpop.permute.xlu0 %1422
      %1424 = vrot.lane.b32.xlu0 %v1398, 126
      %v1425 = vpop.permute.xlu0 %1424
      %1426 = vrot.lane.b32.xlu0 %v1406, 126
      %v1427 = vpop.permute.xlu0 %1426
      %1428 = vrot.lane.b32.xlu0 %v1414, 126
      %v1429 = vpop.permute.xlu0 %1428
      %1430 = vrot.lane.b32.xlu0 %v1391, 126
      %v1431 = vpop.permute.xlu0 %1430
      %1432 = vrot.lane.b32.xlu0 %v1399, 126
      %v1433 = vpop.permute.xlu0 %1432
      %1434 = vrot.lane.b32.xlu0 %v1407, 126
      %v1435 = vpop.permute.xlu0 %1434
      %1436 = vrot.lane.b32.xlu0 %v1415, 126
      %v1437 = vpop.permute.xlu0 %1436
      %1438 = vrot.lane.b32.xlu0 %v1392, 126
      %v1439 = vpop.permute.xlu0 %1438
      %1440 = vrot.lane.b32.xlu0 %v1400, 126
      %v1441 = vpop.permute.xlu0 %1440
      %1442 = vrot.lane.b32.xlu0 %v1408, 126
      %v1443 = vpop.permute.xlu0 %1442
      %1444 = vrot.lane.b32.xlu0 %v1416, 126
      %v1445 = vpop.permute.xlu0 %1444
      %1446 = vrot.lane.b32.xlu0 %v1393, 126
      %v1447 = vpop.permute.xlu0 %1446
      %1448 = vrot.lane.b32.xlu0 %v1401, 126
      %v1449 = vpop.permute.xlu0 %1448
      %1450 = vrot.lane.b32.xlu0 %v1409, 126
      %v1451 = vpop.permute.xlu0 %1450
      %1452 = vrot.lane.b32.xlu0 %v1417, 126
      %v1453 = vpop.permute.xlu0 %1452
      %1454 = vrot.lane.b32.xlu0 %v1394, 126
      %v1455 = vpop.permute.xlu0 %1454
      %1456 = vrot.lane.b32.xlu0 %v1402, 126
      %v1457 = vpop.permute.xlu0 %1456
      %1458 = vrot.lane.b32.xlu0 %v1410, 126
      %v1459 = vpop.permute.xlu0 %1458
      %1460 = vrot.lane.b32.xlu0 %v1418, 126
      %v1461 = vpop.permute.xlu0 %1460
      %1462 = vrot.lane.b32.xlu0 %v1395, 126
      %v1463 = vpop.permute.xlu0 %1462
      %1464 = vrot.lane.b32.xlu0 %v1403, 126
      %v1465 = vpop.permute.xlu0 %1464
      %1466 = vrot.lane.b32.xlu0 %v1411, 126
      %v1467 = vpop.permute.xlu0 %1466
      %1468 = vrot.lane.b32.xlu0 %v1419, 126
      %v1469 = vpop.permute.xlu0 %1468
      %1470 = vrot.lane.b32.xlu0 %v1396, 126
      %v1471 = vpop.permute.xlu0 %1470
      %1472 = vrot.lane.b32.xlu0 %v1404, 126
      %v1473 = vpop.permute.xlu0 %1472
      %1474 = vrot.lane.b32.xlu0 %v1412, 126
      %v1475 = vpop.permute.xlu0 %1474
      %1476 = vrot.lane.b32.xlu0 %v1420, 126
      %v1477 = vpop.permute.xlu0 %1476
      %1478 = vrot.lane.b32.xlu0 %v1397, 126
      %v1479 = vpop.permute.xlu0 %1478
      %1480 = vrot.lane.b32.xlu0 %v1405, 126
      %v1481 = vpop.permute.xlu0 %1480
      %1482 = vrot.lane.b32.xlu0 %v1413, 126
      %v1483 = vpop.permute.xlu0 %1482
      %1484 = vrot.lane.b32.xlu0 %v1421, 126
      %v1485 = vpop.permute.xlu0 %1484
      %v1486 = vsel %vm1044, %v1471, %v1479
      %v1487 = vsel %vm1044, %v1473, %v1481
      %v1488 = vsel %vm1044, %v1475, %v1483
      %v1489 = vsel %vm1044, %v1477, %v1485
      %v1490 = vsel %vm1044, %v1463, %v1471
      %v1491 = vsel %vm1044, %v1465, %v1473
      %v1492 = vsel %vm1044, %v1467, %v1475
      %v1493 = vsel %vm1044, %v1469, %v1477
      %v1494 = vsel %vm1044, %v1455, %v1463
      %v1495 = vsel %vm1044, %v1457, %v1465
      %v1496 = vsel %vm1044, %v1459, %v1467
      %v1497 = vsel %vm1044, %v1461, %v1469
      %v1498 = vsel %vm1044, %v1447, %v1455
      %v1499 = vsel %vm1044, %v1449, %v1457
      %v1500 = vsel %vm1044, %v1451, %v1459
      %v1501 = vsel %vm1044, %v1453, %v1461
      %v1502 = vsel %vm1044, %v1439, %v1447
      %v1503 = vsel %vm1044, %v1441, %v1449
      %v1504 = vsel %vm1044, %v1443, %v1451
      %v1505 = vsel %vm1044, %v1445, %v1453
      %v1506 = vsel %vm1044, %v1431, %v1439
      %v1507 = vsel %vm1044, %v1433, %v1441
      %v1508 = vsel %vm1044, %v1435, %v1443
      %v1509 = vsel %vm1044, %v1437, %v1445
      %v1510 = vsel %vm1044, %v1423, %v1431
      %v1511 = vsel %vm1044, %v1425, %v1433
      %v1512 = vsel %vm1044, %v1427, %v1435
      %v1513 = vsel %vm1044, %v1429, %v1437
      %v1514 = vsel %vm1044, %v1479, %v1423
      %v1515 = vsel %vm1044, %v1481, %v1425
      %v1516 = vsel %vm1044, %v1483, %v1427
      %v1517 = vsel %vm1044, %v1485, %v1429
      %v1518 = vmax.f32 %v1390, %v1510
      %v1519 = vmax.f32 %v1391, %v1506
      %v1520 = vmax.f32 %v1392, %v1502
      %v1521 = vmax.f32 %v1393, %v1498
      %v1522 = vmax.f32 %v1394, %v1494
      %v1523 = vmax.f32 %v1395, %v1490
      %v1524 = vmax.f32 %v1396, %v1486
      %v1525 = vmax.f32 %v1397, %v1514
      %v1526 = vmax.f32 %v1398, %v1511
      %v1527 = vmax.f32 %v1399, %v1507
      %v1528 = vmax.f32 %v1400, %v1503
      %v1529 = vmax.f32 %v1401, %v1499
      %v1530 = vmax.f32 %v1402, %v1495
      %v1531 = vmax.f32 %v1403, %v1491
      %v1532 = vmax.f32 %v1404, %v1487
      %v1533 = vmax.f32 %v1405, %v1515
      %v1534 = vmax.f32 %v1406, %v1512
      %v1535 = vmax.f32 %v1407, %v1508
      %v1536 = vmax.f32 %v1408, %v1504
      %v1537 = vmax.f32 %v1409, %v1500
      %v1538 = vmax.f32 %v1410, %v1496
      %v1539 = vmax.f32 %v1411, %v1492
      %v1540 = vmax.f32 %v1412, %v1488
      %v1541 = vmax.f32 %v1413, %v1516
      %v1542 = vmax.f32 %v1414, %v1513
      %v1543 = vmax.f32 %v1415, %v1509
      %v1544 = vmax.f32 %v1416, %v1505
      %v1545 = vmax.f32 %v1417, %v1501
      %v1546 = vmax.f32 %v1418, %v1497
      %v1547 = vmax.f32 %v1419, %v1493
      %v1548 = vmax.f32 %v1420, %v1489
      %v1549 = vmax.f32 %v1421, %v1517
      %1550 = vrot.lane.b32.xlu0 %v1518, 4
      %v1551 = vpop.permute.xlu0 %1550
      %1552 = vrot.lane.b32.xlu0 %v1526, 4
      %v1553 = vpop.permute.xlu0 %1552
      %1554 = vrot.lane.b32.xlu0 %v1534, 4
      %v1555 = vpop.permute.xlu0 %1554
      %1556 = vrot.lane.b32.xlu0 %v1542, 4
      %v1557 = vpop.permute.xlu0 %1556
      %1558 = vrot.lane.b32.xlu0 %v1519, 4
      %v1559 = vpop.permute.xlu0 %1558
      %1560 = vrot.lane.b32.xlu0 %v1527, 4
      %v1561 = vpop.permute.xlu0 %1560
      %1562 = vrot.lane.b32.xlu0 %v1535, 4
      %v1563 = vpop.permute.xlu0 %1562
      %1564 = vrot.lane.b32.xlu0 %v1543, 4
      %v1565 = vpop.permute.xlu0 %1564
      %1566 = vrot.lane.b32.xlu0 %v1520, 4
      %v1567 = vpop.permute.xlu0 %1566
      %1568 = vrot.lane.b32.xlu0 %v1528, 4
      %v1569 = vpop.permute.xlu0 %1568
      %1570 = vrot.lane.b32.xlu0 %v1536, 4
      %v1571 = vpop.permute.xlu0 %1570
      %1572 = vrot.lane.b32.xlu0 %v1544, 4
      %v1573 = vpop.permute.xlu0 %1572
      %1574 = vrot.lane.b32.xlu0 %v1521, 4
      %v1575 = vpop.permute.xlu0 %1574
      %1576 = vrot.lane.b32.xlu0 %v1529, 4
      %v1577 = vpop.permute.xlu0 %1576
      %1578 = vrot.lane.b32.xlu0 %v1537, 4
      %v1579 = vpop.permute.xlu0 %1578
      %1580 = vrot.lane.b32.xlu0 %v1545, 4
      %v1581 = vpop.permute.xlu0 %1580
      %1582 = vrot.lane.b32.xlu0 %v1522, 4
      %v1583 = vpop.permute.xlu0 %1582
      %1584 = vrot.lane.b32.xlu0 %v1530, 4
      %v1585 = vpop.permute.xlu0 %1584
      %1586 = vrot.lane.b32.xlu0 %v1538, 4
      %v1587 = vpop.permute.xlu0 %1586
      %1588 = vrot.lane.b32.xlu0 %v1546, 4
      %v1589 = vpop.permute.xlu0 %1588
      %1590 = vrot.lane.b32.xlu0 %v1523, 4
      %v1591 = vpop.permute.xlu0 %1590
      %1592 = vrot.lane.b32.xlu0 %v1531, 4
      %v1593 = vpop.permute.xlu0 %1592
      %1594 = vrot.lane.b32.xlu0 %v1539, 4
      %v1595 = vpop.permute.xlu0 %1594
      %1596 = vrot.lane.b32.xlu0 %v1547, 4
      %v1597 = vpop.permute.xlu0 %1596
      %1598 = vrot.lane.b32.xlu0 %v1524, 4
      %v1599 = vpop.permute.xlu0 %1598
      %1600 = vrot.lane.b32.xlu0 %v1532, 4
      %v1601 = vpop.permute.xlu0 %1600
      %1602 = vrot.lane.b32.xlu0 %v1540, 4
      %v1603 = vpop.permute.xlu0 %1602
      %1604 = vrot.lane.b32.xlu0 %v1548, 4
      %v1605 = vpop.permute.xlu0 %1604
      %1606 = vrot.lane.b32.xlu0 %v1525, 4
      %v1607 = vpop.permute.xlu0 %1606
      %1608 = vrot.lane.b32.xlu0 %v1533, 4
      %v1609 = vpop.permute.xlu0 %1608
      %1610 = vrot.lane.b32.xlu0 %v1541, 4
      %v1611 = vpop.permute.xlu0 %1610
      %1612 = vrot.lane.b32.xlu0 %v1549, 4
      %v1613 = vpop.permute.xlu0 %1612
      %vm1614 = vcmp.lt.s32.totalorder %v560, 4
      %v1615 = vsel %vm1614, %v1599, %v1607
      %v1616 = vsel %vm1614, %v1601, %v1609
      %v1617 = vsel %vm1614, %v1603, %v1611
      %v1618 = vsel %vm1614, %v1605, %v1613
      %v1619 = vsel %vm1614, %v1591, %v1599
      %v1620 = vsel %vm1614, %v1593, %v1601
      %v1621 = vsel %vm1614, %v1595, %v1603
      %v1622 = vsel %vm1614, %v1597, %v1605
      %v1623 = vsel %vm1614, %v1583, %v1591
      %v1624 = vsel %vm1614, %v1585, %v1593
      %v1625 = vsel %vm1614, %v1587, %v1595
      %v1626 = vsel %vm1614, %v1589, %v1597
      %v1627 = vsel %vm1614, %v1575, %v1583
      %v1628 = vsel %vm1614, %v1577, %v1585
      %v1629 = vsel %vm1614, %v1579, %v1587
      %v1630 = vsel %vm1614, %v1581, %v1589
      %v1631 = vsel %vm1614, %v1567, %v1575
      %v1632 = vsel %vm1614, %v1569, %v1577
      %v1633 = vsel %vm1614, %v1571, %v1579
      %v1634 = vsel %vm1614, %v1573, %v1581
      %v1635 = vsel %vm1614, %v1559, %v1567
      %v1636 = vsel %vm1614, %v1561, %v1569
      %v1637 = vsel %vm1614, %v1563, %v1571
      %v1638 = vsel %vm1614, %v1565, %v1573
      %v1639 = vsel %vm1614, %v1551, %v1559
      %v1640 = vsel %vm1614, %v1553, %v1561
      %v1641 = vsel %vm1614, %v1555, %v1563
      %v1642 = vsel %vm1614, %v1557, %v1565
      %v1643 = vsel %vm1614, %v1607, %v1551
      %v1644 = vsel %vm1614, %v1609, %v1553
      %v1645 = vsel %vm1614, %v1611, %v1555
      %v1646 = vsel %vm1614, %v1613, %v1557
      %v1647 = vlaneseq
      %v1648 = vshrl.u32 %v1647, 7
      %v1649 = vsub.s32 4, %v1648
      %v1650 = vrot.slane %v493, %v1649
      %v1651 = vlaneseq
      %v1652 = vshrl.u32 %v1651, 7
      %v1653 = vsub.s32 4, %v1652
      %v1654 = vrot.slane %v494, %v1653
      %v1655 = vlaneseq
      %v1656 = vshrl.u32 %v1655, 7
      %v1657 = vsub.s32 4, %v1656
      %v1658 = vrot.slane %v495, %v1657
      %v1659 = vlaneseq
      %v1660 = vshrl.u32 %v1659, 7
      %v1661 = vsub.s32 4, %v1660
      %v1662 = vrot.slane %v496, %v1661
      %v1663 = vlaneseq
      %v1664 = vshrl.u32 %v1663, 7
      %v1665 = vsub.s32 4, %v1664
      %v1666 = vrot.slane %v497, %v1665
      %v1667 = vlaneseq
      %v1668 = vshrl.u32 %v1667, 7
      %v1669 = vsub.s32 4, %v1668
      %v1670 = vrot.slane %v498, %v1669
      %v1671 = vlaneseq
      %v1672 = vshrl.u32 %v1671, 7
      %v1673 = vsub.s32 4, %v1672
      %v1674 = vrot.slane %v499, %v1673
      %v1675 = vlaneseq
      %v1676 = vshrl.u32 %v1675, 7
      %v1677 = vsub.s32 4, %v1676
      %v1678 = vrot.slane %v500, %v1677
      %v1679 = vmul.f32 %v1643, %v1650
      %v1680 = vmul.f32 %v1639, %v1654
      %v1681 = vmul.f32 %v1635, %v1658
      %v1682 = vmul.f32 %v1631, %v1662
      %v1683 = vmul.f32 %v1627, %v1666
      %v1684 = vmul.f32 %v1623, %v1670
      %v1685 = vmul.f32 %v1619, %v1674
      %v1686 = vmul.f32 %v1615, %v1678
      %v1687 = vmul.f32 %v1644, %v1650
      %v1688 = vmul.f32 %v1640, %v1654
      %v1689 = vmul.f32 %v1636, %v1658
      %v1690 = vmul.f32 %v1632, %v1662
      %v1691 = vmul.f32 %v1628, %v1666
      %v1692 = vmul.f32 %v1624, %v1670
      %v1693 = vmul.f32 %v1620, %v1674
      %v1694 = vmul.f32 %v1616, %v1678
      %v1695 = vmul.f32 %v1645, %v1650
      %v1696 = vmul.f32 %v1641, %v1654
      %v1697 = vmul.f32 %v1637, %v1658
      %v1698 = vmul.f32 %v1633, %v1662
      %v1699 = vmul.f32 %v1629, %v1666
      %v1700 = vmul.f32 %v1625, %v1670
      %v1701 = vmul.f32 %v1621, %v1674
      %v1702 = vmul.f32 %v1617, %v1678
      %v1703 = vmul.f32 %v1646, %v1650
      %v1704 = vmul.f32 %v1642, %v1654
      %v1705 = vmul.f32 %v1638, %v1658
      %v1706 = vmul.f32 %v1634, %v1662
      %v1707 = vmul.f32 %v1630, %v1666
      %v1708 = vmul.f32 %v1626, %v1670
      %v1709 = vmul.f32 %v1622, %v1674
      %v1710 = vmul.f32 %v1618, %v1678
      %1711 = vrot.lane.b32.xlu0 %v1518, 124
      %v1712 = vpop.permute.xlu0 %1711
      %1713 = vrot.lane.b32.xlu0 %v1526, 124
      %v1714 = vpop.permute.xlu0 %1713
      %1715 = vrot.lane.b32.xlu0 %v1534, 124
      %v1716 = vpop.permute.xlu0 %1715
      %1717 = vrot.lane.b32.xlu0 %v1542, 124
      %v1718 = vpop.permute.xlu0 %1717
      %1719 = vrot.lane.b32.xlu0 %v1519, 124
      %v1720 = vpop.permute.xlu0 %1719
      %1721 = vrot.lane.b32.xlu0 %v1527, 124
      %v1722 = vpop.permute.xlu0 %1721
      %1723 = vrot.lane.b32.xlu0 %v1535, 124
      %v1724 = vpop.permute.xlu0 %1723
      %1725 = vrot.lane.b32.xlu0 %v1543, 124
      %v1726 = vpop.permute.xlu0 %1725
      %1727 = vrot.lane.b32.xlu0 %v1520, 124
      %v1728 = vpop.permute.xlu0 %1727
      %1729 = vrot.lane.b32.xlu0 %v1528, 124
      %v1730 = vpop.permute.xlu0 %1729
      %1731 = vrot.lane.b32.xlu0 %v1536, 124
      %v1732 = vpop.permute.xlu0 %1731
      %1733 = vrot.lane.b32.xlu0 %v1544, 124
      %v1734 = vpop.permute.xlu0 %1733
      %1735 = vrot.lane.b32.xlu0 %v1521, 124
      %v1736 = vpop.permute.xlu0 %1735
      %1737 = vrot.lane.b32.xlu0 %v1529, 124
      %v1738 = vpop.permute.xlu0 %1737
      %1739 = vrot.lane.b32.xlu0 %v1537, 124
      %v1740 = vpop.permute.xlu0 %1739
      %1741 = vrot.lane.b32.xlu0 %v1545, 124
      %v1742 = vpop.permute.xlu0 %1741
      %1743 = vrot.lane.b32.xlu0 %v1522, 124
      %v1744 = vpop.permute.xlu0 %1743
      %1745 = vrot.lane.b32.xlu0 %v1530, 124
      %v1746 = vpop.permute.xlu0 %1745
      %1747 = vrot.lane.b32.xlu0 %v1538, 124
      %v1748 = vpop.permute.xlu0 %1747
      %1749 = vrot.lane.b32.xlu0 %v1546, 124
      %v1750 = vpop.permute.xlu0 %1749
      %1751 = vrot.lane.b32.xlu0 %v1523, 124
      %v1752 = vpop.permute.xlu0 %1751
      %1753 = vrot.lane.b32.xlu0 %v1531, 124
      %v1754 = vpop.permute.xlu0 %1753
      %1755 = vrot.lane.b32.xlu0 %v1539, 124
      %v1756 = vpop.permute.xlu0 %1755
      %1757 = vrot.lane.b32.xlu0 %v1547, 124
      %v1758 = vpop.permute.xlu0 %1757
      %1759 = vrot.lane.b32.xlu0 %v1524, 124
      %v1760 = vpop.permute.xlu0 %1759
      %1761 = vrot.lane.b32.xlu0 %v1532, 124
      %v1762 = vpop.permute.xlu0 %1761
      %1763 = vrot.lane.b32.xlu0 %v1540, 124
      %v1764 = vpop.permute.xlu0 %1763
      %1765 = vrot.lane.b32.xlu0 %v1548, 124
      %v1766 = vpop.permute.xlu0 %1765
      %1767 = vrot.lane.b32.xlu0 %v1525, 124
      %v1768 = vpop.permute.xlu0 %1767
      %1769 = vrot.lane.b32.xlu0 %v1533, 124
      %v1770 = vpop.permute.xlu0 %1769
      %1771 = vrot.lane.b32.xlu0 %v1541, 124
      %v1772 = vpop.permute.xlu0 %1771
      %1773 = vrot.lane.b32.xlu0 %v1549, 124
      %v1774 = vpop.permute.xlu0 %1773
      %vm1775 = vcmp.lt.s32.totalorder %v560, 124
      %v1776 = vsel %vm1775, %v1760, %v1768
      %v1777 = vsel %vm1775, %v1762, %v1770
      %v1778 = vsel %vm1775, %v1764, %v1772
      %v1779 = vsel %vm1775, %v1766, %v1774
      %v1780 = vsel %vm1775, %v1752, %v1760
      %v1781 = vsel %vm1775, %v1754, %v1762
      %v1782 = vsel %vm1775, %v1756, %v1764
      %v1783 = vsel %vm1775, %v1758, %v1766
      %v1784 = vsel %vm1775, %v1744, %v1752
      %v1785 = vsel %vm1775, %v1746, %v1754
      %v1786 = vsel %vm1775, %v1748, %v1756
      %v1787 = vsel %vm1775, %v1750, %v1758
      %v1788 = vsel %vm1775, %v1736, %v1744
      %v1789 = vsel %vm1775, %v1738, %v1746
      %v1790 = vsel %vm1775, %v1740, %v1748
      %v1791 = vsel %vm1775, %v1742, %v1750
      %v1792 = vsel %vm1775, %v1728, %v1736
      %v1793 = vsel %vm1775, %v1730, %v1738
      %v1794 = vsel %vm1775, %v1732, %v1740
      %v1795 = vsel %vm1775, %v1734, %v1742
      %v1796 = vsel %vm1775, %v1720, %v1728
      %v1797 = vsel %vm1775, %v1722, %v1730
      %v1798 = vsel %vm1775, %v1724, %v1732
      %v1799 = vsel %vm1775, %v1726, %v1734
      %v1800 = vsel %vm1775, %v1712, %v1720
      %v1801 = vsel %vm1775, %v1714, %v1722
      %v1802 = vsel %vm1775, %v1716, %v1724
      %v1803 = vsel %vm1775, %v1718, %v1726
      %v1804 = vsel %vm1775, %v1768, %v1712
      %v1805 = vsel %vm1775, %v1770, %v1714
      %v1806 = vsel %vm1775, %v1772, %v1716
      %v1807 = vsel %vm1775, %v1774, %v1718
      %v1808 = vlaneseq
      %v1809 = vshrl.u32 %v1808, 7
      %v1810 = vsub.s32 5, %v1809
      %v1811 = vrot.slane %v493, %v1810
      %v1812 = vlaneseq
      %v1813 = vshrl.u32 %v1812, 7
      %v1814 = vsub.s32 5, %v1813
      %v1815 = vrot.slane %v494, %v1814
      %v1816 = vlaneseq
      %v1817 = vshrl.u32 %v1816, 7
      %v1818 = vsub.s32 5, %v1817
      %v1819 = vrot.slane %v495, %v1818
      %v1820 = vlaneseq
      %v1821 = vshrl.u32 %v1820, 7
      %v1822 = vsub.s32 5, %v1821
      %v1823 = vrot.slane %v496, %v1822
      %v1824 = vlaneseq
      %v1825 = vshrl.u32 %v1824, 7
      %v1826 = vsub.s32 5, %v1825
      %v1827 = vrot.slane %v497, %v1826
      %v1828 = vlaneseq
      %v1829 = vshrl.u32 %v1828, 7
      %v1830 = vsub.s32 5, %v1829
      %v1831 = vrot.slane %v498, %v1830
      %v1832 = vlaneseq
      %v1833 = vshrl.u32 %v1832, 7
      %v1834 = vsub.s32 5, %v1833
      %v1835 = vrot.slane %v499, %v1834
      %v1836 = vlaneseq
      %v1837 = vshrl.u32 %v1836, 7
      %v1838 = vsub.s32 5, %v1837
      %v1839 = vrot.slane %v500, %v1838
      %v1840 = vmul.f32 %v1800, %v1811
      %v1841 = vmul.f32 %v1796, %v1815
      %v1842 = vmul.f32 %v1792, %v1819
      %v1843 = vmul.f32 %v1788, %v1823
      %v1844 = vmul.f32 %v1784, %v1827
      %v1845 = vmul.f32 %v1780, %v1831
      %v1846 = vmul.f32 %v1776, %v1835
      %v1847 = vmul.f32 %v1804, %v1839
      %v1848 = vmul.f32 %v1801, %v1811
      %v1849 = vmul.f32 %v1797, %v1815
      %v1850 = vmul.f32 %v1793, %v1819
      %v1851 = vmul.f32 %v1789, %v1823
      %v1852 = vmul.f32 %v1785, %v1827
      %v1853 = vmul.f32 %v1781, %v1831
      %v1854 = vmul.f32 %v1777, %v1835
      %v1855 = vmul.f32 %v1805, %v1839
      %v1856 = vmul.f32 %v1802, %v1811
      %v1857 = vmul.f32 %v1798, %v1815
      %v1858 = vmul.f32 %v1794, %v1819
      %v1859 = vmul.f32 %v1790, %v1823
      %v1860 = vmul.f32 %v1786, %v1827
      %v1861 = vmul.f32 %v1782, %v1831
      %v1862 = vmul.f32 %v1778, %v1835
      %v1863 = vmul.f32 %v1806, %v1839
      %v1864 = vmul.f32 %v1803, %v1811
      %v1865 = vmul.f32 %v1799, %v1815
      %v1866 = vmul.f32 %v1795, %v1819
      %v1867 = vmul.f32 %v1791, %v1823
      %v1868 = vmul.f32 %v1787, %v1827
      %v1869 = vmul.f32 %v1783, %v1831
      %v1870 = vmul.f32 %v1779, %v1835
      %v1871 = vmul.f32 %v1807, %v1839
      %v1872 = vpack.c.bf16 %v1687, %v1679
      %v1873 = vpack.c.bf16 %v1688, %v1680
      %v1874 = vpack.c.bf16 %v1689, %v1681
      %v1875 = vpack.c.bf16 %v1690, %v1682
      %v1876 = vpack.c.bf16 %v1691, %v1683
      %v1877 = vpack.c.bf16 %v1692, %v1684
      %v1878 = vpack.c.bf16 %v1693, %v1685
      %v1879 = vpack.c.bf16 %v1694, %v1686
      %v1880 = vpack.c.bf16 %v1703, %v1695
      %v1881 = vpack.c.bf16 %v1704, %v1696
      %v1882 = vpack.c.bf16 %v1705, %v1697
      %v1883 = vpack.c.bf16 %v1706, %v1698
      %v1884 = vpack.c.bf16 %v1707, %v1699
      %v1885 = vpack.c.bf16 %v1708, %v1700
      %v1886 = vpack.c.bf16 %v1709, %v1701
      %v1887 = vpack.c.bf16 %v1710, %v1702
      %v1888 = vpack.c.bf16 %v1526, %v1518
      %v1889 = vpack.c.bf16 %v1527, %v1519
      %v1890 = vpack.c.bf16 %v1528, %v1520
      %v1891 = vpack.c.bf16 %v1529, %v1521
      %v1892 = vpack.c.bf16 %v1530, %v1522
      %v1893 = vpack.c.bf16 %v1531, %v1523
      %v1894 = vpack.c.bf16 %v1532, %v1524
      %v1895 = vpack.c.bf16 %v1533, %v1525
      %v1896 = vpack.c.bf16 %v1542, %v1534
      %v1897 = vpack.c.bf16 %v1543, %v1535
      %v1898 = vpack.c.bf16 %v1544, %v1536
      %v1899 = vpack.c.bf16 %v1545, %v1537
      %v1900 = vpack.c.bf16 %v1546, %v1538
      %v1901 = vpack.c.bf16 %v1547, %v1539
      %v1902 = vpack.c.bf16 %v1548, %v1540
      %v1903 = vpack.c.bf16 %v1549, %v1541
      %v1904 = vpack.c.bf16 %v1848, %v1840
      %v1905 = vpack.c.bf16 %v1849, %v1841
      %v1906 = vpack.c.bf16 %v1850, %v1842
      %v1907 = vpack.c.bf16 %v1851, %v1843
      %v1908 = vpack.c.bf16 %v1852, %v1844
      %v1909 = vpack.c.bf16 %v1853, %v1845
      %v1910 = vpack.c.bf16 %v1854, %v1846
      %v1911 = vpack.c.bf16 %v1855, %v1847
      %v1912 = vpack.c.bf16 %v1864, %v1856
      %v1913 = vpack.c.bf16 %v1865, %v1857
      %v1914 = vpack.c.bf16 %v1866, %v1858
      %v1915 = vpack.c.bf16 %v1867, %v1859
      %v1916 = vpack.c.bf16 %v1868, %v1860
      %v1917 = vpack.c.bf16 %v1869, %v1861
      %v1918 = vpack.c.bf16 %v1870, %v1862
      %v1919 = vpack.c.bf16 %v1871, %v1863
      %v1920 = vld [vmem:[%s6] sm:$0xf]
      %v1921 = vld [vmem:[%s6 + $0x4] sm:$0xf]
      %v1922 = vld [vmem:[%s6 + $0x8] sm:$0xf]
      %v1923 = vld [vmem:[%s6 + $0xc] sm:$0xf]
      %v1924 = vld [vmem:[%s6 + $0x10] sm:$0xf]
      %v1925 = vld [vmem:[%s6 + $0x14] sm:$0xf]
      %v1926 = vld [vmem:[%s6 + $0x18] sm:$0xf]
      %v1927 = vld [vmem:[%s6 + $0x1c] sm:$0xf]
      %v1928 = vld [vmem:[%s7] sm:$0xff]
      %v1929 = vld [vmem:[%s7 + $0x8] sm:$0xff]
      %v1930 = vld [vmem:[%s7 + $0x10] sm:$0xff]
      %v1931 = vld [vmem:[%s7 + $0x18] sm:$0xff]
      %v1932 = vld [vmem:[%s7 + $0x20] sm:$0xff]
      %v1933 = vld [vmem:[%s7 + $0x28] sm:$0xff]
      %v1934 = vld [vmem:[%s7 + $0x30] sm:$0xff]
      %v1935 = vld [vmem:[%s7 + $0x38] sm:$0xff]
      %1937 = vset.pattern.permute.xlu0 0
      %1938 = vperm.xlu0 %1937, %v1928
      %v1939 = vpop.permute.xlu0 %1938
      %1942 = vset.pattern.permute.xlu0 0
      %1943 = vperm.xlu0 %1942, %v1929
      %v1944 = vpop.permute.xlu0 %1943
      %1947 = vset.pattern.permute.xlu0 0
      %1948 = vperm.xlu0 %1947, %v1930
      %v1949 = vpop.permute.xlu0 %1948
      %1952 = vset.pattern.permute.xlu0 0
      %1953 = vperm.xlu0 %1952, %v1931
      %v1954 = vpop.permute.xlu0 %1953
      %1957 = vset.pattern.permute.xlu0 0
      %1958 = vperm.xlu0 %1957, %v1932
      %v1959 = vpop.permute.xlu0 %1958
      %1962 = vset.pattern.permute.xlu0 0
      %1963 = vperm.xlu0 %1962, %v1933
      %v1964 = vpop.permute.xlu0 %1963
      %1967 = vset.pattern.permute.xlu0 0
      %1968 = vperm.xlu0 %1967, %v1934
      %v1969 = vpop.permute.xlu0 %1968
      %1972 = vset.pattern.permute.xlu0 0
      %1973 = vperm.xlu0 %1972, %v1935
      %v1974 = vpop.permute.xlu0 %1973
      %v1984 = vunpack.c.l.b16 %v1920
      %v1985 = vunpack.c.l.b16 %v1921
      %v1986 = vunpack.c.l.b16 %v1922
      %v1987 = vunpack.c.l.b16 %v1923
      %v1988 = vunpack.c.l.b16 %v1924
      %v1989 = vunpack.c.l.b16 %v1925
      %v1990 = vunpack.c.l.b16 %v1926
      %v1991 = vunpack.c.l.b16 %v1927
      %v1992 = vpack.c.b16 %v1985, %v1984
      %v1993 = vpack.c.b16 %v1987, %v1986
      %v1994 = vpack.c.b16 %v1989, %v1988
      %v1995 = vpack.c.b16 %v1991, %v1990
      %vm1996 = vcmask 785408
      %v1998 = vsel %vm1996, %v1992, 0
      %v2001 = vsel %vm1996, %v1993, 0
      %v2004 = vsel %vm1996, %v1994, 0
      %v2007 = vsel %vm1996, %v1995, 0
      %2009 = vmatprep.subr.bf16.mxu0 %v1873
      %2010 = vmatpush1.bf16.msra.mxu0 %v1872
      %2011 = vmatprep.subr.bf16.mxu0 %v1881
      %2012 = vmatpush1.bf16.msra.mxu0 %v1880
      %2013 = vmatprep.subr.bf16.mxu0 %v1889
      %2014 = vmatpush1.bf16.msra.mxu0 %v1888
      %2015 = vmatprep.subr.bf16.mxu0 %v1897
      %2016 = vmatpush1.bf16.msra.mxu0 %v1896
      %2017 = vmatprep.subr.bf16.mxu0 %v1905
      %2018 = vmatpush1.bf16.msra.mxu0 %v1904
      %2019 = vmatprep.subr.bf16.mxu0 %v1913
      %2020 = vmatpush1.bf16.msra.mxu0 %v1912
      %2021 = vmatprep.subr.bf16.mxu0 0
      %2022 = vmatpush1.bf16.msra.mxu0 0
      %2023 = vmatprep.subr.bf16.mxu0 0
      %2024 = vmatpush1.bf16.msra.mxu0 0
      %2025 = vmatprep.subr.bf16.mxu0 0
      %2026 = vmatpush1.bf16.msra.mxu0 0
      %2027 = vmatprep.subr.bf16.mxu0 0
      %2028 = vmatpush1.bf16.msra.mxu0 0
      %2029 = vmatprep.subr.bf16.mxu0 0
      %2030 = vmatpush1.bf16.msra.mxu0 0
      %2031 = vmatprep.subr.bf16.mxu0 0
      %2032 = vmatpush1.bf16.msra.mxu0 0
      %2033 = vmatprep.subr.bf16.mxu0 0
      %2034 = vmatpush1.bf16.msra.mxu0 0
      %2035 = vmatprep.subr.bf16.mxu0 0
      %2036 = vmatpush1.bf16.msra.mxu0 0
      %2037 = vmatprep.subr.bf16.mxu0 0
      %2038 = vmatpush1.bf16.msra.mxu0 0
      %2039 = vmatprep.subr.bf16.mxu0 0
      %2040 = vmatpush1.bf16.msra.mxu0 0
      %2041 = vmatprep.mubr.bf16.mxu0 0
      %2042 = vmatmul.mubr.bf16.gmra.mrb[0].mxu0 %v1998
      %v2043 = vpop.f32.mrb[0].mxu0
      %v2044 = vadd.f32 %v1939, %v2043
      %v2045 = vpop.f32.mrb[0].mxu0
      %v2046 = vadd.f32 %v1939, %v2045
      %v2047 = vpop.f32.mrb[0].mxu0
      %v2048 = vadd.f32 %v1944, %v2047
      %v2049 = vpop.f32.mrb[0].mxu0
      %v2050 = vadd.f32 %v1944, %v2049
      %2051 = vmatprep.mubr.bf16.mxu0 0
      %2052 = vmatmul.mubr.bf16.gmra.mrb[0].mxu0 %v2001
      %v2053 = vpop.f32.mrb[0].mxu0
      %v2054 = vadd.f32 %v1949, %v2053
      %v2055 = vpop.f32.mrb[0].mxu0
      %v2056 = vadd.f32 %v1949, %v2055
      %v2057 = vpop.f32.mrb[0].mxu0
      %v2058 = vadd.f32 %v1954, %v2057
      %v2059 = vpop.f32.mrb[0].mxu0
      %v2060 = vadd.f32 %v1954, %v2059
      %2061 = vmatprep.mubr.bf16.mxu0 0
      %2062 = vmatmul.mubr.bf16.gmra.mrb[0].mxu0 %v2004
      %v2063 = vpop.f32.mrb[0].mxu0
      %v2064 = vadd.f32 %v1959, %v2063
      %v2065 = vpop.f32.mrb[0].mxu0
      %v2066 = vadd.f32 %v1959, %v2065
      %v2067 = vpop.f32.mrb[0].mxu0
      %v2068 = vadd.f32 %v1964, %v2067
      %v2069 = vpop.f32.mrb[0].mxu0
      %v2070 = vadd.f32 %v1964, %v2069
      %2071 = vmatprep.mubr.bf16.mxu0 0
      %2072 = vmatmul.mubr.bf16.gmra.mrb[0].mxu0 %v2007
      %v2073 = vpop.f32.mrb[0].mxu0
      %v2074 = vadd.f32 %v1969, %v2073
      %v2075 = vpop.f32.mrb[0].mxu0
      %v2076 = vadd.f32 %v1969, %v2075
      %v2077 = vpop.f32.mrb[0].mxu0
      %v2078 = vadd.f32 %v1974, %v2077
      %v2079 = vpop.f32.mrb[0].mxu0
      %v2080 = vadd.f32 %v1974, %v2079
      %2081 = vdwg.mxu0
      %2082 = vmatprep.subr.bf16.mxu0 %v1875
      %2083 = vmatpush1.bf16.msra.mxu0 %v1874
      %2084 = vmatprep.subr.bf16.mxu0 %v1883
      %2085 = vmatpush1.bf16.msra.mxu0 %v1882
      %2086 = vmatprep.subr.bf16.mxu0 %v1891
      %2087 = vmatpush1.bf16.msra.mxu0 %v1890
      %2088 = vmatprep.subr.bf16.mxu0 %v1899
      %2089 = vmatpush1.bf16.msra.mxu0 %v1898
      %2090 = vmatprep.subr.bf16.mxu0 %v1907
      %2091 = vmatpush1.bf16.msra.mxu0 %v1906
      %2092 = vmatprep.subr.bf16.mxu0 %v1915
      %2093 = vmatpush1.bf16.msra.mxu0 %v1914
      %2094 = vmatprep.subr.bf16.mxu0 0
      %2095 = vmatpush1.bf16.msra.mxu0 0
      %2096 = vmatprep.subr.bf16.mxu0 0
      %2097 = vmatpush1.bf16.msra.mxu0 0
      %2098 = vmatprep.subr.bf16.mxu0 0
      %2099 = vmatpush1.bf16.msra.mxu0 0
      %2100 = vmatprep.subr.bf16.mxu0 0
      %2101 = vmatpush1.bf16.msra.mxu0 0
      %2102 = vmatprep.subr.bf16.mxu0 0
      %2103 = vmatpush1.bf16.msra.mxu0 0
      %2104 = vmatprep.subr.bf16.mxu0 0
      %2105 = vmatpush1.bf16.msra.mxu0 0
      %2106 = vmatprep.subr.bf16.mxu0 0
      %2107 = vmatpush1.bf16.msra.mxu0 0
      %2108 = vmatprep.subr.bf16.mxu0 0
      %2109 = vmatpush1.bf16.msra.mxu0 0
      %2110 = vmatprep.subr.bf16.mxu0 0
      %2111 = vmatpush1.bf16.msra.mxu0 0
      %2112 = vmatprep.subr.bf16.mxu0 0
      %2113 = vmatpush1.bf16.msra.mxu0 0
      %2114 = vmatprep.mubr.bf16.mxu0 0
      %2115 = vmatmul.mubr.bf16.gmra.mrb[0].mxu0 %v1998
      %v2116 = vpop.f32.mrb[0].mxu0
      %v2117 = vadd.f32 %v1939, %v2116
      %v2118 = vpop.f32.mrb[0].mxu0
      %v2119 = vadd.f32 %v1939, %v2118
      %v2120 = vpop.f32.mrb[0].mxu0
      %v2121 = vadd.f32 %v1944, %v2120
      %v2122 = vpop.f32.mrb[0].mxu0
      %v2123 = vadd.f32 %v1944, %v2122
      %2124 = vmatprep.mubr.bf16.mxu0 0
      %2125 = vmatmul.mubr.bf16.gmra.mrb[0].mxu0 %v2001
      %v2126 = vpop.f32.mrb[0].mxu0
      %v2127 = vadd.f32 %v1949, %v2126
      %v2128 = vpop.f32.mrb[0].mxu0
      %v2129 = vadd.f32 %v1949, %v2128
      %v2130 = vpop.f32.mrb[0].mxu0
      %v2131 = vadd.f32 %v1954, %v2130
      %v2132 = vpop.f32.mrb[0].mxu0
      %v2133 = vadd.f32 %v1954, %v2132
      %2134 = vmatprep.mubr.bf16.mxu0 0
      %2135 = vmatmul.mubr.bf16.gmra.mrb[0].mxu0 %v2004
      %v2136 = vpop.f32.mrb[0].mxu0
      %v2137 = vadd.f32 %v1959, %v2136
      %v2138 = vpop.f32.mrb[0].mxu0
      %v2139 = vadd.f32 %v1959, %v2138
      %v2140 = vpop.f32.mrb[0].mxu0
      %v2141 = vadd.f32 %v1964, %v2140
      %v2142 = vpop.f32.mrb[0].mxu0
      %v2143 = vadd.f32 %v1964, %v2142
      %2144 = vmatprep.mubr.bf16.mxu0 0
      %2145 = vmatmul.mubr.bf16.gmra.mrb[0].mxu0 %v2007
      %v2146 = vpop.f32.mrb[0].mxu0
      %v2147 = vadd.f32 %v1969, %v2146
      %v2148 = vpop.f32.mrb[0].mxu0
      %v2149 = vadd.f32 %v1969, %v2148
      %v2150 = vpop.f32.mrb[0].mxu0
      %v2151 = vadd.f32 %v1974, %v2150
      %v2152 = vpop.f32.mrb[0].mxu0
      %v2153 = vadd.f32 %v1974, %v2152
      %2154 = vdwg.mxu0
      %2155 = vmatprep.subr.bf16.mxu0 %v1877
      %2156 = vmatpush1.bf16.msra.mxu0 %v1876
      %2157 = vmatprep.subr.bf16.mxu0 %v1885
      %2158 = vmatpush1.bf16.msra.mxu0 %v1884
      %2159 = vmatprep.subr.bf16.mxu0 %v1893
      %2160 = vmatpush1.bf16.msra.mxu0 %v1892
      %2161 = vmatprep.subr.bf16.mxu0 %v1901
      %2162 = vmatpush1.bf16.msra.mxu0 %v1900
      %2163 = vmatprep.subr.bf16.mxu0 %v1909
      %2164 = vmatpush1.bf16.msra.mxu0 %v1908
      %2165 = vmatprep.subr.bf16.mxu0 %v1917
      %2166 = vmatpush1.bf16.msra.mxu0 %v1916
      %2167 = vmatprep.subr.bf16.mxu0 0
      %2168 = vmatpush1.bf16.msra.mxu0 0
      %2169 = vmatprep.subr.bf16.mxu0 0
      %2170 = vmatpush1.bf16.msra.mxu0 0
      %2171 = vmatprep.subr.bf16.mxu0 0
      %2172 = vmatpush1.bf16.msra.mxu0 0
      %2173 = vmatprep.subr.bf16.mxu0 0
      %2174 = vmatpush1.bf16.msra.mxu0 0
      %2175 = vmatprep.subr.bf16.mxu0 0
      %2176 = vmatpush1.bf16.msra.mxu0 0
      %2177 = vmatprep.subr.bf16.mxu0 0
      %2178 = vmatpush1.bf16.msra.mxu0 0
      %2179 = vmatprep.subr.bf16.mxu0 0
      %2180 = vmatpush1.bf16.msra.mxu0 0
      %2181 = vmatprep.subr.bf16.mxu0 0
      %2182 = vmatpush1.bf16.msra.mxu0 0
      %2183 = vmatprep.subr.bf16.mxu0 0
      %2184 = vmatpush1.bf16.msra.mxu0 0
      %2185 = vmatprep.subr.bf16.mxu0 0
      %2186 = vmatpush1.bf16.msra.mxu0 0
      %2187 = vmatprep.mubr.bf16.mxu0 0
      %2188 = vmatmul.mubr.bf16.gmra.mrb[0].mxu0 %v1998
      %v2189 = vpop.f32.mrb[0].mxu0
      %v2190 = vadd.f32 %v1939, %v2189
      %v2191 = vpop.f32.mrb[0].mxu0
      %v2192 = vadd.f32 %v1939, %v2191
      %v2193 = vpop.f32.mrb[0].mxu0
      %v2194 = vadd.f32 %v1944, %v2193
      %v2195 = vpop.f32.mrb[0].mxu0
      %v2196 = vadd.f32 %v1944, %v2195
      %2197 = vmatprep.mubr.bf16.mxu0 0
      %2198 = vmatmul.mubr.bf16.gmra.mrb[0].mxu0 %v2001
      %v2199 = vpop.f32.mrb[0].mxu0
      %v2200 = vadd.f32 %v1949, %v2199
      %v2201 = vpop.f32.mrb[0].mxu0
      %v2202 = vadd.f32 %v1949, %v2201
      %v2203 = vpop.f32.mrb[0].mxu0
      %v2204 = vadd.f32 %v1954, %v2203
      %v2205 = vpop.f32.mrb[0].mxu0
      %v2206 = vadd.f32 %v1954, %v2205
      %2207 = vmatprep.mubr.bf16.mxu0 0
      %2208 = vmatmul.mubr.bf16.gmra.mrb[0].mxu0 %v2004
      %v2209 = vpop.f32.mrb[0].mxu0
      %v2210 = vadd.f32 %v1959, %v2209
      %v2211 = vpop.f32.mrb[0].mxu0
      %v2212 = vadd.f32 %v1959, %v2211
      %v2213 = vpop.f32.mrb[0].mxu0
      %v2214 = vadd.f32 %v1964, %v2213
      %v2215 = vpop.f32.mrb[0].mxu0
      %v2216 = vadd.f32 %v1964, %v2215
      %2217 = vmatprep.mubr.bf16.mxu0 0
      %2218 = vmatmul.mubr.bf16.gmra.mrb[0].mxu0 %v2007
      %v2219 = vpop.f32.mrb[0].mxu0
      %v2220 = vadd.f32 %v1969, %v2219
      %v2221 = vpop.f32.mrb[0].mxu0
      %v2222 = vadd.f32 %v1969, %v2221
      %v2223 = vpop.f32.mrb[0].mxu0
      %v2224 = vadd.f32 %v1974, %v2223
      %v2225 = vpop.f32.mrb[0].mxu0
      %v2226 = vadd.f32 %v1974, %v2225
      %2227 = vdwg.mxu0
      %2228 = vmatprep.subr.bf16.mxu0 %v1879
      %2229 = vmatpush1.bf16.msra.mxu0 %v1878
      %2230 = vmatprep.subr.bf16.mxu0 %v1887
      %2231 = vmatpush1.bf16.msra.mxu0 %v1886
      %2232 = vmatprep.subr.bf16.mxu0 %v1895
      %2233 = vmatpush1.bf16.msra.mxu0 %v1894
      %2234 = vmatprep.subr.bf16.mxu0 %v1903
      %2235 = vmatpush1.bf16.msra.mxu0 %v1902
      %2236 = vmatprep.subr.bf16.mxu0 %v1911
      %2237 = vmatpush1.bf16.msra.mxu0 %v1910
      %2238 = vmatprep.subr.bf16.mxu0 %v1919
      %2239 = vmatpush1.bf16.msra.mxu0 %v1918
      %2240 = vmatprep.subr.bf16.mxu0 0
      %2241 = vmatpush1.bf16.msra.mxu0 0
      %2242 = vmatprep.subr.bf16.mxu0 0
      %2243 = vmatpush1.bf16.msra.mxu0 0
      %2244 = vmatprep.subr.bf16.mxu0 0
      %2245 = vmatpush1.bf16.msra.mxu0 0
      %2246 = vmatprep.subr.bf16.mxu0 0
      %2247 = vmatpush1.bf16.msra.mxu0 0
      %2248 = vmatprep.subr.bf16.mxu0 0
      %2249 = vmatpush1.bf16.msra.mxu0 0
      %2250 = vmatprep.subr.bf16.mxu0 0
      %2251 = vmatpush1.bf16.msra.mxu0 0
      %2252 = vmatprep.subr.bf16.mxu0 0
      %2253 = vmatpush1.bf16.msra.mxu0 0
      %2254 = vmatprep.subr.bf16.mxu0 0
      %2255 = vmatpush1.bf16.msra.mxu0 0
      %2256 = vmatprep.subr.bf16.mxu0 0
      %2257 = vmatpush1.bf16.msra.mxu0 0
      %2258 = vmatprep.subr.bf16.mxu0 0
      %2259 = vmatpush1.bf16.msra.mxu0 0
      %2260 = vmatprep.mubr.bf16.mxu0 0
      %2261 = vmatmul.mubr.bf16.gmra.mrb[0].mxu0 %v1998
      %v2262 = vpop.f32.mrb[0].mxu0
      %v2263 = vadd.f32 %v1939, %v2262
      %v2264 = vpop.f32.mrb[0].mxu0
      %v2265 = vadd.f32 %v1939, %v2264
      %v2266 = vpop.f32.mrb[0].mxu0
      %v2267 = vadd.f32 %v1944, %v2266
      %v2268 = vpop.f32.mrb[0].mxu0
      %v2269 = vadd.f32 %v1944, %v2268
      %2270 = vmatprep.mubr.bf16.mxu0 0
      %2271 = vmatmul.mubr.bf16.gmra.mrb[0].mxu0 %v2001
      %v2272 = vpop.f32.mrb[0].mxu0
      %v2273 = vadd.f32 %v1949, %v2272
      %v2274 = vpop.f32.mrb[0].mxu0
      %v2275 = vadd.f32 %v1949, %v2274
      %v2276 = vpop.f32.mrb[0].mxu0
      %v2277 = vadd.f32 %v1954, %v2276
      %v2278 = vpop.f32.mrb[0].mxu0
      %v2279 = vadd.f32 %v1954, %v2278
      %2280 = vmatprep.mubr.bf16.mxu0 0
      %2281 = vmatmul.mubr.bf16.gmra.mrb[0].mxu0 %v2004
      %v2282 = vpop.f32.mrb[0].mxu0
      %v2283 = vadd.f32 %v1959, %v2282
      %v2284 = vpop.f32.mrb[0].mxu0
      %v2285 = vadd.f32 %v1959, %v2284
      %v2286 = vpop.f32.mrb[0].mxu0
      %v2287 = vadd.f32 %v1964, %v2286
      %v2288 = vpop.f32.mrb[0].mxu0
      %v2289 = vadd.f32 %v1964, %v2288
      %2290 = vmatprep.mubr.bf16.mxu0 0
      %2291 = vmatmul.mubr.bf16.gmra.mrb[0].mxu0 %v2007
      %v2292 = vpop.f32.mrb[0].mxu0
      %v2293 = vadd.f32 %v1969, %v2292
      %v2294 = vpop.f32.mrb[0].mxu0
      %v2295 = vadd.f32 %v1969, %v2294
      %v2296 = vpop.f32.mrb[0].mxu0
      %v2297 = vadd.f32 %v1974, %v2296
      %v2298 = vpop.f32.mrb[0].mxu0
      %v2299 = vadd.f32 %v1974, %v2298
      %2300 = vdwg.mxu0
      %v2301 = vmax.f32 %v2044, 0.0
      %v2302 = vmax.f32 %v2046, 0.0
      %v2303 = vmax.f32 %v2117, 0.0
      %v2304 = vmax.f32 %v2119, 0.0
      %v2305 = vmax.f32 %v2190, 0.0
      %v2306 = vmax.f32 %v2192, 0.0
      %v2307 = vmax.f32 %v2263, 0.0
      %v2308 = vmax.f32 %v2265, 0.0
      %v2309 = vmax.f32 %v2048, 0.0
      %v2310 = vmax.f32 %v2050, 0.0
      %v2311 = vmax.f32 %v2121, 0.0
      %v2312 = vmax.f32 %v2123, 0.0
      %v2313 = vmax.f32 %v2194, 0.0
      %v2314 = vmax.f32 %v2196, 0.0
      %v2315 = vmax.f32 %v2267, 0.0
      %v2316 = vmax.f32 %v2269, 0.0
      %v2317 = vmax.f32 %v2054, 0.0
      %v2318 = vmax.f32 %v2056, 0.0
      %v2319 = vmax.f32 %v2127, 0.0
      %v2320 = vmax.f32 %v2129, 0.0
      %v2321 = vmax.f32 %v2200, 0.0
      %v2322 = vmax.f32 %v2202, 0.0
      %v2323 = vmax.f32 %v2273, 0.0
      %v2324 = vmax.f32 %v2275, 0.0
      %v2325 = vmax.f32 %v2058, 0.0
      %v2326 = vmax.f32 %v2060, 0.0
      %v2327 = vmax.f32 %v2131, 0.0
      %v2328 = vmax.f32 %v2133, 0.0
      %v2329 = vmax.f32 %v2204, 0.0
      %v2330 = vmax.f32 %v2206, 0.0
      %v2331 = vmax.f32 %v2277, 0.0
      %v2332 = vmax.f32 %v2279, 0.0
      %v2333 = vmax.f32 %v2064, 0.0
      %v2334 = vmax.f32 %v2066, 0.0
      %v2335 = vmax.f32 %v2137, 0.0
      %v2336 = vmax.f32 %v2139, 0.0
      %v2337 = vmax.f32 %v2210, 0.0
      %v2338 = vmax.f32 %v2212, 0.0
      %v2339 = vmax.f32 %v2283, 0.0
      %v2340 = vmax.f32 %v2285, 0.0
      %v2341 = vmax.f32 %v2068, 0.0
      %v2342 = vmax.f32 %v2070, 0.0
      %v2343 = vmax.f32 %v2141, 0.0
      %v2344 = vmax.f32 %v2143, 0.0
      %v2345 = vmax.f32 %v2214, 0.0
      %v2346 = vmax.f32 %v2216, 0.0
      %v2347 = vmax.f32 %v2287, 0.0
      %v2348 = vmax.f32 %v2289, 0.0
      %v2349 = vmax.f32 %v2074, 0.0
      %v2350 = vmax.f32 %v2076, 0.0
      %v2351 = vmax.f32 %v2147, 0.0
      %v2352 = vmax.f32 %v2149, 0.0
      %v2353 = vmax.f32 %v2220, 0.0
      %v2354 = vmax.f32 %v2222, 0.0
      %v2355 = vmax.f32 %v2293, 0.0
      %v2356 = vmax.f32 %v2295, 0.0
      %v2357 = vmax.f32 %v2078, 0.0
      %v2358 = vmax.f32 %v2080, 0.0
      %v2359 = vmax.f32 %v2151, 0.0
      %v2360 = vmax.f32 %v2153, 0.0
      %v2361 = vmax.f32 %v2224, 0.0
      %v2362 = vmax.f32 %v2226, 0.0
      %v2363 = vmax.f32 %v2297, 0.0
      %v2364 = vmax.f32 %v2299, 0.0
      %2365 = vrot.lane.b32.xlu0 %v2301, 124
      %v2366 = vpop.permute.xlu0 %2365
      %2367 = vrot.lane.b32.xlu0 %v2309, 124
      %v2368 = vpop.permute.xlu0 %2367
      %2369 = vrot.lane.b32.xlu0 %v2317, 124
      %v2370 = vpop.permute.xlu0 %2369
      %2371 = vrot.lane.b32.xlu0 %v2325, 124
      %v2372 = vpop.permute.xlu0 %2371
      %2373 = vrot.lane.b32.xlu0 %v2333, 124
      %v2374 = vpop.permute.xlu0 %2373
      %2375 = vrot.lane.b32.xlu0 %v2341, 124
      %v2376 = vpop.permute.xlu0 %2375
      %2377 = vrot.lane.b32.xlu0 %v2349, 124
      %v2378 = vpop.permute.xlu0 %2377
      %2379 = vrot.lane.b32.xlu0 %v2357, 124
      %v2380 = vpop.permute.xlu0 %2379
      %2381 = vrot.lane.b32.xlu0 %v2302, 124
      %v2382 = vpop.permute.xlu0 %2381
      %2383 = vrot.lane.b32.xlu0 %v2310, 124
      %v2384 = vpop.permute.xlu0 %2383
      %2385 = vrot.lane.b32.xlu0 %v2318, 124
      %v2386 = vpop.permute.xlu0 %2385
      %2387 = vrot.lane.b32.xlu0 %v2326, 124
      %v2388 = vpop.permute.xlu0 %2387
      %2389 = vrot.lane.b32.xlu0 %v2334, 124
      %v2390 = vpop.permute.xlu0 %2389
      %2391 = vrot.lane.b32.xlu0 %v2342, 124
      %v2392 = vpop.permute.xlu0 %2391
      %2393 = vrot.lane.b32.xlu0 %v2350, 124
      %v2394 = vpop.permute.xlu0 %2393
      %2395 = vrot.lane.b32.xlu0 %v2358, 124
      %v2396 = vpop.permute.xlu0 %2395
      %2397 = vrot.lane.b32.xlu0 %v2303, 124
      %v2398 = vpop.permute.xlu0 %2397
      %2399 = vrot.lane.b32.xlu0 %v2311, 124
      %v2400 = vpop.permute.xlu0 %2399
      %2401 = vrot.lane.b32.xlu0 %v2319, 124
      %v2402 = vpop.permute.xlu0 %2401
      %2403 = vrot.lane.b32.xlu0 %v2327, 124
      %v2404 = vpop.permute.xlu0 %2403
      %2405 = vrot.lane.b32.xlu0 %v2335, 124
      %v2406 = vpop.permute.xlu0 %2405
      %2407 = vrot.lane.b32.xlu0 %v2343, 124
      %v2408 = vpop.permute.xlu0 %2407
      %2409 = vrot.lane.b32.xlu0 %v2351, 124
      %v2410 = vpop.permute.xlu0 %2409
      %2411 = vrot.lane.b32.xlu0 %v2359, 124
      %v2412 = vpop.permute.xlu0 %2411
      %2413 = vrot.lane.b32.xlu0 %v2304, 124
      %v2414 = vpop.permute.xlu0 %2413
      %2415 = vrot.lane.b32.xlu0 %v2312, 124
      %v2416 = vpop.permute.xlu0 %2415
      %2417 = vrot.lane.b32.xlu0 %v2320, 124
      %v2418 = vpop.permute.xlu0 %2417
      %2419 = vrot.lane.b32.xlu0 %v2328, 124
      %v2420 = vpop.permute.xlu0 %2419
      %2421 = vrot.lane.b32.xlu0 %v2336, 124
      %v2422 = vpop.permute.xlu0 %2421
      %2423 = vrot.lane.b32.xlu0 %v2344, 124
      %v2424 = vpop.permute.xlu0 %2423
      %2425 = vrot.lane.b32.xlu0 %v2352, 124
      %v2426 = vpop.permute.xlu0 %2425
      %2427 = vrot.lane.b32.xlu0 %v2360, 124
      %v2428 = vpop.permute.xlu0 %2427
      %2429 = vrot.lane.b32.xlu0 %v2305, 124
      %v2430 = vpop.permute.xlu0 %2429
      %2431 = vrot.lane.b32.xlu0 %v2313, 124
      %v2432 = vpop.permute.xlu0 %2431
      %2433 = vrot.lane.b32.xlu0 %v2321, 124
      %v2434 = vpop.permute.xlu0 %2433
      %2435 = vrot.lane.b32.xlu0 %v2329, 124
      %v2436 = vpop.permute.xlu0 %2435
      %2437 = vrot.lane.b32.xlu0 %v2337, 124
      %v2438 = vpop.permute.xlu0 %2437
      %2439 = vrot.lane.b32.xlu0 %v2345, 124
      %v2440 = vpop.permute.xlu0 %2439
      %2441 = vrot.lane.b32.xlu0 %v2353, 124
      %v2442 = vpop.permute.xlu0 %2441
      %2443 = vrot.lane.b32.xlu0 %v2361, 124
      %v2444 = vpop.permute.xlu0 %2443
      %2445 = vrot.lane.b32.xlu0 %v2306, 124
      %v2446 = vpop.permute.xlu0 %2445
      %2447 = vrot.lane.b32.xlu0 %v2314, 124
      %v2448 = vpop.permute.xlu0 %2447
      %2449 = vrot.lane.b32.xlu0 %v2322, 124
      %v2450 = vpop.permute.xlu0 %2449
      %2451 = vrot.lane.b32.xlu0 %v2330, 124
      %v2452 = vpop.permute.xlu0 %2451
      %2453 = vrot.lane.b32.xlu0 %v2338, 124
      %v2454 = vpop.permute.xlu0 %2453
      %2455 = vrot.lane.b32.xlu0 %v2346, 124
      %v2456 = vpop.permute.xlu0 %2455
      %2457 = vrot.lane.b32.xlu0 %v2354, 124
      %v2458 = vpop.permute.xlu0 %2457
      %2459 = vrot.lane.b32.xlu0 %v2362, 124
      %v2460 = vpop.permute.xlu0 %2459
      %2461 = vrot.lane.b32.xlu0 %v2307, 124
      %v2462 = vpop.permute.xlu0 %2461
      %2463 = vrot.lane.b32.xlu0 %v2315, 124
      %v2464 = vpop.permute.xlu0 %2463
      %2465 = vrot.lane.b32.xlu0 %v2323, 124
      %v2466 = vpop.permute.xlu0 %2465
      %2467 = vrot.lane.b32.xlu0 %v2331, 124
      %v2468 = vpop.permute.xlu0 %2467
      %2469 = vrot.lane.b32.xlu0 %v2339, 124
      %v2470 = vpop.permute.xlu0 %2469
      %2471 = vrot.lane.b32.xlu0 %v2347, 124
      %v2472 = vpop.permute.xlu0 %2471
      %2473 = vrot.lane.b32.xlu0 %v2355, 124
      %v2474 = vpop.permute.xlu0 %2473
      %2475 = vrot.lane.b32.xlu0 %v2363, 124
      %v2476 = vpop.permute.xlu0 %2475
      %2477 = vrot.lane.b32.xlu0 %v2308, 124
      %v2478 = vpop.permute.xlu0 %2477
      %2479 = vrot.lane.b32.xlu0 %v2316, 124
      %v2480 = vpop.permute.xlu0 %2479
      %2481 = vrot.lane.b32.xlu0 %v2324, 124
      %v2482 = vpop.permute.xlu0 %2481
      %2483 = vrot.lane.b32.xlu0 %v2332, 124
      %v2484 = vpop.permute.xlu0 %2483
      %2485 = vrot.lane.b32.xlu0 %v2340, 124
      %v2486 = vpop.permute.xlu0 %2485
      %2487 = vrot.lane.b32.xlu0 %v2348, 124
      %v2488 = vpop.permute.xlu0 %2487
      %2489 = vrot.lane.b32.xlu0 %v2356, 124
      %v2490 = vpop.permute.xlu0 %2489
      %2491 = vrot.lane.b32.xlu0 %v2364, 124
      %v2492 = vpop.permute.xlu0 %2491
      %v2493 = vsel %vm1775, %v2462, %v2478
      %v2494 = vsel %vm1775, %v2464, %v2480
      %v2495 = vsel %vm1775, %v2466, %v2482
      %v2496 = vsel %vm1775, %v2468, %v2484
      %v2497 = vsel %vm1775, %v2470, %v2486
      %v2498 = vsel %vm1775, %v2472, %v2488
      %v2499 = vsel %vm1775, %v2474, %v2490
      %v2500 = vsel %vm1775, %v2476, %v2492
      %v2501 = vsel %vm1775, %v2446, %v2462
      %v2502 = vsel %vm1775, %v2448, %v2464
      %v2503 = vsel %vm1775, %v2450, %v2466
      %v2504 = vsel %vm1775, %v2452, %v2468
      %v2505 = vsel %vm1775, %v2454, %v2470
      %v2506 = vsel %vm1775, %v2456, %v2472
      %v2507 = vsel %vm1775, %v2458, %v2474
      %v2508 = vsel %vm1775, %v2460, %v2476
      %v2509 = vsel %vm1775, %v2430, %v2446
      %v2510 = vsel %vm1775, %v2432, %v2448
      %v2511 = vsel %vm1775, %v2434, %v2450
      %v2512 = vsel %vm1775, %v2436, %v2452
      %v2513 = vsel %vm1775, %v2438, %v2454
      %v2514 = vsel %vm1775, %v2440, %v2456
      %v2515 = vsel %vm1775, %v2442, %v2458
      %v2516 = vsel %vm1775, %v2444, %v2460
      %v2517 = vsel %vm1775, %v2414, %v2430
      %v2518 = vsel %vm1775, %v2416, %v2432
      %v2519 = vsel %vm1775, %v2418, %v2434
      %v2520 = vsel %vm1775, %v2420, %v2436
      %v2521 = vsel %vm1775, %v2422, %v2438
      %v2522 = vsel %vm1775, %v2424, %v2440
      %v2523 = vsel %vm1775, %v2426, %v2442
      %v2524 = vsel %vm1775, %v2428, %v2444
      %v2525 = vsel %vm1775, %v2398, %v2414
      %v2526 = vsel %vm1775, %v2400, %v2416
      %v2527 = vsel %vm1775, %v2402, %v2418
      %v2528 = vsel %vm1775, %v2404, %v2420
      %v2529 = vsel %vm1775, %v2406, %v2422
      %v2530 = vsel %vm1775, %v2408, %v2424
      %v2531 = vsel %vm1775, %v2410, %v2426
      %v2532 = vsel %vm1775, %v2412, %v2428
      %v2533 = vsel %vm1775, %v2382, %v2398
      %v2534 = vsel %vm1775, %v2384, %v2400
      %v2535 = vsel %vm1775, %v2386, %v2402
      %v2536 = vsel %vm1775, %v2388, %v2404
      %v2537 = vsel %vm1775, %v2390, %v2406
      %v2538 = vsel %vm1775, %v2392, %v2408
      %v2539 = vsel %vm1775, %v2394, %v2410
      %v2540 = vsel %vm1775, %v2396, %v2412
      %v2541 = vsel %vm1775, %v2366, %v2382
      %v2542 = vsel %vm1775, %v2368, %v2384
      %v2543 = vsel %vm1775, %v2370, %v2386
      %v2544 = vsel %vm1775, %v2372, %v2388
      %v2545 = vsel %vm1775, %v2374, %v2390
      %v2546 = vsel %vm1775, %v2376, %v2392
      %v2547 = vsel %vm1775, %v2378, %v2394
      %v2548 = vsel %vm1775, %v2380, %v2396
      %v2549 = vsel %vm1775, %v2478, %v2366
      %v2550 = vsel %vm1775, %v2480, %v2368
      %v2551 = vsel %vm1775, %v2482, %v2370
      %v2552 = vsel %vm1775, %v2484, %v2372
      %v2553 = vsel %vm1775, %v2486, %v2374
      %v2554 = vsel %vm1775, %v2488, %v2376
      %v2555 = vsel %vm1775, %v2490, %v2378
      %v2556 = vsel %vm1775, %v2492, %v2380
      %v2557 = vmax.f32 %v2301, %v2541
      %v2558 = vmax.f32 %v2302, %v2533
      %v2559 = vmax.f32 %v2303, %v2525
      %v2560 = vmax.f32 %v2304, %v2517
      %v2561 = vmax.f32 %v2305, %v2509
      %v2562 = vmax.f32 %v2306, %v2501
      %v2563 = vmax.f32 %v2307, %v2493
      %v2564 = vmax.f32 %v2308, %v2549
      %v2565 = vmax.f32 %v2309, %v2542
      %v2566 = vmax.f32 %v2310, %v2534
      %v2567 = vmax.f32 %v2311, %v2526
      %v2568 = vmax.f32 %v2312, %v2518
      %v2569 = vmax.f32 %v2313, %v2510
      %v2570 = vmax.f32 %v2314, %v2502
      %v2571 = vmax.f32 %v2315, %v2494
      %v2572 = vmax.f32 %v2316, %v2550
      %v2573 = vmax.f32 %v2317, %v2543
      %v2574 = vmax.f32 %v2318, %v2535
      %v2575 = vmax.f32 %v2319, %v2527
      %v2576 = vmax.f32 %v2320, %v2519
      %v2577 = vmax.f32 %v2321, %v2511
      %v2578 = vmax.f32 %v2322, %v2503
      %v2579 = vmax.f32 %v2323, %v2495
      %v2580 = vmax.f32 %v2324, %v2551
      %v2581 = vmax.f32 %v2325, %v2544
      %v2582 = vmax.f32 %v2326, %v2536
      %v2583 = vmax.f32 %v2327, %v2528
      %v2584 = vmax.f32 %v2328, %v2520
      %v2585 = vmax.f32 %v2329, %v2512
      %v2586 = vmax.f32 %v2330, %v2504
      %v2587 = vmax.f32 %v2331, %v2496
      %v2588 = vmax.f32 %v2332, %v2552
      %v2589 = vmax.f32 %v2333, %v2545
      %v2590 = vmax.f32 %v2334, %v2537
      %v2591 = vmax.f32 %v2335, %v2529
      %v2592 = vmax.f32 %v2336, %v2521
      %v2593 = vmax.f32 %v2337, %v2513
      %v2594 = vmax.f32 %v2338, %v2505
      %v2595 = vmax.f32 %v2339, %v2497
      %v2596 = vmax.f32 %v2340, %v2553
      %v2597 = vmax.f32 %v2341, %v2546
      %v2598 = vmax.f32 %v2342, %v2538
      %v2599 = vmax.f32 %v2343, %v2530
      %v2600 = vmax.f32 %v2344, %v2522
      %v2601 = vmax.f32 %v2345, %v2514
      %v2602 = vmax.f32 %v2346, %v2506
      %v2603 = vmax.f32 %v2347, %v2498
      %v2604 = vmax.f32 %v2348, %v2554
      %v2605 = vmax.f32 %v2349, %v2547
      %v2606 = vmax.f32 %v2350, %v2539
      %v2607 = vmax.f32 %v2351, %v2531
      %v2608 = vmax.f32 %v2352, %v2523
      %v2609 = vmax.f32 %v2353, %v2515
      %v2610 = vmax.f32 %v2354, %v2507
      %v2611 = vmax.f32 %v2355, %v2499
      %v2612 = vmax.f32 %v2356, %v2555
      %v2613 = vmax.f32 %v2357, %v2548
      %v2614 = vmax.f32 %v2358, %v2540
      %v2615 = vmax.f32 %v2359, %v2532
      %v2616 = vmax.f32 %v2360, %v2524
      %v2617 = vmax.f32 %v2361, %v2516
      %v2618 = vmax.f32 %v2362, %v2508
      %v2619 = vmax.f32 %v2363, %v2500
      %v2620 = vmax.f32 %v2364, %v2556
      %2621 = vrot.lane.b32.xlu0 %v2557, 8
      %v2622 = vpop.permute.xlu0 %2621
      %2623 = vrot.lane.b32.xlu0 %v2565, 8
      %v2624 = vpop.permute.xlu0 %2623
      %2625 = vrot.lane.b32.xlu0 %v2573, 8
      %v2626 = vpop.permute.xlu0 %2625
      %2627 = vrot.lane.b32.xlu0 %v2581, 8
      %v2628 = vpop.permute.xlu0 %2627
      %2629 = vrot.lane.b32.xlu0 %v2589, 8
      %v2630 = vpop.permute.xlu0 %2629
      %2631 = vrot.lane.b32.xlu0 %v2597, 8
      %v2632 = vpop.permute.xlu0 %2631
      %2633 = vrot.lane.b32.xlu0 %v2605, 8
      %v2634 = vpop.permute.xlu0 %2633
      %2635 = vrot.lane.b32.xlu0 %v2613, 8
      %v2636 = vpop.permute.xlu0 %2635
      %2637 = vrot.lane.b32.xlu0 %v2558, 8
      %v2638 = vpop.permute.xlu0 %2637
      %2639 = vrot.lane.b32.xlu0 %v2566, 8
      %v2640 = vpop.permute.xlu0 %2639
      %2641 = vrot.lane.b32.xlu0 %v2574, 8
      %v2642 = vpop.permute.xlu0 %2641
      %2643 = vrot.lane.b32.xlu0 %v2582, 8
      %v2644 = vpop.permute.xlu0 %2643
      %2645 = vrot.lane.b32.xlu0 %v2590, 8
      %v2646 = vpop.permute.xlu0 %2645
      %2647 = vrot.lane.b32.xlu0 %v2598, 8
      %v2648 = vpop.permute.xlu0 %2647
      %2649 = vrot.lane.b32.xlu0 %v2606, 8
      %v2650 = vpop.permute.xlu0 %2649
      %2651 = vrot.lane.b32.xlu0 %v2614, 8
      %v2652 = vpop.permute.xlu0 %2651
      %2653 = vrot.lane.b32.xlu0 %v2559, 8
      %v2654 = vpop.permute.xlu0 %2653
      %2655 = vrot.lane.b32.xlu0 %v2567, 8
      %v2656 = vpop.permute.xlu0 %2655
      %2657 = vrot.lane.b32.xlu0 %v2575, 8
      %v2658 = vpop.permute.xlu0 %2657
      %2659 = vrot.lane.b32.xlu0 %v2583, 8
      %v2660 = vpop.permute.xlu0 %2659
      %2661 = vrot.lane.b32.xlu0 %v2591, 8
      %v2662 = vpop.permute.xlu0 %2661
      %2663 = vrot.lane.b32.xlu0 %v2599, 8
      %v2664 = vpop.permute.xlu0 %2663
      %2665 = vrot.lane.b32.xlu0 %v2607, 8
      %v2666 = vpop.permute.xlu0 %2665
      %2667 = vrot.lane.b32.xlu0 %v2615, 8
      %v2668 = vpop.permute.xlu0 %2667
      %2669 = vrot.lane.b32.xlu0 %v2560, 8
      %v2670 = vpop.permute.xlu0 %2669
      %2671 = vrot.lane.b32.xlu0 %v2568, 8
      %v2672 = vpop.permute.xlu0 %2671
      %2673 = vrot.lane.b32.xlu0 %v2576, 8
      %v2674 = vpop.permute.xlu0 %2673
      %2675 = vrot.lane.b32.xlu0 %v2584, 8
      %v2676 = vpop.permute.xlu0 %2675
      %2677 = vrot.lane.b32.xlu0 %v2592, 8
      %v2678 = vpop.permute.xlu0 %2677
      %2679 = vrot.lane.b32.xlu0 %v2600, 8
      %v2680 = vpop.permute.xlu0 %2679
      %2681 = vrot.lane.b32.xlu0 %v2608, 8
      %v2682 = vpop.permute.xlu0 %2681
      %2683 = vrot.lane.b32.xlu0 %v2616, 8
      %v2684 = vpop.permute.xlu0 %2683
      %2685 = vrot.lane.b32.xlu0 %v2561, 8
      %v2686 = vpop.permute.xlu0 %2685
      %2687 = vrot.lane.b32.xlu0 %v2569, 8
      %v2688 = vpop.permute.xlu0 %2687
      %2689 = vrot.lane.b32.xlu0 %v2577, 8
      %v2690 = vpop.permute.xlu0 %2689
      %2691 = vrot.lane.b32.xlu0 %v2585, 8
      %v2692 = vpop.permute.xlu0 %2691
      %2693 = vrot.lane.b32.xlu0 %v2593, 8
      %v2694 = vpop.permute.xlu0 %2693
      %2695 = vrot.lane.b32.xlu0 %v2601, 8
      %v2696 = vpop.permute.xlu0 %2695
      %2697 = vrot.lane.b32.xlu0 %v2609, 8
      %v2698 = vpop.permute.xlu0 %2697
      %2699 = vrot.lane.b32.xlu0 %v2617, 8
      %v2700 = vpop.permute.xlu0 %2699
      %2701 = vrot.lane.b32.xlu0 %v2562, 8
      %v2702 = vpop.permute.xlu0 %2701
      %2703 = vrot.lane.b32.xlu0 %v2570, 8
      %v2704 = vpop.permute.xlu0 %2703
      %2705 = vrot.lane.b32.xlu0 %v2578, 8
      %v2706 = vpop.permute.xlu0 %2705
      %2707 = vrot.lane.b32.xlu0 %v2586, 8
      %v2708 = vpop.permute.xlu0 %2707
      %2709 = vrot.lane.b32.xlu0 %v2594, 8
      %v2710 = vpop.permute.xlu0 %2709
      %2711 = vrot.lane.b32.xlu0 %v2602, 8
      %v2712 = vpop.permute.xlu0 %2711
      %2713 = vrot.lane.b32.xlu0 %v2610, 8
      %v2714 = vpop.permute.xlu0 %2713
      %2715 = vrot.lane.b32.xlu0 %v2618, 8
      %v2716 = vpop.permute.xlu0 %2715
      %2717 = vrot.lane.b32.xlu0 %v2563, 8
      %v2718 = vpop.permute.xlu0 %2717
      %2719 = vrot.lane.b32.xlu0 %v2571, 8
      %v2720 = vpop.permute.xlu0 %2719
      %2721 = vrot.lane.b32.xlu0 %v2579, 8
      %v2722 = vpop.permute.xlu0 %2721
      %2723 = vrot.lane.b32.xlu0 %v2587, 8
      %v2724 = vpop.permute.xlu0 %2723
      %2725 = vrot.lane.b32.xlu0 %v2595, 8
      %v2726 = vpop.permute.xlu0 %2725
      %2727 = vrot.lane.b32.xlu0 %v2603, 8
      %v2728 = vpop.permute.xlu0 %2727
      %2729 = vrot.lane.b32.xlu0 %v2611, 8
      %v2730 = vpop.permute.xlu0 %2729
      %2731 = vrot.lane.b32.xlu0 %v2619, 8
      %v2732 = vpop.permute.xlu0 %2731
      %2733 = vrot.lane.b32.xlu0 %v2564, 8
      %v2734 = vpop.permute.xlu0 %2733
      %2735 = vrot.lane.b32.xlu0 %v2572, 8
      %v2736 = vpop.permute.xlu0 %2735
      %2737 = vrot.lane.b32.xlu0 %v2580, 8
      %v2738 = vpop.permute.xlu0 %2737
      %2739 = vrot.lane.b32.xlu0 %v2588, 8
      %v2740 = vpop.permute.xlu0 %2739
      %2741 = vrot.lane.b32.xlu0 %v2596, 8
      %v2742 = vpop.permute.xlu0 %2741
      %2743 = vrot.lane.b32.xlu0 %v2604, 8
      %v2744 = vpop.permute.xlu0 %2743
      %2745 = vrot.lane.b32.xlu0 %v2612, 8
      %v2746 = vpop.permute.xlu0 %2745
      %2747 = vrot.lane.b32.xlu0 %v2620, 8
      %v2748 = vpop.permute.xlu0 %2747
      %vm2749 = vcmp.lt.s32.totalorder %v560, 8
      %v2750 = vsel %vm2749, %v2718, %v2734
      %v2751 = vsel %vm2749, %v2720, %v2736
      %v2752 = vsel %vm2749, %v2722, %v2738
      %v2753 = vsel %vm2749, %v2724, %v2740
      %v2754 = vsel %vm2749, %v2726, %v2742
      %v2755 = vsel %vm2749, %v2728, %v2744
      %v2756 = vsel %vm2749, %v2730, %v2746
      %v2757 = vsel %vm2749, %v2732, %v2748
      %v2758 = vsel %vm2749, %v2702, %v2718
      %v2759 = vsel %vm2749, %v2704, %v2720
      %v2760 = vsel %vm2749, %v2706, %v2722
      %v2761 = vsel %vm2749, %v2708, %v2724
      %v2762 = vsel %vm2749, %v2710, %v2726
      %v2763 = vsel %vm2749, %v2712, %v2728
      %v2764 = vsel %vm2749, %v2714, %v2730
      %v2765 = vsel %vm2749, %v2716, %v2732
      %v2766 = vsel %vm2749, %v2686, %v2702
      %v2767 = vsel %vm2749, %v2688, %v2704
      %v2768 = vsel %vm2749, %v2690, %v2706
      %v2769 = vsel %vm2749, %v2692, %v2708
      %v2770 = vsel %vm2749, %v2694, %v2710
      %v2771 = vsel %vm2749, %v2696, %v2712
      %v2772 = vsel %vm2749, %v2698, %v2714
      %v2773 = vsel %vm2749, %v2700, %v2716
      %v2774 = vsel %vm2749, %v2670, %v2686
      %v2775 = vsel %vm2749, %v2672, %v2688
      %v2776 = vsel %vm2749, %v2674, %v2690
      %v2777 = vsel %vm2749, %v2676, %v2692
      %v2778 = vsel %vm2749, %v2678, %v2694
      %v2779 = vsel %vm2749, %v2680, %v2696
      %v2780 = vsel %vm2749, %v2682, %v2698
      %v2781 = vsel %vm2749, %v2684, %v2700
      %v2782 = vsel %vm2749, %v2654, %v2670
      %v2783 = vsel %vm2749, %v2656, %v2672
      %v2784 = vsel %vm2749, %v2658, %v2674
      %v2785 = vsel %vm2749, %v2660, %v2676
      %v2786 = vsel %vm2749, %v2662, %v2678
      %v2787 = vsel %vm2749, %v2664, %v2680
      %v2788 = vsel %vm2749, %v2666, %v2682
      %v2789 = vsel %vm2749, %v2668, %v2684
      %v2790 = vsel %vm2749, %v2638, %v2654
      %v2791 = vsel %vm2749, %v2640, %v2656
      %v2792 = vsel %vm2749, %v2642, %v2658
      %v2793 = vsel %vm2749, %v2644, %v2660
      %v2794 = vsel %vm2749, %v2646, %v2662
      %v2795 = vsel %vm2749, %v2648, %v2664
      %v2796 = vsel %vm2749, %v2650, %v2666
      %v2797 = vsel %vm2749, %v2652, %v2668
      %v2798 = vsel %vm2749, %v2622, %v2638
      %v2799 = vsel %vm2749, %v2624, %v2640
      %v2800 = vsel %vm2749, %v2626, %v2642
      %v2801 = vsel %vm2749, %v2628, %v2644
      %v2802 = vsel %vm2749, %v2630, %v2646
      %v2803 = vsel %vm2749, %v2632, %v2648
      %v2804 = vsel %vm2749, %v2634, %v2650
      %v2805 = vsel %vm2749, %v2636, %v2652
      %v2806 = vsel %vm2749, %v2734, %v2622
      %v2807 = vsel %vm2749, %v2736, %v2624
      %v2808 = vsel %vm2749, %v2738, %v2626
      %v2809 = vsel %vm2749, %v2740, %v2628
      %v2810 = vsel %vm2749, %v2742, %v2630
      %v2811 = vsel %vm2749, %v2744, %v2632
      %v2812 = vsel %vm2749, %v2746, %v2634
      %v2813 = vsel %vm2749, %v2748, %v2636
      %v2814 = vlaneseq
      %v2815 = vshrl.u32 %v2814, 7
      %v2816 = vsub.s32 6, %v2815
      %v2817 = vrot.slane %v493, %v2816
      %v2818 = vlaneseq
      %v2819 = vshrl.u32 %v2818, 7
      %v2820 = vsub.s32 6, %v2819
      %v2821 = vrot.slane %v494, %v2820
      %v2822 = vlaneseq
      %v2823 = vshrl.u32 %v2822, 7
      %v2824 = vsub.s32 6, %v2823
      %v2825 = vrot.slane %v495, %v2824
      %v2826 = vlaneseq
      %v2827 = vshrl.u32 %v2826, 7
      %v2828 = vsub.s32 6, %v2827
      %v2829 = vrot.slane %v496, %v2828
      %v2830 = vlaneseq
      %v2831 = vshrl.u32 %v2830, 7
      %v2832 = vsub.s32 6, %v2831
      %v2833 = vrot.slane %v497, %v2832
      %v2834 = vlaneseq
      %v2835 = vshrl.u32 %v2834, 7
      %v2836 = vsub.s32 6, %v2835
      %v2837 = vrot.slane %v498, %v2836
      %v2838 = vlaneseq
      %v2839 = vshrl.u32 %v2838, 7
      %v2840 = vsub.s32 6, %v2839
      %v2841 = vrot.slane %v499, %v2840
      %v2842 = vlaneseq
      %v2843 = vshrl.u32 %v2842, 7
      %v2844 = vsub.s32 6, %v2843
      %v2845 = vrot.slane %v500, %v2844
      %v2846 = vmul.f32 %v2806, %v2817
      %v2847 = vmul.f32 %v2798, %v2821
      %v2848 = vmul.f32 %v2790, %v2825
      %v2849 = vmul.f32 %v2782, %v2829
      %v2850 = vmul.f32 %v2774, %v2833
      %v2851 = vmul.f32 %v2766, %v2837
      %v2852 = vmul.f32 %v2758, %v2841
      %v2853 = vmul.f32 %v2750, %v2845
      %v2854 = vmul.f32 %v2807, %v2817
      %v2855 = vmul.f32 %v2799, %v2821
      %v2856 = vmul.f32 %v2791, %v2825
      %v2857 = vmul.f32 %v2783, %v2829
      %v2858 = vmul.f32 %v2775, %v2833
      %v2859 = vmul.f32 %v2767, %v2837
      %v2860 = vmul.f32 %v2759, %v2841
      %v2861 = vmul.f32 %v2751, %v2845
      %v2862 = vmul.f32 %v2808, %v2817
      %v2863 = vmul.f32 %v2800, %v2821
      %v2864 = vmul.f32 %v2792, %v2825
      %v2865 = vmul.f32 %v2784, %v2829
      %v2866 = vmul.f32 %v2776, %v2833
      %v2867 = vmul.f32 %v2768, %v2837
      %v2868 = vmul.f32 %v2760, %v2841
      %v2869 = vmul.f32 %v2752, %v2845
      %v2870 = vmul.f32 %v2809, %v2817
      %v2871 = vmul.f32 %v2801, %v2821
      %v2872 = vmul.f32 %v2793, %v2825
      %v2873 = vmul.f32 %v2785, %v2829
      %v2874 = vmul.f32 %v2777, %v2833
      %v2875 = vmul.f32 %v2769, %v2837
      %v2876 = vmul.f32 %v2761, %v2841
      %v2877 = vmul.f32 %v2753, %v2845
      %v2878 = vmul.f32 %v2810, %v2817
      %v2879 = vmul.f32 %v2802, %v2821
      %v2880 = vmul.f32 %v2794, %v2825
      %v2881 = vmul.f32 %v2786, %v2829
      %v2882 = vmul.f32 %v2778, %v2833
      %v2883 = vmul.f32 %v2770, %v2837
      %v2884 = vmul.f32 %v2762, %v2841
      %v2885 = vmul.f32 %v2754, %v2845
      %v2886 = vmul.f32 %v2811, %v2817
      %v2887 = vmul.f32 %v2803, %v2821
      %v2888 = vmul.f32 %v2795, %v2825
      %v2889 = vmul.f32 %v2787, %v2829
      %v2890 = vmul.f32 %v2779, %v2833
      %v2891 = vmul.f32 %v2771, %v2837
      %v2892 = vmul.f32 %v2763, %v2841
      %v2893 = vmul.f32 %v2755, %v2845
      %v2894 = vmul.f32 %v2812, %v2817
      %v2895 = vmul.f32 %v2804, %v2821
      %v2896 = vmul.f32 %v2796, %v2825
      %v2897 = vmul.f32 %v2788, %v2829
      %v2898 = vmul.f32 %v2780, %v2833
      %v2899 = vmul.f32 %v2772, %v2837
      %v2900 = vmul.f32 %v2764, %v2841
      %v2901 = vmul.f32 %v2756, %v2845
      %v2902 = vmul.f32 %v2813, %v2817
      %v2903 = vmul.f32 %v2805, %v2821
      %v2904 = vmul.f32 %v2797, %v2825
      %v2905 = vmul.f32 %v2789, %v2829
      %v2906 = vmul.f32 %v2781, %v2833
      %v2907 = vmul.f32 %v2773, %v2837
      %v2908 = vmul.f32 %v2765, %v2841
      %v2909 = vmul.f32 %v2757, %v2845
      %2910 = vrot.lane.b32.xlu0 %v2557, 120
      %v2911 = vpop.permute.xlu0 %2910
      %2912 = vrot.lane.b32.xlu0 %v2565, 120
      %v2913 = vpop.permute.xlu0 %2912
      %2914 = vrot.lane.b32.xlu0 %v2573, 120
      %v2915 = vpop.permute.xlu0 %2914
      %2916 = vrot.lane.b32.xlu0 %v2581, 120
      %v2917 = vpop.permute.xlu0 %2916
      %2918 = vrot.lane.b32.xlu0 %v2589, 120
      %v2919 = vpop.permute.xlu0 %2918
      %2920 = vrot.lane.b32.xlu0 %v2597, 120
      %v2921 = vpop.permute.xlu0 %2920
      %2922 = vrot.lane.b32.xlu0 %v2605, 120
      %v2923 = vpop.permute.xlu0 %2922
      %2924 = vrot.lane.b32.xlu0 %v2613, 120
      %v2925 = vpop.permute.xlu0 %2924
      %2926 = vrot.lane.b32.xlu0 %v2558, 120
      %v2927 = vpop.permute.xlu0 %2926
      %2928 = vrot.lane.b32.xlu0 %v2566, 120
      %v2929 = vpop.permute.xlu0 %2928
      %2930 = vrot.lane.b32.xlu0 %v2574, 120
      %v2931 = vpop.permute.xlu0 %2930
      %2932 = vrot.lane.b32.xlu0 %v2582, 120
      %v2933 = vpop.permute.xlu0 %2932
      %2934 = vrot.lane.b32.xlu0 %v2590, 120
      %v2935 = vpop.permute.xlu0 %2934
      %2936 = vrot.lane.b32.xlu0 %v2598, 120
      %v2937 = vpop.permute.xlu0 %2936
      %2938 = vrot.lane.b32.xlu0 %v2606, 120
      %v2939 = vpop.permute.xlu0 %2938
      %2940 = vrot.lane.b32.xlu0 %v2614, 120
      %v2941 = vpop.permute.xlu0 %2940
      %2942 = vrot.lane.b32.xlu0 %v2559, 120
      %v2943 = vpop.permute.xlu0 %2942
      %2944 = vrot.lane.b32.xlu0 %v2567, 120
      %v2945 = vpop.permute.xlu0 %2944
      %2946 = vrot.lane.b32.xlu0 %v2575, 120
      %v2947 = vpop.permute.xlu0 %2946
      %2948 = vrot.lane.b32.xlu0 %v2583, 120
      %v2949 = vpop.permute.xlu0 %2948
      %2950 = vrot.lane.b32.xlu0 %v2591, 120
      %v2951 = vpop.permute.xlu0 %2950
      %2952 = vrot.lane.b32.xlu0 %v2599, 120
      %v2953 = vpop.permute.xlu0 %2952
      %2954 = vrot.lane.b32.xlu0 %v2607, 120
      %v2955 = vpop.permute.xlu0 %2954
      %2956 = vrot.lane.b32.xlu0 %v2615, 120
      %v2957 = vpop.permute.xlu0 %2956
      %2958 = vrot.lane.b32.xlu0 %v2560, 120
      %v2959 = vpop.permute.xlu0 %2958
      %2960 = vrot.lane.b32.xlu0 %v2568, 120
      %v2961 = vpop.permute.xlu0 %2960
      %2962 = vrot.lane.b32.xlu0 %v2576, 120
      %v2963 = vpop.permute.xlu0 %2962
      %2964 = vrot.lane.b32.xlu0 %v2584, 120
      %v2965 = vpop.permute.xlu0 %2964
      %2966 = vrot.lane.b32.xlu0 %v2592, 120
      %v2967 = vpop.permute.xlu0 %2966
      %2968 = vrot.lane.b32.xlu0 %v2600, 120
      %v2969 = vpop.permute.xlu0 %2968
      %2970 = vrot.lane.b32.xlu0 %v2608, 120
      %v2971 = vpop.permute.xlu0 %2970
      %2972 = vrot.lane.b32.xlu0 %v2616, 120
      %v2973 = vpop.permute.xlu0 %2972
      %2974 = vrot.lane.b32.xlu0 %v2561, 120
      %v2975 = vpop.permute.xlu0 %2974
      %2976 = vrot.lane.b32.xlu0 %v2569, 120
      %v2977 = vpop.permute.xlu0 %2976
      %2978 = vrot.lane.b32.xlu0 %v2577, 120
      %v2979 = vpop.permute.xlu0 %2978
      %2980 = vrot.lane.b32.xlu0 %v2585, 120
      %v2981 = vpop.permute.xlu0 %2980
      %2982 = vrot.lane.b32.xlu0 %v2593, 120
      %v2983 = vpop.permute.xlu0 %2982
      %2984 = vrot.lane.b32.xlu0 %v2601, 120
      %v2985 = vpop.permute.xlu0 %2984
      %2986 = vrot.lane.b32.xlu0 %v2609, 120
      %v2987 = vpop.permute.xlu0 %2986
      %2988 = vrot.lane.b32.xlu0 %v2617, 120
      %v2989 = vpop.permute.xlu0 %2988
      %2990 = vrot.lane.b32.xlu0 %v2562, 120
      %v2991 = vpop.permute.xlu0 %2990
      %2992 = vrot.lane.b32.xlu0 %v2570, 120
      %v2993 = vpop.permute.xlu0 %2992
      %2994 = vrot.lane.b32.xlu0 %v2578, 120
      %v2995 = vpop.permute.xlu0 %2994
      %2996 = vrot.lane.b32.xlu0 %v2586, 120
      %v2997 = vpop.permute.xlu0 %2996
      %2998 = vrot.lane.b32.xlu0 %v2594, 120
      %v2999 = vpop.permute.xlu0 %2998
      %3000 = vrot.lane.b32.xlu0 %v2602, 120
      %v3001 = vpop.permute.xlu0 %3000
      %3002 = vrot.lane.b32.xlu0 %v2610, 120
      %v3003 = vpop.permute.xlu0 %3002
      %3004 = vrot.lane.b32.xlu0 %v2618, 120
      %v3005 = vpop.permute.xlu0 %3004
      %3006 = vrot.lane.b32.xlu0 %v2563, 120
      %v3007 = vpop.permute.xlu0 %3006
      %3008 = vrot.lane.b32.xlu0 %v2571, 120
      %v3009 = vpop.permute.xlu0 %3008
      %3010 = vrot.lane.b32.xlu0 %v2579, 120
      %v3011 = vpop.permute.xlu0 %3010
      %3012 = vrot.lane.b32.xlu0 %v2587, 120
      %v3013 = vpop.permute.xlu0 %3012
      %3014 = vrot.lane.b32.xlu0 %v2595, 120
      %v3015 = vpop.permute.xlu0 %3014
      %3016 = vrot.lane.b32.xlu0 %v2603, 120
      %v3017 = vpop.permute.xlu0 %3016
      %3018 = vrot.lane.b32.xlu0 %v2611, 120
      %v3019 = vpop.permute.xlu0 %3018
      %3020 = vrot.lane.b32.xlu0 %v2619, 120
      %v3021 = vpop.permute.xlu0 %3020
      %3022 = vrot.lane.b32.xlu0 %v2564, 120
      %v3023 = vpop.permute.xlu0 %3022
      %3024 = vrot.lane.b32.xlu0 %v2572, 120
      %v3025 = vpop.permute.xlu0 %3024
      %3026 = vrot.lane.b32.xlu0 %v2580, 120
      %v3027 = vpop.permute.xlu0 %3026
      %3028 = vrot.lane.b32.xlu0 %v2588, 120
      %v3029 = vpop.permute.xlu0 %3028
      %3030 = vrot.lane.b32.xlu0 %v2596, 120
      %v3031 = vpop.permute.xlu0 %3030
      %3032 = vrot.lane.b32.xlu0 %v2604, 120
      %v3033 = vpop.permute.xlu0 %3032
      %3034 = vrot.lane.b32.xlu0 %v2612, 120
      %v3035 = vpop.permute.xlu0 %3034
      %3036 = vrot.lane.b32.xlu0 %v2620, 120
      %v3037 = vpop.permute.xlu0 %3036
      %vm3038 = vcmp.lt.s32.totalorder %v560, 120
      %v3039 = vsel %vm3038, %v3007, %v3023
      %v3040 = vsel %vm3038, %v3009, %v3025
      %v3041 = vsel %vm3038, %v3011, %v3027
      %v3042 = vsel %vm3038, %v3013, %v3029
      %v3043 = vsel %vm3038, %v3015, %v3031
      %v3044 = vsel %vm3038, %v3017, %v3033
      %v3045 = vsel %vm3038, %v3019, %v3035
      %v3046 = vsel %vm3038, %v3021, %v3037
      %v3047 = vsel %vm3038, %v2991, %v3007
      %v3048 = vsel %vm3038, %v2993, %v3009
      %v3049 = vsel %vm3038, %v2995, %v3011
      %v3050 = vsel %vm3038, %v2997, %v3013
      %v3051 = vsel %vm3038, %v2999, %v3015
      %v3052 = vsel %vm3038, %v3001, %v3017
      %v3053 = vsel %vm3038, %v3003, %v3019
      %v3054 = vsel %vm3038, %v3005, %v3021
      %v3055 = vsel %vm3038, %v2975, %v2991
      %v3056 = vsel %vm3038, %v2977, %v2993
      %v3057 = vsel %vm3038, %v2979, %v2995
      %v3058 = vsel %vm3038, %v2981, %v2997
      %v3059 = vsel %vm3038, %v2983, %v2999
      %v3060 = vsel %vm3038, %v2985, %v3001
      %v3061 = vsel %vm3038, %v2987, %v3003
      %v3062 = vsel %vm3038, %v2989, %v3005
      %v3063 = vsel %vm3038, %v2959, %v2975
      %v3064 = vsel %vm3038, %v2961, %v2977
      %v3065 = vsel %vm3038, %v2963, %v2979
      %v3066 = vsel %vm3038, %v2965, %v2981
      %v3067 = vsel %vm3038, %v2967, %v2983
      %v3068 = vsel %vm3038, %v2969, %v2985
      %v3069 = vsel %vm3038, %v2971, %v2987
      %v3070 = vsel %vm3038, %v2973, %v2989
      %v3071 = vsel %vm3038, %v2943, %v2959
      %v3072 = vsel %vm3038, %v2945, %v2961
      %v3073 = vsel %vm3038, %v2947, %v2963
      %v3074 = vsel %vm3038, %v2949, %v2965
      %v3075 = vsel %vm3038, %v2951, %v2967
      %v3076 = vsel %vm3038, %v2953, %v2969
      %v3077 = vsel %vm3038, %v2955, %v2971
      %v3078 = vsel %vm3038, %v2957, %v2973
      %v3079 = vsel %vm3038, %v2927, %v2943
      %v3080 = vsel %vm3038, %v2929, %v2945
      %v3081 = vsel %vm3038, %v2931, %v2947
      %v3082 = vsel %vm3038, %v2933, %v2949
      %v3083 = vsel %vm3038, %v2935, %v2951
      %v3084 = vsel %vm3038, %v2937, %v2953
      %v3085 = vsel %vm3038, %v2939, %v2955
      %v3086 = vsel %vm3038, %v2941, %v2957
      %v3087 = vsel %vm3038, %v2911, %v2927
      %v3088 = vsel %vm3038, %v2913, %v2929
      %v3089 = vsel %vm3038, %v2915, %v2931
      %v3090 = vsel %vm3038, %v2917, %v2933
      %v3091 = vsel %vm3038, %v2919, %v2935
      %v3092 = vsel %vm3038, %v2921, %v2937
      %v3093 = vsel %vm3038, %v2923, %v2939
      %v3094 = vsel %vm3038, %v2925, %v2941
      %v3095 = vsel %vm3038, %v3023, %v2911
      %v3096 = vsel %vm3038, %v3025, %v2913
      %v3097 = vsel %vm3038, %v3027, %v2915
      %v3098 = vsel %vm3038, %v3029, %v2917
      %v3099 = vsel %vm3038, %v3031, %v2919
      %v3100 = vsel %vm3038, %v3033, %v2921
      %v3101 = vsel %vm3038, %v3035, %v2923
      %v3102 = vsel %vm3038, %v3037, %v2925
      %v3103 = vlaneseq
      %v3104 = vshrl.u32 %v3103, 7
      %v3105 = vsub.s32 7, %v3104
      %v3106 = vrot.slane %v493, %v3105
      %v3107 = vlaneseq
      %v3108 = vshrl.u32 %v3107, 7
      %v3109 = vsub.s32 7, %v3108
      %v3110 = vrot.slane %v494, %v3109
      %v3111 = vlaneseq
      %v3112 = vshrl.u32 %v3111, 7
      %v3113 = vsub.s32 7, %v3112
      %v3114 = vrot.slane %v495, %v3113
      %v3115 = vlaneseq
      %v3116 = vshrl.u32 %v3115, 7
      %v3117 = vsub.s32 7, %v3116
      %v3118 = vrot.slane %v496, %v3117
      %v3119 = vlaneseq
      %v3120 = vshrl.u32 %v3119, 7
      %v3121 = vsub.s32 7, %v3120
      %v3122 = vrot.slane %v497, %v3121
      %v3123 = vlaneseq
      %v3124 = vshrl.u32 %v3123, 7
      %v3125 = vsub.s32 7, %v3124
      %v3126 = vrot.slane %v498, %v3125
      %v3127 = vlaneseq
      %v3128 = vshrl.u32 %v3127, 7
      %v3129 = vsub.s32 7, %v3128
      %v3130 = vrot.slane %v499, %v3129
      %v3131 = vlaneseq
      %v3132 = vshrl.u32 %v3131, 7
      %v3133 = vsub.s32 7, %v3132
      %v3134 = vrot.slane %v500, %v3133
      %v3135 = vmul.f32 %v3087, %v3106
      %v3136 = vmul.f32 %v3079, %v3110
      %v3137 = vmul.f32 %v3071, %v3114
      %v3138 = vmul.f32 %v3063, %v3118
      %v3139 = vmul.f32 %v3055, %v3122
      %v3140 = vmul.f32 %v3047, %v3126
      %v3141 = vmul.f32 %v3039, %v3130
      %v3142 = vmul.f32 %v3095, %v3134
      %v3143 = vmul.f32 %v3088, %v3106
      %v3144 = vmul.f32 %v3080, %v3110
      %v3145 = vmul.f32 %v3072, %v3114
      %v3146 = vmul.f32 %v3064, %v3118
      %v3147 = vmul.f32 %v3056, %v3122
      %v3148 = vmul.f32 %v3048, %v3126
      %v3149 = vmul.f32 %v3040, %v3130
      %v3150 = vmul.f32 %v3096, %v3134
      %v3151 = vmul.f32 %v3089, %v3106
      %v3152 = vmul.f32 %v3081, %v3110
      %v3153 = vmul.f32 %v3073, %v3114
      %v3154 = vmul.f32 %v3065, %v3118
      %v3155 = vmul.f32 %v3057, %v3122
      %v3156 = vmul.f32 %v3049, %v3126
      %v3157 = vmul.f32 %v3041, %v3130
      %v3158 = vmul.f32 %v3097, %v3134
      %v3159 = vmul.f32 %v3090, %v3106
      %v3160 = vmul.f32 %v3082, %v3110
      %v3161 = vmul.f32 %v3074, %v3114
      %v3162 = vmul.f32 %v3066, %v3118
      %v3163 = vmul.f32 %v3058, %v3122
      %v3164 = vmul.f32 %v3050, %v3126
      %v3165 = vmul.f32 %v3042, %v3130
      %v3166 = vmul.f32 %v3098, %v3134
      %v3167 = vmul.f32 %v3091, %v3106
      %v3168 = vmul.f32 %v3083, %v3110
      %v3169 = vmul.f32 %v3075, %v3114
      %v3170 = vmul.f32 %v3067, %v3118
      %v3171 = vmul.f32 %v3059, %v3122
      %v3172 = vmul.f32 %v3051, %v3126
      %v3173 = vmul.f32 %v3043, %v3130
      %v3174 = vmul.f32 %v3099, %v3134
      %v3175 = vmul.f32 %v3092, %v3106
      %v3176 = vmul.f32 %v3084, %v3110
      %v3177 = vmul.f32 %v3076, %v3114
      %v3178 = vmul.f32 %v3068, %v3118
      %v3179 = vmul.f32 %v3060, %v3122
      %v3180 = vmul.f32 %v3052, %v3126
      %v3181 = vmul.f32 %v3044, %v3130
      %v3182 = vmul.f32 %v3100, %v3134
      %v3183 = vmul.f32 %v3093, %v3106
      %v3184 = vmul.f32 %v3085, %v3110
      %v3185 = vmul.f32 %v3077, %v3114
      %v3186 = vmul.f32 %v3069, %v3118
      %v3187 = vmul.f32 %v3061, %v3122
      %v3188 = vmul.f32 %v3053, %v3126
      %v3189 = vmul.f32 %v3045, %v3130
      %v3190 = vmul.f32 %v3101, %v3134
      %v3191 = vmul.f32 %v3094, %v3106
      %v3192 = vmul.f32 %v3086, %v3110
      %v3193 = vmul.f32 %v3078, %v3114
      %v3194 = vmul.f32 %v3070, %v3118
      %v3195 = vmul.f32 %v3062, %v3122
      %v3196 = vmul.f32 %v3054, %v3126
      %v3197 = vmul.f32 %v3046, %v3130
      %v3198 = vmul.f32 %v3102, %v3134
      %v3199 = vpack.c.bf16 %v2854, %v2846
      %v3200 = vpack.c.bf16 %v2855, %v2847
      %v3201 = vpack.c.bf16 %v2856, %v2848
      %v3202 = vpack.c.bf16 %v2857, %v2849
      %v3203 = vpack.c.bf16 %v2858, %v2850
      %v3204 = vpack.c.bf16 %v2859, %v2851
      %v3205 = vpack.c.bf16 %v2860, %v2852
      %v3206 = vpack.c.bf16 %v2861, %v2853
      %v3207 = vpack.c.bf16 %v2870, %v2862
      %v3208 = vpack.c.bf16 %v2871, %v2863
      %v3209 = vpack.c.bf16 %v2872, %v2864
      %v3210 = vpack.c.bf16 %v2873, %v2865
      %v3211 = vpack.c.bf16 %v2874, %v2866
      %v3212 = vpack.c.bf16 %v2875, %v2867
      %v3213 = vpack.c.bf16 %v2876, %v2868
      %v3214 = vpack.c.bf16 %v2877, %v2869
      %v3215 = vpack.c.bf16 %v2886, %v2878
      %v3216 = vpack.c.bf16 %v2887, %v2879
      %v3217 = vpack.c.bf16 %v2888, %v2880
      %v3218 = vpack.c.bf16 %v2889, %v2881
      %v3219 = vpack.c.bf16 %v2890, %v2882
      %v3220 = vpack.c.bf16 %v2891, %v2883
      %v3221 = vpack.c.bf16 %v2892, %v2884
      %v3222 = vpack.c.bf16 %v2893, %v2885
      %v3223 = vpack.c.bf16 %v2902, %v2894
      %v3224 = vpack.c.bf16 %v2903, %v2895
      %v3225 = vpack.c.bf16 %v2904, %v2896
      %v3226 = vpack.c.bf16 %v2905, %v2897
      %v3227 = vpack.c.bf16 %v2906, %v2898
      %v3228 = vpack.c.bf16 %v2907, %v2899
      %v3229 = vpack.c.bf16 %v2908, %v2900
      %v3230 = vpack.c.bf16 %v2909, %v2901
      %v3231 = vpack.c.bf16 %v2565, %v2557
      %v3232 = vpack.c.bf16 %v2566, %v2558
      %v3233 = vpack.c.bf16 %v2567, %v2559
      %v3234 = vpack.c.bf16 %v2568, %v2560
      %v3235 = vpack.c.bf16 %v2569, %v2561
      %v3236 = vpack.c.bf16 %v2570, %v2562
      %v3237 = vpack.c.bf16 %v2571, %v2563
      %v3238 = vpack.c.bf16 %v2572, %v2564
      %v3239 = vpack.c.bf16 %v2581, %v2573
      %v3240 = vpack.c.bf16 %v2582, %v2574
      %v3241 = vpack.c.bf16 %v2583, %v2575
      %v3242 = vpack.c.bf16 %v2584, %v2576
      %v3243 = vpack.c.bf16 %v2585, %v2577
      %v3244 = vpack.c.bf16 %v2586, %v2578
      %v3245 = vpack.c.bf16 %v2587, %v2579
      %v3246 = vpack.c.bf16 %v2588, %v2580
      %v3247 = vpack.c.bf16 %v2597, %v2589
      %v3248 = vpack.c.bf16 %v2598, %v2590
      %v3249 = vpack.c.bf16 %v2599, %v2591
      %v3250 = vpack.c.bf16 %v2600, %v2592
      %v3251 = vpack.c.bf16 %v2601, %v2593
      %v3252 = vpack.c.bf16 %v2602, %v2594
      %v3253 = vpack.c.bf16 %v2603, %v2595
      %v3254 = vpack.c.bf16 %v2604, %v2596
      %v3255 = vpack.c.bf16 %v2613, %v2605
      %v3256 = vpack.c.bf16 %v2614, %v2606
      %v3257 = vpack.c.bf16 %v2615, %v2607
      %v3258 = vpack.c.bf16 %v2616, %v2608
      %v3259 = vpack.c.bf16 %v2617, %v2609
      %v3260 = vpack.c.bf16 %v2618, %v2610
      %v3261 = vpack.c.bf16 %v2619, %v2611
      %v3262 = vpack.c.bf16 %v2620, %v2612
      %v3263 = vpack.c.bf16 %v3143, %v3135
      %v3264 = vpack.c.bf16 %v3144, %v3136
      %v3265 = vpack.c.bf16 %v3145, %v3137
      %v3266 = vpack.c.bf16 %v3146, %v3138
      %v3267 = vpack.c.bf16 %v3147, %v3139
      %v3268 = vpack.c.bf16 %v3148, %v3140
      %v3269 = vpack.c.bf16 %v3149, %v3141
      %v3270 = vpack.c.bf16 %v3150, %v3142
      %v3271 = vpack.c.bf16 %v3159, %v3151
      %v3272 = vpack.c.bf16 %v3160, %v3152
      %v3273 = vpack.c.bf16 %v3161, %v3153
      %v3274 = vpack.c.bf16 %v3162, %v3154
      %v3275 = vpack.c.bf16 %v3163, %v3155
      %v3276 = vpack.c.bf16 %v3164, %v3156
      %v3277 = vpack.c.bf16 %v3165, %v3157
      %v3278 = vpack.c.bf16 %v3166, %v3158
      %v3279 = vpack.c.bf16 %v3175, %v3167
      %v3280 = vpack.c.bf16 %v3176, %v3168
      %v3281 = vpack.c.bf16 %v3177, %v3169
      %v3282 = vpack.c.bf16 %v3178, %v3170
      %v3283 = vpack.c.bf16 %v3179, %v3171
      %v3284 = vpack.c.bf16 %v3180, %v3172
      %v3285 = vpack.c.bf16 %v3181, %v3173
      %v3286 = vpack.c.bf16 %v3182, %v3174
      %v3287 = vpack.c.bf16 %v3191, %v3183
      %v3288 = vpack.c.bf16 %v3192, %v3184
      %v3289 = vpack.c.bf16 %v3193, %v3185
      %v3290 = vpack.c.bf16 %v3194, %v3186
      %v3291 = vpack.c.bf16 %v3195, %v3187
      %v3292 = vpack.c.bf16 %v3196, %v3188
      %v3293 = vpack.c.bf16 %v3197, %v3189
      %v3294 = vpack.c.bf16 %v3198, %v3190
      %v3295 = vld [vmem:[%s8] sm:$0xff]
      %v3296 = vld [vmem:[%s8 + $0x8] sm:$0xff]
      %v3297 = vld [vmem:[%s8 + $0x10] sm:$0xff]
      %v3298 = vld [vmem:[%s8 + $0x18] sm:$0xff]
      %v3299 = vld [vmem:[%s8 + $0x20] sm:$0xff]
      %v3300 = vld [vmem:[%s8 + $0x28] sm:$0xff]
      %v3301 = vld [vmem:[%s8 + $0x30] sm:$0xff]
      %v3302 = vld [vmem:[%s8 + $0x38] sm:$0xff]
      %v3303 = vld [vmem:[%s8 + $0x40] sm:$0xff]
      %v3304 = vld [vmem:[%s8 + $0x48] sm:$0xff]
      %v3305 = vld [vmem:[%s8 + $0x50] sm:$0xff]
      %v3306 = vld [vmem:[%s8 + $0x58] sm:$0xff]
      %v3307 = vld [vmem:[%s8 + $0x60] sm:$0xff]
      %v3308 = vld [vmem:[%s8 + $0x68] sm:$0xff]
      %v3309 = vld [vmem:[%s8 + $0x70] sm:$0xff]
      %v3310 = vld [vmem:[%s8 + $0x78] sm:$0xff]
      %v3311 = vld [vmem:[%s9] sm:$0xff]
      %v3312 = vld [vmem:[%s9 + $0x8] sm:$0xff]
      %v3313 = vld [vmem:[%s9 + $0x10] sm:$0xff]
      %v3314 = vld [vmem:[%s9 + $0x18] sm:$0xff]
      %v3315 = vld [vmem:[%s9 + $0x20] sm:$0xff]
      %v3316 = vld [vmem:[%s9 + $0x28] sm:$0xff]
      %v3317 = vld [vmem:[%s9 + $0x30] sm:$0xff]
      %v3318 = vld [vmem:[%s9 + $0x38] sm:$0xff]
      %v3319 = vld [vmem:[%s9 + $0x40] sm:$0xff]
      %v3320 = vld [vmem:[%s9 + $0x48] sm:$0xff]
      %v3321 = vld [vmem:[%s9 + $0x50] sm:$0xff]
      %v3322 = vld [vmem:[%s9 + $0x58] sm:$0xff]
      %v3323 = vld [vmem:[%s9 + $0x60] sm:$0xff]
      %v3324 = vld [vmem:[%s9 + $0x68] sm:$0xff]
      %v3325 = vld [vmem:[%s9 + $0x70] sm:$0xff]
      %v3326 = vld [vmem:[%s9 + $0x78] sm:$0xff]
      %3328 = vset.pattern.permute.xlu0 0
      %3329 = vperm.xlu0 %3328, %v3311
      %v3330 = vpop.permute.xlu0 %3329
      %3333 = vset.pattern.permute.xlu0 0
      %3334 = vperm.xlu0 %3333, %v3312
      %v3335 = vpop.permute.xlu0 %3334
      %3338 = vset.pattern.permute.xlu0 0
      %3339 = vperm.xlu0 %3338, %v3313
      %v3340 = vpop.permute.xlu0 %3339
      %3343 = vset.pattern.permute.xlu0 0
      %3344 = vperm.xlu0 %3343, %v3314
      %v3345 = vpop.permute.xlu0 %3344
      %3348 = vset.pattern.permute.xlu0 0
      %3349 = vperm.xlu0 %3348, %v3315
      %v3350 = vpop.permute.xlu0 %3349
      %3353 = vset.pattern.permute.xlu0 0
      %3354 = vperm.xlu0 %3353, %v3316
      %v3355 = vpop.permute.xlu0 %3354
      %3358 = vset.pattern.permute.xlu0 0
      %3359 = vperm.xlu0 %3358, %v3317
      %v3360 = vpop.permute.xlu0 %3359
      %3363 = vset.pattern.permute.xlu0 0
      %3364 = vperm.xlu0 %3363, %v3318
      %v3365 = vpop.permute.xlu0 %3364
      %3368 = vset.pattern.permute.xlu0 0
      %3369 = vperm.xlu0 %3368, %v3319
      %v3370 = vpop.permute.xlu0 %3369
      %3373 = vset.pattern.permute.xlu0 0
      %3374 = vperm.xlu0 %3373, %v3320
      %v3375 = vpop.permute.xlu0 %3374
      %3378 = vset.pattern.permute.xlu0 0
      %3379 = vperm.xlu0 %3378, %v3321
      %v3380 = vpop.permute.xlu0 %3379
      %3383 = vset.pattern.permute.xlu0 0
      %3384 = vperm.xlu0 %3383, %v3322
      %v3385 = vpop.permute.xlu0 %3384
      %3388 = vset.pattern.permute.xlu0 0
      %3389 = vperm.xlu0 %3388, %v3323
      %v3390 = vpop.permute.xlu0 %3389
      %3393 = vset.pattern.permute.xlu0 0
      %3394 = vperm.xlu0 %3393, %v3324
      %v3395 = vpop.permute.xlu0 %3394
      %3398 = vset.pattern.permute.xlu0 0
      %3399 = vperm.xlu0 %3398, %v3325
      %v3400 = vpop.permute.xlu0 %3399
      %3403 = vset.pattern.permute.xlu0 0
      %3404 = vperm.xlu0 %3403, %v3326
      %v3405 = vpop.permute.xlu0 %3404
      %v3423 = vunpack.c.l.b16 %v3295
      %v3424 = vunpack.c.h.b16 %v3295
      %v3425 = vunpack.c.l.b16 %v3296
      %v3426 = vunpack.c.h.b16 %v3296
      %v3427 = vunpack.c.l.b16 %v3297
      %v3428 = vunpack.c.h.b16 %v3297
      %v3429 = vunpack.c.l.b16 %v3298
      %v3430 = vunpack.c.h.b16 %v3298
      %v3431 = vunpack.c.l.b16 %v3299
      %v3432 = vunpack.c.h.b16 %v3299
      %v3433 = vunpack.c.l.b16 %v3300
      %v3434 = vunpack.c.h.b16 %v3300
      %v3435 = vunpack.c.l.b16 %v3301
      %v3436 = vunpack.c.h.b16 %v3301
      %v3437 = vunpack.c.l.b16 %v3302
      %v3438 = vunpack.c.h.b16 %v3302
      %v3439 = vunpack.c.l.b16 %v3303
      %v3440 = vunpack.c.h.b16 %v3303
      %v3441 = vunpack.c.l.b16 %v3304
      %v3442 = vunpack.c.h.b16 %v3304
      %v3443 = vunpack.c.l.b16 %v3305
      %v3444 = vunpack.c.h.b16 %v3305
      %v3445 = vunpack.c.l.b16 %v3306
      %v3446 = vunpack.c.h.b16 %v3306
      %v3447 = vunpack.c.l.b16 %v3307
      %v3448 = vunpack.c.h.b16 %v3307
      %v3449 = vunpack.c.l.b16 %v3308
      %v3450 = vunpack.c.h.b16 %v3308
      %v3451 = vunpack.c.l.b16 %v3309
      %v3452 = vunpack.c.h.b16 %v3309
      %v3453 = vunpack.c.l.b16 %v3310
      %v3454 = vunpack.c.h.b16 %v3310
      %v3455 = vpack.c.b16 %v3425, %v3423
      %v3456 = vpack.c.b16 %v3426, %v3424
      %v3457 = vpack.c.b16 %v3429, %v3427
      %v3458 = vpack.c.b16 %v3430, %v3428
      %v3459 = vpack.c.b16 %v3433, %v3431
      %v3460 = vpack.c.b16 %v3434, %v3432
      %v3461 = vpack.c.b16 %v3437, %v3435
      %v3462 = vpack.c.b16 %v3438, %v3436
      %v3463 = vpack.c.b16 %v3441, %v3439
      %v3464 = vpack.c.b16 %v3442, %v3440
      %v3465 = vpack.c.b16 %v3445, %v3443
      %v3466 = vpack.c.b16 %v3446, %v3444
      %v3467 = vpack.c.b16 %v3449, %v3447
      %v3468 = vpack.c.b16 %v3450, %v3448
      %v3469 = vpack.c.b16 %v3453, %v3451
      %v3470 = vpack.c.b16 %v3454, %v3452
      %vm3479 = vcmask 523264
      %v3481 = vsel %vm3479, %v3456, 0
      %v3484 = vsel %vm3479, %v3458, 0
      %v3487 = vsel %vm3479, %v3460, 0
      %v3490 = vsel %vm3479, %v3462, 0
      %v3493 = vsel %vm3479, %v3464, 0
      %v3496 = vsel %vm3479, %v3466, 0
      %v3499 = vsel %vm3479, %v3468, 0
      %v3502 = vsel %vm3479, %v3470, 0
      %3504 = vmatprep.subr.bf16.mxu0 %v3200
      %3505 = vmatpush1.bf16.msra.mxu0 %v3199
      %3506 = vmatprep.subr.bf16.mxu0 %v3208
      %3507 = vmatpush1.bf16.msra.mxu0 %v3207
      %3508 = vmatprep.subr.bf16.mxu0 %v3216
      %3509 = vmatpush1.bf16.msra.mxu0 %v3215
      %3510 = vmatprep.subr.bf16.mxu0 %v3224
      %3511 = vmatpush1.bf16.msra.mxu0 %v3223
      %3512 = vmatprep.subr.bf16.mxu0 %v3232
      %3513 = vmatpush1.bf16.msra.mxu0 %v3231
      %3514 = vmatprep.subr.bf16.mxu0 %v3240
      %3515 = vmatpush1.bf16.msra.mxu0 %v3239
      %3516 = vmatprep.subr.bf16.mxu0 %v3248
      %3517 = vmatpush1.bf16.msra.mxu0 %v3247
      %3518 = vmatprep.subr.bf16.mxu0 %v3256
      %3519 = vmatpush1.bf16.msra.mxu0 %v3255
      %3520 = vmatprep.subr.bf16.mxu0 %v3264
      %3521 = vmatpush1.bf16.msra.mxu0 %v3263
      %3522 = vmatprep.subr.bf16.mxu0 %v3272
      %3523 = vmatpush1.bf16.msra.mxu0 %v3271
      %3524 = vmatprep.subr.bf16.mxu0 %v3280
      %3525 = vmatpush1.bf16.msra.mxu0 %v3279
      %3526 = vmatprep.subr.bf16.mxu0 %v3288
      %3527 = vmatpush1.bf16.msra.mxu0 %v3287
      %3528 = vmatprep.subr.bf16.mxu0 0
      %3529 = vmatpush1.bf16.msra.mxu0 0
      %3530 = vmatprep.subr.bf16.mxu0 0
      %3531 = vmatpush1.bf16.msra.mxu0 0
      %3532 = vmatprep.subr.bf16.mxu0 0
      %3533 = vmatpush1.bf16.msra.mxu0 0
      %3534 = vmatprep.subr.bf16.mxu0 0
      %3535 = vmatpush1.bf16.msra.mxu0 0
      %3536 = vmatprep.mubr.bf16.mxu0 %v3481
      %3537 = vmatmul.mubr.bf16.gmra.mrb[0].mxu0 %v3455
      %v3538 = vpop.f32.mrb[0].mxu0
      %v3539 = vadd.f32 %v3330, %v3538
      %v3540 = vpop.f32.mrb[0].mxu0
      %v3541 = vadd.f32 %v3330, %v3540
      %v3542 = vpop.f32.mrb[0].mxu0
      %v3543 = vadd.f32 %v3335, %v3542
      %v3544 = vpop.f32.mrb[0].mxu0
      %v3545 = vadd.f32 %v3335, %v3544
      %3546 = vmatprep.mubr.bf16.mxu0 %v3484
      %3547 = vmatmul.mubr.bf16.gmra.mrb[0].mxu0 %v3457
      %v3548 = vpop.f32.mrb[0].mxu0
      %v3549 = vadd.f32 %v3340, %v3548
      %v3550 = vpop.f32.mrb[0].mxu0
      %v3551 = vadd.f32 %v3340, %v3550
      %v3552 = vpop.f32.mrb[0].mxu0
      %v3553 = vadd.f32 %v3345, %v3552
      %v3554 = vpop.f32.mrb[0].mxu0
      %v3555 = vadd.f32 %v3345, %v3554
      %3556 = vmatprep.mubr.bf16.mxu0 %v3487
      %3557 = vmatmul.mubr.bf16.gmra.mrb[0].mxu0 %v3459
      %v3558 = vpop.f32.mrb[0].mxu0
      %v3559 = vadd.f32 %v3350, %v3558
      %v3560 = vpop.f32.mrb[0].mxu0
      %v3561 = vadd.f32 %v3350, %v3560
      %v3562 = vpop.f32.mrb[0].mxu0
      %v3563 = vadd.f32 %v3355, %v3562
      %v3564 = vpop.f32.mrb[0].mxu0
      %v3565 = vadd.f32 %v3355, %v3564
      %3566 = vmatprep.mubr.bf16.mxu0 %v3490
      %3567 = vmatmul.mubr.bf16.gmra.mrb[0].mxu0 %v3461
      %v3568 = vpop.f32.mrb[0].mxu0
      %v3569 = vadd.f32 %v3360, %v3568
      %v3570 = vpop.f32.mrb[0].mxu0
      %v3571 = vadd.f32 %v3360, %v3570
      %v3572 = vpop.f32.mrb[0].mxu0
      %v3573 = vadd.f32 %v3365, %v3572
      %v3574 = vpop.f32.mrb[0].mxu0
      %v3575 = vadd.f32 %v3365, %v3574
      %3576 = vmatprep.mubr.bf16.mxu0 %v3493
      %3577 = vmatmul.mubr.bf16.gmra.mrb[0].mxu0 %v3463
      %v3578 = vpop.f32.mrb[0].mxu0
      %v3579 = vadd.f32 %v3370, %v3578
      %v3580 = vpop.f32.mrb[0].mxu0
      %v3581 = vadd.f32 %v3370, %v3580
      %v3582 = vpop.f32.mrb[0].mxu0
      %v3583 = vadd.f32 %v3375, %v3582
      %v3584 = vpop.f32.mrb[0].mxu0
      %v3585 = vadd.f32 %v3375, %v3584
      %3586 = vmatprep.mubr.bf16.mxu0 %v3496
      %3587 = vmatmul.mubr.bf16.gmra.mrb[0].mxu0 %v3465
      %v3588 = vpop.f32.mrb[0].mxu0
      %v3589 = vadd.f32 %v3380, %v3588
      %v3590 = vpop.f32.mrb[0].mxu0
      %v3591 = vadd.f32 %v3380, %v3590
      %v3592 = vpop.f32.mrb[0].mxu0
      %v3593 = vadd.f32 %v3385, %v3592
      %v3594 = vpop.f32.mrb[0].mxu0
      %v3595 = vadd.f32 %v3385, %v3594
      %3596 = vmatprep.mubr.bf16.mxu0 %v3499
      %3597 = vmatmul.mubr.bf16.gmra.mrb[0].mxu0 %v3467
      %v3598 = vpop.f32.mrb[0].mxu0
      %v3599 = vadd.f32 %v3390, %v3598
      %v3600 = vpop.f32.mrb[0].mxu0
      %v3601 = vadd.f32 %v3390, %v3600
      %v3602 = vpop.f32.mrb[0].mxu0
      %v3603 = vadd.f32 %v3395, %v3602
      %v3604 = vpop.f32.mrb[0].mxu0
      %v3605 = vadd.f32 %v3395, %v3604
      %3606 = vmatprep.mubr.bf16.mxu0 %v3502
      %3607 = vmatmul.mubr.bf16.gmra.mrb[0].mxu0 %v3469
      %v3608 = vpop.f32.mrb[0].mxu0
      %v3609 = vadd.f32 %v3400, %v3608
      %v3610 = vpop.f32.mrb[0].mxu0
      %v3611 = vadd.f32 %v3400, %v3610
      %v3612 = vpop.f32.mrb[0].mxu0
      %v3613 = vadd.f32 %v3405, %v3612
      %v3614 = vpop.f32.mrb[0].mxu0
      %v3615 = vadd.f32 %v3405, %v3614
      %3616 = vdwg.mxu0
      %3617 = vmatprep.subr.bf16.mxu0 %v3202
      %3618 = vmatpush1.bf16.msra.mxu0 %v3201
      %3619 = vmatprep.subr.bf16.mxu0 %v3210
      %3620 = vmatpush1.bf16.msra.mxu0 %v3209
      %3621 = vmatprep.subr.bf16.mxu0 %v3218
      %3622 = vmatpush1.bf16.msra.mxu0 %v3217
      %3623 = vmatprep.subr.bf16.mxu0 %v3226
      %3624 = vmatpush1.bf16.msra.mxu0 %v3225
      %3625 = vmatprep.subr.bf16.mxu0 %v3234
      %3626 = vmatpush1.bf16.msra.mxu0 %v3233
      %3627 = vmatprep.subr.bf16.mxu0 %v3242
      %3628 = vmatpush1.bf16.msra.mxu0 %v3241
      %3629 = vmatprep.subr.bf16.mxu0 %v3250
      %3630 = vmatpush1.bf16.msra.mxu0 %v3249
      %3631 = vmatprep.subr.bf16.mxu0 %v3258
      %3632 = vmatpush1.bf16.msra.mxu0 %v3257
      %3633 = vmatprep.subr.bf16.mxu0 %v3266
      %3634 = vmatpush1.bf16.msra.mxu0 %v3265
      %3635 = vmatprep.subr.bf16.mxu0 %v3274
      %3636 = vmatpush1.bf16.msra.mxu0 %v3273
      %3637 = vmatprep.subr.bf16.mxu0 %v3282
      %3638 = vmatpush1.bf16.msra.mxu0 %v3281
      %3639 = vmatprep.subr.bf16.mxu0 %v3290
      %3640 = vmatpush1.bf16.msra.mxu0 %v3289
      %3641 = vmatprep.subr.bf16.mxu0 0
      %3642 = vmatpush1.bf16.msra.mxu0 0
      %3643 = vmatprep.subr.bf16.mxu0 0
      %3644 = vmatpush1.bf16.msra.mxu0 0
      %3645 = vmatprep.subr.bf16.mxu0 0
      %3646 = vmatpush1.bf16.msra.mxu0 0
      %3647 = vmatprep.subr.bf16.mxu0 0
      %3648 = vmatpush1.bf16.msra.mxu0 0
      %3649 = vmatprep.mubr.bf16.mxu0 %v3481
      %3650 = vmatmul.mubr.bf16.gmra.mrb[0].mxu0 %v3455
      %v3651 = vpop.f32.mrb[0].mxu0
      %v3652 = vadd.f32 %v3330, %v3651
      %v3653 = vpop.f32.mrb[0].mxu0
      %v3654 = vadd.f32 %v3330, %v3653
      %v3655 = vpop.f32.mrb[0].mxu0
      %v3656 = vadd.f32 %v3335, %v3655
      %v3657 = vpop.f32.mrb[0].mxu0
      %v3658 = vadd.f32 %v3335, %v3657
      %3659 = vmatprep.mubr.bf16.mxu0 %v3484
      %3660 = vmatmul.mubr.bf16.gmra.mrb[0].mxu0 %v3457
      %v3661 = vpop.f32.mrb[0].mxu0
      %v3662 = vadd.f32 %v3340, %v3661
      %v3663 = vpop.f32.mrb[0].mxu0
      %v3664 = vadd.f32 %v3340, %v3663
      %v3665 = vpop.f32.mrb[0].mxu0
      %v3666 = vadd.f32 %v3345, %v3665
      %v3667 = vpop.f32.mrb[0].mxu0
      %v3668 = vadd.f32 %v3345, %v3667
      %3669 = vmatprep.mubr.bf16.mxu0 %v3487
      %3670 = vmatmul.mubr.bf16.gmra.mrb[0].mxu0 %v3459
      %v3671 = vpop.f32.mrb[0].mxu0
      %v3672 = vadd.f32 %v3350, %v3671
      %v3673 = vpop.f32.mrb[0].mxu0
      %v3674 = vadd.f32 %v3350, %v3673
      %v3675 = vpop.f32.mrb[0].mxu0
      %v3676 = vadd.f32 %v3355, %v3675
      %v3677 = vpop.f32.mrb[0].mxu0
      %v3678 = vadd.f32 %v3355, %v3677
      %3679 = vmatprep.mubr.bf16.mxu0 %v3490
      %3680 = vmatmul.mubr.bf16.gmra.mrb[0].mxu0 %v3461
      %v3681 = vpop.f32.mrb[0].mxu0
      %v3682 = vadd.f32 %v3360, %v3681
      %v3683 = vpop.f32.mrb[0].mxu0
      %v3684 = vadd.f32 %v3360, %v3683
      %v3685 = vpop.f32.mrb[0].mxu0
      %v3686 = vadd.f32 %v3365, %v3685
      %v3687 = vpop.f32.mrb[0].mxu0
      %v3688 = vadd.f32 %v3365, %v3687
      %3689 = vmatprep.mubr.bf16.mxu0 %v3493
      %3690 = vmatmul.mubr.bf16.gmra.mrb[0].mxu0 %v3463
      %v3691 = vpop.f32.mrb[0].mxu0
      %v3692 = vadd.f32 %v3370, %v3691
      %v3693 = vpop.f32.mrb[0].mxu0
      %v3694 = vadd.f32 %v3370, %v3693
      %v3695 = vpop.f32.mrb[0].mxu0
      %v3696 = vadd.f32 %v3375, %v3695
      %v3697 = vpop.f32.mrb[0].mxu0
      %v3698 = vadd.f32 %v3375, %v3697
      %3699 = vmatprep.mubr.bf16.mxu0 %v3496
      %3700 = vmatmul.mubr.bf16.gmra.mrb[0].mxu0 %v3465
      %v3701 = vpop.f32.mrb[0].mxu0
      %v3702 = vadd.f32 %v3380, %v3701
      %v3703 = vpop.f32.mrb[0].mxu0
      %v3704 = vadd.f32 %v3380, %v3703
      %v3705 = vpop.f32.mrb[0].mxu0
      %v3706 = vadd.f32 %v3385, %v3705
      %v3707 = vpop.f32.mrb[0].mxu0
      %v3708 = vadd.f32 %v3385, %v3707
      %3709 = vmatprep.mubr.bf16.mxu0 %v3499
      %3710 = vmatmul.mubr.bf16.gmra.mrb[0].mxu0 %v3467
      %v3711 = vpop.f32.mrb[0].mxu0
      %v3712 = vadd.f32 %v3390, %v3711
      %v3713 = vpop.f32.mrb[0].mxu0
      %v3714 = vadd.f32 %v3390, %v3713
      %v3715 = vpop.f32.mrb[0].mxu0
      %v3716 = vadd.f32 %v3395, %v3715
      %v3717 = vpop.f32.mrb[0].mxu0
      %v3718 = vadd.f32 %v3395, %v3717
      %3719 = vmatprep.mubr.bf16.mxu0 %v3502
      %3720 = vmatmul.mubr.bf16.gmra.mrb[0].mxu0 %v3469
      %v3721 = vpop.f32.mrb[0].mxu0
      %v3722 = vadd.f32 %v3400, %v3721
      %v3723 = vpop.f32.mrb[0].mxu0
      %v3724 = vadd.f32 %v3400, %v3723
      %v3725 = vpop.f32.mrb[0].mxu0
      %v3726 = vadd.f32 %v3405, %v3725
      %v3727 = vpop.f32.mrb[0].mxu0
      %v3728 = vadd.f32 %v3405, %v3727
      %3729 = vdwg.mxu0
      %3730 = vmatprep.subr.bf16.mxu0 %v3204
      %3731 = vmatpush1.bf16.msra.mxu0 %v3203
      %3732 = vmatprep.subr.bf16.mxu0 %v3212
      %3733 = vmatpush1.bf16.msra.mxu0 %v3211
      %3734 = vmatprep.subr.bf16.mxu0 %v3220
      %3735 = vmatpush1.bf16.msra.mxu0 %v3219
      %3736 = vmatprep.subr.bf16.mxu0 %v3228
      %3737 = vmatpush1.bf16.msra.mxu0 %v3227
      %3738 = vmatprep.subr.bf16.mxu0 %v3236
      %3739 = vmatpush1.bf16.msra.mxu0 %v3235
      %3740 = vmatprep.subr.bf16.mxu0 %v3244
      %3741 = vmatpush1.bf16.msra.mxu0 %v3243
      %3742 = vmatprep.subr.bf16.mxu0 %v3252
      %3743 = vmatpush1.bf16.msra.mxu0 %v3251
      %3744 = vmatprep.subr.bf16.mxu0 %v3260
      %3745 = vmatpush1.bf16.msra.mxu0 %v3259
      %3746 = vmatprep.subr.bf16.mxu0 %v3268
      %3747 = vmatpush1.bf16.msra.mxu0 %v3267
      %3748 = vmatprep.subr.bf16.mxu0 %v3276
      %3749 = vmatpush1.bf16.msra.mxu0 %v3275
      %3750 = vmatprep.subr.bf16.mxu0 %v3284
      %3751 = vmatpush1.bf16.msra.mxu0 %v3283
      %3752 = vmatprep.subr.bf16.mxu0 %v3292
      %3753 = vmatpush1.bf16.msra.mxu0 %v3291
      %3754 = vmatprep.subr.bf16.mxu0 0
      %3755 = vmatpush1.bf16.msra.mxu0 0
      %3756 = vmatprep.subr.bf16.mxu0 0
      %3757 = vmatpush1.bf16.msra.mxu0 0
      %3758 = vmatprep.subr.bf16.mxu0 0
      %3759 = vmatpush1.bf16.msra.mxu0 0
      %3760 = vmatprep.subr.bf16.mxu0 0
      %3761 = vmatpush1.bf16.msra.mxu0 0
      %3762 = vmatprep.mubr.bf16.mxu0 %v3481
      %3763 = vmatmul.mubr.bf16.gmra.mrb[0].mxu0 %v3455
      %v3764 = vpop.f32.mrb[0].mxu0
      %v3765 = vadd.f32 %v3330, %v3764
      %v3766 = vpop.f32.mrb[0].mxu0
      %v3767 = vadd.f32 %v3330, %v3766
      %v3768 = vpop.f32.mrb[0].mxu0
      %v3769 = vadd.f32 %v3335, %v3768
      %v3770 = vpop.f32.mrb[0].mxu0
      %v3771 = vadd.f32 %v3335, %v3770
      %3772 = vmatprep.mubr.bf16.mxu0 %v3484
      %3773 = vmatmul.mubr.bf16.gmra.mrb[0].mxu0 %v3457
      %v3774 = vpop.f32.mrb[0].mxu0
      %v3775 = vadd.f32 %v3340, %v3774
      %v3776 = vpop.f32.mrb[0].mxu0
      %v3777 = vadd.f32 %v3340, %v3776
      %v3778 = vpop.f32.mrb[0].mxu0
      %v3779 = vadd.f32 %v3345, %v3778
      %v3780 = vpop.f32.mrb[0].mxu0
      %v3781 = vadd.f32 %v3345, %v3780
      %3782 = vmatprep.mubr.bf16.mxu0 %v3487
      %3783 = vmatmul.mubr.bf16.gmra.mrb[0].mxu0 %v3459
      %v3784 = vpop.f32.mrb[0].mxu0
      %v3785 = vadd.f32 %v3350, %v3784
      %v3786 = vpop.f32.mrb[0].mxu0
      %v3787 = vadd.f32 %v3350, %v3786
      %v3788 = vpop.f32.mrb[0].mxu0
      %v3789 = vadd.f32 %v3355, %v3788
      %v3790 = vpop.f32.mrb[0].mxu0
      %v3791 = vadd.f32 %v3355, %v3790
      %3792 = vmatprep.mubr.bf16.mxu0 %v3490
      %3793 = vmatmul.mubr.bf16.gmra.mrb[0].mxu0 %v3461
      %v3794 = vpop.f32.mrb[0].mxu0
      %v3795 = vadd.f32 %v3360, %v3794
      %v3796 = vpop.f32.mrb[0].mxu0
      %v3797 = vadd.f32 %v3360, %v3796
      %v3798 = vpop.f32.mrb[0].mxu0
      %v3799 = vadd.f32 %v3365, %v3798
      %v3800 = vpop.f32.mrb[0].mxu0
      %v3801 = vadd.f32 %v3365, %v3800
      %3802 = vmatprep.mubr.bf16.mxu0 %v3493
      %3803 = vmatmul.mubr.bf16.gmra.mrb[0].mxu0 %v3463
      %v3804 = vpop.f32.mrb[0].mxu0
      %v3805 = vadd.f32 %v3370, %v3804
      %v3806 = vpop.f32.mrb[0].mxu0
      %v3807 = vadd.f32 %v3370, %v3806
      %v3808 = vpop.f32.mrb[0].mxu0
      %v3809 = vadd.f32 %v3375, %v3808
      %v3810 = vpop.f32.mrb[0].mxu0
      %v3811 = vadd.f32 %v3375, %v3810
      %3812 = vmatprep.mubr.bf16.mxu0 %v3496
      %3813 = vmatmul.mubr.bf16.gmra.mrb[0].mxu0 %v3465
      %v3814 = vpop.f32.mrb[0].mxu0
      %v3815 = vadd.f32 %v3380, %v3814
      %v3816 = vpop.f32.mrb[0].mxu0
      %v3817 = vadd.f32 %v3380, %v3816
      %v3818 = vpop.f32.mrb[0].mxu0
      %v3819 = vadd.f32 %v3385, %v3818
      %v3820 = vpop.f32.mrb[0].mxu0
      %v3821 = vadd.f32 %v3385, %v3820
      %3822 = vmatprep.mubr.bf16.mxu0 %v3499
      %3823 = vmatmul.mubr.bf16.gmra.mrb[0].mxu0 %v3467
      %v3824 = vpop.f32.mrb[0].mxu0
      %v3825 = vadd.f32 %v3390, %v3824
      %v3826 = vpop.f32.mrb[0].mxu0
      %v3827 = vadd.f32 %v3390, %v3826
      %v3828 = vpop.f32.mrb[0].mxu0
      %v3829 = vadd.f32 %v3395, %v3828
      %v3830 = vpop.f32.mrb[0].mxu0
      %v3831 = vadd.f32 %v3395, %v3830
      %3832 = vmatprep.mubr.bf16.mxu0 %v3502
      %3833 = vmatmul.mubr.bf16.gmra.mrb[0].mxu0 %v3469
      %v3834 = vpop.f32.mrb[0].mxu0
      %v3835 = vadd.f32 %v3400, %v3834
      %v3836 = vpop.f32.mrb[0].mxu0
      %v3837 = vadd.f32 %v3400, %v3836
      %v3838 = vpop.f32.mrb[0].mxu0
      %v3839 = vadd.f32 %v3405, %v3838
      %v3840 = vpop.f32.mrb[0].mxu0
      %v3841 = vadd.f32 %v3405, %v3840
      %3842 = vdwg.mxu0
      %3843 = vmatprep.subr.bf16.mxu0 %v3206
      %3844 = vmatpush1.bf16.msra.mxu0 %v3205
      %3845 = vmatprep.subr.bf16.mxu0 %v3214
      %3846 = vmatpush1.bf16.msra.mxu0 %v3213
      %3847 = vmatprep.subr.bf16.mxu0 %v3222
      %3848 = vmatpush1.bf16.msra.mxu0 %v3221
      %3849 = vmatprep.subr.bf16.mxu0 %v3230
      %3850 = vmatpush1.bf16.msra.mxu0 %v3229
      %3851 = vmatprep.subr.bf16.mxu0 %v3238
      %3852 = vmatpush1.bf16.msra.mxu0 %v3237
      %3853 = vmatprep.subr.bf16.mxu0 %v3246
      %3854 = vmatpush1.bf16.msra.mxu0 %v3245
      %3855 = vmatprep.subr.bf16.mxu0 %v3254
      %3856 = vmatpush1.bf16.msra.mxu0 %v3253
      %3857 = vmatprep.subr.bf16.mxu0 %v3262
      %3858 = vmatpush1.bf16.msra.mxu0 %v3261
      %3859 = vmatprep.subr.bf16.mxu0 %v3270
      %3860 = vmatpush1.bf16.msra.mxu0 %v3269
      %3861 = vmatprep.subr.bf16.mxu0 %v3278
      %3862 = vmatpush1.bf16.msra.mxu0 %v3277
      %3863 = vmatprep.subr.bf16.mxu0 %v3286
      %3864 = vmatpush1.bf16.msra.mxu0 %v3285
      %3865 = vmatprep.subr.bf16.mxu0 %v3294
      %3866 = vmatpush1.bf16.msra.mxu0 %v3293
      %3867 = vmatprep.subr.bf16.mxu0 0
      %3868 = vmatpush1.bf16.msra.mxu0 0
      %3869 = vmatprep.subr.bf16.mxu0 0
      %3870 = vmatpush1.bf16.msra.mxu0 0
      %3871 = vmatprep.subr.bf16.mxu0 0
      %3872 = vmatpush1.bf16.msra.mxu0 0
      %3873 = vmatprep.subr.bf16.mxu0 0
      %3874 = vmatpush1.bf16.msra.mxu0 0
      %3875 = vmatprep.mubr.bf16.mxu0 %v3481
      %3876 = vmatmul.mubr.bf16.gmra.mrb[0].mxu0 %v3455
      %v3877 = vpop.f32.mrb[0].mxu0
      %v3878 = vadd.f32 %v3330, %v3877
      %v3879 = vpop.f32.mrb[0].mxu0
      %v3880 = vadd.f32 %v3330, %v3879
      %v3881 = vpop.f32.mrb[0].mxu0
      %v3882 = vadd.f32 %v3335, %v3881
      %v3883 = vpop.f32.mrb[0].mxu0
      %v3884 = vadd.f32 %v3335, %v3883
      %3885 = vmatprep.mubr.bf16.mxu0 %v3484
      %3886 = vmatmul.mubr.bf16.gmra.mrb[0].mxu0 %v3457
      %v3887 = vpop.f32.mrb[0].mxu0
      %v3888 = vadd.f32 %v3340, %v3887
      %v3889 = vpop.f32.mrb[0].mxu0
      %v3890 = vadd.f32 %v3340, %v3889
      %v3891 = vpop.f32.mrb[0].mxu0
      %v3892 = vadd.f32 %v3345, %v3891
      %v3893 = vpop.f32.mrb[0].mxu0
      %v3894 = vadd.f32 %v3345, %v3893
      %3895 = vmatprep.mubr.bf16.mxu0 %v3487
      %3896 = vmatmul.mubr.bf16.gmra.mrb[0].mxu0 %v3459
      %v3897 = vpop.f32.mrb[0].mxu0
      %v3898 = vadd.f32 %v3350, %v3897
      %v3899 = vpop.f32.mrb[0].mxu0
      %v3900 = vadd.f32 %v3350, %v3899
      %v3901 = vpop.f32.mrb[0].mxu0
      %v3902 = vadd.f32 %v3355, %v3901
      %v3903 = vpop.f32.mrb[0].mxu0
      %v3904 = vadd.f32 %v3355, %v3903
      %3905 = vmatprep.mubr.bf16.mxu0 %v3490
      %3906 = vmatmul.mubr.bf16.gmra.mrb[0].mxu0 %v3461
      %v3907 = vpop.f32.mrb[0].mxu0
      %v3908 = vadd.f32 %v3360, %v3907
      %v3909 = vpop.f32.mrb[0].mxu0
      %v3910 = vadd.f32 %v3360, %v3909
      %v3911 = vpop.f32.mrb[0].mxu0
      %v3912 = vadd.f32 %v3365, %v3911
      %v3913 = vpop.f32.mrb[0].mxu0
      %v3914 = vadd.f32 %v3365, %v3913
      %3915 = vmatprep.mubr.bf16.mxu0 %v3493
      %3916 = vmatmul.mubr.bf16.gmra.mrb[0].mxu0 %v3463
      %v3917 = vpop.f32.mrb[0].mxu0
      %v3918 = vadd.f32 %v3370, %v3917
      %v3919 = vpop.f32.mrb[0].mxu0
      %v3920 = vadd.f32 %v3370, %v3919
      %v3921 = vpop.f32.mrb[0].mxu0
      %v3922 = vadd.f32 %v3375, %v3921
      %v3923 = vpop.f32.mrb[0].mxu0
      %v3924 = vadd.f32 %v3375, %v3923
      %3925 = vmatprep.mubr.bf16.mxu0 %v3496
      %3926 = vmatmul.mubr.bf16.gmra.mrb[0].mxu0 %v3465
      %v3927 = vpop.f32.mrb[0].mxu0
      %v3928 = vadd.f32 %v3380, %v3927
      %v3929 = vpop.f32.mrb[0].mxu0
      %v3930 = vadd.f32 %v3380, %v3929
      %v3931 = vpop.f32.mrb[0].mxu0
      %v3932 = vadd.f32 %v3385, %v3931
      %v3933 = vpop.f32.mrb[0].mxu0
      %v3934 = vadd.f32 %v3385, %v3933
      %3935 = vmatprep.mubr.bf16.mxu0 %v3499
      %3936 = vmatmul.mubr.bf16.gmra.mrb[0].mxu0 %v3467
      %v3937 = vpop.f32.mrb[0].mxu0
      %v3938 = vadd.f32 %v3390, %v3937
      %v3939 = vpop.f32.mrb[0].mxu0
      %v3940 = vadd.f32 %v3390, %v3939
      %v3941 = vpop.f32.mrb[0].mxu0
      %v3942 = vadd.f32 %v3395, %v3941
      %v3943 = vpop.f32.mrb[0].mxu0
      %v3944 = vadd.f32 %v3395, %v3943
      %3945 = vmatprep.mubr.bf16.mxu0 %v3502
      %3946 = vmatmul.mubr.bf16.gmra.mrb[0].mxu0 %v3469
      %v3947 = vpop.f32.mrb[0].mxu0
      %v3948 = vadd.f32 %v3400, %v3947
      %v3949 = vpop.f32.mrb[0].mxu0
      %v3950 = vadd.f32 %v3400, %v3949
      %v3951 = vpop.f32.mrb[0].mxu0
      %v3952 = vadd.f32 %v3405, %v3951
      %v3953 = vpop.f32.mrb[0].mxu0
      %v3954 = vadd.f32 %v3405, %v3953
      %3955 = vdwg.mxu0
      %v3956 = vmax.f32 %v3539, 0.0
      %v3957 = vmax.f32 %v3541, 0.0
      %v3958 = vmax.f32 %v3652, 0.0
      %v3959 = vmax.f32 %v3654, 0.0
      %v3960 = vmax.f32 %v3765, 0.0
      %v3961 = vmax.f32 %v3767, 0.0
      %v3962 = vmax.f32 %v3878, 0.0
      %v3963 = vmax.f32 %v3880, 0.0
      %v3964 = vmax.f32 %v3543, 0.0
      %v3965 = vmax.f32 %v3545, 0.0
      %v3966 = vmax.f32 %v3656, 0.0
      %v3967 = vmax.f32 %v3658, 0.0
      %v3968 = vmax.f32 %v3769, 0.0
      %v3969 = vmax.f32 %v3771, 0.0
      %v3970 = vmax.f32 %v3882, 0.0
      %v3971 = vmax.f32 %v3884, 0.0
      %v3972 = vmax.f32 %v3549, 0.0
      %v3973 = vmax.f32 %v3551, 0.0
      %v3974 = vmax.f32 %v3662, 0.0
      %v3975 = vmax.f32 %v3664, 0.0
      %v3976 = vmax.f32 %v3775, 0.0
      %v3977 = vmax.f32 %v3777, 0.0
      %v3978 = vmax.f32 %v3888, 0.0
      %v3979 = vmax.f32 %v3890, 0.0
      %v3980 = vmax.f32 %v3553, 0.0
      %v3981 = vmax.f32 %v3555, 0.0
      %v3982 = vmax.f32 %v3666, 0.0
      %v3983 = vmax.f32 %v3668, 0.0
      %v3984 = vmax.f32 %v3779, 0.0
      %v3985 = vmax.f32 %v3781, 0.0
      %v3986 = vmax.f32 %v3892, 0.0
      %v3987 = vmax.f32 %v3894, 0.0
      %v3988 = vmax.f32 %v3559, 0.0
      %v3989 = vmax.f32 %v3561, 0.0
      %v3990 = vmax.f32 %v3672, 0.0
      %v3991 = vmax.f32 %v3674, 0.0
      %v3992 = vmax.f32 %v3785, 0.0
      %v3993 = vmax.f32 %v3787, 0.0
      %v3994 = vmax.f32 %v3898, 0.0
      %v3995 = vmax.f32 %v3900, 0.0
      %v3996 = vmax.f32 %v3563, 0.0
      %v3997 = vmax.f32 %v3565, 0.0
      %v3998 = vmax.f32 %v3676, 0.0
      %v3999 = vmax.f32 %v3678, 0.0
      %v4000 = vmax.f32 %v3789, 0.0
      %v4001 = vmax.f32 %v3791, 0.0
      %v4002 = vmax.f32 %v3902, 0.0
      %v4003 = vmax.f32 %v3904, 0.0
      %v4004 = vmax.f32 %v3569, 0.0
      %v4005 = vmax.f32 %v3571, 0.0
      %v4006 = vmax.f32 %v3682, 0.0
      %v4007 = vmax.f32 %v3684, 0.0
      %v4008 = vmax.f32 %v3795, 0.0
      %v4009 = vmax.f32 %v3797, 0.0
      %v4010 = vmax.f32 %v3908, 0.0
      %v4011 = vmax.f32 %v3910, 0.0
      %v4012 = vmax.f32 %v3573, 0.0
      %v4013 = vmax.f32 %v3575, 0.0
      %v4014 = vmax.f32 %v3686, 0.0
      %v4015 = vmax.f32 %v3688, 0.0
      %v4016 = vmax.f32 %v3799, 0.0
      %v4017 = vmax.f32 %v3801, 0.0
      %v4018 = vmax.f32 %v3912, 0.0
      %v4019 = vmax.f32 %v3914, 0.0
      %v4020 = vmax.f32 %v3579, 0.0
      %v4021 = vmax.f32 %v3581, 0.0
      %v4022 = vmax.f32 %v3692, 0.0
      %v4023 = vmax.f32 %v3694, 0.0
      %v4024 = vmax.f32 %v3805, 0.0
      %v4025 = vmax.f32 %v3807, 0.0
      %v4026 = vmax.f32 %v3918, 0.0
      %v4027 = vmax.f32 %v3920, 0.0
      %v4028 = vmax.f32 %v3583, 0.0
      %v4029 = vmax.f32 %v3585, 0.0
      %v4030 = vmax.f32 %v3696, 0.0
      %v4031 = vmax.f32 %v3698, 0.0
      %v4032 = vmax.f32 %v3809, 0.0
      %v4033 = vmax.f32 %v3811, 0.0
      %v4034 = vmax.f32 %v3922, 0.0
      %v4035 = vmax.f32 %v3924, 0.0
      %v4036 = vmax.f32 %v3589, 0.0
      %v4037 = vmax.f32 %v3591, 0.0
      %v4038 = vmax.f32 %v3702, 0.0
      %v4039 = vmax.f32 %v3704, 0.0
      %v4040 = vmax.f32 %v3815, 0.0
      %v4041 = vmax.f32 %v3817, 0.0
      %v4042 = vmax.f32 %v3928, 0.0
      %v4043 = vmax.f32 %v3930, 0.0
      %v4044 = vmax.f32 %v3593, 0.0
      %v4045 = vmax.f32 %v3595, 0.0
      %v4046 = vmax.f32 %v3706, 0.0
      %v4047 = vmax.f32 %v3708, 0.0
      %v4048 = vmax.f32 %v3819, 0.0
      %v4049 = vmax.f32 %v3821, 0.0
      %v4050 = vmax.f32 %v3932, 0.0
      %v4051 = vmax.f32 %v3934, 0.0
      %v4052 = vmax.f32 %v3599, 0.0
      %v4053 = vmax.f32 %v3601, 0.0
      %v4054 = vmax.f32 %v3712, 0.0
      %v4055 = vmax.f32 %v3714, 0.0
      %v4056 = vmax.f32 %v3825, 0.0
      %v4057 = vmax.f32 %v3827, 0.0
      %v4058 = vmax.f32 %v3938, 0.0
      %v4059 = vmax.f32 %v3940, 0.0
      %v4060 = vmax.f32 %v3603, 0.0
      %v4061 = vmax.f32 %v3605, 0.0
      %v4062 = vmax.f32 %v3716, 0.0
      %v4063 = vmax.f32 %v3718, 0.0
      %v4064 = vmax.f32 %v3829, 0.0
      %v4065 = vmax.f32 %v3831, 0.0
      %v4066 = vmax.f32 %v3942, 0.0
      %v4067 = vmax.f32 %v3944, 0.0
      %v4068 = vmax.f32 %v3609, 0.0
      %v4069 = vmax.f32 %v3611, 0.0
      %v4070 = vmax.f32 %v3722, 0.0
      %v4071 = vmax.f32 %v3724, 0.0
      %v4072 = vmax.f32 %v3835, 0.0
      %v4073 = vmax.f32 %v3837, 0.0
      %v4074 = vmax.f32 %v3948, 0.0
      %v4075 = vmax.f32 %v3950, 0.0
      %v4076 = vmax.f32 %v3613, 0.0
      %v4077 = vmax.f32 %v3615, 0.0
      %v4078 = vmax.f32 %v3726, 0.0
      %v4079 = vmax.f32 %v3728, 0.0
      %v4080 = vmax.f32 %v3839, 0.0
      %v4081 = vmax.f32 %v3841, 0.0
      %v4082 = vmax.f32 %v3952, 0.0
      %v4083 = vmax.f32 %v3954, 0.0
      %4084 = vrot.lane.b32.xlu0 %v3956, 120
      %v4085 = vpop.permute.xlu0 %4084
      %4086 = vrot.lane.b32.xlu0 %v3964, 120
      %v4087 = vpop.permute.xlu0 %4086
      %4088 = vrot.lane.b32.xlu0 %v3972, 120
      %v4089 = vpop.permute.xlu0 %4088
      %4090 = vrot.lane.b32.xlu0 %v3980, 120
      %v4091 = vpop.permute.xlu0 %4090
      %4092 = vrot.lane.b32.xlu0 %v3988, 120
      %v4093 = vpop.permute.xlu0 %4092
      %4094 = vrot.lane.b32.xlu0 %v3996, 120
      %v4095 = vpop.permute.xlu0 %4094
      %4096 = vrot.lane.b32.xlu0 %v4004, 120
      %v4097 = vpop.permute.xlu0 %4096
      %4098 = vrot.lane.b32.xlu0 %v4012, 120
      %v4099 = vpop.permute.xlu0 %4098
      %4100 = vrot.lane.b32.xlu0 %v4020, 120
      %v4101 = vpop.permute.xlu0 %4100
      %4102 = vrot.lane.b32.xlu0 %v4028, 120
      %v4103 = vpop.permute.xlu0 %4102
      %4104 = vrot.lane.b32.xlu0 %v4036, 120
      %v4105 = vpop.permute.xlu0 %4104
      %4106 = vrot.lane.b32.xlu0 %v4044, 120
      %v4107 = vpop.permute.xlu0 %4106
      %4108 = vrot.lane.b32.xlu0 %v4052, 120
      %v4109 = vpop.permute.xlu0 %4108
      %4110 = vrot.lane.b32.xlu0 %v4060, 120
      %v4111 = vpop.permute.xlu0 %4110
      %4112 = vrot.lane.b32.xlu0 %v4068, 120
      %v4113 = vpop.permute.xlu0 %4112
      %4114 = vrot.lane.b32.xlu0 %v4076, 120
      %v4115 = vpop.permute.xlu0 %4114
      %4116 = vrot.lane.b32.xlu0 %v3957, 120
      %v4117 = vpop.permute.xlu0 %4116
      %4118 = vrot.lane.b32.xlu0 %v3965, 120
      %v4119 = vpop.permute.xlu0 %4118
      %4120 = vrot.lane.b32.xlu0 %v3973, 120
      %v4121 = vpop.permute.xlu0 %4120
      %4122 = vrot.lane.b32.xlu0 %v3981, 120
      %v4123 = vpop.permute.xlu0 %4122
      %4124 = vrot.lane.b32.xlu0 %v3989, 120
      %v4125 = vpop.permute.xlu0 %4124
      %4126 = vrot.lane.b32.xlu0 %v3997, 120
      %v4127 = vpop.permute.xlu0 %4126
      %4128 = vrot.lane.b32.xlu0 %v4005, 120
      %v4129 = vpop.permute.xlu0 %4128
      %4130 = vrot.lane.b32.xlu0 %v4013, 120
      %v4131 = vpop.permute.xlu0 %4130
      %4132 = vrot.lane.b32.xlu0 %v4021, 120
      %v4133 = vpop.permute.xlu0 %4132
      %4134 = vrot.lane.b32.xlu0 %v4029, 120
      %v4135 = vpop.permute.xlu0 %4134
      %4136 = vrot.lane.b32.xlu0 %v4037, 120
      %v4137 = vpop.permute.xlu0 %4136
      %4138 = vrot.lane.b32.xlu0 %v4045, 120
      %v4139 = vpop.permute.xlu0 %4138
      %4140 = vrot.lane.b32.xlu0 %v4053, 120
      %v4141 = vpop.permute.xlu0 %4140
      %4142 = vrot.lane.b32.xlu0 %v4061, 120
      %v4143 = vpop.permute.xlu0 %4142
      %4144 = vrot.lane.b32.xlu0 %v4069, 120
      %v4145 = vpop.permute.xlu0 %4144
      %4146 = vrot.lane.b32.xlu0 %v4077, 120
      %v4147 = vpop.permute.xlu0 %4146
      %4148 = vrot.lane.b32.xlu0 %v3958, 120
      %v4149 = vpop.permute.xlu0 %4148
      %4150 = vrot.lane.b32.xlu0 %v3966, 120
      %v4151 = vpop.permute.xlu0 %4150
      %4152 = vrot.lane.b32.xlu0 %v3974, 120
      %v4153 = vpop.permute.xlu0 %4152
      %4154 = vrot.lane.b32.xlu0 %v3982, 120
      %v4155 = vpop.permute.xlu0 %4154
      %4156 = vrot.lane.b32.xlu0 %v3990, 120
      %v4157 = vpop.permute.xlu0 %4156
      %4158 = vrot.lane.b32.xlu0 %v3998, 120
      %v4159 = vpop.permute.xlu0 %4158
      %4160 = vrot.lane.b32.xlu0 %v4006, 120
      %v4161 = vpop.permute.xlu0 %4160
      %4162 = vrot.lane.b32.xlu0 %v4014, 120
      %v4163 = vpop.permute.xlu0 %4162
      %4164 = vrot.lane.b32.xlu0 %v4022, 120
      %v4165 = vpop.permute.xlu0 %4164
      %4166 = vrot.lane.b32.xlu0 %v4030, 120
      %v4167 = vpop.permute.xlu0 %4166
      %4168 = vrot.lane.b32.xlu0 %v4038, 120
      %v4169 = vpop.permute.xlu0 %4168
      %4170 = vrot.lane.b32.xlu0 %v4046, 120
      %v4171 = vpop.permute.xlu0 %4170
      %4172 = vrot.lane.b32.xlu0 %v4054, 120
      %v4173 = vpop.permute.xlu0 %4172
      %4174 = vrot.lane.b32.xlu0 %v4062, 120
      %v4175 = vpop.permute.xlu0 %4174
      %4176 = vrot.lane.b32.xlu0 %v4070, 120
      %v4177 = vpop.permute.xlu0 %4176
      %4178 = vrot.lane.b32.xlu0 %v4078, 120
      %v4179 = vpop.permute.xlu0 %4178
      %4180 = vrot.lane.b32.xlu0 %v3959, 120
      %v4181 = vpop.permute.xlu0 %4180
      %4182 = vrot.lane.b32.xlu0 %v3967, 120
      %v4183 = vpop.permute.xlu0 %4182
      %4184 = vrot.lane.b32.xlu0 %v3975, 120
      %v4185 = vpop.permute.xlu0 %4184
      %4186 = vrot.lane.b32.xlu0 %v3983, 120
      %v4187 = vpop.permute.xlu0 %4186
      %4188 = vrot.lane.b32.xlu0 %v3991, 120
      %v4189 = vpop.permute.xlu0 %4188
      %4190 = vrot.lane.b32.xlu0 %v3999, 120
      %v4191 = vpop.permute.xlu0 %4190
      %4192 = vrot.lane.b32.xlu0 %v4007, 120
      %v4193 = vpop.permute.xlu0 %4192
      %4194 = vrot.lane.b32.xlu0 %v4015, 120
      %v4195 = vpop.permute.xlu0 %4194
      %4196 = vrot.lane.b32.xlu0 %v4023, 120
      %v4197 = vpop.permute.xlu0 %4196
      %4198 = vrot.lane.b32.xlu0 %v4031, 120
      %v4199 = vpop.permute.xlu0 %4198
      %4200 = vrot.lane.b32.xlu0 %v4039, 120
      %v4201 = vpop.permute.xlu0 %4200
      %4202 = vrot.lane.b32.xlu0 %v4047, 120
      %v4203 = vpop.permute.xlu0 %4202
      %4204 = vrot.lane.b32.xlu0 %v4055, 120
      %v4205 = vpop.permute.xlu0 %4204
      %4206 = vrot.lane.b32.xlu0 %v4063, 120
      %v4207 = vpop.permute.xlu0 %4206
      %4208 = vrot.lane.b32.xlu0 %v4071, 120
      %v4209 = vpop.permute.xlu0 %4208
      %4210 = vrot.lane.b32.xlu0 %v4079, 120
      %v4211 = vpop.permute.xlu0 %4210
      %4212 = vrot.lane.b32.xlu0 %v3960, 120
      %v4213 = vpop.permute.xlu0 %4212
      %4214 = vrot.lane.b32.xlu0 %v3968, 120
      %v4215 = vpop.permute.xlu0 %4214
      %4216 = vrot.lane.b32.xlu0 %v3976, 120
      %v4217 = vpop.permute.xlu0 %4216
      %4218 = vrot.lane.b32.xlu0 %v3984, 120
      %v4219 = vpop.permute.xlu0 %4218
      %4220 = vrot.lane.b32.xlu0 %v3992, 120
      %v4221 = vpop.permute.xlu0 %4220
      %4222 = vrot.lane.b32.xlu0 %v4000, 120
      %v4223 = vpop.permute.xlu0 %4222
      %4224 = vrot.lane.b32.xlu0 %v4008, 120
      %v4225 = vpop.permute.xlu0 %4224
      %4226 = vrot.lane.b32.xlu0 %v4016, 120
      %v4227 = vpop.permute.xlu0 %4226
      %4228 = vrot.lane.b32.xlu0 %v4024, 120
      %v4229 = vpop.permute.xlu0 %4228
      %4230 = vrot.lane.b32.xlu0 %v4032, 120
      %v4231 = vpop.permute.xlu0 %4230
      %4232 = vrot.lane.b32.xlu0 %v4040, 120
      %v4233 = vpop.permute.xlu0 %4232
      %4234 = vrot.lane.b32.xlu0 %v4048, 120
      %v4235 = vpop.permute.xlu0 %4234
      %4236 = vrot.lane.b32.xlu0 %v4056, 120
      %v4237 = vpop.permute.xlu0 %4236
      %4238 = vrot.lane.b32.xlu0 %v4064, 120
      %v4239 = vpop.permute.xlu0 %4238
      %4240 = vrot.lane.b32.xlu0 %v4072, 120
      %v4241 = vpop.permute.xlu0 %4240
      %4242 = vrot.lane.b32.xlu0 %v4080, 120
      %v4243 = vpop.permute.xlu0 %4242
      %4244 = vrot.lane.b32.xlu0 %v3961, 120
      %v4245 = vpop.permute.xlu0 %4244
      %4246 = vrot.lane.b32.xlu0 %v3969, 120
      %v4247 = vpop.permute.xlu0 %4246
      %4248 = vrot.lane.b32.xlu0 %v3977, 120
      %v4249 = vpop.permute.xlu0 %4248
      %4250 = vrot.lane.b32.xlu0 %v3985, 120
      %v4251 = vpop.permute.xlu0 %4250
      %4252 = vrot.lane.b32.xlu0 %v3993, 120
      %v4253 = vpop.permute.xlu0 %4252
      %4254 = vrot.lane.b32.xlu0 %v4001, 120
      %v4255 = vpop.permute.xlu0 %4254
      %4256 = vrot.lane.b32.xlu0 %v4009, 120
      %v4257 = vpop.permute.xlu0 %4256
      %4258 = vrot.lane.b32.xlu0 %v4017, 120
      %v4259 = vpop.permute.xlu0 %4258
      %4260 = vrot.lane.b32.xlu0 %v4025, 120
      %v4261 = vpop.permute.xlu0 %4260
      %4262 = vrot.lane.b32.xlu0 %v4033, 120
      %v4263 = vpop.permute.xlu0 %4262
      %4264 = vrot.lane.b32.xlu0 %v4041, 120
      %v4265 = vpop.permute.xlu0 %4264
      %4266 = vrot.lane.b32.xlu0 %v4049, 120
      %v4267 = vpop.permute.xlu0 %4266
      %4268 = vrot.lane.b32.xlu0 %v4057, 120
      %v4269 = vpop.permute.xlu0 %4268
      %4270 = vrot.lane.b32.xlu0 %v4065, 120
      %v4271 = vpop.permute.xlu0 %4270
      %4272 = vrot.lane.b32.xlu0 %v4073, 120
      %v4273 = vpop.permute.xlu0 %4272
      %4274 = vrot.lane.b32.xlu0 %v4081, 120
      %v4275 = vpop.permute.xlu0 %4274
      %4276 = vrot.lane.b32.xlu0 %v3962, 120
      %v4277 = vpop.permute.xlu0 %4276
      %4278 = vrot.lane.b32.xlu0 %v3970, 120
      %v4279 = vpop.permute.xlu0 %4278
      %4280 = vrot.lane.b32.xlu0 %v3978, 120
      %v4281 = vpop.permute.xlu0 %4280
      %4282 = vrot.lane.b32.xlu0 %v3986, 120
      %v4283 = vpop.permute.xlu0 %4282
      %4284 = vrot.lane.b32.xlu0 %v3994, 120
      %v4285 = vpop.permute.xlu0 %4284
      %4286 = vrot.lane.b32.xlu0 %v4002, 120
      %v4287 = vpop.permute.xlu0 %4286
      %4288 = vrot.lane.b32.xlu0 %v4010, 120
      %v4289 = vpop.permute.xlu0 %4288
      %4290 = vrot.lane.b32.xlu0 %v4018, 120
      %v4291 = vpop.permute.xlu0 %4290
      %4292 = vrot.lane.b32.xlu0 %v4026, 120
      %v4293 = vpop.permute.xlu0 %4292
      %4294 = vrot.lane.b32.xlu0 %v4034, 120
      %v4295 = vpop.permute.xlu0 %4294
      %4296 = vrot.lane.b32.xlu0 %v4042, 120
      %v4297 = vpop.permute.xlu0 %4296
      %4298 = vrot.lane.b32.xlu0 %v4050, 120
      %v4299 = vpop.permute.xlu0 %4298
      %4300 = vrot.lane.b32.xlu0 %v4058, 120
      %v4301 = vpop.permute.xlu0 %4300
      %4302 = vrot.lane.b32.xlu0 %v4066, 120
      %v4303 = vpop.permute.xlu0 %4302
      %4304 = vrot.lane.b32.xlu0 %v4074, 120
      %v4305 = vpop.permute.xlu0 %4304
      %4306 = vrot.lane.b32.xlu0 %v4082, 120
      %v4307 = vpop.permute.xlu0 %4306
      %4308 = vrot.lane.b32.xlu0 %v3963, 120
      %v4309 = vpop.permute.xlu0 %4308
      %4310 = vrot.lane.b32.xlu0 %v3971, 120
      %v4311 = vpop.permute.xlu0 %4310
      %4312 = vrot.lane.b32.xlu0 %v3979, 120
      %v4313 = vpop.permute.xlu0 %4312
      %4314 = vrot.lane.b32.xlu0 %v3987, 120
      %v4315 = vpop.permute.xlu0 %4314
      %4316 = vrot.lane.b32.xlu0 %v3995, 120
      %v4317 = vpop.permute.xlu0 %4316
      %4318 = vrot.lane.b32.xlu0 %v4003, 120
      %v4319 = vpop.permute.xlu0 %4318
      %4320 = vrot.lane.b32.xlu0 %v4011, 120
      %v4321 = vpop.permute.xlu0 %4320
      %4322 = vrot.lane.b32.xlu0 %v4019, 120
      %v4323 = vpop.permute.xlu0 %4322
      %4324 = vrot.lane.b32.xlu0 %v4027, 120
      %v4325 = vpop.permute.xlu0 %4324
      %4326 = vrot.lane.b32.xlu0 %v4035, 120
      %v4327 = vpop.permute.xlu0 %4326
      %4328 = vrot.lane.b32.xlu0 %v4043, 120
      %v4329 = vpop.permute.xlu0 %4328
      %4330 = vrot.lane.b32.xlu0 %v4051, 120
      %v4331 = vpop.permute.xlu0 %4330
      %4332 = vrot.lane.b32.xlu0 %v4059, 120
      %v4333 = vpop.permute.xlu0 %4332
      %4334 = vrot.lane.b32.xlu0 %v4067, 120
      %v4335 = vpop.permute.xlu0 %4334
      %4336 = vrot.lane.b32.xlu0 %v4075, 120
      %v4337 = vpop.permute.xlu0 %4336
      %4338 = vrot.lane.b32.xlu0 %v4083, 120
      %v4339 = vpop.permute.xlu0 %4338
      %v4340 = vsel %vm3038, %v4277, %v4309
      %v4341 = vsel %vm3038, %v4279, %v4311
      %v4342 = vsel %vm3038, %v4281, %v4313
      %v4343 = vsel %vm3038, %v4283, %v4315
      %v4344 = vsel %vm3038, %v4285, %v4317
      %v4345 = vsel %vm3038, %v4287, %v4319
      %v4346 = vsel %vm3038, %v4289, %v4321
      %v4347 = vsel %vm3038, %v4291, %v4323
      %v4348 = vsel %vm3038, %v4293, %v4325
      %v4349 = vsel %vm3038, %v4295, %v4327
      %v4350 = vsel %vm3038, %v4297, %v4329
      %v4351 = vsel %vm3038, %v4299, %v4331
      %v4352 = vsel %vm3038, %v4301, %v4333
      %v4353 = vsel %vm3038, %v4303, %v4335
      %v4354 = vsel %vm3038, %v4305, %v4337
      %v4355 = vsel %vm3038, %v4307, %v4339
      %v4356 = vsel %vm3038, %v4245, %v4277
      %v4357 = vsel %vm3038, %v4247, %v4279
      %v4358 = vsel %vm3038, %v4249, %v4281
      %v4359 = vsel %vm3038, %v4251, %v4283
      %v4360 = vsel %vm3038, %v4253, %v4285
      %v4361 = vsel %vm3038, %v4255, %v4287
      %v4362 = vsel %vm3038, %v4257, %v4289
      %v4363 = vsel %vm3038, %v4259, %v4291
      %v4364 = vsel %vm3038, %v4261, %v4293
      %v4365 = vsel %vm3038, %v4263, %v4295
      %v4366 = vsel %vm3038, %v4265, %v4297
      %v4367 = vsel %vm3038, %v4267, %v4299
      %v4368 = vsel %vm3038, %v4269, %v4301
      %v4369 = vsel %vm3038, %v4271, %v4303
      %v4370 = vsel %vm3038, %v4273, %v4305
      %v4371 = vsel %vm3038, %v4275, %v4307
      %v4372 = vsel %vm3038, %v4213, %v4245
      %v4373 = vsel %vm3038, %v4215, %v4247
      %v4374 = vsel %vm3038, %v4217, %v4249
      %v4375 = vsel %vm3038, %v4219, %v4251
      %v4376 = vsel %vm3038, %v4221, %v4253
      %v4377 = vsel %vm3038, %v4223, %v4255
      %v4378 = vsel %vm3038, %v4225, %v4257
      %v4379 = vsel %vm3038, %v4227, %v4259
      %v4380 = vsel %vm3038, %v4229, %v4261
      %v4381 = vsel %vm3038, %v4231, %v4263
      %v4382 = vsel %vm3038, %v4233, %v4265
      %v4383 = vsel %vm3038, %v4235, %v4267
      %v4384 = vsel %vm3038, %v4237, %v4269
      %v4385 = vsel %vm3038, %v4239, %v4271
      %v4386 = vsel %vm3038, %v4241, %v4273
      %v4387 = vsel %vm3038, %v4243, %v4275
      %v4388 = vsel %vm3038, %v4181, %v4213
      %v4389 = vsel %vm3038, %v4183, %v4215
      %v4390 = vsel %vm3038, %v4185, %v4217
      %v4391 = vsel %vm3038, %v4187, %v4219
      %v4392 = vsel %vm3038, %v4189, %v4221
      %v4393 = vsel %vm3038, %v4191, %v4223
      %v4394 = vsel %vm3038, %v4193, %v4225
      %v4395 = vsel %vm3038, %v4195, %v4227
      %v4396 = vsel %vm3038, %v4197, %v4229
      %v4397 = vsel %vm3038, %v4199, %v4231
      %v4398 = vsel %vm3038, %v4201, %v4233
      %v4399 = vsel %vm3038, %v4203, %v4235
      %v4400 = vsel %vm3038, %v4205, %v4237
      %v4401 = vsel %vm3038, %v4207, %v4239
      %v4402 = vsel %vm3038, %v4209, %v4241
      %v4403 = vsel %vm3038, %v4211, %v4243
      %v4404 = vsel %vm3038, %v4149, %v4181
      %v4405 = vsel %vm3038, %v4151, %v4183
      %v4406 = vsel %vm3038, %v4153, %v4185
      %v4407 = vsel %vm3038, %v4155, %v4187
      %v4408 = vsel %vm3038, %v4157, %v4189
      %v4409 = vsel %vm3038, %v4159, %v4191
      %v4410 = vsel %vm3038, %v4161, %v4193
      %v4411 = vsel %vm3038, %v4163, %v4195
      %v4412 = vsel %vm3038, %v4165, %v4197
      %v4413 = vsel %vm3038, %v4167, %v4199
      %v4414 = vsel %vm3038, %v4169, %v4201
      %v4415 = vsel %vm3038, %v4171, %v4203
      %v4416 = vsel %vm3038, %v4173, %v4205
      %v4417 = vsel %vm3038, %v4175, %v4207
      %v4418 = vsel %vm3038, %v4177, %v4209
      %v4419 = vsel %vm3038, %v4179, %v4211
      %v4420 = vsel %vm3038, %v4117, %v4149
      %v4421 = vsel %vm3038, %v4119, %v4151
      %v4422 = vsel %vm3038, %v4121, %v4153
      %v4423 = vsel %vm3038, %v4123, %v4155
      %v4424 = vsel %vm3038, %v4125, %v4157
      %v4425 = vsel %vm3038, %v4127, %v4159
      %v4426 = vsel %vm3038, %v4129, %v4161
      %v4427 = vsel %vm3038, %v4131, %v4163
      %v4428 = vsel %vm3038, %v4133, %v4165
      %v4429 = vsel %vm3038, %v4135, %v4167
      %v4430 = vsel %vm3038, %v4137, %v4169
      %v4431 = vsel %vm3038, %v4139, %v4171
      %v4432 = vsel %vm3038, %v4141, %v4173
      %v4433 = vsel %vm3038, %v4143, %v4175
      %v4434 = vsel %vm3038, %v4145, %v4177
      %v4435 = vsel %vm3038, %v4147, %v4179
      %v4436 = vsel %vm3038, %v4085, %v4117
      %v4437 = vsel %vm3038, %v4087, %v4119
      %v4438 = vsel %vm3038, %v4089, %v4121
      %v4439 = vsel %vm3038, %v4091, %v4123
      %v4440 = vsel %vm3038, %v4093, %v4125
      %v4441 = vsel %vm3038, %v4095, %v4127
      %v4442 = vsel %vm3038, %v4097, %v4129
      %v4443 = vsel %vm3038, %v4099, %v4131
      %v4444 = vsel %vm3038, %v4101, %v4133
      %v4445 = vsel %vm3038, %v4103, %v4135
      %v4446 = vsel %vm3038, %v4105, %v4137
      %v4447 = vsel %vm3038, %v4107, %v4139
      %v4448 = vsel %vm3038, %v4109, %v4141
      %v4449 = vsel %vm3038, %v4111, %v4143
      %v4450 = vsel %vm3038, %v4113, %v4145
      %v4451 = vsel %vm3038, %v4115, %v4147
      %v4452 = vsel %vm3038, %v4309, %v4085
      %v4453 = vsel %vm3038, %v4311, %v4087
      %v4454 = vsel %vm3038, %v4313, %v4089
      %v4455 = vsel %vm3038, %v4315, %v4091
      %v4456 = vsel %vm3038, %v4317, %v4093
      %v4457 = vsel %vm3038, %v4319, %v4095
      %v4458 = vsel %vm3038, %v4321, %v4097
      %v4459 = vsel %vm3038, %v4323, %v4099
      %v4460 = vsel %vm3038, %v4325, %v4101
      %v4461 = vsel %vm3038, %v4327, %v4103
      %v4462 = vsel %vm3038, %v4329, %v4105
      %v4463 = vsel %vm3038, %v4331, %v4107
      %v4464 = vsel %vm3038, %v4333, %v4109
      %v4465 = vsel %vm3038, %v4335, %v4111
      %v4466 = vsel %vm3038, %v4337, %v4113
      %v4467 = vsel %vm3038, %v4339, %v4115
      %v4468 = vmax.f32 %v3956, %v4436
      %v4469 = vmax.f32 %v3957, %v4420
      %v4470 = vmax.f32 %v3958, %v4404
      %v4471 = vmax.f32 %v3959, %v4388
      %v4472 = vmax.f32 %v3960, %v4372
      %v4473 = vmax.f32 %v3961, %v4356
      %v4474 = vmax.f32 %v3962, %v4340
      %v4475 = vmax.f32 %v3963, %v4452
      %v4476 = vmax.f32 %v3964, %v4437
      %v4477 = vmax.f32 %v3965, %v4421
      %v4478 = vmax.f32 %v3966, %v4405
      %v4479 = vmax.f32 %v3967, %v4389
      %v4480 = vmax.f32 %v3968, %v4373
      %v4481 = vmax.f32 %v3969, %v4357
      %v4482 = vmax.f32 %v3970, %v4341
      %v4483 = vmax.f32 %v3971, %v4453
      %v4484 = vmax.f32 %v3972, %v4438
      %v4485 = vmax.f32 %v3973, %v4422
      %v4486 = vmax.f32 %v3974, %v4406
      %v4487 = vmax.f32 %v3975, %v4390
      %v4488 = vmax.f32 %v3976, %v4374
      %v4489 = vmax.f32 %v3977, %v4358
      %v4490 = vmax.f32 %v3978, %v4342
      %v4491 = vmax.f32 %v3979, %v4454
      %v4492 = vmax.f32 %v3980, %v4439
      %v4493 = vmax.f32 %v3981, %v4423
      %v4494 = vmax.f32 %v3982, %v4407
      %v4495 = vmax.f32 %v3983, %v4391
      %v4496 = vmax.f32 %v3984, %v4375
      %v4497 = vmax.f32 %v3985, %v4359
      %v4498 = vmax.f32 %v3986, %v4343
      %v4499 = vmax.f32 %v3987, %v4455
      %v4500 = vmax.f32 %v3988, %v4440
      %v4501 = vmax.f32 %v3989, %v4424
      %v4502 = vmax.f32 %v3990, %v4408
      %v4503 = vmax.f32 %v3991, %v4392
      %v4504 = vmax.f32 %v3992, %v4376
      %v4505 = vmax.f32 %v3993, %v4360
      %v4506 = vmax.f32 %v3994, %v4344
      %v4507 = vmax.f32 %v3995, %v4456
      %v4508 = vmax.f32 %v3996, %v4441
      %v4509 = vmax.f32 %v3997, %v4425
      %v4510 = vmax.f32 %v3998, %v4409
      %v4511 = vmax.f32 %v3999, %v4393
      %v4512 = vmax.f32 %v4000, %v4377
      %v4513 = vmax.f32 %v4001, %v4361
      %v4514 = vmax.f32 %v4002, %v4345
      %v4515 = vmax.f32 %v4003, %v4457
      %v4516 = vmax.f32 %v4004, %v4442
      %v4517 = vmax.f32 %v4005, %v4426
      %v4518 = vmax.f32 %v4006, %v4410
      %v4519 = vmax.f32 %v4007, %v4394
      %v4520 = vmax.f32 %v4008, %v4378
      %v4521 = vmax.f32 %v4009, %v4362
      %v4522 = vmax.f32 %v4010, %v4346
      %v4523 = vmax.f32 %v4011, %v4458
      %v4524 = vmax.f32 %v4012, %v4443
      %v4525 = vmax.f32 %v4013, %v4427
      %v4526 = vmax.f32 %v4014, %v4411
      %v4527 = vmax.f32 %v4015, %v4395
      %v4528 = vmax.f32 %v4016, %v4379
      %v4529 = vmax.f32 %v4017, %v4363
      %v4530 = vmax.f32 %v4018, %v4347
      %v4531 = vmax.f32 %v4019, %v4459
      %v4532 = vmax.f32 %v4020, %v4444
      %v4533 = vmax.f32 %v4021, %v4428
      %v4534 = vmax.f32 %v4022, %v4412
      %v4535 = vmax.f32 %v4023, %v4396
      %v4536 = vmax.f32 %v4024, %v4380
      %v4537 = vmax.f32 %v4025, %v4364
      %v4538 = vmax.f32 %v4026, %v4348
      %v4539 = vmax.f32 %v4027, %v4460
      %v4540 = vmax.f32 %v4028, %v4445
      %v4541 = vmax.f32 %v4029, %v4429
      %v4542 = vmax.f32 %v4030, %v4413
      %v4543 = vmax.f32 %v4031, %v4397
      %v4544 = vmax.f32 %v4032, %v4381
      %v4545 = vmax.f32 %v4033, %v4365
      %v4546 = vmax.f32 %v4034, %v4349
      %v4547 = vmax.f32 %v4035, %v4461
      %v4548 = vmax.f32 %v4036, %v4446
      %v4549 = vmax.f32 %v4037, %v4430
      %v4550 = vmax.f32 %v4038, %v4414
      %v4551 = vmax.f32 %v4039, %v4398
      %v4552 = vmax.f32 %v4040, %v4382
      %v4553 = vmax.f32 %v4041, %v4366
      %v4554 = vmax.f32 %v4042, %v4350
      %v4555 = vmax.f32 %v4043, %v4462
      %v4556 = vmax.f32 %v4044, %v4447
      %v4557 = vmax.f32 %v4045, %v4431
      %v4558 = vmax.f32 %v4046, %v4415
      %v4559 = vmax.f32 %v4047, %v4399
      %v4560 = vmax.f32 %v4048, %v4383
      %v4561 = vmax.f32 %v4049, %v4367
      %v4562 = vmax.f32 %v4050, %v4351
      %v4563 = vmax.f32 %v4051, %v4463
      %v4564 = vmax.f32 %v4052, %v4448
      %v4565 = vmax.f32 %v4053, %v4432
      %v4566 = vmax.f32 %v4054, %v4416
      %v4567 = vmax.f32 %v4055, %v4400
      %v4568 = vmax.f32 %v4056, %v4384
      %v4569 = vmax.f32 %v4057, %v4368
      %v4570 = vmax.f32 %v4058, %v4352
      %v4571 = vmax.f32 %v4059, %v4464
      %v4572 = vmax.f32 %v4060, %v4449
      %v4573 = vmax.f32 %v4061, %v4433
      %v4574 = vmax.f32 %v4062, %v4417
      %v4575 = vmax.f32 %v4063, %v4401
      %v4576 = vmax.f32 %v4064, %v4385
      %v4577 = vmax.f32 %v4065, %v4369
      %v4578 = vmax.f32 %v4066, %v4353
      %v4579 = vmax.f32 %v4067, %v4465
      %v4580 = vmax.f32 %v4068, %v4450
      %v4581 = vmax.f32 %v4069, %v4434
      %v4582 = vmax.f32 %v4070, %v4418
      %v4583 = vmax.f32 %v4071, %v4402
      %v4584 = vmax.f32 %v4072, %v4386
      %v4585 = vmax.f32 %v4073, %v4370
      %v4586 = vmax.f32 %v4074, %v4354
      %v4587 = vmax.f32 %v4075, %v4466
      %v4588 = vmax.f32 %v4076, %v4451
      %v4589 = vmax.f32 %v4077, %v4435
      %v4590 = vmax.f32 %v4078, %v4419
      %v4591 = vmax.f32 %v4079, %v4403
      %v4592 = vmax.f32 %v4080, %v4387
      %v4593 = vmax.f32 %v4081, %v4371
      %v4594 = vmax.f32 %v4082, %v4355
      %v4595 = vmax.f32 %v4083, %v4467
      %v4596 = vpack.c.bf16 %v4476, %v4468
      %v4597 = vpack.c.bf16 %v4477, %v4469
      %v4598 = vpack.c.bf16 %v4478, %v4470
      %v4599 = vpack.c.bf16 %v4479, %v4471
      %v4600 = vpack.c.bf16 %v4480, %v4472
      %v4601 = vpack.c.bf16 %v4481, %v4473
      %v4602 = vpack.c.bf16 %v4482, %v4474
      %v4603 = vpack.c.bf16 %v4483, %v4475
      %v4604 = vpack.c.bf16 %v4492, %v4484
      %v4605 = vpack.c.bf16 %v4493, %v4485
      %v4606 = vpack.c.bf16 %v4494, %v4486
      %v4607 = vpack.c.bf16 %v4495, %v4487
      %v4608 = vpack.c.bf16 %v4496, %v4488
      %v4609 = vpack.c.bf16 %v4497, %v4489
      %v4610 = vpack.c.bf16 %v4498, %v4490
      %v4611 = vpack.c.bf16 %v4499, %v4491
      %v4612 = vpack.c.bf16 %v4508, %v4500
      %v4613 = vpack.c.bf16 %v4509, %v4501
      %v4614 = vpack.c.bf16 %v4510, %v4502
      %v4615 = vpack.c.bf16 %v4511, %v4503
      %v4616 = vpack.c.bf16 %v4512, %v4504
      %v4617 = vpack.c.bf16 %v4513, %v4505
      %v4618 = vpack.c.bf16 %v4514, %v4506
      %v4619 = vpack.c.bf16 %v4515, %v4507
      %v4620 = vpack.c.bf16 %v4524, %v4516
      %v4621 = vpack.c.bf16 %v4525, %v4517
      %v4622 = vpack.c.bf16 %v4526, %v4518
      %v4623 = vpack.c.bf16 %v4527, %v4519
      %v4624 = vpack.c.bf16 %v4528, %v4520
      %v4625 = vpack.c.bf16 %v4529, %v4521
      %v4626 = vpack.c.bf16 %v4530, %v4522
      %v4627 = vpack.c.bf16 %v4531, %v4523
      %v4628 = vpack.c.bf16 %v4540, %v4532
      %v4629 = vpack.c.bf16 %v4541, %v4533
      %v4630 = vpack.c.bf16 %v4542, %v4534
      %v4631 = vpack.c.bf16 %v4543, %v4535
      %v4632 = vpack.c.bf16 %v4544, %v4536
      %v4633 = vpack.c.bf16 %v4545, %v4537
      %v4634 = vpack.c.bf16 %v4546, %v4538
      %v4635 = vpack.c.bf16 %v4547, %v4539
      %v4636 = vpack.c.bf16 %v4556, %v4548
      %v4637 = vpack.c.bf16 %v4557, %v4549
      %v4638 = vpack.c.bf16 %v4558, %v4550
      %v4639 = vpack.c.bf16 %v4559, %v4551
      %v4640 = vpack.c.bf16 %v4560, %v4552
      %v4641 = vpack.c.bf16 %v4561, %v4553
      %v4642 = vpack.c.bf16 %v4562, %v4554
      %v4643 = vpack.c.bf16 %v4563, %v4555
      %v4644 = vpack.c.bf16 %v4572, %v4564
      %v4645 = vpack.c.bf16 %v4573, %v4565
      %v4646 = vpack.c.bf16 %v4574, %v4566
      %v4647 = vpack.c.bf16 %v4575, %v4567
      %v4648 = vpack.c.bf16 %v4576, %v4568
      %v4649 = vpack.c.bf16 %v4577, %v4569
      %v4650 = vpack.c.bf16 %v4578, %v4570
      %v4651 = vpack.c.bf16 %v4579, %v4571
      %v4652 = vpack.c.bf16 %v4588, %v4580
      %v4653 = vpack.c.bf16 %v4589, %v4581
      %v4654 = vpack.c.bf16 %v4590, %v4582
      %v4655 = vpack.c.bf16 %v4591, %v4583
      %v4656 = vpack.c.bf16 %v4592, %v4584
      %v4657 = vpack.c.bf16 %v4593, %v4585
      %v4658 = vpack.c.bf16 %v4594, %v4586
      %v4659 = vpack.c.bf16 %v4595, %v4587
      %v4660 = vld [vmem:[%s10] sm:$0xf]
      %v4661 = vld [vmem:[%s10 + $0x4] sm:$0xf]
      %v4662 = vld [vmem:[%s10 + $0x8] sm:$0xf]
      %v4663 = vld [vmem:[%s10 + $0xc] sm:$0xf]
      %v4664 = vld [vmem:[%s10 + $0x10] sm:$0xf]
      %v4665 = vld [vmem:[%s10 + $0x14] sm:$0xf]
      %v4666 = vld [vmem:[%s10 + $0x18] sm:$0xf]
      %v4667 = vld [vmem:[%s10 + $0x1c] sm:$0xf]
      %v4668 = vld [vmem:[%s10 + $0x20] sm:$0xf]
      %v4669 = vld [vmem:[%s10 + $0x24] sm:$0xf]
      %v4670 = vld [vmem:[%s10 + $0x28] sm:$0xf]
      %v4671 = vld [vmem:[%s10 + $0x2c] sm:$0xf]
      %v4672 = vld [vmem:[%s10 + $0x30] sm:$0xf]
      %v4673 = vld [vmem:[%s10 + $0x34] sm:$0xf]
      %v4674 = vld [vmem:[%s10 + $0x38] sm:$0xf]
      %v4675 = vld [vmem:[%s10 + $0x3c] sm:$0xf]
      %v4676 = vld [vmem:[%s10 + $0x40] sm:$0xf]
      %v4677 = vld [vmem:[%s10 + $0x44] sm:$0xf]
      %v4678 = vld [vmem:[%s10 + $0x48] sm:$0xf]
      %v4679 = vld [vmem:[%s10 + $0x4c] sm:$0xf]
      %v4680 = vld [vmem:[%s10 + $0x50] sm:$0xf]
      %v4681 = vld [vmem:[%s10 + $0x54] sm:$0xf]
      %v4682 = vld [vmem:[%s10 + $0x58] sm:$0xf]
      %v4683 = vld [vmem:[%s10 + $0x5c] sm:$0xf]
      %v4684 = vld [vmem:[%s10 + $0x60] sm:$0xf]
      %v4685 = vld [vmem:[%s10 + $0x64] sm:$0xf]
      %v4686 = vld [vmem:[%s10 + $0x68] sm:$0xf]
      %v4687 = vld [vmem:[%s10 + $0x6c] sm:$0xf]
      %v4688 = vld [vmem:[%s10 + $0x70] sm:$0xf]
      %v4689 = vld [vmem:[%s10 + $0x74] sm:$0xf]
      %v4690 = vld [vmem:[%s10 + $0x78] sm:$0xf]
      %v4691 = vld [vmem:[%s10 + $0x7c] sm:$0xf]
      %v4692 = vld [vmem:[%s10 + $0x80] sm:$0xf]
      %v4693 = vld [vmem:[%s10 + $0x84] sm:$0xf]
      %v4694 = vld [vmem:[%s10 + $0x88] sm:$0xf]
      %v4695 = vld [vmem:[%s10 + $0x8c] sm:$0xf]
      %v4696 = vld [vmem:[%s10 + $0x90] sm:$0xf]
      %v4697 = vld [vmem:[%s10 + $0x94] sm:$0xf]
      %v4698 = vld [vmem:[%s10 + $0x98] sm:$0xf]
      %v4699 = vld [vmem:[%s10 + $0x9c] sm:$0xf]
      %v4700 = vld [vmem:[%s10 + $0xa0] sm:$0xf]
      %v4701 = vld [vmem:[%s10 + $0xa4] sm:$0xf]
      %v4702 = vld [vmem:[%s10 + $0xa8] sm:$0xf]
      %v4703 = vld [vmem:[%s10 + $0xac] sm:$0xf]
      %v4704 = vld [vmem:[%s10 + $0xb0] sm:$0xf]
      %v4705 = vld [vmem:[%s10 + $0xb4] sm:$0xf]
      %v4706 = vld [vmem:[%s10 + $0xb8] sm:$0xf]
      %v4707 = vld [vmem:[%s10 + $0xbc] sm:$0xf]
      %v4708 = vld [vmem:[%s10 + $0xc0] sm:$0xf]
      %v4709 = vld [vmem:[%s10 + $0xc4] sm:$0xf]
      %v4710 = vld [vmem:[%s10 + $0xc8] sm:$0xf]
      %v4711 = vld [vmem:[%s10 + $0xcc] sm:$0xf]
      %v4712 = vld [vmem:[%s10 + $0xd0] sm:$0xf]
      %v4713 = vld [vmem:[%s10 + $0xd4] sm:$0xf]
      %v4714 = vld [vmem:[%s10 + $0xd8] sm:$0xf]
      %v4715 = vld [vmem:[%s10 + $0xdc] sm:$0xf]
      %v4716 = vld [vmem:[%s10 + $0xe0] sm:$0xf]
      %v4717 = vld [vmem:[%s10 + $0xe4] sm:$0xf]
      %v4718 = vld [vmem:[%s10 + $0xe8] sm:$0xf]
      %v4719 = vld [vmem:[%s10 + $0xec] sm:$0xf]
      %v4720 = vld [vmem:[%s10 + $0xf0] sm:$0xf]
      %v4721 = vld [vmem:[%s10 + $0xf4] sm:$0xf]
      %v4722 = vld [vmem:[%s10 + $0xf8] sm:$0xf]
      %v4723 = vld [vmem:[%s10 + $0xfc] sm:$0xf]
      %v4724 = vld [vmem:[%s10 + $0x100] sm:$0xf]
      %v4725 = vld [vmem:[%s10 + $0x104] sm:$0xf]
      %v4726 = vld [vmem:[%s10 + $0x108] sm:$0xf]
      %v4727 = vld [vmem:[%s10 + $0x10c] sm:$0xf]
      %v4728 = vld [vmem:[%s10 + $0x110] sm:$0xf]
      %v4729 = vld [vmem:[%s10 + $0x114] sm:$0xf]
      %v4730 = vld [vmem:[%s10 + $0x118] sm:$0xf]
      %v4731 = vld [vmem:[%s10 + $0x11c] sm:$0xf]
      %v4732 = vld [vmem:[%s10 + $0x120] sm:$0xf]
      %v4733 = vld [vmem:[%s10 + $0x124] sm:$0xf]
      %v4734 = vld [vmem:[%s10 + $0x128] sm:$0xf]
      %v4735 = vld [vmem:[%s10 + $0x12c] sm:$0xf]
      %v4736 = vld [vmem:[%s10 + $0x130] sm:$0xf]
      %v4737 = vld [vmem:[%s10 + $0x134] sm:$0xf]
      %v4738 = vld [vmem:[%s10 + $0x138] sm:$0xf]
      %v4739 = vld [vmem:[%s10 + $0x13c] sm:$0xf]
      %v4740 = vld [vmem:[%s10 + $0x140] sm:$0xf]
      %v4741 = vld [vmem:[%s10 + $0x144] sm:$0xf]
      %v4742 = vld [vmem:[%s10 + $0x148] sm:$0xf]
      %v4743 = vld [vmem:[%s10 + $0x14c] sm:$0xf]
      %v4744 = vld [vmem:[%s10 + $0x150] sm:$0xf]
      %v4745 = vld [vmem:[%s10 + $0x154] sm:$0xf]
      %v4746 = vld [vmem:[%s10 + $0x158] sm:$0xf]
      %v4747 = vld [vmem:[%s10 + $0x15c] sm:$0xf]
      %v4748 = vld [vmem:[%s10 + $0x160] sm:$0xf]
      %v4749 = vld [vmem:[%s10 + $0x164] sm:$0xf]
      %v4750 = vld [vmem:[%s10 + $0x168] sm:$0xf]
      %v4751 = vld [vmem:[%s10 + $0x16c] sm:$0xf]
      %v4752 = vld [vmem:[%s10 + $0x170] sm:$0xf]
      %v4753 = vld [vmem:[%s10 + $0x174] sm:$0xf]
      %v4754 = vld [vmem:[%s10 + $0x178] sm:$0xf]
      %v4755 = vld [vmem:[%s10 + $0x17c] sm:$0xf]
      %v4756 = vld [vmem:[%s10 + $0x180] sm:$0xf]
      %v4757 = vld [vmem:[%s10 + $0x184] sm:$0xf]
      %v4758 = vld [vmem:[%s10 + $0x188] sm:$0xf]
      %v4759 = vld [vmem:[%s10 + $0x18c] sm:$0xf]
      %v4760 = vld [vmem:[%s10 + $0x190] sm:$0xf]
      %v4761 = vld [vmem:[%s10 + $0x194] sm:$0xf]
      %v4762 = vld [vmem:[%s10 + $0x198] sm:$0xf]
      %v4763 = vld [vmem:[%s10 + $0x19c] sm:$0xf]
      %v4764 = vld [vmem:[%s10 + $0x1a0] sm:$0xf]
      %v4765 = vld [vmem:[%s10 + $0x1a4] sm:$0xf]
      %v4766 = vld [vmem:[%s10 + $0x1a8] sm:$0xf]
      %v4767 = vld [vmem:[%s10 + $0x1ac] sm:$0xf]
      %v4768 = vld [vmem:[%s10 + $0x1b0] sm:$0xf]
      %v4769 = vld [vmem:[%s10 + $0x1b4] sm:$0xf]
      %v4770 = vld [vmem:[%s10 + $0x1b8] sm:$0xf]
      %v4771 = vld [vmem:[%s10 + $0x1bc] sm:$0xf]
      %v4772 = vld [vmem:[%s10 + $0x1c0] sm:$0xf]
      %v4773 = vld [vmem:[%s10 + $0x1c4] sm:$0xf]
      %v4774 = vld [vmem:[%s10 + $0x1c8] sm:$0xf]
      %v4775 = vld [vmem:[%s10 + $0x1cc] sm:$0xf]
      %v4776 = vld [vmem:[%s10 + $0x1d0] sm:$0xf]
      %v4777 = vld [vmem:[%s10 + $0x1d4] sm:$0xf]
      %v4778 = vld [vmem:[%s10 + $0x1d8] sm:$0xf]
      %v4779 = vld [vmem:[%s10 + $0x1dc] sm:$0xf]
      %v4780 = vld [vmem:[%s10 + $0x1e0] sm:$0xf]
      %v4781 = vld [vmem:[%s10 + $0x1e4] sm:$0xf]
      %v4782 = vld [vmem:[%s10 + $0x1e8] sm:$0xf]
      %v4783 = vld [vmem:[%s10 + $0x1ec] sm:$0xf]
      %v4784 = vld [vmem:[%s10 + $0x1f0] sm:$0xf]
      %v4785 = vld [vmem:[%s10 + $0x1f4] sm:$0xf]
      %v4786 = vld [vmem:[%s10 + $0x1f8] sm:$0xf]
      %v4787 = vld [vmem:[%s10 + $0x1fc] sm:$0xf]
      %v4916 = vunpack.c.l.b16 %v4660
      %v4917 = vunpack.c.l.b16 %v4661
      %v4918 = vunpack.c.l.b16 %v4662
      %v4919 = vunpack.c.l.b16 %v4663
      %v4920 = vunpack.c.l.b16 %v4664
      %v4921 = vunpack.c.l.b16 %v4665
      %v4922 = vunpack.c.l.b16 %v4666
      %v4923 = vunpack.c.l.b16 %v4667
      %v4924 = vunpack.c.l.b16 %v4668
      %v4925 = vunpack.c.l.b16 %v4669
      %v4926 = vunpack.c.l.b16 %v4670
      %v4927 = vunpack.c.l.b16 %v4671
      %v4928 = vunpack.c.l.b16 %v4672
      %v4929 = vunpack.c.l.b16 %v4673
      %v4930 = vunpack.c.l.b16 %v4674
      %v4931 = vunpack.c.l.b16 %v4675
      %v4932 = vunpack.c.l.b16 %v4676
      %v4933 = vunpack.c.l.b16 %v4677
      %v4934 = vunpack.c.l.b16 %v4678
      %v4935 = vunpack.c.l.b16 %v4679
      %v4936 = vunpack.c.l.b16 %v4680
      %v4937 = vunpack.c.l.b16 %v4681
      %v4938 = vunpack.c.l.b16 %v4682
      %v4939 = vunpack.c.l.b16 %v4683
      %v4940 = vunpack.c.l.b16 %v4684
      %v4941 = vunpack.c.l.b16 %v4685
      %v4942 = vunpack.c.l.b16 %v4686
      %v4943 = vunpack.c.l.b16 %v4687
      %v4944 = vunpack.c.l.b16 %v4688
      %v4945 = vunpack.c.l.b16 %v4689
      %v4946 = vunpack.c.l.b16 %v4690
      %v4947 = vunpack.c.l.b16 %v4691
      %v4948 = vunpack.c.l.b16 %v4692
      %v4949 = vunpack.c.l.b16 %v4693
      %v4950 = vunpack.c.l.b16 %v4694
      %v4951 = vunpack.c.l.b16 %v4695
      %v4952 = vunpack.c.l.b16 %v4696
      %v4953 = vunpack.c.l.b16 %v4697
      %v4954 = vunpack.c.l.b16 %v4698
      %v4955 = vunpack.c.l.b16 %v4699
      %v4956 = vunpack.c.l.b16 %v4700
      %v4957 = vunpack.c.l.b16 %v4701
      %v4958 = vunpack.c.l.b16 %v4702
      %v4959 = vunpack.c.l.b16 %v4703
      %v4960 = vunpack.c.l.b16 %v4704
      %v4961 = vunpack.c.l.b16 %v4705
      %v4962 = vunpack.c.l.b16 %v4706
      %v4963 = vunpack.c.l.b16 %v4707
      %v4964 = vunpack.c.l.b16 %v4708
      %v4965 = vunpack.c.l.b16 %v4709
      %v4966 = vunpack.c.l.b16 %v4710
      %v4967 = vunpack.c.l.b16 %v4711
      %v4968 = vunpack.c.l.b16 %v4712
      %v4969 = vunpack.c.l.b16 %v4713
      %v4970 = vunpack.c.l.b16 %v4714
      %v4971 = vunpack.c.l.b16 %v4715
      %v4972 = vunpack.c.l.b16 %v4716
      %v4973 = vunpack.c.l.b16 %v4717
      %v4974 = vunpack.c.l.b16 %v4718
      %v4975 = vunpack.c.l.b16 %v4719
      %v4976 = vunpack.c.l.b16 %v4720
      %v4977 = vunpack.c.l.b16 %v4721
      %v4978 = vunpack.c.l.b16 %v4722
      %v4979 = vunpack.c.l.b16 %v4723
      %v4980 = vunpack.c.l.b16 %v4724
      %v4981 = vunpack.c.l.b16 %v4725
      %v4982 = vunpack.c.l.b16 %v4726
      %v4983 = vunpack.c.l.b16 %v4727
      %v4984 = vunpack.c.l.b16 %v4728
      %v4985 = vunpack.c.l.b16 %v4729
      %v4986 = vunpack.c.l.b16 %v4730
      %v4987 = vunpack.c.l.b16 %v4731
      %v4988 = vunpack.c.l.b16 %v4732
      %v4989 = vunpack.c.l.b16 %v4733
      %v4990 = vunpack.c.l.b16 %v4734
      %v4991 = vunpack.c.l.b16 %v4735
      %v4992 = vunpack.c.l.b16 %v4736
      %v4993 = vunpack.c.l.b16 %v4737
      %v4994 = vunpack.c.l.b16 %v4738
      %v4995 = vunpack.c.l.b16 %v4739
      %v4996 = vunpack.c.l.b16 %v4740
      %v4997 = vunpack.c.l.b16 %v4741
      %v4998 = vunpack.c.l.b16 %v4742
      %v4999 = vunpack.c.l.b16 %v4743
      %v5000 = vunpack.c.l.b16 %v4744
      %v5001 = vunpack.c.l.b16 %v4745
      %v5002 = vunpack.c.l.b16 %v4746
      %v5003 = vunpack.c.l.b16 %v4747
      %v5004 = vunpack.c.l.b16 %v4748
      %v5005 = vunpack.c.l.b16 %v4749
      %v5006 = vunpack.c.l.b16 %v4750
      %v5007 = vunpack.c.l.b16 %v4751
      %v5008 = vunpack.c.l.b16 %v4752
      %v5009 = vunpack.c.l.b16 %v4753
      %v5010 = vunpack.c.l.b16 %v4754
      %v5011 = vunpack.c.l.b16 %v4755
      %v5012 = vunpack.c.l.b16 %v4756
      %v5013 = vunpack.c.l.b16 %v4757
      %v5014 = vunpack.c.l.b16 %v4758
      %v5015 = vunpack.c.l.b16 %v4759
      %v5016 = vunpack.c.l.b16 %v4760
      %v5017 = vunpack.c.l.b16 %v4761
      %v5018 = vunpack.c.l.b16 %v4762
      %v5019 = vunpack.c.l.b16 %v4763
      %v5020 = vunpack.c.l.b16 %v4764
      %v5021 = vunpack.c.l.b16 %v4765
      %v5022 = vunpack.c.l.b16 %v4766
      %v5023 = vunpack.c.l.b16 %v4767
      %v5024 = vunpack.c.l.b16 %v4768
      %v5025 = vunpack.c.l.b16 %v4769
      %v5026 = vunpack.c.l.b16 %v4770
      %v5027 = vunpack.c.l.b16 %v4771
      %v5028 = vunpack.c.l.b16 %v4772
      %v5029 = vunpack.c.l.b16 %v4773
      %v5030 = vunpack.c.l.b16 %v4774
      %v5031 = vunpack.c.l.b16 %v4775
      %v5032 = vunpack.c.l.b16 %v4776
      %v5033 = vunpack.c.l.b16 %v4777
      %v5034 = vunpack.c.l.b16 %v4778
      %v5035 = vunpack.c.l.b16 %v4779
      %v5036 = vunpack.c.l.b16 %v4780
      %v5037 = vunpack.c.l.b16 %v4781
      %v5038 = vunpack.c.l.b16 %v4782
      %v5039 = vunpack.c.l.b16 %v4783
      %v5040 = vunpack.c.l.b16 %v4784
      %v5041 = vunpack.c.l.b16 %v4785
      %v5042 = vunpack.c.l.b16 %v4786
      %v5043 = vunpack.c.l.b16 %v4787
      %v5044 = vpack.c.b16 %v4917, %v4916
      %v5045 = vpack.c.b16 %v4919, %v4918
      %v5046 = vpack.c.b16 %v4921, %v4920
      %v5047 = vpack.c.b16 %v4923, %v4922
      %v5048 = vpack.c.b16 %v4925, %v4924
      %v5049 = vpack.c.b16 %v4927, %v4926
      %v5050 = vpack.c.b16 %v4929, %v4928
      %v5051 = vpack.c.b16 %v4931, %v4930
      %v5052 = vpack.c.b16 %v4933, %v4932
      %v5053 = vpack.c.b16 %v4935, %v4934
      %v5054 = vpack.c.b16 %v4937, %v4936
      %v5055 = vpack.c.b16 %v4939, %v4938
      %v5056 = vpack.c.b16 %v4941, %v4940
      %v5057 = vpack.c.b16 %v4943, %v4942
      %v5058 = vpack.c.b16 %v4945, %v4944
      %v5059 = vpack.c.b16 %v4947, %v4946
      %v5060 = vpack.c.b16 %v4949, %v4948
      %v5061 = vpack.c.b16 %v4951, %v4950
      %v5062 = vpack.c.b16 %v4953, %v4952
      %v5063 = vpack.c.b16 %v4955, %v4954
      %v5064 = vpack.c.b16 %v4957, %v4956
      %v5065 = vpack.c.b16 %v4959, %v4958
      %v5066 = vpack.c.b16 %v4961, %v4960
      %v5067 = vpack.c.b16 %v4963, %v4962
      %v5068 = vpack.c.b16 %v4965, %v4964
      %v5069 = vpack.c.b16 %v4967, %v4966
      %v5070 = vpack.c.b16 %v4969, %v4968
      %v5071 = vpack.c.b16 %v4971, %v4970
      %v5072 = vpack.c.b16 %v4973, %v4972
      %v5073 = vpack.c.b16 %v4975, %v4974
      %v5074 = vpack.c.b16 %v4977, %v4976
      %v5075 = vpack.c.b16 %v4979, %v4978
      %v5076 = vpack.c.b16 %v4981, %v4980
      %v5077 = vpack.c.b16 %v4983, %v4982
      %v5078 = vpack.c.b16 %v4985, %v4984
      %v5079 = vpack.c.b16 %v4987, %v4986
      %v5080 = vpack.c.b16 %v4989, %v4988
      %v5081 = vpack.c.b16 %v4991, %v4990
      %v5082 = vpack.c.b16 %v4993, %v4992
      %v5083 = vpack.c.b16 %v4995, %v4994
      %v5084 = vpack.c.b16 %v4997, %v4996
      %v5085 = vpack.c.b16 %v4999, %v4998
      %v5086 = vpack.c.b16 %v5001, %v5000
      %v5087 = vpack.c.b16 %v5003, %v5002
      %v5088 = vpack.c.b16 %v5005, %v5004
      %v5089 = vpack.c.b16 %v5007, %v5006
      %v5090 = vpack.c.b16 %v5009, %v5008
      %v5091 = vpack.c.b16 %v5011, %v5010
      %v5092 = vpack.c.b16 %v5013, %v5012
      %v5093 = vpack.c.b16 %v5015, %v5014
      %v5094 = vpack.c.b16 %v5017, %v5016
      %v5095 = vpack.c.b16 %v5019, %v5018
      %v5096 = vpack.c.b16 %v5021, %v5020
      %v5097 = vpack.c.b16 %v5023, %v5022
      %v5098 = vpack.c.b16 %v5025, %v5024
      %v5099 = vpack.c.b16 %v5027, %v5026
      %v5100 = vpack.c.b16 %v5029, %v5028
      %v5101 = vpack.c.b16 %v5031, %v5030
      %v5102 = vpack.c.b16 %v5033, %v5032
      %v5103 = vpack.c.b16 %v5035, %v5034
      %v5104 = vpack.c.b16 %v5037, %v5036
      %v5105 = vpack.c.b16 %v5039, %v5038
      %v5106 = vpack.c.b16 %v5041, %v5040
      %v5107 = vpack.c.b16 %v5043, %v5042
      %5172 = vmatprep.subr.bf16.mxu0 0
      %5173 = vmatpush1.bf16.msra.mxu0 %v5044
      %5174 = vmatprep.subr.bf16.mxu0 0
      %5175 = vmatpush1.bf16.msra.mxu0 %v5045
      %5176 = vmatprep.subr.bf16.mxu0 0
      %5177 = vmatpush1.bf16.msra.mxu0 %v5046
      %5178 = vmatprep.subr.bf16.mxu0 0
      %5179 = vmatpush1.bf16.msra.mxu0 %v5047
      %5180 = vmatprep.subr.bf16.mxu0 0
      %5181 = vmatpush1.bf16.msra.mxu0 %v5048
      %5182 = vmatprep.subr.bf16.mxu0 0
      %5183 = vmatpush1.bf16.msra.mxu0 %v5049
      %5184 = vmatprep.subr.bf16.mxu0 0
      %5185 = vmatpush1.bf16.msra.mxu0 %v5050
      %5186 = vmatprep.subr.bf16.mxu0 0
      %5187 = vmatpush1.bf16.msra.mxu0 %v5051
      %5188 = vmatprep.subr.bf16.mxu0 0
      %5189 = vmatpush1.bf16.msra.mxu0 %v5052
      %5190 = vmatprep.subr.bf16.mxu0 0
      %5191 = vmatpush1.bf16.msra.mxu0 %v5053
      %5192 = vmatprep.subr.bf16.mxu0 0
      %5193 = vmatpush1.bf16.msra.mxu0 %v5054
      %5194 = vmatprep.subr.bf16.mxu0 0
      %5195 = vmatpush1.bf16.msra.mxu0 %v5055
      %5196 = vmatprep.subr.bf16.mxu0 0
      %5197 = vmatpush1.bf16.msra.mxu0 %v5056
      %5198 = vmatprep.subr.bf16.mxu0 0
      %5199 = vmatpush1.bf16.msra.mxu0 %v5057
      %5200 = vmatprep.subr.bf16.mxu0 0
      %5201 = vmatpush1.bf16.msra.mxu0 %v5058
      %5202 = vmatprep.subr.bf16.mxu0 0
      %5203 = vmatpush1.bf16.msra.mxu0 %v5059
      %5204 = vmatprep.mubr.bf16.mxu0 %v4597
      %5205 = vmatmul.mubr.bf16.gmra.mrb[0].mxu0 %v4596
      %v5206 = vpop.f32.mrb[0].mxu0
      %v5207 = vadd.f32 0.0, %v5206
      %v5208 = vpop.f32.mrb[0].mxu0
      %v5209 = vpop.f32.mrb[0].mxu0
      %v5210 = vadd.f32 0.0, %v5209
      %v5211 = vpop.f32.mrb[0].mxu0
      %5212 = vmatprep.mubr.bf16.mxu0 %v4605
      %5213 = vmatmul.mubr.bf16.gmra.mrb[0].mxu0 %v4604
      %v5214 = vpop.f32.mrb[0].mxu0
      %v5215 = vadd.f32 0.0, %v5214
      %v5216 = vpop.f32.mrb[0].mxu0
      %v5217 = vpop.f32.mrb[0].mxu0
      %v5218 = vadd.f32 0.0, %v5217
      %v5219 = vpop.f32.mrb[0].mxu0
      %5220 = vmatprep.mubr.bf16.mxu0 %v4613
      %5221 = vmatmul.mubr.bf16.gmra.mrb[0].mxu0 %v4612
      %v5222 = vpop.f32.mrb[0].mxu0
      %v5223 = vadd.f32 0.0, %v5222
      %v5224 = vpop.f32.mrb[0].mxu0
      %v5225 = vpop.f32.mrb[0].mxu0
      %v5226 = vadd.f32 0.0, %v5225
      %v5227 = vpop.f32.mrb[0].mxu0
      %5228 = vmatprep.mubr.bf16.mxu0 %v4621
      %5229 = vmatmul.mubr.bf16.gmra.mrb[0].mxu0 %v4620
      %v5230 = vpop.f32.mrb[0].mxu0
      %v5231 = vadd.f32 0.0, %v5230
      %v5232 = vpop.f32.mrb[0].mxu0
      %v5233 = vpop.f32.mrb[0].mxu0
      %v5234 = vadd.f32 0.0, %v5233
      %v5235 = vpop.f32.mrb[0].mxu0
      %5236 = vmatprep.mubr.bf16.mxu0 %v4629
      %5237 = vmatmul.mubr.bf16.gmra.mrb[0].mxu0 %v4628
      %v5238 = vpop.f32.mrb[0].mxu0
      %v5239 = vadd.f32 0.0, %v5238
      %v5240 = vpop.f32.mrb[0].mxu0
      %v5241 = vpop.f32.mrb[0].mxu0
      %v5242 = vadd.f32 0.0, %v5241
      %v5243 = vpop.f32.mrb[0].mxu0
      %5244 = vmatprep.mubr.bf16.mxu0 %v4637
      %5245 = vmatmul.mubr.bf16.gmra.mrb[0].mxu0 %v4636
      %v5246 = vpop.f32.mrb[0].mxu0
      %v5247 = vadd.f32 0.0, %v5246
      %v5248 = vpop.f32.mrb[0].mxu0
      %v5249 = vpop.f32.mrb[0].mxu0
      %v5250 = vadd.f32 0.0, %v5249
      %v5251 = vpop.f32.mrb[0].mxu0
      %5252 = vmatprep.mubr.bf16.mxu0 %v4645
      %5253 = vmatmul.mubr.bf16.gmra.mrb[0].mxu0 %v4644
      %v5254 = vpop.f32.mrb[0].mxu0
      %v5255 = vadd.f32 0.0, %v5254
      %v5256 = vpop.f32.mrb[0].mxu0
      %v5257 = vpop.f32.mrb[0].mxu0
      %v5258 = vadd.f32 0.0, %v5257
      %v5259 = vpop.f32.mrb[0].mxu0
      %5260 = vmatprep.mubr.bf16.mxu0 %v4653
      %5261 = vmatmul.mubr.bf16.gmra.mrb[0].mxu0 %v4652
      %v5262 = vpop.f32.mrb[0].mxu0
      %v5263 = vadd.f32 0.0, %v5262
      %v5264 = vpop.f32.mrb[0].mxu0
      %v5265 = vpop.f32.mrb[0].mxu0
      %v5266 = vadd.f32 0.0, %v5265
      %v5267 = vpop.f32.mrb[0].mxu0
      %5268 = vdwg.mxu0
      %5269 = vmatprep.subr.bf16.mxu0 0
      %5270 = vmatpush1.bf16.msra.mxu0 %v5060
      %5271 = vmatprep.subr.bf16.mxu0 0
      %5272 = vmatpush1.bf16.msra.mxu0 %v5061
      %5273 = vmatprep.subr.bf16.mxu0 0
      %5274 = vmatpush1.bf16.msra.mxu0 %v5062
      %5275 = vmatprep.subr.bf16.mxu0 0
      %5276 = vmatpush1.bf16.msra.mxu0 %v5063
      %5277 = vmatprep.subr.bf16.mxu0 0
      %5278 = vmatpush1.bf16.msra.mxu0 %v5064
      %5279 = vmatprep.subr.bf16.mxu0 0
      %5280 = vmatpush1.bf16.msra.mxu0 %v5065
      %5281 = vmatprep.subr.bf16.mxu0 0
      %5282 = vmatpush1.bf16.msra.mxu0 %v5066
      %5283 = vmatprep.subr.bf16.mxu0 0
      %5284 = vmatpush1.bf16.msra.mxu0 %v5067
      %5285 = vmatprep.subr.bf16.mxu0 0
      %5286 = vmatpush1.bf16.msra.mxu0 %v5068
      %5287 = vmatprep.subr.bf16.mxu0 0
      %5288 = vmatpush1.bf16.msra.mxu0 %v5069
      %5289 = vmatprep.subr.bf16.mxu0 0
      %5290 = vmatpush1.bf16.msra.mxu0 %v5070
      %5291 = vmatprep.subr.bf16.mxu0 0
      %5292 = vmatpush1.bf16.msra.mxu0 %v5071
      %5293 = vmatprep.subr.bf16.mxu0 0
      %5294 = vmatpush1.bf16.msra.mxu0 %v5072
      %5295 = vmatprep.subr.bf16.mxu0 0
      %5296 = vmatpush1.bf16.msra.mxu0 %v5073
      %5297 = vmatprep.subr.bf16.mxu0 0
      %5298 = vmatpush1.bf16.msra.mxu0 %v5074
      %5299 = vmatprep.subr.bf16.mxu0 0
      %5300 = vmatpush1.bf16.msra.mxu0 %v5075
      %5301 = vmatprep.mubr.bf16.mxu0 %v4599
      %5302 = vmatmul.mubr.bf16.gmra.mrb[0].mxu0 %v4598
      %v5303 = vpop.f32.mrb[0].mxu0
      %v5304 = vadd.f32 %v5207, %v5303
      %v5305 = vpop.f32.mrb[0].mxu0
      %v5306 = vpop.f32.mrb[0].mxu0
      %v5307 = vadd.f32 %v5210, %v5306
      %v5308 = vpop.f32.mrb[0].mxu0
      %5309 = vmatprep.mubr.bf16.mxu0 %v4607
      %5310 = vmatmul.mubr.bf16.gmra.mrb[0].mxu0 %v4606
      %v5311 = vpop.f32.mrb[0].mxu0
      %v5312 = vadd.f32 %v5215, %v5311
      %v5313 = vpop.f32.mrb[0].mxu0
      %v5314 = vpop.f32.mrb[0].mxu0
      %v5315 = vadd.f32 %v5218, %v5314
      %v5316 = vpop.f32.mrb[0].mxu0
      %5317 = vmatprep.mubr.bf16.mxu0 %v4615
      %5318 = vmatmul.mubr.bf16.gmra.mrb[0].mxu0 %v4614
      %v5319 = vpop.f32.mrb[0].mxu0
      %v5320 = vadd.f32 %v5223, %v5319
      %v5321 = vpop.f32.mrb[0].mxu0
      %v5322 = vpop.f32.mrb[0].mxu0
      %v5323 = vadd.f32 %v5226, %v5322
      %v5324 = vpop.f32.mrb[0].mxu0
      %5325 = vmatprep.mubr.bf16.mxu0 %v4623
      %5326 = vmatmul.mubr.bf16.gmra.mrb[0].mxu0 %v4622
      %v5327 = vpop.f32.mrb[0].mxu0
      %v5328 = vadd.f32 %v5231, %v5327
      %v5329 = vpop.f32.mrb[0].mxu0
      %v5330 = vpop.f32.mrb[0].mxu0
      %v5331 = vadd.f32 %v5234, %v5330
      %v5332 = vpop.f32.mrb[0].mxu0
      %5333 = vmatprep.mubr.bf16.mxu0 %v4631
      %5334 = vmatmul.mubr.bf16.gmra.mrb[0].mxu0 %v4630
      %v5335 = vpop.f32.mrb[0].mxu0
      %v5336 = vadd.f32 %v5239, %v5335
      %v5337 = vpop.f32.mrb[0].mxu0
      %v5338 = vpop.f32.mrb[0].mxu0
      %v5339 = vadd.f32 %v5242, %v5338
      %v5340 = vpop.f32.mrb[0].mxu0
      %5341 = vmatprep.mubr.bf16.mxu0 %v4639
      %5342 = vmatmul.mubr.bf16.gmra.mrb[0].mxu0 %v4638
      %v5343 = vpop.f32.mrb[0].mxu0
      %v5344 = vadd.f32 %v5247, %v5343
      %v5345 = vpop.f32.mrb[0].mxu0
      %v5346 = vpop.f32.mrb[0].mxu0
      %v5347 = vadd.f32 %v5250, %v5346
      %v5348 = vpop.f32.mrb[0].mxu0
      %5349 = vmatprep.mubr.bf16.mxu0 %v4647
      %5350 = vmatmul.mubr.bf16.gmra.mrb[0].mxu0 %v4646
      %v5351 = vpop.f32.mrb[0].mxu0
      %v5352 = vadd.f32 %v5255, %v5351
      %v5353 = vpop.f32.mrb[0].mxu0
      %v5354 = vpop.f32.mrb[0].mxu0
      %v5355 = vadd.f32 %v5258, %v5354
      %v5356 = vpop.f32.mrb[0].mxu0
      %5357 = vmatprep.mubr.bf16.mxu0 %v4655
      %5358 = vmatmul.mubr.bf16.gmra.mrb[0].mxu0 %v4654
      %v5359 = vpop.f32.mrb[0].mxu0
      %v5360 = vadd.f32 %v5263, %v5359
      %v5361 = vpop.f32.mrb[0].mxu0
      %v5362 = vpop.f32.mrb[0].mxu0
      %v5363 = vadd.f32 %v5266, %v5362
      %v5364 = vpop.f32.mrb[0].mxu0
      %5365 = vdwg.mxu0
      %5366 = vmatprep.subr.bf16.mxu0 0
      %5367 = vmatpush1.bf16.msra.mxu0 %v5076
      %5368 = vmatprep.subr.bf16.mxu0 0
      %5369 = vmatpush1.bf16.msra.mxu0 %v5077
      %5370 = vmatprep.subr.bf16.mxu0 0
      %5371 = vmatpush1.bf16.msra.mxu0 %v5078
      %5372 = vmatprep.subr.bf16.mxu0 0
      %5373 = vmatpush1.bf16.msra.mxu0 %v5079
      %5374 = vmatprep.subr.bf16.mxu0 0
      %5375 = vmatpush1.bf16.msra.mxu0 %v5080
      %5376 = vmatprep.subr.bf16.mxu0 0
      %5377 = vmatpush1.bf16.msra.mxu0 %v5081
      %5378 = vmatprep.subr.bf16.mxu0 0
      %5379 = vmatpush1.bf16.msra.mxu0 %v5082
      %5380 = vmatprep.subr.bf16.mxu0 0
      %5381 = vmatpush1.bf16.msra.mxu0 %v5083
      %5382 = vmatprep.subr.bf16.mxu0 0
      %5383 = vmatpush1.bf16.msra.mxu0 %v5084
      %5384 = vmatprep.subr.bf16.mxu0 0
      %5385 = vmatpush1.bf16.msra.mxu0 %v5085
      %5386 = vmatprep.subr.bf16.mxu0 0
      %5387 = vmatpush1.bf16.msra.mxu0 %v5086
      %5388 = vmatprep.subr.bf16.mxu0 0
      %5389 = vmatpush1.bf16.msra.mxu0 %v5087
      %5390 = vmatprep.subr.bf16.mxu0 0
      %5391 = vmatpush1.bf16.msra.mxu0 %v5088
      %5392 = vmatprep.subr.bf16.mxu0 0
      %5393 = vmatpush1.bf16.msra.mxu0 %v5089
      %5394 = vmatprep.subr.bf16.mxu0 0
      %5395 = vmatpush1.bf16.msra.mxu0 %v5090
      %5396 = vmatprep.subr.bf16.mxu0 0
      %5397 = vmatpush1.bf16.msra.mxu0 %v5091
      %5398 = vmatprep.mubr.bf16.mxu0 %v4601
      %5399 = vmatmul.mubr.bf16.gmra.mrb[0].mxu0 %v4600
      %v5400 = vpop.f32.mrb[0].mxu0
      %v5401 = vadd.f32 %v5304, %v5400
      %v5402 = vpop.f32.mrb[0].mxu0
      %v5403 = vpop.f32.mrb[0].mxu0
      %v5404 = vadd.f32 %v5307, %v5403
      %v5405 = vpop.f32.mrb[0].mxu0
      %5406 = vmatprep.mubr.bf16.mxu0 %v4609
      %5407 = vmatmul.mubr.bf16.gmra.mrb[0].mxu0 %v4608
      %v5408 = vpop.f32.mrb[0].mxu0
      %v5409 = vadd.f32 %v5312, %v5408
      %v5410 = vpop.f32.mrb[0].mxu0
      %v5411 = vpop.f32.mrb[0].mxu0
      %v5412 = vadd.f32 %v5315, %v5411
      %v5413 = vpop.f32.mrb[0].mxu0
      %5414 = vmatprep.mubr.bf16.mxu0 %v4617
      %5415 = vmatmul.mubr.bf16.gmra.mrb[0].mxu0 %v4616
      %v5416 = vpop.f32.mrb[0].mxu0
      %v5417 = vadd.f32 %v5320, %v5416
      %v5418 = vpop.f32.mrb[0].mxu0
      %v5419 = vpop.f32.mrb[0].mxu0
      %v5420 = vadd.f32 %v5323, %v5419
      %v5421 = vpop.f32.mrb[0].mxu0
      %5422 = vmatprep.mubr.bf16.mxu0 %v4625
      %5423 = vmatmul.mubr.bf16.gmra.mrb[0].mxu0 %v4624
      %v5424 = vpop.f32.mrb[0].mxu0
      %v5425 = vadd.f32 %v5328, %v5424
      %v5426 = vpop.f32.mrb[0].mxu0
      %v5427 = vpop.f32.mrb[0].mxu0
      %v5428 = vadd.f32 %v5331, %v5427
      %v5429 = vpop.f32.mrb[0].mxu0
      %5430 = vmatprep.mubr.bf16.mxu0 %v4633
      %5431 = vmatmul.mubr.bf16.gmra.mrb[0].mxu0 %v4632
      %v5432 = vpop.f32.mrb[0].mxu0
      %v5433 = vadd.f32 %v5336, %v5432
      %v5434 = vpop.f32.mrb[0].mxu0
      %v5435 = vpop.f32.mrb[0].mxu0
      %v5436 = vadd.f32 %v5339, %v5435
      %v5437 = vpop.f32.mrb[0].mxu0
      %5438 = vmatprep.mubr.bf16.mxu0 %v4641
      %5439 = vmatmul.mubr.bf16.gmra.mrb[0].mxu0 %v4640
      %v5440 = vpop.f32.mrb[0].mxu0
      %v5441 = vadd.f32 %v5344, %v5440
      %v5442 = vpop.f32.mrb[0].mxu0
      %v5443 = vpop.f32.mrb[0].mxu0
      %v5444 = vadd.f32 %v5347, %v5443
      %v5445 = vpop.f32.mrb[0].mxu0
      %5446 = vmatprep.mubr.bf16.mxu0 %v4649
      %5447 = vmatmul.mubr.bf16.gmra.mrb[0].mxu0 %v4648
      %v5448 = vpop.f32.mrb[0].mxu0
      %v5449 = vadd.f32 %v5352, %v5448
      %v5450 = vpop.f32.mrb[0].mxu0
      %v5451 = vpop.f32.mrb[0].mxu0
      %v5452 = vadd.f32 %v5355, %v5451
      %v5453 = vpop.f32.mrb[0].mxu0
      %5454 = vmatprep.mubr.bf16.mxu0 %v4657
      %5455 = vmatmul.mubr.bf16.gmra.mrb[0].mxu0 %v4656
      %v5456 = vpop.f32.mrb[0].mxu0
      %v5457 = vadd.f32 %v5360, %v5456
      %v5458 = vpop.f32.mrb[0].mxu0
      %v5459 = vpop.f32.mrb[0].mxu0
      %v5460 = vadd.f32 %v5363, %v5459
      %v5461 = vpop.f32.mrb[0].mxu0
      %5462 = vdwg.mxu0
      %5463 = vmatprep.subr.bf16.mxu0 0
      %5464 = vmatpush1.bf16.msra.mxu0 %v5092
      %5465 = vmatprep.subr.bf16.mxu0 0
      %5466 = vmatpush1.bf16.msra.mxu0 %v5093
      %5467 = vmatprep.subr.bf16.mxu0 0
      %5468 = vmatpush1.bf16.msra.mxu0 %v5094
      %5469 = vmatprep.subr.bf16.mxu0 0
      %5470 = vmatpush1.bf16.msra.mxu0 %v5095
      %5471 = vmatprep.subr.bf16.mxu0 0
      %5472 = vmatpush1.bf16.msra.mxu0 %v5096
      %5473 = vmatprep.subr.bf16.mxu0 0
      %5474 = vmatpush1.bf16.msra.mxu0 %v5097
      %5475 = vmatprep.subr.bf16.mxu0 0
      %5476 = vmatpush1.bf16.msra.mxu0 %v5098
      %5477 = vmatprep.subr.bf16.mxu0 0
      %5478 = vmatpush1.bf16.msra.mxu0 %v5099
      %5479 = vmatprep.subr.bf16.mxu0 0
      %5480 = vmatpush1.bf16.msra.mxu0 %v5100
      %5481 = vmatprep.subr.bf16.mxu0 0
      %5482 = vmatpush1.bf16.msra.mxu0 %v5101
      %5483 = vmatprep.subr.bf16.mxu0 0
      %5484 = vmatpush1.bf16.msra.mxu0 %v5102
      %5485 = vmatprep.subr.bf16.mxu0 0
      %5486 = vmatpush1.bf16.msra.mxu0 %v5103
      %5487 = vmatprep.subr.bf16.mxu0 0
      %5488 = vmatpush1.bf16.msra.mxu0 %v5104
      %5489 = vmatprep.subr.bf16.mxu0 0
      %5490 = vmatpush1.bf16.msra.mxu0 %v5105
      %5491 = vmatprep.subr.bf16.mxu0 0
      %5492 = vmatpush1.bf16.msra.mxu0 %v5106
      %5493 = vmatprep.subr.bf16.mxu0 0
      %5494 = vmatpush1.bf16.msra.mxu0 %v5107
      %5495 = vmatprep.mubr.bf16.mxu0 %v4603
      %5496 = vmatmul.mubr.bf16.gmra.mrb[0].mxu0 %v4602
      %v5497 = vpop.f32.mrb[0].mxu0
      %v5498 = vadd.f32 %v5401, %v5497
      %v5499 = vpop.f32.mrb[0].mxu0
      %v5500 = vpop.f32.mrb[0].mxu0
      %v5501 = vadd.f32 %v5404, %v5500
      %v5502 = vpop.f32.mrb[0].mxu0
      %5503 = vmatprep.mubr.bf16.mxu0 %v4611
      %5504 = vmatmul.mubr.bf16.gmra.mrb[0].mxu0 %v4610
      %v5505 = vpop.f32.mrb[0].mxu0
      %v5506 = vadd.f32 %v5409, %v5505
      %v5507 = vpop.f32.mrb[0].mxu0
      %v5508 = vpop.f32.mrb[0].mxu0
      %v5509 = vadd.f32 %v5412, %v5508
      %v5510 = vpop.f32.mrb[0].mxu0
      %5511 = vmatprep.mubr.bf16.mxu0 %v4619
      %5512 = vmatmul.mubr.bf16.gmra.mrb[0].mxu0 %v4618
      %v5513 = vpop.f32.mrb[0].mxu0
      %v5514 = vadd.f32 %v5417, %v5513
      %v5515 = vpop.f32.mrb[0].mxu0
      %v5516 = vpop.f32.mrb[0].mxu0
      %v5517 = vadd.f32 %v5420, %v5516
      %v5518 = vpop.f32.mrb[0].mxu0
      %5519 = vmatprep.mubr.bf16.mxu0 %v4627
      %5520 = vmatmul.mubr.bf16.gmra.mrb[0].mxu0 %v4626
      %v5521 = vpop.f32.mrb[0].mxu0
      %v5522 = vadd.f32 %v5425, %v5521
      %v5523 = vpop.f32.mrb[0].mxu0
      %v5524 = vpop.f32.mrb[0].mxu0
      %v5525 = vadd.f32 %v5428, %v5524
      %v5526 = vpop.f32.mrb[0].mxu0
      %5527 = vmatprep.mubr.bf16.mxu0 %v4635
      %5528 = vmatmul.mubr.bf16.gmra.mrb[0].mxu0 %v4634
      %v5529 = vpop.f32.mrb[0].mxu0
      %v5530 = vadd.f32 %v5433, %v5529
      %v5531 = vpop.f32.mrb[0].mxu0
      %v5532 = vpop.f32.mrb[0].mxu0
      %v5533 = vadd.f32 %v5436, %v5532
      %v5534 = vpop.f32.mrb[0].mxu0
      %5535 = vmatprep.mubr.bf16.mxu0 %v4643
      %5536 = vmatmul.mubr.bf16.gmra.mrb[0].mxu0 %v4642
      %v5537 = vpop.f32.mrb[0].mxu0
      %v5538 = vadd.f32 %v5441, %v5537
      %v5539 = vpop.f32.mrb[0].mxu0
      %v5540 = vpop.f32.mrb[0].mxu0
      %v5541 = vadd.f32 %v5444, %v5540
      %v5542 = vpop.f32.mrb[0].mxu0
      %5543 = vmatprep.mubr.bf16.mxu0 %v4651
      %5544 = vmatmul.mubr.bf16.gmra.mrb[0].mxu0 %v4650
      %v5545 = vpop.f32.mrb[0].mxu0
      %v5546 = vadd.f32 %v5449, %v5545
      %v5547 = vpop.f32.mrb[0].mxu0
      %v5548 = vpop.f32.mrb[0].mxu0
      %v5549 = vadd.f32 %v5452, %v5548
      %v5550 = vpop.f32.mrb[0].mxu0
      %5551 = vmatprep.mubr.bf16.mxu0 %v4659
      %5552 = vmatmul.mubr.bf16.gmra.mrb[0].mxu0 %v4658
      %v5553 = vpop.f32.mrb[0].mxu0
      %v5554 = vadd.f32 %v5457, %v5553
      %v5555 = vpop.f32.mrb[0].mxu0
      %v5556 = vpop.f32.mrb[0].mxu0
      %v5557 = vadd.f32 %v5460, %v5556
      %v5558 = vpop.f32.mrb[0].mxu0
      %5559 = vdwg.mxu0
      %5576 = vrot.lane.b32.xlu0 %v5498, 120
      %v5577 = vpop.permute.xlu0 %5576
      %5578 = vrot.lane.b32.xlu0 %v5501, 120
      %v5579 = vpop.permute.xlu0 %5578
      %5580 = vrot.lane.b32.xlu0 %v5506, 120
      %v5581 = vpop.permute.xlu0 %5580
      %5582 = vrot.lane.b32.xlu0 %v5509, 120
      %v5583 = vpop.permute.xlu0 %5582
      %5584 = vrot.lane.b32.xlu0 %v5514, 120
      %v5585 = vpop.permute.xlu0 %5584
      %5586 = vrot.lane.b32.xlu0 %v5517, 120
      %v5587 = vpop.permute.xlu0 %5586
      %5588 = vrot.lane.b32.xlu0 %v5522, 120
      %v5589 = vpop.permute.xlu0 %5588
      %5590 = vrot.lane.b32.xlu0 %v5525, 120
      %v5591 = vpop.permute.xlu0 %5590
      %5592 = vrot.lane.b32.xlu0 %v5530, 120
      %v5593 = vpop.permute.xlu0 %5592
      %5594 = vrot.lane.b32.xlu0 %v5533, 120
      %v5595 = vpop.permute.xlu0 %5594
      %5596 = vrot.lane.b32.xlu0 %v5538, 120
      %v5597 = vpop.permute.xlu0 %5596
      %5598 = vrot.lane.b32.xlu0 %v5541, 120
      %v5599 = vpop.permute.xlu0 %5598
      %5600 = vrot.lane.b32.xlu0 %v5546, 120
      %v5601 = vpop.permute.xlu0 %5600
      %5602 = vrot.lane.b32.xlu0 %v5549, 120
      %v5603 = vpop.permute.xlu0 %5602
      %5604 = vrot.lane.b32.xlu0 %v5554, 120
      %v5605 = vpop.permute.xlu0 %5604
      %5606 = vrot.lane.b32.xlu0 %v5557, 120
      %v5607 = vpop.permute.xlu0 %5606
      %5624 = vrot.lane.b32.xlu0 %v5498, 112
      %v5625 = vpop.permute.xlu0 %5624
      %5626 = vrot.lane.b32.xlu0 %v5501, 112
      %v5627 = vpop.permute.xlu0 %5626
      %5628 = vrot.lane.b32.xlu0 %v5506, 112
      %v5629 = vpop.permute.xlu0 %5628
      %5630 = vrot.lane.b32.xlu0 %v5509, 112
      %v5631 = vpop.permute.xlu0 %5630
      %5632 = vrot.lane.b32.xlu0 %v5514, 112
      %v5633 = vpop.permute.xlu0 %5632
      %5634 = vrot.lane.b32.xlu0 %v5517, 112
      %v5635 = vpop.permute.xlu0 %5634
      %5636 = vrot.lane.b32.xlu0 %v5522, 112
      %v5637 = vpop.permute.xlu0 %5636
      %5638 = vrot.lane.b32.xlu0 %v5525, 112
      %v5639 = vpop.permute.xlu0 %5638
      %5640 = vrot.lane.b32.xlu0 %v5530, 112
      %v5641 = vpop.permute.xlu0 %5640
      %5642 = vrot.lane.b32.xlu0 %v5533, 112
      %v5643 = vpop.permute.xlu0 %5642
      %5644 = vrot.lane.b32.xlu0 %v5538, 112
      %v5645 = vpop.permute.xlu0 %5644
      %5646 = vrot.lane.b32.xlu0 %v5541, 112
      %v5647 = vpop.permute.xlu0 %5646
      %5648 = vrot.lane.b32.xlu0 %v5546, 112
      %v5649 = vpop.permute.xlu0 %5648
      %5650 = vrot.lane.b32.xlu0 %v5549, 112
      %v5651 = vpop.permute.xlu0 %5650
      %5652 = vrot.lane.b32.xlu0 %v5554, 112
      %v5653 = vpop.permute.xlu0 %5652
      %5654 = vrot.lane.b32.xlu0 %v5557, 112
      %v5655 = vpop.permute.xlu0 %5654
      %5672 = vrot.lane.b32.xlu0 %v5498, 104
      %v5673 = vpop.permute.xlu0 %5672
      %5674 = vrot.lane.b32.xlu0 %v5501, 104
      %v5675 = vpop.permute.xlu0 %5674
      %5676 = vrot.lane.b32.xlu0 %v5506, 104
      %v5677 = vpop.permute.xlu0 %5676
      %5678 = vrot.lane.b32.xlu0 %v5509, 104
      %v5679 = vpop.permute.xlu0 %5678
      %5680 = vrot.lane.b32.xlu0 %v5514, 104
      %v5681 = vpop.permute.xlu0 %5680
      %5682 = vrot.lane.b32.xlu0 %v5517, 104
      %v5683 = vpop.permute.xlu0 %5682
      %5684 = vrot.lane.b32.xlu0 %v5522, 104
      %v5685 = vpop.permute.xlu0 %5684
      %5686 = vrot.lane.b32.xlu0 %v5525, 104
      %v5687 = vpop.permute.xlu0 %5686
      %5688 = vrot.lane.b32.xlu0 %v5530, 104
      %v5689 = vpop.permute.xlu0 %5688
      %5690 = vrot.lane.b32.xlu0 %v5533, 104
      %v5691 = vpop.permute.xlu0 %5690
      %5692 = vrot.lane.b32.xlu0 %v5538, 104
      %v5693 = vpop.permute.xlu0 %5692
      %5694 = vrot.lane.b32.xlu0 %v5541, 104
      %v5695 = vpop.permute.xlu0 %5694
      %5696 = vrot.lane.b32.xlu0 %v5546, 104
      %v5697 = vpop.permute.xlu0 %5696
      %5698 = vrot.lane.b32.xlu0 %v5549, 104
      %v5699 = vpop.permute.xlu0 %5698
      %5700 = vrot.lane.b32.xlu0 %v5554, 104
      %v5701 = vpop.permute.xlu0 %5700
      %5702 = vrot.lane.b32.xlu0 %v5557, 104
      %v5703 = vpop.permute.xlu0 %5702
      %5720 = vrot.lane.b32.xlu0 %v5498, 96
      %v5721 = vpop.permute.xlu0 %5720
      %5722 = vrot.lane.b32.xlu0 %v5501, 96
      %v5723 = vpop.permute.xlu0 %5722
      %5724 = vrot.lane.b32.xlu0 %v5506, 96
      %v5725 = vpop.permute.xlu0 %5724
      %5726 = vrot.lane.b32.xlu0 %v5509, 96
      %v5727 = vpop.permute.xlu0 %5726
      %5728 = vrot.lane.b32.xlu0 %v5514, 96
      %v5729 = vpop.permute.xlu0 %5728
      %5730 = vrot.lane.b32.xlu0 %v5517, 96
      %v5731 = vpop.permute.xlu0 %5730
      %5732 = vrot.lane.b32.xlu0 %v5522, 96
      %v5733 = vpop.permute.xlu0 %5732
      %5734 = vrot.lane.b32.xlu0 %v5525, 96
      %v5735 = vpop.permute.xlu0 %5734
      %5736 = vrot.lane.b32.xlu0 %v5530, 96
      %v5737 = vpop.permute.xlu0 %5736
      %5738 = vrot.lane.b32.xlu0 %v5533, 96
      %v5739 = vpop.permute.xlu0 %5738
      %5740 = vrot.lane.b32.xlu0 %v5538, 96
      %v5741 = vpop.permute.xlu0 %5740
      %5742 = vrot.lane.b32.xlu0 %v5541, 96
      %v5743 = vpop.permute.xlu0 %5742
      %5744 = vrot.lane.b32.xlu0 %v5546, 96
      %v5745 = vpop.permute.xlu0 %5744
      %5746 = vrot.lane.b32.xlu0 %v5549, 96
      %v5747 = vpop.permute.xlu0 %5746
      %5748 = vrot.lane.b32.xlu0 %v5554, 96
      %v5749 = vpop.permute.xlu0 %5748
      %5750 = vrot.lane.b32.xlu0 %v5557, 96
      %v5751 = vpop.permute.xlu0 %5750
      %5768 = vrot.lane.b32.xlu0 %v5498, 88
      %v5769 = vpop.permute.xlu0 %5768
      %5770 = vrot.lane.b32.xlu0 %v5501, 88
      %v5771 = vpop.permute.xlu0 %5770
      %5772 = vrot.lane.b32.xlu0 %v5506, 88
      %v5773 = vpop.permute.xlu0 %5772
      %5774 = vrot.lane.b32.xlu0 %v5509, 88
      %v5775 = vpop.permute.xlu0 %5774
      %5776 = vrot.lane.b32.xlu0 %v5514, 88
      %v5777 = vpop.permute.xlu0 %5776
      %5778 = vrot.lane.b32.xlu0 %v5517, 88
      %v5779 = vpop.permute.xlu0 %5778
      %5780 = vrot.lane.b32.xlu0 %v5522, 88
      %v5781 = vpop.permute.xlu0 %5780
      %5782 = vrot.lane.b32.xlu0 %v5525, 88
      %v5783 = vpop.permute.xlu0 %5782
      %5784 = vrot.lane.b32.xlu0 %v5530, 88
      %v5785 = vpop.permute.xlu0 %5784
      %5786 = vrot.lane.b32.xlu0 %v5533, 88
      %v5787 = vpop.permute.xlu0 %5786
      %5788 = vrot.lane.b32.xlu0 %v5538, 88
      %v5789 = vpop.permute.xlu0 %5788
      %5790 = vrot.lane.b32.xlu0 %v5541, 88
      %v5791 = vpop.permute.xlu0 %5790
      %5792 = vrot.lane.b32.xlu0 %v5546, 88
      %v5793 = vpop.permute.xlu0 %5792
      %5794 = vrot.lane.b32.xlu0 %v5549, 88
      %v5795 = vpop.permute.xlu0 %5794
      %5796 = vrot.lane.b32.xlu0 %v5554, 88
      %v5797 = vpop.permute.xlu0 %5796
      %5798 = vrot.lane.b32.xlu0 %v5557, 88
      %v5799 = vpop.permute.xlu0 %5798
      %5816 = vrot.lane.b32.xlu0 %v5498, 80
      %v5817 = vpop.permute.xlu0 %5816
      %5818 = vrot.lane.b32.xlu0 %v5501, 80
      %v5819 = vpop.permute.xlu0 %5818
      %5820 = vrot.lane.b32.xlu0 %v5506, 80
      %v5821 = vpop.permute.xlu0 %5820
      %5822 = vrot.lane.b32.xlu0 %v5509, 80
      %v5823 = vpop.permute.xlu0 %5822
      %5824 = vrot.lane.b32.xlu0 %v5514, 80
      %v5825 = vpop.permute.xlu0 %5824
      %5826 = vrot.lane.b32.xlu0 %v5517, 80
      %v5827 = vpop.permute.xlu0 %5826
      %5828 = vrot.lane.b32.xlu0 %v5522, 80
      %v5829 = vpop.permute.xlu0 %5828
      %5830 = vrot.lane.b32.xlu0 %v5525, 80
      %v5831 = vpop.permute.xlu0 %5830
      %5832 = vrot.lane.b32.xlu0 %v5530, 80
      %v5833 = vpop.permute.xlu0 %5832
      %5834 = vrot.lane.b32.xlu0 %v5533, 80
      %v5835 = vpop.permute.xlu0 %5834
      %5836 = vrot.lane.b32.xlu0 %v5538, 80
      %v5837 = vpop.permute.xlu0 %5836
      %5838 = vrot.lane.b32.xlu0 %v5541, 80
      %v5839 = vpop.permute.xlu0 %5838
      %5840 = vrot.lane.b32.xlu0 %v5546, 80
      %v5841 = vpop.permute.xlu0 %5840
      %5842 = vrot.lane.b32.xlu0 %v5549, 80
      %v5843 = vpop.permute.xlu0 %5842
      %5844 = vrot.lane.b32.xlu0 %v5554, 80
      %v5845 = vpop.permute.xlu0 %5844
      %5846 = vrot.lane.b32.xlu0 %v5557, 80
      %v5847 = vpop.permute.xlu0 %5846
      %5864 = vrot.lane.b32.xlu0 %v5498, 72
      %v5865 = vpop.permute.xlu0 %5864
      %5866 = vrot.lane.b32.xlu0 %v5501, 72
      %v5867 = vpop.permute.xlu0 %5866
      %5868 = vrot.lane.b32.xlu0 %v5506, 72
      %v5869 = vpop.permute.xlu0 %5868
      %5870 = vrot.lane.b32.xlu0 %v5509, 72
      %v5871 = vpop.permute.xlu0 %5870
      %5872 = vrot.lane.b32.xlu0 %v5514, 72
      %v5873 = vpop.permute.xlu0 %5872
      %5874 = vrot.lane.b32.xlu0 %v5517, 72
      %v5875 = vpop.permute.xlu0 %5874
      %5876 = vrot.lane.b32.xlu0 %v5522, 72
      %v5877 = vpop.permute.xlu0 %5876
      %5878 = vrot.lane.b32.xlu0 %v5525, 72
      %v5879 = vpop.permute.xlu0 %5878
      %5880 = vrot.lane.b32.xlu0 %v5530, 72
      %v5881 = vpop.permute.xlu0 %5880
      %5882 = vrot.lane.b32.xlu0 %v5533, 72
      %v5883 = vpop.permute.xlu0 %5882
      %5884 = vrot.lane.b32.xlu0 %v5538, 72
      %v5885 = vpop.permute.xlu0 %5884
      %5886 = vrot.lane.b32.xlu0 %v5541, 72
      %v5887 = vpop.permute.xlu0 %5886
      %5888 = vrot.lane.b32.xlu0 %v5546, 72
      %v5889 = vpop.permute.xlu0 %5888
      %5890 = vrot.lane.b32.xlu0 %v5549, 72
      %v5891 = vpop.permute.xlu0 %5890
      %5892 = vrot.lane.b32.xlu0 %v5554, 72
      %v5893 = vpop.permute.xlu0 %5892
      %5894 = vrot.lane.b32.xlu0 %v5557, 72
      %v5895 = vpop.permute.xlu0 %5894
      %v5912 = vld [vmem:[%s11] sm:$0xff]
      %v5913 = vld [vmem:[%s11 + $0x8] sm:$0xff]
      %v5914 = vld [vmem:[%s11 + $0x10] sm:$0xff]
      %v5915 = vld [vmem:[%s11 + $0x18] sm:$0xff]
      %v5916 = vld [vmem:[%s11 + $0x20] sm:$0xff]
      %v5917 = vld [vmem:[%s11 + $0x28] sm:$0xff]
      %v5918 = vld [vmem:[%s11 + $0x30] sm:$0xff]
      %v5919 = vld [vmem:[%s11 + $0x38] sm:$0xff]
      %v5920 = vld [vmem:[%s11 + $0x40] sm:$0xff]
      %v5921 = vld [vmem:[%s11 + $0x48] sm:$0xff]
      %v5922 = vld [vmem:[%s11 + $0x50] sm:$0xff]
      %v5923 = vld [vmem:[%s11 + $0x58] sm:$0xff]
      %v5924 = vld [vmem:[%s11 + $0x60] sm:$0xff]
      %v5925 = vld [vmem:[%s11 + $0x68] sm:$0xff]
      %v5926 = vld [vmem:[%s11 + $0x70] sm:$0xff]
      %v5927 = vld [vmem:[%s11 + $0x78] sm:$0xff]
      %v5928 = vld [vmem:[%s11 + $0x80] sm:$0xff]
      %v5929 = vld [vmem:[%s11 + $0x88] sm:$0xff]
      %v5930 = vld [vmem:[%s11 + $0x90] sm:$0xff]
      %v5931 = vld [vmem:[%s11 + $0x98] sm:$0xff]
      %v5932 = vld [vmem:[%s11 + $0xa0] sm:$0xff]
      %v5933 = vld [vmem:[%s11 + $0xa8] sm:$0xff]
      %v5934 = vld [vmem:[%s11 + $0xb0] sm:$0xff]
      %v5935 = vld [vmem:[%s11 + $0xb8] sm:$0xff]
      %v5936 = vld [vmem:[%s11 + $0xc0] sm:$0xff]
      %v5937 = vld [vmem:[%s11 + $0xc8] sm:$0xff]
      %v5938 = vld [vmem:[%s11 + $0xd0] sm:$0xff]
      %v5939 = vld [vmem:[%s11 + $0xd8] sm:$0xff]
      %v5940 = vld [vmem:[%s11 + $0xe0] sm:$0xff]
      %v5941 = vld [vmem:[%s11 + $0xe8] sm:$0xff]
      %v5942 = vld [vmem:[%s11 + $0xf0] sm:$0xff]
      %v5943 = vld [vmem:[%s11 + $0xf8] sm:$0xff]
      %v5944 = vld [vmem:[%s11 + $0x100] sm:$0xff]
      %v5945 = vld [vmem:[%s11 + $0x108] sm:$0xff]
      %v5946 = vld [vmem:[%s11 + $0x110] sm:$0xff]
      %v5947 = vld [vmem:[%s11 + $0x118] sm:$0xff]
      %v5948 = vld [vmem:[%s11 + $0x120] sm:$0xff]
      %v5949 = vld [vmem:[%s11 + $0x128] sm:$0xff]
      %v5950 = vld [vmem:[%s11 + $0x130] sm:$0xff]
      %v5951 = vld [vmem:[%s11 + $0x138] sm:$0xff]
      %v5952 = vld [vmem:[%s11 + $0x140] sm:$0xff]
      %v5953 = vld [vmem:[%s11 + $0x148] sm:$0xff]
      %v5954 = vld [vmem:[%s11 + $0x150] sm:$0xff]
      %v5955 = vld [vmem:[%s11 + $0x158] sm:$0xff]
      %v5956 = vld [vmem:[%s11 + $0x160] sm:$0xff]
      %v5957 = vld [vmem:[%s11 + $0x168] sm:$0xff]
      %v5958 = vld [vmem:[%s11 + $0x170] sm:$0xff]
      %v5959 = vld [vmem:[%s11 + $0x178] sm:$0xff]
      %v5960 = vld [vmem:[%s11 + $0x180] sm:$0xff]
      %v5961 = vld [vmem:[%s11 + $0x188] sm:$0xff]
      %v5962 = vld [vmem:[%s11 + $0x190] sm:$0xff]
      %v5963 = vld [vmem:[%s11 + $0x198] sm:$0xff]
      %v5964 = vld [vmem:[%s11 + $0x1a0] sm:$0xff]
      %v5965 = vld [vmem:[%s11 + $0x1a8] sm:$0xff]
      %v5966 = vld [vmem:[%s11 + $0x1b0] sm:$0xff]
      %v5967 = vld [vmem:[%s11 + $0x1b8] sm:$0xff]
      %v5968 = vld [vmem:[%s11 + $0x1c0] sm:$0xff]
      %v5969 = vld [vmem:[%s11 + $0x1c8] sm:$0xff]
      %v5970 = vld [vmem:[%s11 + $0x1d0] sm:$0xff]
      %v5971 = vld [vmem:[%s11 + $0x1d8] sm:$0xff]
      %v5972 = vld [vmem:[%s11 + $0x1e0] sm:$0xff]
      %v5973 = vld [vmem:[%s11 + $0x1e8] sm:$0xff]
      %v5974 = vld [vmem:[%s11 + $0x1f0] sm:$0xff]
      %v5975 = vld [vmem:[%s11 + $0x1f8] sm:$0xff]
      %v5976 = vld [vmem:[%s11 + $0x200] sm:$0xff]
      %v5977 = vld [vmem:[%s11 + $0x208] sm:$0xff]
      %v5978 = vld [vmem:[%s11 + $0x210] sm:$0xff]
      %v5979 = vld [vmem:[%s11 + $0x218] sm:$0xff]
      %v5980 = vld [vmem:[%s11 + $0x220] sm:$0xff]
      %v5981 = vld [vmem:[%s11 + $0x228] sm:$0xff]
      %v5982 = vld [vmem:[%s11 + $0x230] sm:$0xff]
      %v5983 = vld [vmem:[%s11 + $0x238] sm:$0xff]
      %v5984 = vld [vmem:[%s11 + $0x240] sm:$0xff]
      %v5985 = vld [vmem:[%s11 + $0x248] sm:$0xff]
      %v5986 = vld [vmem:[%s11 + $0x250] sm:$0xff]
      %v5987 = vld [vmem:[%s11 + $0x258] sm:$0xff]
      %v5988 = vld [vmem:[%s11 + $0x260] sm:$0xff]
      %v5989 = vld [vmem:[%s11 + $0x268] sm:$0xff]
      %v5990 = vld [vmem:[%s11 + $0x270] sm:$0xff]
      %v5991 = vld [vmem:[%s11 + $0x278] sm:$0xff]
      %v5992 = vld [vmem:[%s11 + $0x280] sm:$0xff]
      %v5993 = vld [vmem:[%s11 + $0x288] sm:$0xff]
      %v5994 = vld [vmem:[%s11 + $0x290] sm:$0xff]
      %v5995 = vld [vmem:[%s11 + $0x298] sm:$0xff]
      %v5996 = vld [vmem:[%s11 + $0x2a0] sm:$0xff]
      %v5997 = vld [vmem:[%s11 + $0x2a8] sm:$0xff]
      %v5998 = vld [vmem:[%s11 + $0x2b0] sm:$0xff]
      %v5999 = vld [vmem:[%s11 + $0x2b8] sm:$0xff]
      %v6000 = vld [vmem:[%s11 + $0x2c0] sm:$0xff]
      %v6001 = vld [vmem:[%s11 + $0x2c8] sm:$0xff]
      %v6002 = vld [vmem:[%s11 + $0x2d0] sm:$0xff]
      %v6003 = vld [vmem:[%s11 + $0x2d8] sm:$0xff]
      %v6004 = vld [vmem:[%s11 + $0x2e0] sm:$0xff]
      %v6005 = vld [vmem:[%s11 + $0x2e8] sm:$0xff]
      %v6006 = vld [vmem:[%s11 + $0x2f0] sm:$0xff]
      %v6007 = vld [vmem:[%s11 + $0x2f8] sm:$0xff]
      %v6008 = vld [vmem:[%s11 + $0x300] sm:$0xff]
      %v6009 = vld [vmem:[%s11 + $0x308] sm:$0xff]
      %v6010 = vld [vmem:[%s11 + $0x310] sm:$0xff]
      %v6011 = vld [vmem:[%s11 + $0x318] sm:$0xff]
      %v6012 = vld [vmem:[%s11 + $0x320] sm:$0xff]
      %v6013 = vld [vmem:[%s11 + $0x328] sm:$0xff]
      %v6014 = vld [vmem:[%s11 + $0x330] sm:$0xff]
      %v6015 = vld [vmem:[%s11 + $0x338] sm:$0xff]
      %v6016 = vld [vmem:[%s11 + $0x340] sm:$0xff]
      %v6017 = vld [vmem:[%s11 + $0x348] sm:$0xff]
      %v6018 = vld [vmem:[%s11 + $0x350] sm:$0xff]
      %v6019 = vld [vmem:[%s11 + $0x358] sm:$0xff]
      %v6020 = vld [vmem:[%s11 + $0x360] sm:$0xff]
      %v6021 = vld [vmem:[%s11 + $0x368] sm:$0xff]
      %v6022 = vld [vmem:[%s11 + $0x370] sm:$0xff]
      %v6023 = vld [vmem:[%s11 + $0x378] sm:$0xff]
      %v6024 = vld [vmem:[%s11 + $0x380] sm:$0xff]
      %v6025 = vld [vmem:[%s11 + $0x388] sm:$0xff]
      %v6026 = vld [vmem:[%s11 + $0x390] sm:$0xff]
      %v6027 = vld [vmem:[%s11 + $0x398] sm:$0xff]
      %v6028 = vld [vmem:[%s11 + $0x3a0] sm:$0xff]
      %v6029 = vld [vmem:[%s11 + $0x3a8] sm:$0xff]
      %v6030 = vld [vmem:[%s11 + $0x3b0] sm:$0xff]
      %v6031 = vld [vmem:[%s11 + $0x3b8] sm:$0xff]
      %v6032 = vld [vmem:[%s11 + $0x3c0] sm:$0xff]
      %v6033 = vld [vmem:[%s11 + $0x3c8] sm:$0xff]
      %v6034 = vld [vmem:[%s11 + $0x3d0] sm:$0xff]
      %v6035 = vld [vmem:[%s11 + $0x3d8] sm:$0xff]
      %v6036 = vld [vmem:[%s11 + $0x3e0] sm:$0xff]
      %v6037 = vld [vmem:[%s11 + $0x3e8] sm:$0xff]
      %v6038 = vld [vmem:[%s11 + $0x3f0] sm:$0xff]
      %v6039 = vld [vmem:[%s11 + $0x3f8] sm:$0xff]
      %v6040 = vpack.c.bf16 %v5501, %v5498
      %v6041 = vpack.c.bf16 %v5509, %v5506
      %v6042 = vpack.c.bf16 %v5517, %v5514
      %v6043 = vpack.c.bf16 %v5525, %v5522
      %v6044 = vpack.c.bf16 %v5533, %v5530
      %v6045 = vpack.c.bf16 %v5541, %v5538
      %v6046 = vpack.c.bf16 %v5549, %v5546
      %v6047 = vpack.c.bf16 %v5557, %v5554
      %v6048 = vpack.c.bf16 %v5579, %v5577
      %v6049 = vpack.c.bf16 %v5583, %v5581
      %v6050 = vpack.c.bf16 %v5587, %v5585
      %v6051 = vpack.c.bf16 %v5591, %v5589
      %v6052 = vpack.c.bf16 %v5595, %v5593
      %v6053 = vpack.c.bf16 %v5599, %v5597
      %v6054 = vpack.c.bf16 %v5603, %v5601
      %v6055 = vpack.c.bf16 %v5607, %v5605
      %v6056 = vpack.c.bf16 %v5627, %v5625
      %v6057 = vpack.c.bf16 %v5631, %v5629
      %v6058 = vpack.c.bf16 %v5635, %v5633
      %v6059 = vpack.c.bf16 %v5639, %v5637
      %v6060 = vpack.c.bf16 %v5643, %v5641
      %v6061 = vpack.c.bf16 %v5647, %v5645
      %v6062 = vpack.c.bf16 %v5651, %v5649
      %v6063 = vpack.c.bf16 %v5655, %v5653
      %v6064 = vpack.c.bf16 %v5675, %v5673
      %v6065 = vpack.c.bf16 %v5679, %v5677
      %v6066 = vpack.c.bf16 %v5683, %v5681
      %v6067 = vpack.c.bf16 %v5687, %v5685
      %v6068 = vpack.c.bf16 %v5691, %v5689
      %v6069 = vpack.c.bf16 %v5695, %v5693
      %v6070 = vpack.c.bf16 %v5699, %v5697
      %v6071 = vpack.c.bf16 %v5703, %v5701
      %v6072 = vpack.c.bf16 %v5723, %v5721
      %v6073 = vpack.c.bf16 %v5727, %v5725
      %v6074 = vpack.c.bf16 %v5731, %v5729
      %v6075 = vpack.c.bf16 %v5735, %v5733
      %v6076 = vpack.c.bf16 %v5739, %v5737
      %v6077 = vpack.c.bf16 %v5743, %v5741
      %v6078 = vpack.c.bf16 %v5747, %v5745
      %v6079 = vpack.c.bf16 %v5751, %v5749
      %v6080 = vpack.c.bf16 %v5771, %v5769
      %v6081 = vpack.c.bf16 %v5775, %v5773
      %v6082 = vpack.c.bf16 %v5779, %v5777
      %v6083 = vpack.c.bf16 %v5783, %v5781
      %v6084 = vpack.c.bf16 %v5787, %v5785
      %v6085 = vpack.c.bf16 %v5791, %v5789
      %v6086 = vpack.c.bf16 %v5795, %v5793
      %v6087 = vpack.c.bf16 %v5799, %v5797
      %v6088 = vpack.c.bf16 %v5819, %v5817
      %v6089 = vpack.c.bf16 %v5823, %v5821
      %v6090 = vpack.c.bf16 %v5827, %v5825
      %v6091 = vpack.c.bf16 %v5831, %v5829
      %v6092 = vpack.c.bf16 %v5835, %v5833
      %v6093 = vpack.c.bf16 %v5839, %v5837
      %v6094 = vpack.c.bf16 %v5843, %v5841
      %v6095 = vpack.c.bf16 %v5847, %v5845
      %v6096 = vpack.c.bf16 %v5867, %v5865
      %v6097 = vpack.c.bf16 %v5871, %v5869
      %v6098 = vpack.c.bf16 %v5875, %v5873
      %v6099 = vpack.c.bf16 %v5879, %v5877
      %v6100 = vpack.c.bf16 %v5883, %v5881
      %v6101 = vpack.c.bf16 %v5887, %v5885
      %v6102 = vpack.c.bf16 %v5891, %v5889
      %v6103 = vpack.c.bf16 %v5895, %v5893
      %v6104 = vld [vmem:[%s12] sm:$0xff]
      %v6105 = vld [vmem:[%s12 + $0x8] sm:$0xff]
      %v6106 = vld [vmem:[%s12 + $0x10] sm:$0xff]
      %v6107 = vld [vmem:[%s12 + $0x18] sm:$0xff]
      %v6108 = vld [vmem:[%s12 + $0x20] sm:$0xff]
      %v6109 = vld [vmem:[%s12 + $0x28] sm:$0xff]
      %v6110 = vld [vmem:[%s12 + $0x30] sm:$0xff]
      %v6111 = vld [vmem:[%s12 + $0x38] sm:$0xff]
      %v6112 = vld [vmem:[%s12 + $0x40] sm:$0xff]
      %v6113 = vld [vmem:[%s12 + $0x48] sm:$0xff]
      %v6114 = vld [vmem:[%s12 + $0x50] sm:$0xff]
      %v6115 = vld [vmem:[%s12 + $0x58] sm:$0xff]
      %v6116 = vld [vmem:[%s12 + $0x60] sm:$0xff]
      %v6117 = vld [vmem:[%s12 + $0x68] sm:$0xff]
      %v6118 = vld [vmem:[%s12 + $0x70] sm:$0xff]
      %v6119 = vld [vmem:[%s12 + $0x78] sm:$0xff]
      %v6120 = vld [vmem:[%s12 + $0x80] sm:$0xff]
      %v6121 = vld [vmem:[%s12 + $0x88] sm:$0xff]
      %v6122 = vld [vmem:[%s12 + $0x90] sm:$0xff]
      %v6123 = vld [vmem:[%s12 + $0x98] sm:$0xff]
      %v6124 = vld [vmem:[%s12 + $0xa0] sm:$0xff]
      %v6125 = vld [vmem:[%s12 + $0xa8] sm:$0xff]
      %v6126 = vld [vmem:[%s12 + $0xb0] sm:$0xff]
      %v6127 = vld [vmem:[%s12 + $0xb8] sm:$0xff]
      %v6128 = vld [vmem:[%s12 + $0xc0] sm:$0xff]
      %v6129 = vld [vmem:[%s12 + $0xc8] sm:$0xff]
      %v6130 = vld [vmem:[%s12 + $0xd0] sm:$0xff]
      %v6131 = vld [vmem:[%s12 + $0xd8] sm:$0xff]
      %v6132 = vld [vmem:[%s12 + $0xe0] sm:$0xff]
      %v6133 = vld [vmem:[%s12 + $0xe8] sm:$0xff]
      %v6134 = vld [vmem:[%s12 + $0xf0] sm:$0xff]
      %v6135 = vld [vmem:[%s12 + $0xf8] sm:$0xff]
      %6137 = vset.pattern.permute.xlu0 0
      %6138 = vperm.xlu0 %6137, %v6104
      %v6139 = vpop.permute.xlu0 %6138
      %6142 = vset.pattern.permute.xlu0 0
      %6143 = vperm.xlu0 %6142, %v6105
      %v6144 = vpop.permute.xlu0 %6143
      %6147 = vset.pattern.permute.xlu0 0
      %6148 = vperm.xlu0 %6147, %v6106
      %v6149 = vpop.permute.xlu0 %6148
      %6152 = vset.pattern.permute.xlu0 0
      %6153 = vperm.xlu0 %6152, %v6107
      %v6154 = vpop.permute.xlu0 %6153
      %6157 = vset.pattern.permute.xlu0 0
      %6158 = vperm.xlu0 %6157, %v6108
      %v6159 = vpop.permute.xlu0 %6158
      %6162 = vset.pattern.permute.xlu0 0
      %6163 = vperm.xlu0 %6162, %v6109
      %v6164 = vpop.permute.xlu0 %6163
      %6167 = vset.pattern.permute.xlu0 0
      %6168 = vperm.xlu0 %6167, %v6110
      %v6169 = vpop.permute.xlu0 %6168
      %6172 = vset.pattern.permute.xlu0 0
      %6173 = vperm.xlu0 %6172, %v6111
      %v6174 = vpop.permute.xlu0 %6173
      %6177 = vset.pattern.permute.xlu0 0
      %6178 = vperm.xlu0 %6177, %v6112
      %v6179 = vpop.permute.xlu0 %6178
      %6182 = vset.pattern.permute.xlu0 0
      %6183 = vperm.xlu0 %6182, %v6113
      %v6184 = vpop.permute.xlu0 %6183
      %6187 = vset.pattern.permute.xlu0 0
      %6188 = vperm.xlu0 %6187, %v6114
      %v6189 = vpop.permute.xlu0 %6188
      %6192 = vset.pattern.permute.xlu0 0
      %6193 = vperm.xlu0 %6192, %v6115
      %v6194 = vpop.permute.xlu0 %6193
      %6197 = vset.pattern.permute.xlu0 0
      %6198 = vperm.xlu0 %6197, %v6116
      %v6199 = vpop.permute.xlu0 %6198
      %6202 = vset.pattern.permute.xlu0 0
      %6203 = vperm.xlu0 %6202, %v6117
      %v6204 = vpop.permute.xlu0 %6203
      %6207 = vset.pattern.permute.xlu0 0
      %6208 = vperm.xlu0 %6207, %v6118
      %v6209 = vpop.permute.xlu0 %6208
      %6212 = vset.pattern.permute.xlu0 0
      %6213 = vperm.xlu0 %6212, %v6119
      %v6214 = vpop.permute.xlu0 %6213
      %6217 = vset.pattern.permute.xlu0 0
      %6218 = vperm.xlu0 %6217, %v6120
      %v6219 = vpop.permute.xlu0 %6218
      %6222 = vset.pattern.permute.xlu0 0
      %6223 = vperm.xlu0 %6222, %v6121
      %v6224 = vpop.permute.xlu0 %6223
      %6227 = vset.pattern.permute.xlu0 0
      %6228 = vperm.xlu0 %6227, %v6122
      %v6229 = vpop.permute.xlu0 %6228
      %6232 = vset.pattern.permute.xlu0 0
      %6233 = vperm.xlu0 %6232, %v6123
      %v6234 = vpop.permute.xlu0 %6233
      %6237 = vset.pattern.permute.xlu0 0
      %6238 = vperm.xlu0 %6237, %v6124
      %v6239 = vpop.permute.xlu0 %6238
      %6242 = vset.pattern.permute.xlu0 0
      %6243 = vperm.xlu0 %6242, %v6125
      %v6244 = vpop.permute.xlu0 %6243
      %6247 = vset.pattern.permute.xlu0 0
      %6248 = vperm.xlu0 %6247, %v6126
      %v6249 = vpop.permute.xlu0 %6248
      %6252 = vset.pattern.permute.xlu0 0
      %6253 = vperm.xlu0 %6252, %v6127
      %v6254 = vpop.permute.xlu0 %6253
      %6257 = vset.pattern.permute.xlu0 0
      %6258 = vperm.xlu0 %6257, %v6128
      %v6259 = vpop.permute.xlu0 %6258
      %6262 = vset.pattern.permute.xlu0 0
      %6263 = vperm.xlu0 %6262, %v6129
      %v6264 = vpop.permute.xlu0 %6263
      %6267 = vset.pattern.permute.xlu0 0
      %6268 = vperm.xlu0 %6267, %v6130
      %v6269 = vpop.permute.xlu0 %6268
      %6272 = vset.pattern.permute.xlu0 0
      %6273 = vperm.xlu0 %6272, %v6131
      %v6274 = vpop.permute.xlu0 %6273
      %6277 = vset.pattern.permute.xlu0 0
      %6278 = vperm.xlu0 %6277, %v6132
      %v6279 = vpop.permute.xlu0 %6278
      %6282 = vset.pattern.permute.xlu0 0
      %6283 = vperm.xlu0 %6282, %v6133
      %v6284 = vpop.permute.xlu0 %6283
      %6287 = vset.pattern.permute.xlu0 0
      %6288 = vperm.xlu0 %6287, %v6134
      %v6289 = vpop.permute.xlu0 %6288
      %6292 = vset.pattern.permute.xlu0 0
      %6293 = vperm.xlu0 %6292, %v6135
      %v6294 = vpop.permute.xlu0 %6293
      %v6424 = vunpack.c.l.b16 %v5912
      %v6425 = vunpack.c.h.b16 %v5912
      %v6426 = vunpack.c.l.b16 %v5913
      %v6427 = vunpack.c.h.b16 %v5913
      %v6428 = vunpack.c.l.b16 %v5914
      %v6429 = vunpack.c.h.b16 %v5914
      %v6430 = vunpack.c.l.b16 %v5915
      %v6431 = vunpack.c.h.b16 %v5915
      %v6432 = vunpack.c.l.b16 %v5916
      %v6433 = vunpack.c.h.b16 %v5916
      %v6434 = vunpack.c.l.b16 %v5917
      %v6435 = vunpack.c.h.b16 %v5917
      %v6436 = vunpack.c.l.b16 %v5918
      %v6437 = vunpack.c.h.b16 %v5918
      %v6438 = vunpack.c.l.b16 %v5919
      %v6439 = vunpack.c.h.b16 %v5919
      %v6440 = vunpack.c.l.b16 %v5920
      %v6441 = vunpack.c.h.b16 %v5920
      %v6442 = vunpack.c.l.b16 %v5921
      %v6443 = vunpack.c.h.b16 %v5921
      %v6444 = vunpack.c.l.b16 %v5922
      %v6445 = vunpack.c.h.b16 %v5922
      %v6446 = vunpack.c.l.b16 %v5923
      %v6447 = vunpack.c.h.b16 %v5923
      %v6448 = vunpack.c.l.b16 %v5924
      %v6449 = vunpack.c.h.b16 %v5924
      %v6450 = vunpack.c.l.b16 %v5925
      %v6451 = vunpack.c.h.b16 %v5925
      %v6452 = vunpack.c.l.b16 %v5926
      %v6453 = vunpack.c.h.b16 %v5926
      %v6454 = vunpack.c.l.b16 %v5927
      %v6455 = vunpack.c.h.b16 %v5927
      %v6456 = vunpack.c.l.b16 %v5928
      %v6457 = vunpack.c.h.b16 %v5928
      %v6458 = vunpack.c.l.b16 %v5929
      %v6459 = vunpack.c.h.b16 %v5929
      %v6460 = vunpack.c.l.b16 %v5930
      %v6461 = vunpack.c.h.b16 %v5930
      %v6462 = vunpack.c.l.b16 %v5931
      %v6463 = vunpack.c.h.b16 %v5931
      %v6464 = vunpack.c.l.b16 %v5932
      %v6465 = vunpack.c.h.b16 %v5932
      %v6466 = vunpack.c.l.b16 %v5933
      %v6467 = vunpack.c.h.b16 %v5933
      %v6468 = vunpack.c.l.b16 %v5934
      %v6469 = vunpack.c.h.b16 %v5934
      %v6470 = vunpack.c.l.b16 %v5935
      %v6471 = vunpack.c.h.b16 %v5935
      %v6472 = vunpack.c.l.b16 %v5936
      %v6473 = vunpack.c.h.b16 %v5936
      %v6474 = vunpack.c.l.b16 %v5937
      %v6475 = vunpack.c.h.b16 %v5937
      %v6476 = vunpack.c.l.b16 %v5938
      %v6477 = vunpack.c.h.b16 %v5938
      %v6478 = vunpack.c.l.b16 %v5939
      %v6479 = vunpack.c.h.b16 %v5939
      %v6480 = vunpack.c.l.b16 %v5940
      %v6481 = vunpack.c.h.b16 %v5940
      %v6482 = vunpack.c.l.b16 %v5941
      %v6483 = vunpack.c.h.b16 %v5941
      %v6484 = vunpack.c.l.b16 %v5942
      %v6485 = vunpack.c.h.b16 %v5942
      %v6486 = vunpack.c.l.b16 %v5943
      %v6487 = vunpack.c.h.b16 %v5943
      %v6488 = vunpack.c.l.b16 %v5944
      %v6489 = vunpack.c.h.b16 %v5944
      %v6490 = vunpack.c.l.b16 %v5945
      %v6491 = vunpack.c.h.b16 %v5945
      %v6492 = vunpack.c.l.b16 %v5946
      %v6493 = vunpack.c.h.b16 %v5946
      %v6494 = vunpack.c.l.b16 %v5947
      %v6495 = vunpack.c.h.b16 %v5947
      %v6496 = vunpack.c.l.b16 %v5948
      %v6497 = vunpack.c.h.b16 %v5948
      %v6498 = vunpack.c.l.b16 %v5949
      %v6499 = vunpack.c.h.b16 %v5949
      %v6500 = vunpack.c.l.b16 %v5950
      %v6501 = vunpack.c.h.b16 %v5950
      %v6502 = vunpack.c.l.b16 %v5951
      %v6503 = vunpack.c.h.b16 %v5951
      %v6504 = vunpack.c.l.b16 %v5952
      %v6505 = vunpack.c.h.b16 %v5952
      %v6506 = vunpack.c.l.b16 %v5953
      %v6507 = vunpack.c.h.b16 %v5953
      %v6508 = vunpack.c.l.b16 %v5954
      %v6509 = vunpack.c.h.b16 %v5954
      %v6510 = vunpack.c.l.b16 %v5955
      %v6511 = vunpack.c.h.b16 %v5955
      %v6512 = vunpack.c.l.b16 %v5956
      %v6513 = vunpack.c.h.b16 %v5956
      %v6514 = vunpack.c.l.b16 %v5957
      %v6515 = vunpack.c.h.b16 %v5957
      %v6516 = vunpack.c.l.b16 %v5958
      %v6517 = vunpack.c.h.b16 %v5958
      %v6518 = vunpack.c.l.b16 %v5959
      %v6519 = vunpack.c.h.b16 %v5959
      %v6520 = vunpack.c.l.b16 %v5960
      %v6521 = vunpack.c.h.b16 %v5960
      %v6522 = vunpack.c.l.b16 %v5961
      %v6523 = vunpack.c.h.b16 %v5961
      %v6524 = vunpack.c.l.b16 %v5962
      %v6525 = vunpack.c.h.b16 %v5962
      %v6526 = vunpack.c.l.b16 %v5963
      %v6527 = vunpack.c.h.b16 %v5963
      %v6528 = vunpack.c.l.b16 %v5964
      %v6529 = vunpack.c.h.b16 %v5964
      %v6530 = vunpack.c.l.b16 %v5965
      %v6531 = vunpack.c.h.b16 %v5965
      %v6532 = vunpack.c.l.b16 %v5966
      %v6533 = vunpack.c.h.b16 %v5966
      %v6534 = vunpack.c.l.b16 %v5967
      %v6535 = vunpack.c.h.b16 %v5967
      %v6536 = vunpack.c.l.b16 %v5968
      %v6537 = vunpack.c.h.b16 %v5968
      %v6538 = vunpack.c.l.b16 %v5969
      %v6539 = vunpack.c.h.b16 %v5969
      %v6540 = vunpack.c.l.b16 %v5970
      %v6541 = vunpack.c.h.b16 %v5970
      %v6542 = vunpack.c.l.b16 %v5971
      %v6543 = vunpack.c.h.b16 %v5971
      %v6544 = vunpack.c.l.b16 %v5972
      %v6545 = vunpack.c.h.b16 %v5972
      %v6546 = vunpack.c.l.b16 %v5973
      %v6547 = vunpack.c.h.b16 %v5973
      %v6548 = vunpack.c.l.b16 %v5974
      %v6549 = vunpack.c.h.b16 %v5974
      %v6550 = vunpack.c.l.b16 %v5975
      %v6551 = vunpack.c.h.b16 %v5975
      %v6552 = vunpack.c.l.b16 %v5976
      %v6553 = vunpack.c.h.b16 %v5976
      %v6554 = vunpack.c.l.b16 %v5977
      %v6555 = vunpack.c.h.b16 %v5977
      %v6556 = vunpack.c.l.b16 %v5978
      %v6557 = vunpack.c.h.b16 %v5978
      %v6558 = vunpack.c.l.b16 %v5979
      %v6559 = vunpack.c.h.b16 %v5979
      %v6560 = vunpack.c.l.b16 %v5980
      %v6561 = vunpack.c.h.b16 %v5980
      %v6562 = vunpack.c.l.b16 %v5981
      %v6563 = vunpack.c.h.b16 %v5981
      %v6564 = vunpack.c.l.b16 %v5982
      %v6565 = vunpack.c.h.b16 %v5982
      %v6566 = vunpack.c.l.b16 %v5983
      %v6567 = vunpack.c.h.b16 %v5983
      %v6568 = vunpack.c.l.b16 %v5984
      %v6569 = vunpack.c.h.b16 %v5984
      %v6570 = vunpack.c.l.b16 %v5985
      %v6571 = vunpack.c.h.b16 %v5985
      %v6572 = vunpack.c.l.b16 %v5986
      %v6573 = vunpack.c.h.b16 %v5986
      %v6574 = vunpack.c.l.b16 %v5987
      %v6575 = vunpack.c.h.b16 %v5987
      %v6576 = vunpack.c.l.b16 %v5988
      %v6577 = vunpack.c.h.b16 %v5988
      %v6578 = vunpack.c.l.b16 %v5989
      %v6579 = vunpack.c.h.b16 %v5989
      %v6580 = vunpack.c.l.b16 %v5990
      %v6581 = vunpack.c.h.b16 %v5990
      %v6582 = vunpack.c.l.b16 %v5991
      %v6583 = vunpack.c.h.b16 %v5991
      %v6584 = vunpack.c.l.b16 %v5992
      %v6585 = vunpack.c.h.b16 %v5992
      %v6586 = vunpack.c.l.b16 %v5993
      %v6587 = vunpack.c.h.b16 %v5993
      %v6588 = vunpack.c.l.b16 %v5994
      %v6589 = vunpack.c.h.b16 %v5994
      %v6590 = vunpack.c.l.b16 %v5995
      %v6591 = vunpack.c.h.b16 %v5995
      %v6592 = vunpack.c.l.b16 %v5996
      %v6593 = vunpack.c.h.b16 %v5996
      %v6594 = vunpack.c.l.b16 %v5997
      %v6595 = vunpack.c.h.b16 %v5997
      %v6596 = vunpack.c.l.b16 %v5998
      %v6597 = vunpack.c.h.b16 %v5998
      %v6598 = vunpack.c.l.b16 %v5999
      %v6599 = vunpack.c.h.b16 %v5999
      %v6600 = vunpack.c.l.b16 %v6000
      %v6601 = vunpack.c.h.b16 %v6000
      %v6602 = vunpack.c.l.b16 %v6001
      %v6603 = vunpack.c.h.b16 %v6001
      %v6604 = vunpack.c.l.b16 %v6002
      %v6605 = vunpack.c.h.b16 %v6002
      %v6606 = vunpack.c.l.b16 %v6003
      %v6607 = vunpack.c.h.b16 %v6003
      %v6608 = vunpack.c.l.b16 %v6004
      %v6609 = vunpack.c.h.b16 %v6004
      %v6610 = vunpack.c.l.b16 %v6005
      %v6611 = vunpack.c.h.b16 %v6005
      %v6612 = vunpack.c.l.b16 %v6006
      %v6613 = vunpack.c.h.b16 %v6006
      %v6614 = vunpack.c.l.b16 %v6007
      %v6615 = vunpack.c.h.b16 %v6007
      %v6616 = vunpack.c.l.b16 %v6008
      %v6617 = vunpack.c.h.b16 %v6008
      %v6618 = vunpack.c.l.b16 %v6009
      %v6619 = vunpack.c.h.b16 %v6009
      %v6620 = vunpack.c.l.b16 %v6010
      %v6621 = vunpack.c.h.b16 %v6010
      %v6622 = vunpack.c.l.b16 %v6011
      %v6623 = vunpack.c.h.b16 %v6011
      %v6624 = vunpack.c.l.b16 %v6012
      %v6625 = vunpack.c.h.b16 %v6012
      %v6626 = vunpack.c.l.b16 %v6013
      %v6627 = vunpack.c.h.b16 %v6013
      %v6628 = vunpack.c.l.b16 %v6014
      %v6629 = vunpack.c.h.b16 %v6014
      %v6630 = vunpack.c.l.b16 %v6015
      %v6631 = vunpack.c.h.b16 %v6015
      %v6632 = vunpack.c.l.b16 %v6016
      %v6633 = vunpack.c.h.b16 %v6016
      %v6634 = vunpack.c.l.b16 %v6017
      %v6635 = vunpack.c.h.b16 %v6017
      %v6636 = vunpack.c.l.b16 %v6018
      %v6637 = vunpack.c.h.b16 %v6018
      %v6638 = vunpack.c.l.b16 %v6019
      %v6639 = vunpack.c.h.b16 %v6019
      %v6640 = vunpack.c.l.b16 %v6020
      %v6641 = vunpack.c.h.b16 %v6020
      %v6642 = vunpack.c.l.b16 %v6021
      %v6643 = vunpack.c.h.b16 %v6021
      %v6644 = vunpack.c.l.b16 %v6022
      %v6645 = vunpack.c.h.b16 %v6022
      %v6646 = vunpack.c.l.b16 %v6023
      %v6647 = vunpack.c.h.b16 %v6023
      %v6648 = vunpack.c.l.b16 %v6024
      %v6649 = vunpack.c.h.b16 %v6024
      %v6650 = vunpack.c.l.b16 %v6025
      %v6651 = vunpack.c.h.b16 %v6025
      %v6652 = vunpack.c.l.b16 %v6026
      %v6653 = vunpack.c.h.b16 %v6026
      %v6654 = vunpack.c.l.b16 %v6027
      %v6655 = vunpack.c.h.b16 %v6027
      %v6656 = vunpack.c.l.b16 %v6028
      %v6657 = vunpack.c.h.b16 %v6028
      %v6658 = vunpack.c.l.b16 %v6029
      %v6659 = vunpack.c.h.b16 %v6029
      %v6660 = vunpack.c.l.b16 %v6030
      %v6661 = vunpack.c.h.b16 %v6030
      %v6662 = vunpack.c.l.b16 %v6031
      %v6663 = vunpack.c.h.b16 %v6031
      %v6664 = vunpack.c.l.b16 %v6032
      %v6665 = vunpack.c.h.b16 %v6032
      %v6666 = vunpack.c.l.b16 %v6033
      %v6667 = vunpack.c.h.b16 %v6033
      %v6668 = vunpack.c.l.b16 %v6034
      %v6669 = vunpack.c.h.b16 %v6034
      %v6670 = vunpack.c.l.b16 %v6035
      %v6671 = vunpack.c.h.b16 %v6035
      %v6672 = vunpack.c.l.b16 %v6036
      %v6673 = vunpack.c.h.b16 %v6036
      %v6674 = vunpack.c.l.b16 %v6037
      %v6675 = vunpack.c.h.b16 %v6037
      %v6676 = vunpack.c.l.b16 %v6038
      %v6677 = vunpack.c.h.b16 %v6038
      %v6678 = vunpack.c.l.b16 %v6039
      %v6679 = vunpack.c.h.b16 %v6039
      %v6680 = vpack.c.b16 %v6432, %v6424
      %v6681 = vpack.c.b16 %v6433, %v6425
      %v6682 = vpack.c.b16 %v6434, %v6426
      %v6683 = vpack.c.b16 %v6435, %v6427
      %v6684 = vpack.c.b16 %v6436, %v6428
      %v6685 = vpack.c.b16 %v6437, %v6429
      %v6686 = vpack.c.b16 %v6438, %v6430
      %v6687 = vpack.c.b16 %v6439, %v6431
      %v6688 = vpack.c.b16 %v6448, %v6440
      %v6689 = vpack.c.b16 %v6449, %v6441
      %v6690 = vpack.c.b16 %v6450, %v6442
      %v6691 = vpack.c.b16 %v6451, %v6443
      %v6692 = vpack.c.b16 %v6452, %v6444
      %v6693 = vpack.c.b16 %v6453, %v6445
      %v6694 = vpack.c.b16 %v6454, %v6446
      %v6695 = vpack.c.b16 %v6455, %v6447
      %v6696 = vpack.c.b16 %v6464, %v6456
      %v6697 = vpack.c.b16 %v6465, %v6457
      %v6698 = vpack.c.b16 %v6466, %v6458
      %v6699 = vpack.c.b16 %v6467, %v6459
      %v6700 = vpack.c.b16 %v6468, %v6460
      %v6701 = vpack.c.b16 %v6469, %v6461
      %v6702 = vpack.c.b16 %v6470, %v6462
      %v6703 = vpack.c.b16 %v6471, %v6463
      %v6704 = vpack.c.b16 %v6480, %v6472
      %v6705 = vpack.c.b16 %v6481, %v6473
      %v6706 = vpack.c.b16 %v6482, %v6474
      %v6707 = vpack.c.b16 %v6483, %v6475
      %v6708 = vpack.c.b16 %v6484, %v6476
      %v6709 = vpack.c.b16 %v6485, %v6477
      %v6710 = vpack.c.b16 %v6486, %v6478
      %v6711 = vpack.c.b16 %v6487, %v6479
      %v6712 = vpack.c.b16 %v6496, %v6488
      %v6713 = vpack.c.b16 %v6497, %v6489
      %v6714 = vpack.c.b16 %v6498, %v6490
      %v6715 = vpack.c.b16 %v6499, %v6491
      %v6716 = vpack.c.b16 %v6500, %v6492
      %v6717 = vpack.c.b16 %v6501, %v6493
      %v6718 = vpack.c.b16 %v6502, %v6494
      %v6719 = vpack.c.b16 %v6503, %v6495
      %v6720 = vpack.c.b16 %v6512, %v6504
      %v6721 = vpack.c.b16 %v6513, %v6505
      %v6722 = vpack.c.b16 %v6514, %v6506
      %v6723 = vpack.c.b16 %v6515, %v6507
      %v6724 = vpack.c.b16 %v6516, %v6508
      %v6725 = vpack.c.b16 %v6517, %v6509
      %v6726 = vpack.c.b16 %v6518, %v6510
      %v6727 = vpack.c.b16 %v6519, %v6511
      %v6728 = vpack.c.b16 %v6528, %v6520
      %v6729 = vpack.c.b16 %v6529, %v6521
      %v6730 = vpack.c.b16 %v6530, %v6522
      %v6731 = vpack.c.b16 %v6531, %v6523
      %v6732 = vpack.c.b16 %v6532, %v6524
      %v6733 = vpack.c.b16 %v6533, %v6525
      %v6734 = vpack.c.b16 %v6534, %v6526
      %v6735 = vpack.c.b16 %v6535, %v6527
      %v6736 = vpack.c.b16 %v6544, %v6536
      %v6737 = vpack.c.b16 %v6545, %v6537
      %v6738 = vpack.c.b16 %v6546, %v6538
      %v6739 = vpack.c.b16 %v6547, %v6539
      %v6740 = vpack.c.b16 %v6548, %v6540
      %v6741 = vpack.c.b16 %v6549, %v6541
      %v6742 = vpack.c.b16 %v6550, %v6542
      %v6743 = vpack.c.b16 %v6551, %v6543
      %v6744 = vpack.c.b16 %v6560, %v6552
      %v6745 = vpack.c.b16 %v6561, %v6553
      %v6746 = vpack.c.b16 %v6562, %v6554
      %v6747 = vpack.c.b16 %v6563, %v6555
      %v6748 = vpack.c.b16 %v6564, %v6556
      %v6749 = vpack.c.b16 %v6565, %v6557
      %v6750 = vpack.c.b16 %v6566, %v6558
      %v6751 = vpack.c.b16 %v6567, %v6559
      %v6752 = vpack.c.b16 %v6576, %v6568
      %v6753 = vpack.c.b16 %v6577, %v6569
      %v6754 = vpack.c.b16 %v6578, %v6570
      %v6755 = vpack.c.b16 %v6579, %v6571
      %v6756 = vpack.c.b16 %v6580, %v6572
      %v6757 = vpack.c.b16 %v6581, %v6573
      %v6758 = vpack.c.b16 %v6582, %v6574
      %v6759 = vpack.c.b16 %v6583, %v6575
      %v6760 = vpack.c.b16 %v6592, %v6584
      %v6761 = vpack.c.b16 %v6593, %v6585
      %v6762 = vpack.c.b16 %v6594, %v6586
      %v6763 = vpack.c.b16 %v6595, %v6587
      %v6764 = vpack.c.b16 %v6596, %v6588
      %v6765 = vpack.c.b16 %v6597, %v6589
      %v6766 = vpack.c.b16 %v6598, %v6590
      %v6767 = vpack.c.b16 %v6599, %v6591
      %v6768 = vpack.c.b16 %v6608, %v6600
      %v6769 = vpack.c.b16 %v6609, %v6601
      %v6770 = vpack.c.b16 %v6610, %v6602
      %v6771 = vpack.c.b16 %v6611, %v6603
      %v6772 = vpack.c.b16 %v6612, %v6604
      %v6773 = vpack.c.b16 %v6613, %v6605
      %v6774 = vpack.c.b16 %v6614, %v6606
      %v6775 = vpack.c.b16 %v6615, %v6607
      %v6776 = vpack.c.b16 %v6624, %v6616
      %v6777 = vpack.c.b16 %v6625, %v6617
      %v6778 = vpack.c.b16 %v6626, %v6618
      %v6779 = vpack.c.b16 %v6627, %v6619
      %v6780 = vpack.c.b16 %v6628, %v6620
      %v6781 = vpack.c.b16 %v6629, %v6621
      %v6782 = vpack.c.b16 %v6630, %v6622
      %v6783 = vpack.c.b16 %v6631, %v6623
      %v6784 = vpack.c.b16 %v6640, %v6632
      %v6785 = vpack.c.b16 %v6641, %v6633
      %v6786 = vpack.c.b16 %v6642, %v6634
      %v6787 = vpack.c.b16 %v6643, %v6635
      %v6788 = vpack.c.b16 %v6644, %v6636
      %v6789 = vpack.c.b16 %v6645, %v6637
      %v6790 = vpack.c.b16 %v6646, %v6638
      %v6791 = vpack.c.b16 %v6647, %v6639
      %v6792 = vpack.c.b16 %v6656, %v6648
      %v6793 = vpack.c.b16 %v6657, %v6649
      %v6794 = vpack.c.b16 %v6658, %v6650
      %v6795 = vpack.c.b16 %v6659, %v6651
      %v6796 = vpack.c.b16 %v6660, %v6652
      %v6797 = vpack.c.b16 %v6661, %v6653
      %v6798 = vpack.c.b16 %v6662, %v6654
      %v6799 = vpack.c.b16 %v6663, %v6655
      %v6800 = vpack.c.b16 %v6672, %v6664
      %v6801 = vpack.c.b16 %v6673, %v6665
      %v6802 = vpack.c.b16 %v6674, %v6666
      %v6803 = vpack.c.b16 %v6675, %v6667
      %v6804 = vpack.c.b16 %v6676, %v6668
      %v6805 = vpack.c.b16 %v6677, %v6669
      %v6806 = vpack.c.b16 %v6678, %v6670
      %v6807 = vpack.c.b16 %v6679, %v6671
      %6936 = vmatprep.subr.bf16.mxu0 0
      %6937 = vmatpush1.bf16.msra.mxu0 %v6040
      %6938 = vmatprep.subr.bf16.mxu0 0
      %6939 = vmatpush1.bf16.msra.mxu0 %v6041
      %6940 = vmatprep.subr.bf16.mxu0 0
      %6941 = vmatpush1.bf16.msra.mxu0 %v6042
      %6942 = vmatprep.subr.bf16.mxu0 0
      %6943 = vmatpush1.bf16.msra.mxu0 %v6043
      %6944 = vmatprep.subr.bf16.mxu0 0
      %6945 = vmatpush1.bf16.msra.mxu0 %v6044
      %6946 = vmatprep.subr.bf16.mxu0 0
      %6947 = vmatpush1.bf16.msra.mxu0 %v6045
      %6948 = vmatprep.subr.bf16.mxu0 0
      %6949 = vmatpush1.bf16.msra.mxu0 %v6046
      %6950 = vmatprep.subr.bf16.mxu0 0
      %6951 = vmatpush1.bf16.msra.mxu0 %v6047
      %6952 = vmatprep.subr.bf16.mxu0 0
      %6953 = vmatpush1.bf16.msra.mxu0 %v6048
      %6954 = vmatprep.subr.bf16.mxu0 0
      %6955 = vmatpush1.bf16.msra.mxu0 %v6049
      %6956 = vmatprep.subr.bf16.mxu0 0
      %6957 = vmatpush1.bf16.msra.mxu0 %v6050
      %6958 = vmatprep.subr.bf16.mxu0 0
      %6959 = vmatpush1.bf16.msra.mxu0 %v6051
      %6960 = vmatprep.subr.bf16.mxu0 0
      %6961 = vmatpush1.bf16.msra.mxu0 %v6052
      %6962 = vmatprep.subr.bf16.mxu0 0
      %6963 = vmatpush1.bf16.msra.mxu0 %v6053
      %6964 = vmatprep.subr.bf16.mxu0 0
      %6965 = vmatpush1.bf16.msra.mxu0 %v6054
      %6966 = vmatprep.subr.bf16.mxu0 0
      %6967 = vmatpush1.bf16.msra.mxu0 %v6055
      %6968 = vmatprep.mubr.bf16.mxu0 %v6681
      %6969 = vmatmul.mubr.bf16.gmra.mrb[0].mxu0 %v6680
      %v6970 = vpop.f32.mrb[0].mxu0
      %v6971 = vadd.f32 %v6139, %v6970
      %v6972 = vpop.f32.mrb[0].mxu0
      %v6973 = vpop.f32.mrb[0].mxu0
      %v6974 = vadd.f32 %v6144, %v6973
      %v6975 = vpop.f32.mrb[0].mxu0
      %6976 = vmatprep.mubr.bf16.mxu0 %v6689
      %6977 = vmatmul.mubr.bf16.gmra.mrb[0].mxu0 %v6688
      %v6978 = vpop.f32.mrb[0].mxu0
      %v6979 = vadd.f32 %v6149, %v6978
      %v6980 = vpop.f32.mrb[0].mxu0
      %v6981 = vpop.f32.mrb[0].mxu0
      %v6982 = vadd.f32 %v6154, %v6981
      %v6983 = vpop.f32.mrb[0].mxu0
      %6984 = vmatprep.mubr.bf16.mxu0 %v6697
      %6985 = vmatmul.mubr.bf16.gmra.mrb[0].mxu0 %v6696
      %v6986 = vpop.f32.mrb[0].mxu0
      %v6987 = vadd.f32 %v6159, %v6986
      %v6988 = vpop.f32.mrb[0].mxu0
      %v6989 = vpop.f32.mrb[0].mxu0
      %v6990 = vadd.f32 %v6164, %v6989
      %v6991 = vpop.f32.mrb[0].mxu0
      %6992 = vmatprep.mubr.bf16.mxu0 %v6705
      %6993 = vmatmul.mubr.bf16.gmra.mrb[0].mxu0 %v6704
      %v6994 = vpop.f32.mrb[0].mxu0
      %v6995 = vadd.f32 %v6169, %v6994
      %v6996 = vpop.f32.mrb[0].mxu0
      %v6997 = vpop.f32.mrb[0].mxu0
      %v6998 = vadd.f32 %v6174, %v6997
      %v6999 = vpop.f32.mrb[0].mxu0
      %7000 = vmatprep.mubr.bf16.mxu0 %v6713
      %7001 = vmatmul.mubr.bf16.gmra.mrb[0].mxu0 %v6712
      %v7002 = vpop.f32.mrb[0].mxu0
      %v7003 = vadd.f32 %v6179, %v7002
      %v7004 = vpop.f32.mrb[0].mxu0
      %v7005 = vpop.f32.mrb[0].mxu0
      %v7006 = vadd.f32 %v6184, %v7005
      %v7007 = vpop.f32.mrb[0].mxu0
      %7008 = vmatprep.mubr.bf16.mxu0 %v6721
      %7009 = vmatmul.mubr.bf16.gmra.mrb[0].mxu0 %v6720
      %v7010 = vpop.f32.mrb[0].mxu0
      %v7011 = vadd.f32 %v6189, %v7010
      %v7012 = vpop.f32.mrb[0].mxu0
      %v7013 = vpop.f32.mrb[0].mxu0
      %v7014 = vadd.f32 %v6194, %v7013
      %v7015 = vpop.f32.mrb[0].mxu0
      %7016 = vmatprep.mubr.bf16.mxu0 %v6729
      %7017 = vmatmul.mubr.bf16.gmra.mrb[0].mxu0 %v6728
      %v7018 = vpop.f32.mrb[0].mxu0
      %v7019 = vadd.f32 %v6199, %v7018
      %v7020 = vpop.f32.mrb[0].mxu0
      %v7021 = vpop.f32.mrb[0].mxu0
      %v7022 = vadd.f32 %v6204, %v7021
      %v7023 = vpop.f32.mrb[0].mxu0
      %7024 = vmatprep.mubr.bf16.mxu0 %v6737
      %7025 = vmatmul.mubr.bf16.gmra.mrb[0].mxu0 %v6736
      %v7026 = vpop.f32.mrb[0].mxu0
      %v7027 = vadd.f32 %v6209, %v7026
      %v7028 = vpop.f32.mrb[0].mxu0
      %v7029 = vpop.f32.mrb[0].mxu0
      %v7030 = vadd.f32 %v6214, %v7029
      %v7031 = vpop.f32.mrb[0].mxu0
      %7032 = vmatprep.mubr.bf16.mxu0 %v6745
      %7033 = vmatmul.mubr.bf16.gmra.mrb[0].mxu0 %v6744
      %v7034 = vpop.f32.mrb[0].mxu0
      %v7035 = vadd.f32 %v6219, %v7034
      %v7036 = vpop.f32.mrb[0].mxu0
      %v7037 = vpop.f32.mrb[0].mxu0
      %v7038 = vadd.f32 %v6224, %v7037
      %v7039 = vpop.f32.mrb[0].mxu0
      %7040 = vmatprep.mubr.bf16.mxu0 %v6753
      %7041 = vmatmul.mubr.bf16.gmra.mrb[0].mxu0 %v6752
      %v7042 = vpop.f32.mrb[0].mxu0
      %v7043 = vadd.f32 %v6229, %v7042
      %v7044 = vpop.f32.mrb[0].mxu0
      %v7045 = vpop.f32.mrb[0].mxu0
      %v7046 = vadd.f32 %v6234, %v7045
      %v7047 = vpop.f32.mrb[0].mxu0
      %7048 = vmatprep.mubr.bf16.mxu0 %v6761
      %7049 = vmatmul.mubr.bf16.gmra.mrb[0].mxu0 %v6760
      %v7050 = vpop.f32.mrb[0].mxu0
      %v7051 = vadd.f32 %v6239, %v7050
      %v7052 = vpop.f32.mrb[0].mxu0
      %v7053 = vpop.f32.mrb[0].mxu0
      %v7054 = vadd.f32 %v6244, %v7053
      %v7055 = vpop.f32.mrb[0].mxu0
      %7056 = vmatprep.mubr.bf16.mxu0 %v6769
      %7057 = vmatmul.mubr.bf16.gmra.mrb[0].mxu0 %v6768
      %v7058 = vpop.f32.mrb[0].mxu0
      %v7059 = vadd.f32 %v6249, %v7058
      %v7060 = vpop.f32.mrb[0].mxu0
      %v7061 = vpop.f32.mrb[0].mxu0
      %v7062 = vadd.f32 %v6254, %v7061
      %v7063 = vpop.f32.mrb[0].mxu0
      %7064 = vmatprep.mubr.bf16.mxu0 %v6777
      %7065 = vmatmul.mubr.bf16.gmra.mrb[0].mxu0 %v6776
      %v7066 = vpop.f32.mrb[0].mxu0
      %v7067 = vadd.f32 %v6259, %v7066
      %v7068 = vpop.f32.mrb[0].mxu0
      %v7069 = vpop.f32.mrb[0].mxu0
      %v7070 = vadd.f32 %v6264, %v7069
      %v7071 = vpop.f32.mrb[0].mxu0
      %7072 = vmatprep.mubr.bf16.mxu0 %v6785
      %7073 = vmatmul.mubr.bf16.gmra.mrb[0].mxu0 %v6784
      %v7074 = vpop.f32.mrb[0].mxu0
      %v7075 = vadd.f32 %v6269, %v7074
      %v7076 = vpop.f32.mrb[0].mxu0
      %v7077 = vpop.f32.mrb[0].mxu0
      %v7078 = vadd.f32 %v6274, %v7077
      %v7079 = vpop.f32.mrb[0].mxu0
      %7080 = vmatprep.mubr.bf16.mxu0 %v6793
      %7081 = vmatmul.mubr.bf16.gmra.mrb[0].mxu0 %v6792
      %v7082 = vpop.f32.mrb[0].mxu0
      %v7083 = vadd.f32 %v6279, %v7082
      %v7084 = vpop.f32.mrb[0].mxu0
      %v7085 = vpop.f32.mrb[0].mxu0
      %v7086 = vadd.f32 %v6284, %v7085
      %v7087 = vpop.f32.mrb[0].mxu0
      %7088 = vmatprep.mubr.bf16.mxu0 %v6801
      %7089 = vmatmul.mubr.bf16.gmra.mrb[0].mxu0 %v6800
      %v7090 = vpop.f32.mrb[0].mxu0
      %v7091 = vadd.f32 %v6289, %v7090
      %v7092 = vpop.f32.mrb[0].mxu0
      %v7093 = vpop.f32.mrb[0].mxu0
      %v7094 = vadd.f32 %v6294, %v7093
      %v7095 = vpop.f32.mrb[0].mxu0
      %7096 = vdwg.mxu0
      %7097 = vmatprep.subr.bf16.mxu0 0
      %7098 = vmatpush1.bf16.msra.mxu0 %v6056
      %7099 = vmatprep.subr.bf16.mxu0 0
      %7100 = vmatpush1.bf16.msra.mxu0 %v6057
      %7101 = vmatprep.subr.bf16.mxu0 0
      %7102 = vmatpush1.bf16.msra.mxu0 %v6058
      %7103 = vmatprep.subr.bf16.mxu0 0
      %7104 = vmatpush1.bf16.msra.mxu0 %v6059
      %7105 = vmatprep.subr.bf16.mxu0 0
      %7106 = vmatpush1.bf16.msra.mxu0 %v6060
      %7107 = vmatprep.subr.bf16.mxu0 0
      %7108 = vmatpush1.bf16.msra.mxu0 %v6061
      %7109 = vmatprep.subr.bf16.mxu0 0
      %7110 = vmatpush1.bf16.msra.mxu0 %v6062
      %7111 = vmatprep.subr.bf16.mxu0 0
      %7112 = vmatpush1.bf16.msra.mxu0 %v6063
      %7113 = vmatprep.subr.bf16.mxu0 0
      %7114 = vmatpush1.bf16.msra.mxu0 %v6064
      %7115 = vmatprep.subr.bf16.mxu0 0
      %7116 = vmatpush1.bf16.msra.mxu0 %v6065
      %7117 = vmatprep.subr.bf16.mxu0 0
      %7118 = vmatpush1.bf16.msra.mxu0 %v6066
      %7119 = vmatprep.subr.bf16.mxu0 0
      %7120 = vmatpush1.bf16.msra.mxu0 %v6067
      %7121 = vmatprep.subr.bf16.mxu0 0
      %7122 = vmatpush1.bf16.msra.mxu0 %v6068
      %7123 = vmatprep.subr.bf16.mxu0 0
      %7124 = vmatpush1.bf16.msra.mxu0 %v6069
      %7125 = vmatprep.subr.bf16.mxu0 0
      %7126 = vmatpush1.bf16.msra.mxu0 %v6070
      %7127 = vmatprep.subr.bf16.mxu0 0
      %7128 = vmatpush1.bf16.msra.mxu0 %v6071
      %7129 = vmatprep.mubr.bf16.mxu0 %v6683
      %7130 = vmatmul.mubr.bf16.gmra.mrb[0].mxu0 %v6682
      %v7131 = vpop.f32.mrb[0].mxu0
      %v7132 = vadd.f32 %v6971, %v7131
      %v7133 = vpop.f32.mrb[0].mxu0
      %v7134 = vpop.f32.mrb[0].mxu0
      %v7135 = vadd.f32 %v6974, %v7134
      %v7136 = vpop.f32.mrb[0].mxu0
      %7137 = vmatprep.mubr.bf16.mxu0 %v6691
      %7138 = vmatmul.mubr.bf16.gmra.mrb[0].mxu0 %v6690
      %v7139 = vpop.f32.mrb[0].mxu0
      %v7140 = vadd.f32 %v6979, %v7139
      %v7141 = vpop.f32.mrb[0].mxu0
      %v7142 = vpop.f32.mrb[0].mxu0
      %v7143 = vadd.f32 %v6982, %v7142
      %v7144 = vpop.f32.mrb[0].mxu0
      %7145 = vmatprep.mubr.bf16.mxu0 %v6699
      %7146 = vmatmul.mubr.bf16.gmra.mrb[0].mxu0 %v6698
      %v7147 = vpop.f32.mrb[0].mxu0
      %v7148 = vadd.f32 %v6987, %v7147
      %v7149 = vpop.f32.mrb[0].mxu0
      %v7150 = vpop.f32.mrb[0].mxu0
      %v7151 = vadd.f32 %v6990, %v7150
      %v7152 = vpop.f32.mrb[0].mxu0
      %7153 = vmatprep.mubr.bf16.mxu0 %v6707
      %7154 = vmatmul.mubr.bf16.gmra.mrb[0].mxu0 %v6706
      %v7155 = vpop.f32.mrb[0].mxu0
      %v7156 = vadd.f32 %v6995, %v7155
      %v7157 = vpop.f32.mrb[0].mxu0
      %v7158 = vpop.f32.mrb[0].mxu0
      %v7159 = vadd.f32 %v6998, %v7158
      %v7160 = vpop.f32.mrb[0].mxu0
      %7161 = vmatprep.mubr.bf16.mxu0 %v6715
      %7162 = vmatmul.mubr.bf16.gmra.mrb[0].mxu0 %v6714
      %v7163 = vpop.f32.mrb[0].mxu0
      %v7164 = vadd.f32 %v7003, %v7163
      %v7165 = vpop.f32.mrb[0].mxu0
      %v7166 = vpop.f32.mrb[0].mxu0
      %v7167 = vadd.f32 %v7006, %v7166
      %v7168 = vpop.f32.mrb[0].mxu0
      %7169 = vmatprep.mubr.bf16.mxu0 %v6723
      %7170 = vmatmul.mubr.bf16.gmra.mrb[0].mxu0 %v6722
      %v7171 = vpop.f32.mrb[0].mxu0
      %v7172 = vadd.f32 %v7011, %v7171
      %v7173 = vpop.f32.mrb[0].mxu0
      %v7174 = vpop.f32.mrb[0].mxu0
      %v7175 = vadd.f32 %v7014, %v7174
      %v7176 = vpop.f32.mrb[0].mxu0
      %7177 = vmatprep.mubr.bf16.mxu0 %v6731
      %7178 = vmatmul.mubr.bf16.gmra.mrb[0].mxu0 %v6730
      %v7179 = vpop.f32.mrb[0].mxu0
      %v7180 = vadd.f32 %v7019, %v7179
      %v7181 = vpop.f32.mrb[0].mxu0
      %v7182 = vpop.f32.mrb[0].mxu0
      %v7183 = vadd.f32 %v7022, %v7182
      %v7184 = vpop.f32.mrb[0].mxu0
      %7185 = vmatprep.mubr.bf16.mxu0 %v6739
      %7186 = vmatmul.mubr.bf16.gmra.mrb[0].mxu0 %v6738
      %v7187 = vpop.f32.mrb[0].mxu0
      %v7188 = vadd.f32 %v7027, %v7187
      %v7189 = vpop.f32.mrb[0].mxu0
      %v7190 = vpop.f32.mrb[0].mxu0
      %v7191 = vadd.f32 %v7030, %v7190
      %v7192 = vpop.f32.mrb[0].mxu0
      %7193 = vmatprep.mubr.bf16.mxu0 %v6747
      %7194 = vmatmul.mubr.bf16.gmra.mrb[0].mxu0 %v6746
      %v7195 = vpop.f32.mrb[0].mxu0
      %v7196 = vadd.f32 %v7035, %v7195
      %v7197 = vpop.f32.mrb[0].mxu0
      %v7198 = vpop.f32.mrb[0].mxu0
      %v7199 = vadd.f32 %v7038, %v7198
      %v7200 = vpop.f32.mrb[0].mxu0
      %7201 = vmatprep.mubr.bf16.mxu0 %v6755
      %7202 = vmatmul.mubr.bf16.gmra.mrb[0].mxu0 %v6754
      %v7203 = vpop.f32.mrb[0].mxu0
      %v7204 = vadd.f32 %v7043, %v7203
      %v7205 = vpop.f32.mrb[0].mxu0
      %v7206 = vpop.f32.mrb[0].mxu0
      %v7207 = vadd.f32 %v7046, %v7206
      %v7208 = vpop.f32.mrb[0].mxu0
      %7209 = vmatprep.mubr.bf16.mxu0 %v6763
      %7210 = vmatmul.mubr.bf16.gmra.mrb[0].mxu0 %v6762
      %v7211 = vpop.f32.mrb[0].mxu0
      %v7212 = vadd.f32 %v7051, %v7211
      %v7213 = vpop.f32.mrb[0].mxu0
      %v7214 = vpop.f32.mrb[0].mxu0
      %v7215 = vadd.f32 %v7054, %v7214
      %v7216 = vpop.f32.mrb[0].mxu0
      %7217 = vmatprep.mubr.bf16.mxu0 %v6771
      %7218 = vmatmul.mubr.bf16.gmra.mrb[0].mxu0 %v6770
      %v7219 = vpop.f32.mrb[0].mxu0
      %v7220 = vadd.f32 %v7059, %v7219
      %v7221 = vpop.f32.mrb[0].mxu0
      %v7222 = vpop.f32.mrb[0].mxu0
      %v7223 = vadd.f32 %v7062, %v7222
      %v7224 = vpop.f32.mrb[0].mxu0
      %7225 = vmatprep.mubr.bf16.mxu0 %v6779
      %7226 = vmatmul.mubr.bf16.gmra.mrb[0].mxu0 %v6778
      %v7227 = vpop.f32.mrb[0].mxu0
      %v7228 = vadd.f32 %v7067, %v7227
      %v7229 = vpop.f32.mrb[0].mxu0
      %v7230 = vpop.f32.mrb[0].mxu0
      %v7231 = vadd.f32 %v7070, %v7230
      %v7232 = vpop.f32.mrb[0].mxu0
      %7233 = vmatprep.mubr.bf16.mxu0 %v6787
      %7234 = vmatmul.mubr.bf16.gmra.mrb[0].mxu0 %v6786
      %v7235 = vpop.f32.mrb[0].mxu0
      %v7236 = vadd.f32 %v7075, %v7235
      %v7237 = vpop.f32.mrb[0].mxu0
      %v7238 = vpop.f32.mrb[0].mxu0
      %v7239 = vadd.f32 %v7078, %v7238
      %v7240 = vpop.f32.mrb[0].mxu0
      %7241 = vmatprep.mubr.bf16.mxu0 %v6795
      %7242 = vmatmul.mubr.bf16.gmra.mrb[0].mxu0 %v6794
      %v7243 = vpop.f32.mrb[0].mxu0
      %v7244 = vadd.f32 %v7083, %v7243
      %v7245 = vpop.f32.mrb[0].mxu0
      %v7246 = vpop.f32.mrb[0].mxu0
      %v7247 = vadd.f32 %v7086, %v7246
      %v7248 = vpop.f32.mrb[0].mxu0
      %7249 = vmatprep.mubr.bf16.mxu0 %v6803
      %7250 = vmatmul.mubr.bf16.gmra.mrb[0].mxu0 %v6802
      %v7251 = vpop.f32.mrb[0].mxu0
      %v7252 = vadd.f32 %v7091, %v7251
      %v7253 = vpop.f32.mrb[0].mxu0
      %v7254 = vpop.f32.mrb[0].mxu0
      %v7255 = vadd.f32 %v7094, %v7254
      %v7256 = vpop.f32.mrb[0].mxu0
      %7257 = vdwg.mxu0
      %7258 = vmatprep.subr.bf16.mxu0 0
      %7259 = vmatpush1.bf16.msra.mxu0 %v6072
      %7260 = vmatprep.subr.bf16.mxu0 0
      %7261 = vmatpush1.bf16.msra.mxu0 %v6073
      %7262 = vmatprep.subr.bf16.mxu0 0
      %7263 = vmatpush1.bf16.msra.mxu0 %v6074
      %7264 = vmatprep.subr.bf16.mxu0 0
      %7265 = vmatpush1.bf16.msra.mxu0 %v6075
      %7266 = vmatprep.subr.bf16.mxu0 0
      %7267 = vmatpush1.bf16.msra.mxu0 %v6076
      %7268 = vmatprep.subr.bf16.mxu0 0
      %7269 = vmatpush1.bf16.msra.mxu0 %v6077
      %7270 = vmatprep.subr.bf16.mxu0 0
      %7271 = vmatpush1.bf16.msra.mxu0 %v6078
      %7272 = vmatprep.subr.bf16.mxu0 0
      %7273 = vmatpush1.bf16.msra.mxu0 %v6079
      %7274 = vmatprep.subr.bf16.mxu0 0
      %7275 = vmatpush1.bf16.msra.mxu0 %v6080
      %7276 = vmatprep.subr.bf16.mxu0 0
      %7277 = vmatpush1.bf16.msra.mxu0 %v6081
      %7278 = vmatprep.subr.bf16.mxu0 0
      %7279 = vmatpush1.bf16.msra.mxu0 %v6082
      %7280 = vmatprep.subr.bf16.mxu0 0
      %7281 = vmatpush1.bf16.msra.mxu0 %v6083
      %7282 = vmatprep.subr.bf16.mxu0 0
      %7283 = vmatpush1.bf16.msra.mxu0 %v6084
      %7284 = vmatprep.subr.bf16.mxu0 0
      %7285 = vmatpush1.bf16.msra.mxu0 %v6085
      %7286 = vmatprep.subr.bf16.mxu0 0
      %7287 = vmatpush1.bf16.msra.mxu0 %v6086
      %7288 = vmatprep.subr.bf16.mxu0 0
      %7289 = vmatpush1.bf16.msra.mxu0 %v6087
      %7290 = vmatprep.mubr.bf16.mxu0 %v6685
      %7291 = vmatmul.mubr.bf16.gmra.mrb[0].mxu0 %v6684
      %v7292 = vpop.f32.mrb[0].mxu0
      %v7293 = vadd.f32 %v7132, %v7292
      %v7294 = vpop.f32.mrb[0].mxu0
      %v7295 = vpop.f32.mrb[0].mxu0
      %v7296 = vadd.f32 %v7135, %v7295
      %v7297 = vpop.f32.mrb[0].mxu0
      %7298 = vmatprep.mubr.bf16.mxu0 %v6693
      %7299 = vmatmul.mubr.bf16.gmra.mrb[0].mxu0 %v6692
      %v7300 = vpop.f32.mrb[0].mxu0
      %v7301 = vadd.f32 %v7140, %v7300
      %v7302 = vpop.f32.mrb[0].mxu0
      %v7303 = vpop.f32.mrb[0].mxu0
      %v7304 = vadd.f32 %v7143, %v7303
      %v7305 = vpop.f32.mrb[0].mxu0
      %7306 = vmatprep.mubr.bf16.mxu0 %v6701
      %7307 = vmatmul.mubr.bf16.gmra.mrb[0].mxu0 %v6700
      %v7308 = vpop.f32.mrb[0].mxu0
      %v7309 = vadd.f32 %v7148, %v7308
      %v7310 = vpop.f32.mrb[0].mxu0
      %v7311 = vpop.f32.mrb[0].mxu0
      %v7312 = vadd.f32 %v7151, %v7311
      %v7313 = vpop.f32.mrb[0].mxu0
      %7314 = vmatprep.mubr.bf16.mxu0 %v6709
      %7315 = vmatmul.mubr.bf16.gmra.mrb[0].mxu0 %v6708
      %v7316 = vpop.f32.mrb[0].mxu0
      %v7317 = vadd.f32 %v7156, %v7316
      %v7318 = vpop.f32.mrb[0].mxu0
      %v7319 = vpop.f32.mrb[0].mxu0
      %v7320 = vadd.f32 %v7159, %v7319
      %v7321 = vpop.f32.mrb[0].mxu0
      %7322 = vmatprep.mubr.bf16.mxu0 %v6717
      %7323 = vmatmul.mubr.bf16.gmra.mrb[0].mxu0 %v6716
      %v7324 = vpop.f32.mrb[0].mxu0
      %v7325 = vadd.f32 %v7164, %v7324
      %v7326 = vpop.f32.mrb[0].mxu0
      %v7327 = vpop.f32.mrb[0].mxu0
      %v7328 = vadd.f32 %v7167, %v7327
      %v7329 = vpop.f32.mrb[0].mxu0
      %7330 = vmatprep.mubr.bf16.mxu0 %v6725
      %7331 = vmatmul.mubr.bf16.gmra.mrb[0].mxu0 %v6724
      %v7332 = vpop.f32.mrb[0].mxu0
      %v7333 = vadd.f32 %v7172, %v7332
      %v7334 = vpop.f32.mrb[0].mxu0
      %v7335 = vpop.f32.mrb[0].mxu0
      %v7336 = vadd.f32 %v7175, %v7335
      %v7337 = vpop.f32.mrb[0].mxu0
      %7338 = vmatprep.mubr.bf16.mxu0 %v6733
      %7339 = vmatmul.mubr.bf16.gmra.mrb[0].mxu0 %v6732
      %v7340 = vpop.f32.mrb[0].mxu0
      %v7341 = vadd.f32 %v7180, %v7340
      %v7342 = vpop.f32.mrb[0].mxu0
      %v7343 = vpop.f32.mrb[0].mxu0
      %v7344 = vadd.f32 %v7183, %v7343
      %v7345 = vpop.f32.mrb[0].mxu0
      %7346 = vmatprep.mubr.bf16.mxu0 %v6741
      %7347 = vmatmul.mubr.bf16.gmra.mrb[0].mxu0 %v6740
      %v7348 = vpop.f32.mrb[0].mxu0
      %v7349 = vadd.f32 %v7188, %v7348
      %v7350 = vpop.f32.mrb[0].mxu0
      %v7351 = vpop.f32.mrb[0].mxu0
      %v7352 = vadd.f32 %v7191, %v7351
      %v7353 = vpop.f32.mrb[0].mxu0
      %7354 = vmatprep.mubr.bf16.mxu0 %v6749
      %7355 = vmatmul.mubr.bf16.gmra.mrb[0].mxu0 %v6748
      %v7356 = vpop.f32.mrb[0].mxu0
      %v7357 = vadd.f32 %v7196, %v7356
      %v7358 = vpop.f32.mrb[0].mxu0
      %v7359 = vpop.f32.mrb[0].mxu0
      %v7360 = vadd.f32 %v7199, %v7359
      %v7361 = vpop.f32.mrb[0].mxu0
      %7362 = vmatprep.mubr.bf16.mxu0 %v6757
      %7363 = vmatmul.mubr.bf16.gmra.mrb[0].mxu0 %v6756
      %v7364 = vpop.f32.mrb[0].mxu0
      %v7365 = vadd.f32 %v7204, %v7364
      %v7366 = vpop.f32.mrb[0].mxu0
      %v7367 = vpop.f32.mrb[0].mxu0
      %v7368 = vadd.f32 %v7207, %v7367
      %v7369 = vpop.f32.mrb[0].mxu0
      %7370 = vmatprep.mubr.bf16.mxu0 %v6765
      %7371 = vmatmul.mubr.bf16.gmra.mrb[0].mxu0 %v6764
      %v7372 = vpop.f32.mrb[0].mxu0
      %v7373 = vadd.f32 %v7212, %v7372
      %v7374 = vpop.f32.mrb[0].mxu0
      %v7375 = vpop.f32.mrb[0].mxu0
      %v7376 = vadd.f32 %v7215, %v7375
      %v7377 = vpop.f32.mrb[0].mxu0
      %7378 = vmatprep.mubr.bf16.mxu0 %v6773
      %7379 = vmatmul.mubr.bf16.gmra.mrb[0].mxu0 %v6772
      %v7380 = vpop.f32.mrb[0].mxu0
      %v7381 = vadd.f32 %v7220, %v7380
      %v7382 = vpop.f32.mrb[0].mxu0
      %v7383 = vpop.f32.mrb[0].mxu0
      %v7384 = vadd.f32 %v7223, %v7383
      %v7385 = vpop.f32.mrb[0].mxu0
      %7386 = vmatprep.mubr.bf16.mxu0 %v6781
      %7387 = vmatmul.mubr.bf16.gmra.mrb[0].mxu0 %v6780
      %v7388 = vpop.f32.mrb[0].mxu0
      %v7389 = vadd.f32 %v7228, %v7388
      %v7390 = vpop.f32.mrb[0].mxu0
      %v7391 = vpop.f32.mrb[0].mxu0
      %v7392 = vadd.f32 %v7231, %v7391
      %v7393 = vpop.f32.mrb[0].mxu0
      %7394 = vmatprep.mubr.bf16.mxu0 %v6789
      %7395 = vmatmul.mubr.bf16.gmra.mrb[0].mxu0 %v6788
      %v7396 = vpop.f32.mrb[0].mxu0
      %v7397 = vadd.f32 %v7236, %v7396
      %v7398 = vpop.f32.mrb[0].mxu0
      %v7399 = vpop.f32.mrb[0].mxu0
      %v7400 = vadd.f32 %v7239, %v7399
      %v7401 = vpop.f32.mrb[0].mxu0
      %7402 = vmatprep.mubr.bf16.mxu0 %v6797
      %7403 = vmatmul.mubr.bf16.gmra.mrb[0].mxu0 %v6796
      %v7404 = vpop.f32.mrb[0].mxu0
      %v7405 = vadd.f32 %v7244, %v7404
      %v7406 = vpop.f32.mrb[0].mxu0
      %v7407 = vpop.f32.mrb[0].mxu0
      %v7408 = vadd.f32 %v7247, %v7407
      %v7409 = vpop.f32.mrb[0].mxu0
      %7410 = vmatprep.mubr.bf16.mxu0 %v6805
      %7411 = vmatmul.mubr.bf16.gmra.mrb[0].mxu0 %v6804
      %v7412 = vpop.f32.mrb[0].mxu0
      %v7413 = vadd.f32 %v7252, %v7412
      %v7414 = vpop.f32.mrb[0].mxu0
      %v7415 = vpop.f32.mrb[0].mxu0
      %v7416 = vadd.f32 %v7255, %v7415
      %v7417 = vpop.f32.mrb[0].mxu0
      %7418 = vdwg.mxu0
      %7419 = vmatprep.subr.bf16.mxu0 0
      %7420 = vmatpush1.bf16.msra.mxu0 %v6088
      %7421 = vmatprep.subr.bf16.mxu0 0
      %7422 = vmatpush1.bf16.msra.mxu0 %v6089
      %7423 = vmatprep.subr.bf16.mxu0 0
      %7424 = vmatpush1.bf16.msra.mxu0 %v6090
      %7425 = vmatprep.subr.bf16.mxu0 0
      %7426 = vmatpush1.bf16.msra.mxu0 %v6091
      %7427 = vmatprep.subr.bf16.mxu0 0
      %7428 = vmatpush1.bf16.msra.mxu0 %v6092
      %7429 = vmatprep.subr.bf16.mxu0 0
      %7430 = vmatpush1.bf16.msra.mxu0 %v6093
      %7431 = vmatprep.subr.bf16.mxu0 0
      %7432 = vmatpush1.bf16.msra.mxu0 %v6094
      %7433 = vmatprep.subr.bf16.mxu0 0
      %7434 = vmatpush1.bf16.msra.mxu0 %v6095
      %7435 = vmatprep.subr.bf16.mxu0 0
      %7436 = vmatpush1.bf16.msra.mxu0 %v6096
      %7437 = vmatprep.subr.bf16.mxu0 0
      %7438 = vmatpush1.bf16.msra.mxu0 %v6097
      %7439 = vmatprep.subr.bf16.mxu0 0
      %7440 = vmatpush1.bf16.msra.mxu0 %v6098
      %7441 = vmatprep.subr.bf16.mxu0 0
      %7442 = vmatpush1.bf16.msra.mxu0 %v6099
      %7443 = vmatprep.subr.bf16.mxu0 0
      %7444 = vmatpush1.bf16.msra.mxu0 %v6100
      %7445 = vmatprep.subr.bf16.mxu0 0
      %7446 = vmatpush1.bf16.msra.mxu0 %v6101
      %7447 = vmatprep.subr.bf16.mxu0 0
      %7448 = vmatpush1.bf16.msra.mxu0 %v6102
      %7449 = vmatprep.subr.bf16.mxu0 0
      %7450 = vmatpush1.bf16.msra.mxu0 %v6103
      %7451 = vmatprep.mubr.bf16.mxu0 %v6687
      %7452 = vmatmul.mubr.bf16.gmra.mrb[0].mxu0 %v6686
      %v7453 = vpop.f32.mrb[0].mxu0
      %v7454 = vadd.f32 %v7293, %v7453
      %v7455 = vpop.f32.mrb[0].mxu0
      %v7456 = vpop.f32.mrb[0].mxu0
      %v7457 = vadd.f32 %v7296, %v7456
      %v7458 = vpop.f32.mrb[0].mxu0
      %7459 = vmatprep.mubr.bf16.mxu0 %v6695
      %7460 = vmatmul.mubr.bf16.gmra.mrb[0].mxu0 %v6694
      %v7461 = vpop.f32.mrb[0].mxu0
      %v7462 = vadd.f32 %v7301, %v7461
      %v7463 = vpop.f32.mrb[0].mxu0
      %v7464 = vpop.f32.mrb[0].mxu0
      %v7465 = vadd.f32 %v7304, %v7464
      %v7466 = vpop.f32.mrb[0].mxu0
      %7467 = vmatprep.mubr.bf16.mxu0 %v6703
      %7468 = vmatmul.mubr.bf16.gmra.mrb[0].mxu0 %v6702
      %v7469 = vpop.f32.mrb[0].mxu0
      %v7470 = vadd.f32 %v7309, %v7469
      %v7471 = vpop.f32.mrb[0].mxu0
      %v7472 = vpop.f32.mrb[0].mxu0
      %v7473 = vadd.f32 %v7312, %v7472
      %v7474 = vpop.f32.mrb[0].mxu0
      %7475 = vmatprep.mubr.bf16.mxu0 %v6711
      %7476 = vmatmul.mubr.bf16.gmra.mrb[0].mxu0 %v6710
      %v7477 = vpop.f32.mrb[0].mxu0
      %v7478 = vadd.f32 %v7317, %v7477
      %v7479 = vpop.f32.mrb[0].mxu0
      %v7480 = vpop.f32.mrb[0].mxu0
      %v7481 = vadd.f32 %v7320, %v7480
      %v7482 = vpop.f32.mrb[0].mxu0
      %7483 = vmatprep.mubr.bf16.mxu0 %v6719
      %7484 = vmatmul.mubr.bf16.gmra.mrb[0].mxu0 %v6718
      %v7485 = vpop.f32.mrb[0].mxu0
      %v7486 = vadd.f32 %v7325, %v7485
      %v7487 = vpop.f32.mrb[0].mxu0
      %v7488 = vpop.f32.mrb[0].mxu0
      %v7489 = vadd.f32 %v7328, %v7488
      %v7490 = vpop.f32.mrb[0].mxu0
      %7491 = vmatprep.mubr.bf16.mxu0 %v6727
      %7492 = vmatmul.mubr.bf16.gmra.mrb[0].mxu0 %v6726
      %v7493 = vpop.f32.mrb[0].mxu0
      %v7494 = vadd.f32 %v7333, %v7493
      %v7495 = vpop.f32.mrb[0].mxu0
      %v7496 = vpop.f32.mrb[0].mxu0
      %v7497 = vadd.f32 %v7336, %v7496
      %v7498 = vpop.f32.mrb[0].mxu0
      %7499 = vmatprep.mubr.bf16.mxu0 %v6735
      %7500 = vmatmul.mubr.bf16.gmra.mrb[0].mxu0 %v6734
      %v7501 = vpop.f32.mrb[0].mxu0
      %v7502 = vadd.f32 %v7341, %v7501
      %v7503 = vpop.f32.mrb[0].mxu0
      %v7504 = vpop.f32.mrb[0].mxu0
      %v7505 = vadd.f32 %v7344, %v7504
      %v7506 = vpop.f32.mrb[0].mxu0
      %7507 = vmatprep.mubr.bf16.mxu0 %v6743
      %7508 = vmatmul.mubr.bf16.gmra.mrb[0].mxu0 %v6742
      %v7509 = vpop.f32.mrb[0].mxu0
      %v7510 = vadd.f32 %v7349, %v7509
      %v7511 = vpop.f32.mrb[0].mxu0
      %v7512 = vpop.f32.mrb[0].mxu0
      %v7513 = vadd.f32 %v7352, %v7512
      %v7514 = vpop.f32.mrb[0].mxu0
      %7515 = vmatprep.mubr.bf16.mxu0 %v6751
      %7516 = vmatmul.mubr.bf16.gmra.mrb[0].mxu0 %v6750
      %v7517 = vpop.f32.mrb[0].mxu0
      %v7518 = vadd.f32 %v7357, %v7517
      %v7519 = vpop.f32.mrb[0].mxu0
      %v7520 = vpop.f32.mrb[0].mxu0
      %v7521 = vadd.f32 %v7360, %v7520
      %v7522 = vpop.f32.mrb[0].mxu0
      %7523 = vmatprep.mubr.bf16.mxu0 %v6759
      %7524 = vmatmul.mubr.bf16.gmra.mrb[0].mxu0 %v6758
      %v7525 = vpop.f32.mrb[0].mxu0
      %v7526 = vadd.f32 %v7365, %v7525
      %v7527 = vpop.f32.mrb[0].mxu0
      %v7528 = vpop.f32.mrb[0].mxu0
      %v7529 = vadd.f32 %v7368, %v7528
      %v7530 = vpop.f32.mrb[0].mxu0
      %7531 = vmatprep.mubr.bf16.mxu0 %v6767
      %7532 = vmatmul.mubr.bf16.gmra.mrb[0].mxu0 %v6766
      %v7533 = vpop.f32.mrb[0].mxu0
      %v7534 = vadd.f32 %v7373, %v7533
      %v7535 = vpop.f32.mrb[0].mxu0
      %v7536 = vpop.f32.mrb[0].mxu0
      %v7537 = vadd.f32 %v7376, %v7536
      %v7538 = vpop.f32.mrb[0].mxu0
      %7539 = vmatprep.mubr.bf16.mxu0 %v6775
      %7540 = vmatmul.mubr.bf16.gmra.mrb[0].mxu0 %v6774
      %v7541 = vpop.f32.mrb[0].mxu0
      %v7542 = vadd.f32 %v7381, %v7541
      %v7543 = vpop.f32.mrb[0].mxu0
      %v7544 = vpop.f32.mrb[0].mxu0
      %v7545 = vadd.f32 %v7384, %v7544
      %v7546 = vpop.f32.mrb[0].mxu0
      %7547 = vmatprep.mubr.bf16.mxu0 %v6783
      %7548 = vmatmul.mubr.bf16.gmra.mrb[0].mxu0 %v6782
      %v7549 = vpop.f32.mrb[0].mxu0
      %v7550 = vadd.f32 %v7389, %v7549
      %v7551 = vpop.f32.mrb[0].mxu0
      %v7552 = vpop.f32.mrb[0].mxu0
      %v7553 = vadd.f32 %v7392, %v7552
      %v7554 = vpop.f32.mrb[0].mxu0
      %7555 = vmatprep.mubr.bf16.mxu0 %v6791
      %7556 = vmatmul.mubr.bf16.gmra.mrb[0].mxu0 %v6790
      %v7557 = vpop.f32.mrb[0].mxu0
      %v7558 = vadd.f32 %v7397, %v7557
      %v7559 = vpop.f32.mrb[0].mxu0
      %v7560 = vpop.f32.mrb[0].mxu0
      %v7561 = vadd.f32 %v7400, %v7560
      %v7562 = vpop.f32.mrb[0].mxu0
      %7563 = vmatprep.mubr.bf16.mxu0 %v6799
      %7564 = vmatmul.mubr.bf16.gmra.mrb[0].mxu0 %v6798
      %v7565 = vpop.f32.mrb[0].mxu0
      %v7566 = vadd.f32 %v7405, %v7565
      %v7567 = vpop.f32.mrb[0].mxu0
      %v7568 = vpop.f32.mrb[0].mxu0
      %v7569 = vadd.f32 %v7408, %v7568
      %v7570 = vpop.f32.mrb[0].mxu0
      %7571 = vmatprep.mubr.bf16.mxu0 %v6807
      %7572 = vmatmul.mubr.bf16.gmra.mrb[0].mxu0 %v6806
      %v7573 = vpop.f32.mrb[0].mxu0
      %v7574 = vadd.f32 %v7413, %v7573
      %v7575 = vpop.f32.mrb[0].mxu0
      %v7576 = vpop.f32.mrb[0].mxu0
      %v7577 = vadd.f32 %v7416, %v7576
      %v7578 = vpop.f32.mrb[0].mxu0
      %7579 = vdwg.mxu0
      %v7580 = vmax.f32 %v7454, 0.0
      %v7581 = vmax.f32 %v7457, 0.0
      %v7582 = vmax.f32 %v7462, 0.0
      %v7583 = vmax.f32 %v7465, 0.0
      %v7584 = vmax.f32 %v7470, 0.0
      %v7585 = vmax.f32 %v7473, 0.0
      %v7586 = vmax.f32 %v7478, 0.0
      %v7587 = vmax.f32 %v7481, 0.0
      %v7588 = vmax.f32 %v7486, 0.0
      %v7589 = vmax.f32 %v7489, 0.0
      %v7590 = vmax.f32 %v7494, 0.0
      %v7591 = vmax.f32 %v7497, 0.0
      %v7592 = vmax.f32 %v7502, 0.0
      %v7593 = vmax.f32 %v7505, 0.0
      %v7594 = vmax.f32 %v7510, 0.0
      %v7595 = vmax.f32 %v7513, 0.0
      %v7596 = vmax.f32 %v7518, 0.0
      %v7597 = vmax.f32 %v7521, 0.0
      %v7598 = vmax.f32 %v7526, 0.0
      %v7599 = vmax.f32 %v7529, 0.0
      %v7600 = vmax.f32 %v7534, 0.0
      %v7601 = vmax.f32 %v7537, 0.0
      %v7602 = vmax.f32 %v7542, 0.0
      %v7603 = vmax.f32 %v7545, 0.0
      %v7604 = vmax.f32 %v7550, 0.0
      %v7605 = vmax.f32 %v7553, 0.0
      %v7606 = vmax.f32 %v7558, 0.0
      %v7607 = vmax.f32 %v7561, 0.0
      %v7608 = vmax.f32 %v7566, 0.0
      %v7609 = vmax.f32 %v7569, 0.0
      %v7610 = vmax.f32 %v7574, 0.0
      %v7611 = vmax.f32 %v7577, 0.0
      %v7612 = vld [vmem:[%s13] sm:$0xf]
      %v7613 = vpack.c.bf16 %v7581, %v7580
      %v7614 = vpack.c.bf16 %v7583, %v7582
      %v7615 = vpack.c.bf16 %v7585, %v7584
      %v7616 = vpack.c.bf16 %v7587, %v7586
      %v7617 = vpack.c.bf16 %v7589, %v7588
      %v7618 = vpack.c.bf16 %v7591, %v7590
      %v7619 = vpack.c.bf16 %v7593, %v7592
      %v7620 = vpack.c.bf16 %v7595, %v7594
      %v7621 = vpack.c.bf16 %v7597, %v7596
      %v7622 = vpack.c.bf16 %v7599, %v7598
      %v7623 = vpack.c.bf16 %v7601, %v7600
      %v7624 = vpack.c.bf16 %v7603, %v7602
      %v7625 = vpack.c.bf16 %v7605, %v7604
      %v7626 = vpack.c.bf16 %v7607, %v7606
      %v7627 = vpack.c.bf16 %v7609, %v7608
      %v7628 = vpack.c.bf16 %v7611, %v7610
      %v7629 = vld [vmem:[%s14] sm:$0x7]
      %7631 = vset.pattern.permute.xlu0 0
      %7632 = vperm.xlu0 %7631, %v7629
      %v7633 = vpop.permute.xlu0 %7632
      %v7637 = vunpack.c.l.s4 1983009808
      %v7638 = vunpack.c.0.s8 %v7637
      %v7639 = vlaneseq
      %v7640 = vshrl.u32 %v7639, 7
      %v7641 = vsub.s32 %v7638, %v7640
      %v7642 = vrot.slane %v7612, %v7641
      %v7643 = vcombine.high %v7642, %v7642
      %7646 = vmatprep.subr.bf16.mxu0 0
      %7647 = vmatpush1.bf16.msra.mxu0 %v7613
      %7648 = vmatprep.subr.bf16.mxu0 0
      %7649 = vmatpush1.bf16.msra.mxu0 %v7614
      %7650 = vmatprep.subr.bf16.mxu0 0
      %7651 = vmatpush1.bf16.msra.mxu0 %v7615
      %7652 = vmatprep.subr.bf16.mxu0 0
      %7653 = vmatpush1.bf16.msra.mxu0 %v7616
      %7654 = vmatprep.subr.bf16.mxu0 0
      %7655 = vmatpush1.bf16.msra.mxu0 %v7617
      %7656 = vmatprep.subr.bf16.mxu0 0
      %7657 = vmatpush1.bf16.msra.mxu0 %v7618
      %7658 = vmatprep.subr.bf16.mxu0 0
      %7659 = vmatpush1.bf16.msra.mxu0 %v7619
      %7660 = vmatprep.subr.bf16.mxu0 0
      %7661 = vmatpush1.bf16.msra.mxu0 %v7620
      %7662 = vmatprep.subr.bf16.mxu0 0
      %7663 = vmatpush1.bf16.msra.mxu0 %v7621
      %7664 = vmatprep.subr.bf16.mxu0 0
      %7665 = vmatpush1.bf16.msra.mxu0 %v7622
      %7666 = vmatprep.subr.bf16.mxu0 0
      %7667 = vmatpush1.bf16.msra.mxu0 %v7623
      %7668 = vmatprep.subr.bf16.mxu0 0
      %7669 = vmatpush1.bf16.msra.mxu0 %v7624
      %7670 = vmatprep.subr.bf16.mxu0 0
      %7671 = vmatpush1.bf16.msra.mxu0 %v7625
      %7672 = vmatprep.subr.bf16.mxu0 0
      %7673 = vmatpush1.bf16.msra.mxu0 %v7626
      %7674 = vmatprep.subr.bf16.mxu0 0
      %7675 = vmatpush1.bf16.msra.mxu0 %v7627
      %7676 = vmatprep.subr.bf16.mxu0 0
      %7677 = vmatpush1.bf16.msra.mxu0 %v7628
      %7678 = vmatprep.mubr.bf16.mxu0 %v7643
      %7679 = vmatmul.mubr.bf16.gmra.mrb[0].mxu0 %v7642
      %v7680 = vpop.f32.mrb[0].mxu0
      %v7681 = vadd.f32 %v7633, %v7680
      %v7682 = vpop.f32.mrb[0].mxu0
      %v7683 = vpop.f32.mrb[0].mxu0
      %v7684 = vpop.f32.mrb[0].mxu0
      %7685 = vdwg.mxu0
      %vm7686 = vcmask 59392
      %7687 = vst.msk [vmem:[%s491] sm:$0x7] %vm7686, %v7681
      %p7688 = scmp.lt.s32.totalorder %s26, 1
      %s7689 = scalar_select %p7688, %s26, 1
      %s7690 = smul.addr %s7689, 4
      %s7691 = scalar_lea.vmem %s15, %s7690
      // Predicated region
      $region81: #{spectrum_cnn_forward.1} parent=79 // pred_check
        %p7692 = pneg %p364
      $region82: #{spectrum_cnn_forward.1} parent=79 // pred_check_branch
        %7694 = sbr.rel (%p7692) target = $region84
      $region83: #{spectrum_cnn_forward.1} parent=79 // pred_region
        _
      $region84: #{spectrum_cnn_forward.1} parent=79 // pred_fallthru
        _
    $region80: #{spectrum_cnn_forward.1} parent=5 // pred_fallthru
      _
    %p7695 = scmp.le.s32.totalorder 2, %s21
    // Predicated region
    $region85: #{spectrum_cnn_forward.1} parent=5 // pred_check
      %p7696 = pneg %p7695
    $region86: #{spectrum_cnn_forward.1} parent=5 // pred_check_branch
      %7698 = sbr.rel (%p7696) target = $region88
    $region87: #{spectrum_cnn_forward.1} parent=5 // pred_region
      %s7699 = ssub.s32 %s21, 2
      // Predicated region
      $region89: #{spectrum_cnn_forward.1} parent=87 // pred_check
        %p7700 = pneg %p370
      $region90: #{spectrum_cnn_forward.1} parent=87 // pred_check_branch
        %7702 = sbr.rel (%p7700) target = $region92
      $region91: #{spectrum_cnn_forward.1} parent=87 // pred_region
        %p7703 = scmp.lt.s32.totalorder %s27, 1
        %s7704 = scalar_select %p7703, %s27, 1
        %s7705 = smul.addr %s7704, 4
        %s7706 = scalar_lea.vmem %s15, %s7705
      $region92: #{spectrum_cnn_forward.1} parent=87 // pred_fallthru
        _
    $region88: #{spectrum_cnn_forward.1} parent=5 // pred_fallthru
      _
  $region6: #{spectrum_cnn_forward.1} parent=0 // loop_footer
    %s25 = sadd.s32 1, %s21
  $region7: #{spectrum_cnn_forward.1} parent=0 // loop_footer_branch
    %20 = sbr.rel target = $region3
  $region8: #{spectrum_cnn_forward.1} parent=0 // loop_exit
    _

</llo_original>
